<compile_context>
chip_gen: v7x
topology: tpu7x:2x2x1
jax: 0.10.0
libtpu: 0.0.40
codegen_flags: <defaults>
</compile_context>

<pallas_src>
import functools

import jax
import jax.numpy as jnp
from jax import lax
from jax.experimental import pallas as pl
from jax.experimental.pallas import tpu as pltpu


def _deconv_bn_kernel(x_ref, w_ref, b_ref, o_ref, xp_ref, lhs_ref, *, T, Dy, Dx):
    """Grid = (batch, S*S output phases).  One MXU matmul per grid step.

    x_ref  : (1, H, W, Cin)          bf16  input image (constant over the phase axis)
    w_ref  : (S*S, T*T*Cin, Cout)    bf16  per-phase tap-concatenated weights (BN folded)
    b_ref  : (1, Cout)               f32   folded conv/BN bias
    o_ref  : (1, Hb*Wb, Cout)        f32   flat phase plane (lane-dense store)
    xp_ref : (H+2*Dy, W+2*Dx, Cin)   bf16  zero-haloed staging buffer (scratch)
    lhs_ref: (Hb*Wb, T*T*Cin)        bf16  tap-concatenated LHS (scratch)
    """
    p = pl.program_id(1)                       # output phase index py*S + px
    _, H, W, Cin = x_ref.shape
    Cout = w_ref.shape[2]
    Hb, Wb = H + Dy, W + Dx
    Hp, Wp = H + 2 * Dy, W + 2 * Dx

    # Per-image staging, done once on the first phase step of each image.  The phase
    # axis is 'arbitrary' (never split across megacore cores), so every core that
    # works on image b runs its p == 0 step before the phases that consume lhs_ref.
    @pl.when(p == 0)
    def _stage():
        # Zero only the thin halo strips; the interior is fully rewritten below.
        if Dy > 0:
            zrow = jnp.zeros((Dy, Wp, Cin), xp_ref.dtype)
            xp_ref[:Dy, :, :] = zrow
            xp_ref[Dy + H:, :, :] = zrow
        if Dx > 0:
            zcol = jnp.zeros((Hp, Dx, Cin), xp_ref.dtype)
            xp_ref[:, :Dx, :] = zcol
            xp_ref[:, Dx + W:, :] = zcol
        xp_ref[Dy:Dy + H, Dx:Dx + W, :] = x_ref[0]
        # Build the tap-concatenated LHS once per image: the T*T shifted windows are
        # phase-independent, so the (Hb*Wb, Cin) compaction relayout happens T*T
        # times per image instead of once per (phase, tap).
        for dy in range(T):
            for dx in range(T):
                win = xp_ref[Dy - dy:Dy - dy + Hb, Dx - dx:Dx - dx + Wb, :]
                c0 = (dy * T + dx) * Cin
                lhs_ref[:, c0:c0 + Cin] = win.reshape(Hb * Wb, Cin)

    # One deep MXU matmul per phase: (Hb*Wb, T*T*Cin) x (T*T*Cin, Cout), f32 acc.
    acc = jnp.dot(lhs_ref[...], w_ref[p], preferred_element_type=jnp.float32)
    o_ref[0] = acc + b_ref[...]


@functools.partial(jax.jit, static_argnames=("stride", "padding"))
def deconv2d_batchnorm_forward(x_nchw, w_pt, conv_bias, gamma, beta, mean, var,
                               *, stride, padding):
    """ConvTranspose2d(w_pt, bias, stride, padding) + BatchNorm2d (inference)."""
    eps = 1e-5
    Cin, Cout, K, Kw = w_pt.shape
    assert K == Kw, "only square kernels supported"
    S, P = int(stride), int(padding)
    B, _, H, W = x_nchw.shape
    Dy = Dx = max(0, (K - 1) // S)
    T = Dy + 1                                   # (padded) taps per spatial dim/phase
    Hb, Wb = H + Dy, W + Dx
    Hout = (H - 1) * S - 2 * P + K
    Wout = (W - 1) * S - 2 * P + K
    assert Hout > 0 and Wout > 0

    # Fold BN into the conv: scale into the weights (per output channel), bias add
    # stays as a single in-kernel add.
    scale = gamma / jnp.sqrt(var + eps)                               # (Cout,)
    bias = beta + scale * (conv_bias - mean)                          # (Cout,)
    w_hwio = jnp.transpose(w_pt, (2, 3, 0, 1)) * scale[None, None, None, :]  # (K,K,Cin,Cout)

    # Per-phase tap-concatenated weights: (S*S, T*T*Cin, Cout).  Taps whose kernel
    # index falls outside [0, K) (possible when K % S != 0 or S > K) are zero-padded
    # so every phase runs the identical single deep matmul.
    zero_tap = jnp.zeros((Cin, Cout), w_hwio.dtype)
    phase_mats = []
    for py in range(S):
        for px in range(S):
            taps = []
            for dy in range(T):
                for dx in range(T):
                    ky, kx = dy * S + py, dx * S + px
                    taps.append(w_hwio[ky, kx] if (ky < K and kx < K) else zero_tap)
            phase_mats.append(jnp.concatenate(taps, axis=0))          # (T*T*Cin, Cout)
    w_cat = jnp.stack(phase_mats, axis=0).astype(jnp.bfloat16)        # (S*S, T*T*Cin, Cout)
    bias2d = bias[None, :].astype(jnp.float32)

    x = jnp.transpose(x_nchw, (0, 2, 3, 1)).astype(jnp.bfloat16)      # NHWC, bf16

    kernel = functools.partial(_deconv_bn_kernel, T=T, Dy=Dy, Dx=Dx)
    outp = pl.pallas_call(
        kernel,
        out_shape=jax.ShapeDtypeStruct((B * S * S, Hb * Wb, Cout), jnp.float32),
        grid_spec=pltpu.PrefetchScalarGridSpec(
            num_scalar_prefetch=0,
            grid=(B, S * S),
            in_specs=[
                # x / weights / bias block indices are constant across the phase
                # axis -> fetched once per image / once per core, stay resident.
                pl.BlockSpec((1, H, W, Cin), lambda b, p: (b, 0, 0, 0)),
                pl.BlockSpec((S * S, T * T * Cin, Cout), lambda b, p: (0, 0, 0)),
                pl.BlockSpec((1, Cout), lambda b, p: (0, 0)),
            ],
            out_specs=pl.BlockSpec((1, Hb * Wb, Cout),
                                   lambda b, p: (b * S * S + p, 0, 0)),
            scratch_shapes=[
                pltpu.VMEM((H + 2 * Dy, W + 2 * Dx, Cin), jnp.bfloat16),
                pltpu.VMEM((Hb * Wb, T * T * Cin), jnp.bfloat16),
            ],
        ),
        compiler_params=pltpu.CompilerParams(
            # Phase axis must stay 'arbitrary': the pl.when(p == 0) staging has to
            # run on the same core as the phases that consume it (megacore safety).
            dimension_semantics=("parallel", "arbitrary")),
    )(x, w_cat, bias2d)

    # Wrapper-side de-interleave of the S*S phase planes (layout plumbing; keeps the
    # kernel's stores flat and lane-dense): (B*S*S, Hb*Wb, C) -> (B, Hout, Wout, C).
    outp = outp.reshape(B, S, S, Hb, Wb, Cout)
    outp = jnp.transpose(outp, (0, 3, 1, 4, 2, 5)).reshape(B, Hb * S, Wb * S, Cout)
    out = outp[:, P:P + Hout, P:P + Wout, :]
    return jnp.transpose(out, (0, 3, 1, 2))


def _reference(x_nchw, w_pt, conv_bias, gamma, beta, mean, var, stride, padding):
    """Pure-JAX ConvTranspose2d + BN (inference), bf16 inputs / f32 accumulation
    folded exactly like the kernel so the check isolates the conv structure."""
    eps = 1e-5
    Cin, Cout, K, _ = w_pt.shape
    scale = gamma / jnp.sqrt(var + eps)
    bias = beta + scale * (conv_bias - mean)
    w_scaled = (w_pt * scale[None, :, None, None]).astype(jnp.bfloat16)
    # ConvTranspose2d == conv with lhs dilation, spatially-flipped kernel, I/O swap.
    w_conv = jnp.transpose(w_scaled[:, :, ::-1, ::-1], (1, 0, 2, 3))   # OIHW
    q = K - 1 - padding
    assert q >= 0
    y = lax.conv_general_dilated(
        x_nchw.astype(jnp.bfloat16), w_conv, window_strides=(1, 1),
        padding=[(q, q), (q, q)], lhs_dilation=(stride, stride),
        dimension_numbers=("NCHW", "OIHW", "NCHW"),
        preferred_element_type=jnp.float32)
    return y + bias[None, :, None, None]


if __name__ == "__main__":
    # deconv2DBatchNorm(in_channels=128, n_filters=256, k_size=4, stride=2,
    #                   padding=1, bias=True): classic 2x upsampling deconv.
    B, Cin, Cout = 2, 128, 256
    H = W = 16
    K, S, P = 4, 2, 1

    key = jax.random.PRNGKey(0)
    ks = jax.random.split(key, 7)
    x = jax.random.normal(ks[0], (B, Cin, H, W), jnp.float32)
    w = jax.random.normal(ks[1], (Cin, Cout, K, K), jnp.float32) * 0.05  # PyTorch IOHW
    conv_bias = 0.1 * jax.random.normal(ks[2], (Cout,), jnp.float32)
    gamma = 1.0 + 0.1 * jax.random.normal(ks[3], (Cout,), jnp.float32)
    beta = 0.1 * jax.random.normal(ks[4], (Cout,), jnp.float32)
    mean = 0.1 * jax.random.normal(ks[5], (Cout,), jnp.float32)
    var = jnp.abs(jax.random.normal(ks[6], (Cout,), jnp.float32)) + 0.5

    out = deconv2d_batchnorm_forward(x, w, conv_bias, gamma, beta, mean, var,
                                     stride=S, padding=P)
    out = jax.block_until_ready(out)

    ref = _reference(x, w, conv_bias, gamma, beta, mean, var, S, P)
    ref = jax.block_until_ready(ref)

    Hout = (H - 1) * S - 2 * P + K
    Wout = (W - 1) * S - 2 * P + K
    assert out.shape == (B, Cout, Hout, Wout), out.shape
    max_err = float(jnp.max(jnp.abs(out - ref)))
    assert jnp.allclose(out, ref, atol=1e-2, rtol=1e-2), max_err
    print("KERNEL_OK")
</pallas_src>

<mosaic_0001>
module attributes {stable_mosaic.version = 11 : i64} {
  func.func @_deconv_bn_kernel(%arg0: i32, %arg1: i32, %arg2: memref<1x16x16x128xbf16, #tpu.memory_space<vmem>>, %arg3: memref<4x512x256xbf16, #tpu.memory_space<vmem>>, %arg4: memref<1x256xf32, #tpu.memory_space<vmem>>, %arg5: memref<1x289x256xf32, #tpu.memory_space<vmem>>, %arg6: memref<18x18x128xbf16, #tpu.memory_space<vmem>>, %arg7: memref<289x512xbf16, #tpu.memory_space<vmem>>) attributes {dimension_semantics = [#tpu.dimension_semantics<parallel>, #tpu.dimension_semantics<arbitrary>], iteration_bounds = array<i64: 2, 4>, scalar_prefetch = 0 : i64, scratch_operands = 2 : i64, tpu.core_type = #tpu.core_type<tc>, window_params = [{transform_indices = @transform_0, window_bounds = array<i64: 1, 16, 16, 128>}, {pipeline_mode = #tpu.pipeline_mode<synchronous>, transform_indices = @transform_1, window_bounds = array<i64: 4, 512, 256>}, {pipeline_mode = #tpu.pipeline_mode<synchronous>, transform_indices = @transform_2, window_bounds = array<i64: 1, 256>}, {transform_indices = @transform_3, window_bounds = array<i64: 1, 289, 256>}]} {
    %c0_i32 = arith.constant 0 : i32
    %0 = arith.cmpi eq, %arg1, %c0_i32 : i32
    %1 = arith.extui %0 : i1 to i32
    %c0_i32_0 = arith.constant 0 : i32
    %2 = arith.cmpi ne, %1, %c0_i32_0 : i32
    scf.if %2 {
      %cst_9 = arith.constant 0.000000e+00 : bf16
      %14 = vector.broadcast %cst_9 : bf16 to vector<1x18x128xbf16>
      %c0_10 = arith.constant 0 : index
      %c0_11 = arith.constant 0 : index
      %c0_12 = arith.constant 0 : index
      %15 = vector.load %arg6[%c0_10, %c0_11, %c0_12] : memref<18x18x128xbf16, #tpu.memory_space<vmem>>, vector<1x18x128xbf16>
      tpu.vector_store %arg6[%c0_10, %c0_11, %c0_12], %14 {strides = array<i32>} : memref<18x18x128xbf16, #tpu.memory_space<vmem>>, vector<1x18x128xbf16>,
      %c17 = arith.constant 17 : index
      %c0_13 = arith.constant 0 : index
      %c0_14 = arith.constant 0 : index
      %16 = vector.load %arg6[%c17, %c0_13, %c0_14] : memref<18x18x128xbf16, #tpu.memory_space<vmem>>, vector<1x18x128xbf16>
      tpu.vector_store %arg6[%c17, %c0_13, %c0_14], %14 {strides = array<i32>} : memref<18x18x128xbf16, #tpu.memory_space<vmem>>, vector<1x18x128xbf16>,
      %cst_15 = arith.constant 0.000000e+00 : bf16
      %17 = vector.broadcast %cst_15 : bf16 to vector<18x1x128xbf16>
      %c0_16 = arith.constant 0 : index
      %c0_17 = arith.constant 0 : index
      %c0_18 = arith.constant 0 : index
      %18 = vector.load %arg6[%c0_16, %c0_17, %c0_18] : memref<18x18x128xbf16, #tpu.memory_space<vmem>>, vector<18x1x128xbf16>
      tpu.vector_store %arg6[%c0_16, %c0_17, %c0_18], %17 {strides = array<i32>} : memref<18x18x128xbf16, #tpu.memory_space<vmem>>, vector<18x1x128xbf16>,
      %c0_19 = arith.constant 0 : index
      %c17_20 = arith.constant 17 : index
      %c0_21 = arith.constant 0 : index
      %19 = vector.load %arg6[%c0_19, %c17_20, %c0_21] : memref<18x18x128xbf16, #tpu.memory_space<vmem>>, vector<18x1x128xbf16>
      tpu.vector_store %arg6[%c0_19, %c17_20, %c0_21], %17 {strides = array<i32>} : memref<18x18x128xbf16, #tpu.memory_space<vmem>>, vector<18x1x128xbf16>,
      %c0_22 = arith.constant 0 : index
      %c0_23 = arith.constant 0 : index
      %c0_24 = arith.constant 0 : index
      %c0_25 = arith.constant 0 : index
      %20 = vector.load %arg2[%c0_22, %c0_23, %c0_24, %c0_25] : memref<1x16x16x128xbf16, #tpu.memory_space<vmem>>, vector<1x16x16x128xbf16>
      %21 = vector.shape_cast %20 : vector<1x16x16x128xbf16> to vector<16x16x128xbf16>
      %c1 = arith.constant 1 : index
      %c1_26 = arith.constant 1 : index
      %c0_27 = arith.constant 0 : index
      %22 = vector.load %arg6[%c1, %c1_26, %c0_27] : memref<18x18x128xbf16, #tpu.memory_space<vmem>>, vector<16x16x128xbf16>
      tpu.vector_store %arg6[%c1, %c1_26, %c0_27], %21 {strides = array<i32>} : memref<18x18x128xbf16, #tpu.memory_space<vmem>>, vector<16x16x128xbf16>,
      %c1_28 = arith.constant 1 : index
      %c1_29 = arith.constant 1 : index
      %c0_30 = arith.constant 0 : index
      %23 = vector.load %arg6[%c1_28, %c1_29, %c0_30] : memref<18x18x128xbf16, #tpu.memory_space<vmem>>, vector<17x17x128xbf16>
      %24 = vector.shape_cast %23 : vector<17x17x128xbf16> to vector<289x128xbf16>
      %c0_31 = arith.constant 0 : index
      %c0_32 = arith.constant 0 : index
      %25 = vector.load %arg7[%c0_31, %c0_32] : memref<289x512xbf16, #tpu.memory_space<vmem>>, vector<289x128xbf16>
      tpu.vector_store %arg7[%c0_31, %c0_32], %24 {strides = array<i32>} : memref<289x512xbf16, #tpu.memory_space<vmem>>, vector<289x128xbf16>,
      %c1_33 = arith.constant 1 : index
      %c0_34 = arith.constant 0 : index
      %c0_35 = arith.constant 0 : index
      %26 = vector.load %arg6[%c1_33, %c0_34, %c0_35] : memref<18x18x128xbf16, #tpu.memory_space<vmem>>, vector<17x17x128xbf16>
      %27 = vector.shape_cast %26 : vector<17x17x128xbf16> to vector<289x128xbf16>
      %c0_36 = arith.constant 0 : index
      %c128 = arith.constant 128 : index
      %28 = vector.load %arg7[%c0_36, %c128] : memref<289x512xbf16, #tpu.memory_space<vmem>>, vector<289x128xbf16>
      tpu.vector_store %arg7[%c0_36, %c128], %27 {strides = array<i32>} : memref<289x512xbf16, #tpu.memory_space<vmem>>, vector<289x128xbf16>,
      %c0_37 = arith.constant 0 : index
      %c1_38 = arith.constant 1 : index
      %c0_39 = arith.constant 0 : index
      %29 = vector.load %arg6[%c0_37, %c1_38, %c0_39] : memref<18x18x128xbf16, #tpu.memory_space<vmem>>, vector<17x17x128xbf16>
      %30 = vector.shape_cast %29 : vector<17x17x128xbf16> to vector<289x128xbf16>
      %c0_40 = arith.constant 0 : index
      %c256 = arith.constant 256 : index
      %31 = vector.load %arg7[%c0_40, %c256] : memref<289x512xbf16, #tpu.memory_space<vmem>>, vector<289x128xbf16>
      tpu.vector_store %arg7[%c0_40, %c256], %30 {strides = array<i32>} : memref<289x512xbf16, #tpu.memory_space<vmem>>, vector<289x128xbf16>,
      %c0_41 = arith.constant 0 : index
      %c0_42 = arith.constant 0 : index
      %c0_43 = arith.constant 0 : index
      %32 = vector.load %arg6[%c0_41, %c0_42, %c0_43] : memref<18x18x128xbf16, #tpu.memory_space<vmem>>, vector<17x17x128xbf16>
      %33 = vector.shape_cast %32 : vector<17x17x128xbf16> to vector<289x128xbf16>
      %c0_44 = arith.constant 0 : index
      %c384 = arith.constant 384 : index
      %34 = vector.load %arg7[%c0_44, %c384] : memref<289x512xbf16, #tpu.memory_space<vmem>>, vector<289x128xbf16>
      tpu.vector_store %arg7[%c0_44, %c384], %33 {strides = array<i32>} : memref<289x512xbf16, #tpu.memory_space<vmem>>, vector<289x128xbf16>,
    } else {
    }
    %c0 = arith.constant 0 : index
    %c0_1 = arith.constant 0 : index
    %3 = vector.load %arg7[%c0, %c0_1] : memref<289x512xbf16, #tpu.memory_space<vmem>>, vector<289x512xbf16>
    %4 = arith.index_cast %arg1 : i32 to index
    %c0_2 = arith.constant 0 : index
    %c0_3 = arith.constant 0 : index
    %5 = vector.load %arg3[%4, %c0_2, %c0_3] : memref<4x512x256xbf16, #tpu.memory_space<vmem>>, vector<1x512x256xbf16>
    %6 = vector.shape_cast %5 : vector<1x512x256xbf16> to vector<512x256xbf16>
    %cst = arith.constant dense<0.000000e+00> : vector<289x256xf32>
    %7 = tpu.matmul %3, %6, %cst {dimension_numbers = #tpu.dot_dimension_numbers<[1], [0], [0], [1], [0, 0, 1, 1], [], []>} : vector<289x512xbf16>, vector<512x256xbf16>, vector<289x256xf32> -> vector<289x256xf32>
    %c0_4 = arith.constant 0 : index
    %c0_5 = arith.constant 0 : index
    %8 = vector.load %arg4[%c0_4, %c0_5] : memref<1x256xf32, #tpu.memory_space<vmem>>, vector<1x256xf32>
    %9 = vector.broadcast %8 : vector<1x256xf32> to vector<289x256xf32>
    %10 = arith.addf %7, %9 : vector<289x256xf32>
    %c0_6 = arith.constant 0 : index
    %c0_7 = arith.constant 0 : index
    %c0_8 = arith.constant 0 : index
    %11 = vector.load %arg5[%c0_6, %c0_7, %c0_8] : memref<1x289x256xf32, #tpu.memory_space<vmem>>, vector<1x289x256xf32>
    %12 = vector.shape_cast %11 : vector<1x289x256xf32> to vector<289x256xf32>
    %13 = vector.shape_cast %10 : vector<289x256xf32> to vector<1x289x256xf32>
    tpu.vector_store %arg5[%c0_6, %c0_7, %c0_8], %13 {strides = array<i32>} : memref<1x289x256xf32, #tpu.memory_space<vmem>>, vector<1x289x256xf32>,
    return
  }
  func.func @transform_0(%arg0: i32, %arg1: i32) -> (i32, i32, i32, i32) {
    %c0_i32 = arith.constant 0 : i32
    %c0_i32_0 = arith.constant 0 : i32
    %c0_i32_1 = arith.constant 0 : i32
    %c0_i32_2 = arith.constant 0 : i32
    return %arg0, %c0_i32, %c0_i32_0, %c0_i32_1 : i32, i32, i32, i32
  }
  func.func @transform_1(%arg0: i32, %arg1: i32) -> (i32, i32, i32) {
    %c0_i32 = arith.constant 0 : i32
    %c0_i32_0 = arith.constant 0 : i32
    %c0_i32_1 = arith.constant 0 : i32
    %c0_i32_2 = arith.constant 0 : i32
    return %c0_i32, %c0_i32_0, %c0_i32_1 : i32, i32, i32
  }
  func.func @transform_2(%arg0: i32, %arg1: i32) -> (i32, i32) {
    %c0_i32 = arith.constant 0 : i32
    %c0_i32_0 = arith.constant 0 : i32
    %c0_i32_1 = arith.constant 0 : i32
    return %c0_i32, %c0_i32_0 : i32, i32
  }
  func.func @transform_3(%arg0: i32, %arg1: i32) -> (i32, i32, i32) {
    %c2_i32 = arith.constant 2 : i32
    %0 = arith.muli %arg0, %c2_i32 : i32
    %c2_i32_0 = arith.constant 2 : i32
    %1 = arith.muli %0, %c2_i32_0 : i32
    %2 = arith.addi %1, %arg1 : i32
    %c0_i32 = arith.constant 0 : i32
    %c0_i32_1 = arith.constant 0 : i32
    %c0_i32_2 = arith.constant 0 : i32
    return %2, %c0_i32, %c0_i32_1 : i32, i32, i32
  }
}

</mosaic_0001>

<llo_original>
// kernel: deconv2d_batchnorm_forward.1
$region0: #{deconv2d_batchnorm_forward.1}
  #allocation0 [shape = 'u32[]', space=smem, size = 0x4, offset = 0x4, fixed_abs, tag = 'smem constant byte address 0x4 - core index']
  #allocation1 [shape = 'u32[144,128]{1,0:T(1,128)}', space=vmem, size = 0x12000, scoped, tag = 'internal scratch']
  #allocation2 [shape = 'bf16[18,18,128]{2,1,0:T(8,128)(2,1)}', space=vmem, size = 0x1b000, scoped, tag = 'scratch operand']
  #allocation3 [shape = 'bf16[289,512]{1,0:T(8,128)(2,1)}', space=vmem, size = 0x4a000, scoped, tag = 'scratch operand']
  %s0 = inlined_call_operand.vmem [shape: bf16[2,16,16,128], index: 0, kind: input, shape index: {}]
  %s1 = inlined_call_operand.vmem [shape: bf16[4,512,256], index: 1, kind: input, shape index: {}]
  %s2 = inlined_call_operand.vmem [shape: f32[1,256], index: 2, kind: input, shape index: {}]
  %s3 = inlined_call_operand.vmem [shape: f32[8,289,256], index: 3, kind: output, shape index: {}]
  %s4 = sld [smem:[#allocation0]]
  $region49: #{deconv2d_batchnorm_forward.1} parent=0
    _
  %s6 = ssub.s32 1, %s4
  %s7 = scalar_select 0, %s6, %s4
  loop: start=0, step=1, limit=10
  $region2: #{deconv2d_batchnorm_forward.1} parent=0 // loop_pre_header
    _
  $region3: #{deconv2d_batchnorm_forward.1} parent=0 // loop_header
    %s9 = sphi 0, %s13
    %p10 = scmp.ge.s32.totalorder %s9, 10
    %s16 = sphi 0, %s28
    %s17 = sphi 0, %s24
    %s18 = sphi 0, %s16
    %s19 = sphi 0, %s17
    %s20 = sphi 0, %s18
    %s21 = sphi 0, %s19
    %s31 = sphi 0, %s33
    %s34 = sphi 0, %s31
    %s35 = sphi 0, %s34
    %s51 = sphi 0, %s35
    %s55 = sphi 0, %s55
    %s57 = sphi 0, %s55
    %s58 = sphi 0, %s57
    %s72 = sphi 0, %s58
    %s76 = sphi 0, %s76
    %s78 = sphi 0, %s76
    %s79 = sphi 0, %s78
    %s93 = sphi 0, %s79
    %s103 = sphi 0, %s105
    %s106 = sphi 0, %s103
    %s107 = sphi 0, %s106
    %s123 = sphi 0, %s107
  $region4: #{deconv2d_batchnorm_forward.1} parent=0 // loop_header_branch
    %12 = sbr.rel (%p10) target = $region8
  $region5: #{deconv2d_batchnorm_forward.1} parent=0 // loop_body
    %s14 = ssub.s32 %s9, 1
    %s15 = ssub.s32 %s9, 2
    %s22 = sadd.s32 1, %s17
    %p23 = scmp.ge.s32.totalorder %s22, 4
    %s24 = scalar_select %p23, 0, %s22
    %s25 = sadd.s32 1, %s16
    %s26 = scalar_select %p23, %s25, %s16
    %p27 = scmp.ge.s32.totalorder %s26, 2
    %s28 = scalar_select %p27, 0, %s26
    %s29 = ssub.s32 %s16, %s28
    %p30 = scmp.eq.s32.totalorder %s29, 0
    %s32 = sadd.s32 %s31, 1
    %s33 = scalar_select %p30, %s31, %s32
    %p36 = pneg %p30
    %p37 = scmp.eq.s32.totalorder %s9, 7
    %p38 = por %p36, %p37
    %p39 = scmp.ne.s32.totalorder %s31, %s34
    %p40 = scmp.eq.s32.totalorder %s9, 0
    %p41 = por %p39, %p40
    %p42 = scmp.ne.s32.totalorder %s31, %s34
    %p43 = scmp.eq.s32.totalorder %s14, 7
    %p44 = por %p42, %p43
    %p45 = scmp.ne.s32.totalorder %s34, %s35
    %p46 = scmp.eq.s32.totalorder %s14, 0
    %p47 = por %p45, %p46
    %p48 = scmp.ne.s32.totalorder %s34, %s35
    %p49 = scmp.eq.s32.totalorder %s15, 7
    %p50 = por %p48, %p49
    %p52 = scmp.ne.s32.totalorder %s35, %s51
    %p53 = scmp.eq.s32.totalorder %s15, 0
    %p54 = por %p52, %p53
    %s56 = sadd.s32 %s55, 1
    %p59 = scmp.eq.s32.totalorder %s9, 7
    %p60 = scmp.ne.s32.totalorder %s55, %s57
    %p61 = scmp.eq.s32.totalorder %s9, 0
    %p62 = por %p60, %p61
    %p63 = scmp.ne.s32.totalorder %s55, %s57
    %p64 = scmp.eq.s32.totalorder %s14, 7
    %p65 = por %p63, %p64
    %p66 = scmp.ne.s32.totalorder %s57, %s58
    %p67 = scmp.eq.s32.totalorder %s14, 0
    %p68 = por %p66, %p67
    %p69 = scmp.ne.s32.totalorder %s57, %s58
    %p70 = scmp.eq.s32.totalorder %s15, 7
    %p71 = por %p69, %p70
    %p73 = scmp.ne.s32.totalorder %s58, %s72
    %p74 = scmp.eq.s32.totalorder %s15, 0
    %p75 = por %p73, %p74
    %s77 = sadd.s32 %s76, 1
    %p80 = scmp.eq.s32.totalorder %s9, 7
    %p81 = scmp.ne.s32.totalorder %s76, %s78
    %p82 = scmp.eq.s32.totalorder %s9, 0
    %p83 = por %p81, %p82
    %p84 = scmp.ne.s32.totalorder %s76, %s78
    %p85 = scmp.eq.s32.totalorder %s14, 7
    %p86 = por %p84, %p85
    %p87 = scmp.ne.s32.totalorder %s78, %s79
    %p88 = scmp.eq.s32.totalorder %s14, 0
    %p89 = por %p87, %p88
    %p90 = scmp.ne.s32.totalorder %s78, %s79
    %p91 = scmp.eq.s32.totalorder %s15, 7
    %p92 = por %p90, %p91
    %p94 = scmp.ne.s32.totalorder %s79, %s93
    %p95 = scmp.eq.s32.totalorder %s15, 0
    %p96 = por %p94, %p95
    %s97 = smul.u32 %s16, 4
    %s98 = sadd.s32 %s97, %s17
    %s99 = smul.u32 %s28, 4
    %s100 = sadd.s32 %s99, %s24
    %s101 = ssub.s32 %s98, %s100
    %p102 = scmp.eq.s32.totalorder %s101, 0
    %s104 = sadd.s32 %s103, 1
    %s105 = scalar_select %p102, %s103, %s104
    %p108 = pneg %p102
    %p109 = scmp.eq.s32.totalorder %s9, 7
    %p110 = por %p108, %p109
    %p111 = scmp.ne.s32.totalorder %s103, %s106
    %p112 = scmp.eq.s32.totalorder %s9, 0
    %p113 = por %p111, %p112
    %p114 = scmp.ne.s32.totalorder %s103, %s106
    %p115 = scmp.eq.s32.totalorder %s14, 7
    %p116 = por %p114, %p115
    %p117 = scmp.ne.s32.totalorder %s106, %s107
    %p118 = scmp.eq.s32.totalorder %s14, 0
    %p119 = por %p117, %p118
    %p120 = scmp.ne.s32.totalorder %s106, %s107
    %p121 = scmp.eq.s32.totalorder %s15, 7
    %p122 = por %p120, %p121
    %p124 = scmp.ne.s32.totalorder %s107, %s123
    %p125 = scmp.eq.s32.totalorder %s15, 0
    %p126 = por %p124, %p125
    %p127 = scmp.le.s32.totalorder 1, %s9
    %p128 = scmp.lt.s32.totalorder %s9, 9
    %p129 = pnand %p127, %p128
    %p130 = pneg %p129
    // Predicated region
    $region9: #{deconv2d_batchnorm_forward.1} parent=5 // pred_check
      _
    $region10: #{deconv2d_batchnorm_forward.1} parent=5 // pred_check_branch
      %132 = sbr.rel (%p129) target = $region12
    $region11: #{deconv2d_batchnorm_forward.1} parent=5 // pred_region
      %s133 = ssub.s32 %s9, 1
      // Predicated region
      $region13: #{deconv2d_batchnorm_forward.1} parent=11 // pred_check
        %p134 = pneg %p68
      $region14: #{deconv2d_batchnorm_forward.1} parent=11 // pred_check_branch
        %136 = sbr.rel (%p134) target = $region16
      $region15: #{deconv2d_batchnorm_forward.1} parent=11 // pred_region
        _
      $region16: #{deconv2d_batchnorm_forward.1} parent=11 // pred_fallthru
        _
      // Predicated region
      $region17: #{deconv2d_batchnorm_forward.1} parent=11 // pred_check
        %p137 = pneg %p89
      $region18: #{deconv2d_batchnorm_forward.1} parent=11 // pred_check_branch
        %139 = sbr.rel (%p137) target = $region20
      $region19: #{deconv2d_batchnorm_forward.1} parent=11 // pred_region
        _
      $region20: #{deconv2d_batchnorm_forward.1} parent=11 // pred_fallthru
        _
    $region12: #{deconv2d_batchnorm_forward.1} parent=5 // pred_fallthru
      _
    %p140 = scmp.lt.s32.totalorder %s9, 8
    // Predicated region
    $region21: #{deconv2d_batchnorm_forward.1} parent=5 // pred_check
      %p141 = pneg %p140
    $region22: #{deconv2d_batchnorm_forward.1} parent=5 // pred_check_branch
      %143 = sbr.rel (%p141) target = $region24
    $region23: #{deconv2d_batchnorm_forward.1} parent=5 // pred_region
      // Predicated region
      $region25: #{deconv2d_batchnorm_forward.1} parent=23 // pred_check
        %p144 = pneg %p41
      $region26: #{deconv2d_batchnorm_forward.1} parent=23 // pred_check_branch
        %146 = sbr.rel (%p144) target = $region28
      $region27: #{deconv2d_batchnorm_forward.1} parent=23 // pred_region
        %p147 = scmp.lt.s32.totalorder %s16, 1
        %s148 = scalar_select %p147, %s16, 1
        %s149 = smul.addr %s148, 32
        %s150 = smul.addr %s149, 4
        %s151 = scalar_lea.vmem %s0, %s150
      $region28: #{deconv2d_batchnorm_forward.1} parent=23 // pred_fallthru
        _
    $region24: #{deconv2d_batchnorm_forward.1} parent=5 // pred_fallthru
      _
    %p152 = scmp.le.s32.totalorder 1, %s9
    %p153 = scmp.lt.s32.totalorder %s9, 9
    %p154 = pnand %p152, %p153
    %p155 = pneg %p154
    // Predicated region
    $region29: #{deconv2d_batchnorm_forward.1} parent=5 // pred_check
      _
    $region30: #{deconv2d_batchnorm_forward.1} parent=5 // pred_check_branch
      %157 = sbr.rel (%p154) target = $region32
    $region31: #{deconv2d_batchnorm_forward.1} parent=5 // pred_region
      %s158 = ssub.s32 %s9, 1
      %p159 = scmp.lt.s32.totalorder %s18, 1
      %s160 = scalar_select %p159, %s18, 1
      %s161 = smul.addr %s160, 32
      %s162 = smul.addr %s161, 4
      %s163 = scalar_lea.vmem %s0, %s162
      %p164 = pneg %p47
      %p165 = pneg %p44
      %p166 = pneg %p68
      %p167 = pneg %p65
      %p168 = pneg %p89
      %p169 = pneg %p86
      %p170 = pneg %p119
      %p171 = pneg %p116
      %s172 = smul.u32 %s18, 4
      %s173 = sadd.s32 %s172, %s19
      %p174 = scmp.lt.s32.totalorder %s173, 7
      %s175 = scalar_select %p174, %s173, 7
      %s176 = smul.addr %s175, 74
      %s177 = smul.addr %s176, 8
      %s178 = scalar_lea.vmem %s3, %s177
      %p179 = scmp.lt.s32.totalorder %s18, 1
      %s180 = scalar_select %p179, %s18, 1
      %s181 = smul.addr %s180, 32
      %s182 = smul.addr %s181, 4
      %s183 = scalar_lea.vmem %s0, %s182
      %s184 = smul.u32 %s18, 4
      %s185 = sadd.s32 %s184, %s19
      %p186 = scmp.lt.s32.totalorder %s185, 7
      %s187 = scalar_select %p186, %s185, 7
      %s188 = smul.addr %s187, 74
      %s189 = smul.addr %s188, 8
      %s190 = scalar_lea.vmem %s3, %s189
      %s191 = smul.u32 %s18, 4
      %s192 = sadd.s32 %s191, %s19
      %p194 = scmp.eq.s32.totalorder %s19, 0
      // Predicated region
      $region33: #{deconv2d_batchnorm_forward.1} parent=31 // pred_check
        %p195 = pneg %p194
      $region34: #{deconv2d_batchnorm_forward.1} parent=31 // pred_check_branch
        %197 = sbr.rel (%p195) target = $region36
      $region35: #{deconv2d_batchnorm_forward.1} parent=31 // pred_region
        %198 = vst [vmem:[#allocation2] sm:$0xf] 0
        %199 = vst [vmem:[#allocation2 + $0x4] sm:$0xf] 0
        %200 = vst [vmem:[#allocation2 + $0x8] sm:$0x1] 0
        %s201 = scalar_lea.vmem [#allocation2], 204
        %202 = vst [vmem:[%s201] sm:$0xf] 0
        %203 = vst [vmem:[%s201 + $0x4] sm:$0xf] 0
        %204 = vst [vmem:[%s201 + $0x8] sm:$0x1] 0
        %vm205 = vcmask 1040384
        %vm206 = vsmask.f32 256
        %vm207 = vmand %vm205, %vm206
        %v208 = vld [vmem:[#allocation2] sm:$0x1]
        %v209 = vsel %vm207, 0, %v208
        %210 = vst [vmem:[#allocation2] sm:$0x1] %v209
        %v211 = vld [vmem:[#allocation2 + $0xc] sm:$0x1]
        %v212 = vsel %vm207, 0, %v211
        %213 = vst [vmem:[#allocation2 + $0xc] sm:$0x1] %v212
        %v214 = vld [vmem:[#allocation2 + $0x18] sm:$0x1]
        %v215 = vsel %vm207, 0, %v214
        %216 = vst [vmem:[#allocation2 + $0x18] sm:$0x1] %v215
        %v217 = vld [vmem:[#allocation2 + $0x24] sm:$0x1]
        %v218 = vsel %vm207, 0, %v217
        %219 = vst [vmem:[#allocation2 + $0x24] sm:$0x1] %v218
        %v220 = vld [vmem:[#allocation2 + $0x30] sm:$0x1]
        %v221 = vsel %vm207, 0, %v220
        %222 = vst [vmem:[#allocation2 + $0x30] sm:$0x1] %v221
        %v223 = vld [vmem:[#allocation2 + $0x3c] sm:$0x1]
        %v224 = vsel %vm207, 0, %v223
        %225 = vst [vmem:[#allocation2 + $0x3c] sm:$0x1] %v224
        %v226 = vld [vmem:[#allocation2 + $0x48] sm:$0x1]
        %v227 = vsel %vm207, 0, %v226
        %228 = vst [vmem:[#allocation2 + $0x48] sm:$0x1] %v227
        %v229 = vld [vmem:[#allocation2 + $0x54] sm:$0x1]
        %v230 = vsel %vm207, 0, %v229
        %231 = vst [vmem:[#allocation2 + $0x54] sm:$0x1] %v230
        %v232 = vld [vmem:[#allocation2 + $0x60] sm:$0x1]
        %v233 = vsel %vm207, 0, %v232
        %234 = vst [vmem:[#allocation2 + $0x60] sm:$0x1] %v233
        %v235 = vld [vmem:[#allocation2 + $0x6c] sm:$0x1]
        %v236 = vsel %vm207, 0, %v235
        %237 = vst [vmem:[#allocation2 + $0x6c] sm:$0x1] %v236
        %v238 = vld [vmem:[#allocation2 + $0x78] sm:$0x1]
        %v239 = vsel %vm207, 0, %v238
        %240 = vst [vmem:[#allocation2 + $0x78] sm:$0x1] %v239
        %v241 = vld [vmem:[#allocation2 + $0x84] sm:$0x1]
        %v242 = vsel %vm207, 0, %v241
        %243 = vst [vmem:[#allocation2 + $0x84] sm:$0x1] %v242
        %v244 = vld [vmem:[#allocation2 + $0x90] sm:$0x1]
        %v245 = vsel %vm207, 0, %v244
        %246 = vst [vmem:[#allocation2 + $0x90] sm:$0x1] %v245
        %v247 = vld [vmem:[#allocation2 + $0x9c] sm:$0x1]
        %v248 = vsel %vm207, 0, %v247
        %249 = vst [vmem:[#allocation2 + $0x9c] sm:$0x1] %v248
        %v250 = vld [vmem:[#allocation2 + $0xa8] sm:$0x1]
        %v251 = vsel %vm207, 0, %v250
        %252 = vst [vmem:[#allocation2 + $0xa8] sm:$0x1] %v251
        %v253 = vld [vmem:[#allocation2 + $0xb4] sm:$0x1]
        %v254 = vsel %vm207, 0, %v253
        %255 = vst [vmem:[#allocation2 + $0xb4] sm:$0x1] %v254
        %v256 = vld [vmem:[#allocation2 + $0xc0] sm:$0x1]
        %v257 = vsel %vm207, 0, %v256
        %258 = vst [vmem:[#allocation2 + $0xc0] sm:$0x1] %v257
        %v259 = vld [vmem:[#allocation2 + $0xcc] sm:$0x1]
        %v260 = vsel %vm207, 0, %v259
        %261 = vst [vmem:[#allocation2 + $0xcc] sm:$0x1] %v260
        %vm262 = vsmask.f32 7938
        %vm263 = vmand %vm205, %vm262
        %v264 = vld [vmem:[#allocation2 + $0x8] sm:$0x1]
        %v265 = vsel %vm263, 0, %v264
        %266 = vst [vmem:[#allocation2 + $0x8] sm:$0x1] %v265
        %v267 = vld [vmem:[#allocation2 + $0x14] sm:$0x1]
        %v268 = vsel %vm263, 0, %v267
        %269 = vst [vmem:[#allocation2 + $0x14] sm:$0x1] %v268
        %v270 = vld [vmem:[#allocation2 + $0x20] sm:$0x1]
        %v271 = vsel %vm263, 0, %v270
        %272 = vst [vmem:[#allocation2 + $0x20] sm:$0x1] %v271
        %v273 = vld [vmem:[#allocation2 + $0x2c] sm:$0x1]
        %v274 = vsel %vm263, 0, %v273
        %275 = vst [vmem:[#allocation2 + $0x2c] sm:$0x1] %v274
        %v276 = vld [vmem:[#allocation2 + $0x38] sm:$0x1]
        %v277 = vsel %vm263, 0, %v276
        %278 = vst [vmem:[#allocation2 + $0x38] sm:$0x1] %v277
        %v279 = vld [vmem:[#allocation2 + $0x44] sm:$0x1]
        %v280 = vsel %vm263, 0, %v279
        %281 = vst [vmem:[#allocation2 + $0x44] sm:$0x1] %v280
        %v282 = vld [vmem:[#allocation2 + $0x50] sm:$0x1]
        %v283 = vsel %vm263, 0, %v282
        %284 = vst [vmem:[#allocation2 + $0x50] sm:$0x1] %v283
        %v285 = vld [vmem:[#allocation2 + $0x5c] sm:$0x1]
        %v286 = vsel %vm263, 0, %v285
        %287 = vst [vmem:[#allocation2 + $0x5c] sm:$0x1] %v286
        %v288 = vld [vmem:[#allocation2 + $0x68] sm:$0x1]
        %v289 = vsel %vm263, 0, %v288
        %290 = vst [vmem:[#allocation2 + $0x68] sm:$0x1] %v289
        %v291 = vld [vmem:[#allocation2 + $0x74] sm:$0x1]
        %v292 = vsel %vm263, 0, %v291
        %293 = vst [vmem:[#allocation2 + $0x74] sm:$0x1] %v292
        %v294 = vld [vmem:[#allocation2 + $0x80] sm:$0x1]
        %v295 = vsel %vm263, 0, %v294
        %296 = vst [vmem:[#allocation2 + $0x80] sm:$0x1] %v295
        %v297 = vld [vmem:[#allocation2 + $0x8c] sm:$0x1]
        %v298 = vsel %vm263, 0, %v297
        %299 = vst [vmem:[#allocation2 + $0x8c] sm:$0x1] %v298
        %v300 = vld [vmem:[#allocation2 + $0x98] sm:$0x1]
        %v301 = vsel %vm263, 0, %v300
        %302 = vst [vmem:[#allocation2 + $0x98] sm:$0x1] %v301
        %v303 = vld [vmem:[#allocation2 + $0xa4] sm:$0x1]
        %v304 = vsel %vm263, 0, %v303
        %305 = vst [vmem:[#allocation2 + $0xa4] sm:$0x1] %v304
        %v306 = vld [vmem:[#allocation2 + $0xb0] sm:$0x1]
        %v307 = vsel %vm263, 0, %v306
        %308 = vst [vmem:[#allocation2 + $0xb0] sm:$0x1] %v307
        %v309 = vld [vmem:[#allocation2 + $0xbc] sm:$0x1]
        %v310 = vsel %vm263, 0, %v309
        %311 = vst [vmem:[#allocation2 + $0xbc] sm:$0x1] %v310
        %v312 = vld [vmem:[#allocation2 + $0xc8] sm:$0x1]
        %v313 = vsel %vm263, 0, %v312
        %314 = vst [vmem:[#allocation2 + $0xc8] sm:$0x1] %v313
        %v315 = vld [vmem:[#allocation2 + $0xd4] sm:$0x1]
        %v316 = vsel %vm263, 0, %v315
        %317 = vst [vmem:[#allocation2 + $0xd4] sm:$0x1] %v316
        %v318 = vld [vmem:[%s183] sm:$0xf]
        %v319 = vld [vmem:[%s183 + $0x4] sm:$0xf]
        %v320 = vld [vmem:[%s183 + $0x8] sm:$0xf]
        %v321 = vld [vmem:[%s183 + $0xc] sm:$0xf]
        %v322 = vld [vmem:[%s183 + $0x10] sm:$0xf]
        %v323 = vld [vmem:[%s183 + $0x14] sm:$0xf]
        %v324 = vld [vmem:[%s183 + $0x18] sm:$0xf]
        %v325 = vld [vmem:[%s183 + $0x1c] sm:$0xf]
        %v326 = vld [vmem:[%s183 + $0x20] sm:$0xf]
        %v327 = vld [vmem:[%s183 + $0x24] sm:$0xf]
        %v328 = vld [vmem:[%s183 + $0x28] sm:$0xf]
        %v329 = vld [vmem:[%s183 + $0x2c] sm:$0xf]
        %v330 = vld [vmem:[%s183 + $0x30] sm:$0xf]
        %v331 = vld [vmem:[%s183 + $0x34] sm:$0xf]
        %v332 = vld [vmem:[%s183 + $0x38] sm:$0xf]
        %v333 = vld [vmem:[%s183 + $0x3c] sm:$0xf]
        %v334 = vld [vmem:[%s183 + $0x40] sm:$0xf]
        %v335 = vld [vmem:[%s183 + $0x44] sm:$0xf]
        %v336 = vld [vmem:[%s183 + $0x48] sm:$0xf]
        %v337 = vld [vmem:[%s183 + $0x4c] sm:$0xf]
        %v338 = vld [vmem:[%s183 + $0x50] sm:$0xf]
        %v339 = vld [vmem:[%s183 + $0x54] sm:$0xf]
        %v340 = vld [vmem:[%s183 + $0x58] sm:$0xf]
        %v341 = vld [vmem:[%s183 + $0x5c] sm:$0xf]
        %v342 = vld [vmem:[%s183 + $0x60] sm:$0xf]
        %v343 = vld [vmem:[%s183 + $0x64] sm:$0xf]
        %v344 = vld [vmem:[%s183 + $0x68] sm:$0xf]
        %v345 = vld [vmem:[%s183 + $0x6c] sm:$0xf]
        %v346 = vld [vmem:[%s183 + $0x70] sm:$0xf]
        %v347 = vld [vmem:[%s183 + $0x74] sm:$0xf]
        %v348 = vld [vmem:[%s183 + $0x78] sm:$0xf]
        %v349 = vld [vmem:[%s183 + $0x7c] sm:$0xf]
        %vm350 = vsmask.f32 4368
        %vm351 = vmor %vm206, %vm350
        %v353 = vshrl.u32 %v318, 16
        %v355 = vrot.slane %v353, 7
        %v356 = vshll.u32 %v318, 16
        %v358 = vor.u32 %v355, %v356
        %v359 = vrot.slane %v355, 4
        %v361 = vshrl.u32 %v319, 16
        %v363 = vrot.slane %v361, 7
        %v364 = vshll.u32 %v319, 16
        %v366 = vor.u32 %v363, %v364
        %v367 = vsel %vm351, %v359, %v366
        %v368 = vrot.slane %v363, 4
        %v370 = vshrl.u32 %v320, 16
        %v372 = vrot.slane %v370, 7
        %v373 = vshll.u32 %v320, 16
        %v375 = vor.u32 %v372, %v373
        %v376 = vrot.slane %v372, 4
        %v378 = vshrl.u32 %v321, 16
        %v380 = vrot.slane %v378, 7
        %v381 = vshll.u32 %v321, 16
        %v383 = vor.u32 %v380, %v381
        %v384 = vsel %vm351, %v376, %v383
        %v385 = vrot.slane %v380, 4
        %v387 = vshrl.u32 %v322, 16
        %v389 = vrot.slane %v387, 7
        %v390 = vshll.u32 %v322, 16
        %v392 = vor.u32 %v389, %v390
        %v393 = vrot.slane %v389, 4
        %v395 = vshrl.u32 %v323, 16
        %v397 = vrot.slane %v395, 7
        %v398 = vshll.u32 %v323, 16
        %v400 = vor.u32 %v397, %v398
        %v401 = vsel %vm351, %v393, %v400
        %v402 = vrot.slane %v397, 4
        %v404 = vshrl.u32 %v324, 16
        %v406 = vrot.slane %v404, 7
        %v407 = vshll.u32 %v324, 16
        %v409 = vor.u32 %v406, %v407
        %v410 = vrot.slane %v406, 4
        %v412 = vshrl.u32 %v325, 16
        %v414 = vrot.slane %v412, 7
        %v415 = vshll.u32 %v325, 16
        %v417 = vor.u32 %v414, %v415
        %v418 = vsel %vm351, %v410, %v417
        %v419 = vrot.slane %v414, 4
        %v421 = vshrl.u32 %v326, 16
        %v423 = vrot.slane %v421, 7
        %v424 = vshll.u32 %v326, 16
        %v426 = vor.u32 %v423, %v424
        %v427 = vrot.slane %v423, 4
        %v429 = vshrl.u32 %v327, 16
        %v431 = vrot.slane %v429, 7
        %v432 = vshll.u32 %v327, 16
        %v434 = vor.u32 %v431, %v432
        %v435 = vsel %vm351, %v427, %v434
        %v436 = vrot.slane %v431, 4
        %v438 = vshrl.u32 %v328, 16
        %v440 = vrot.slane %v438, 7
        %v441 = vshll.u32 %v328, 16
        %v443 = vor.u32 %v440, %v441
        %v444 = vrot.slane %v440, 4
        %v446 = vshrl.u32 %v329, 16
        %v448 = vrot.slane %v446, 7
        %v449 = vshll.u32 %v329, 16
        %v451 = vor.u32 %v448, %v449
        %v452 = vsel %vm351, %v444, %v451
        %v453 = vrot.slane %v448, 4
        %v455 = vshrl.u32 %v330, 16
        %v457 = vrot.slane %v455, 7
        %v458 = vshll.u32 %v330, 16
        %v460 = vor.u32 %v457, %v458
        %v461 = vrot.slane %v457, 4
        %v463 = vshrl.u32 %v331, 16
        %v465 = vrot.slane %v463, 7
        %v466 = vshll.u32 %v331, 16
        %v468 = vor.u32 %v465, %v466
        %v469 = vsel %vm351, %v461, %v468
        %v470 = vrot.slane %v465, 4
        %v472 = vshrl.u32 %v332, 16
        %v474 = vrot.slane %v472, 7
        %v475 = vshll.u32 %v332, 16
        %v477 = vor.u32 %v474, %v475
        %v478 = vrot.slane %v474, 4
        %v480 = vshrl.u32 %v333, 16
        %v482 = vrot.slane %v480, 7
        %v483 = vshll.u32 %v333, 16
        %v485 = vor.u32 %v482, %v483
        %v486 = vsel %vm351, %v478, %v485
        %v487 = vrot.slane %v482, 4
        %v489 = vshrl.u32 %v334, 16
        %v491 = vrot.slane %v489, 7
        %v492 = vshll.u32 %v334, 16
        %v494 = vor.u32 %v491, %v492
        %v495 = vrot.slane %v491, 4
        %v497 = vshrl.u32 %v335, 16
        %v499 = vrot.slane %v497, 7
        %v500 = vshll.u32 %v335, 16
        %v502 = vor.u32 %v499, %v500
        %v503 = vsel %vm351, %v495, %v502
        %v504 = vrot.slane %v499, 4
        %v506 = vshrl.u32 %v336, 16
        %v508 = vrot.slane %v506, 7
        %v509 = vshll.u32 %v336, 16
        %v511 = vor.u32 %v508, %v509
        %v512 = vrot.slane %v508, 4
        %v514 = vshrl.u32 %v337, 16
        %v516 = vrot.slane %v514, 7
        %v517 = vshll.u32 %v337, 16
        %v519 = vor.u32 %v516, %v517
        %v520 = vsel %vm351, %v512, %v519
        %v521 = vrot.slane %v516, 4
        %v523 = vshrl.u32 %v338, 16
        %v525 = vrot.slane %v523, 7
        %v526 = vshll.u32 %v338, 16
        %v528 = vor.u32 %v525, %v526
        %v529 = vrot.slane %v525, 4
        %v531 = vshrl.u32 %v339, 16
        %v533 = vrot.slane %v531, 7
        %v534 = vshll.u32 %v339, 16
        %v536 = vor.u32 %v533, %v534
        %v537 = vsel %vm351, %v529, %v536
        %v538 = vrot.slane %v533, 4
        %v540 = vshrl.u32 %v340, 16
        %v542 = vrot.slane %v540, 7
        %v543 = vshll.u32 %v340, 16
        %v545 = vor.u32 %v542, %v543
        %v546 = vrot.slane %v542, 4
        %v548 = vshrl.u32 %v341, 16
        %v550 = vrot.slane %v548, 7
        %v551 = vshll.u32 %v341, 16
        %v553 = vor.u32 %v550, %v551
        %v554 = vsel %vm351, %v546, %v553
        %v555 = vrot.slane %v550, 4
        %v557 = vshrl.u32 %v342, 16
        %v559 = vrot.slane %v557, 7
        %v560 = vshll.u32 %v342, 16
        %v562 = vor.u32 %v559, %v560
        %v563 = vrot.slane %v559, 4
        %v565 = vshrl.u32 %v343, 16
        %v567 = vrot.slane %v565, 7
        %v568 = vshll.u32 %v343, 16
        %v570 = vor.u32 %v567, %v568
        %v571 = vsel %vm351, %v563, %v570
        %v572 = vrot.slane %v567, 4
        %v574 = vshrl.u32 %v344, 16
        %v576 = vrot.slane %v574, 7
        %v577 = vshll.u32 %v344, 16
        %v579 = vor.u32 %v576, %v577
        %v580 = vrot.slane %v576, 4
        %v582 = vshrl.u32 %v345, 16
        %v584 = vrot.slane %v582, 7
        %v585 = vshll.u32 %v345, 16
        %v587 = vor.u32 %v584, %v585
        %v588 = vsel %vm351, %v580, %v587
        %v589 = vrot.slane %v584, 4
        %v591 = vshrl.u32 %v346, 16
        %v593 = vrot.slane %v591, 7
        %v594 = vshll.u32 %v346, 16
        %v596 = vor.u32 %v593, %v594
        %v597 = vrot.slane %v593, 4
        %v599 = vshrl.u32 %v347, 16
        %v601 = vrot.slane %v599, 7
        %v602 = vshll.u32 %v347, 16
        %v604 = vor.u32 %v601, %v602
        %v605 = vsel %vm351, %v597, %v604
        %v606 = vrot.slane %v601, 4
        %v608 = vshrl.u32 %v348, 16
        %v610 = vrot.slane %v608, 7
        %v611 = vshll.u32 %v348, 16
        %v613 = vor.u32 %v610, %v611
        %v614 = vrot.slane %v610, 4
        %v616 = vshrl.u32 %v349, 16
        %v618 = vrot.slane %v616, 7
        %v619 = vshll.u32 %v349, 16
        %v621 = vor.u32 %v618, %v619
        %v622 = vsel %vm351, %v614, %v621
        %v623 = vrot.slane %v618, 4
        %s672 = scalar_lea.vmem [#allocation2], 12
        %vm673 = vcmask 1043456
        %vm674 = vmand %vm673, %vm262
        %v675 = vld [vmem:[%s672] sm:$0xf]
        %v676 = vsel %vm674, %v358, %v675
        %677 = vst [vmem:[%s672] sm:$0xf] %v676
        %678 = vst [vmem:[%s672 + $0x4] sm:$0xf] %v367
        %v679 = vld [vmem:[%s672 + $0x8] sm:$0x1]
        %v680 = vsel %vm207, %v368, %v679
        %681 = vst [vmem:[%s672 + $0x8] sm:$0x1] %v680
        %v682 = vld [vmem:[%s672 + $0xc] sm:$0xf]
        %v683 = vsel %vm674, %v375, %v682
        %684 = vst [vmem:[%s672 + $0xc] sm:$0xf] %v683
        %685 = vst [vmem:[%s672 + $0x10] sm:$0xf] %v384
        %v686 = vld [vmem:[%s672 + $0x14] sm:$0x1]
        %v687 = vsel %vm207, %v385, %v686
        %688 = vst [vmem:[%s672 + $0x14] sm:$0x1] %v687
        %v689 = vld [vmem:[%s672 + $0x18] sm:$0xf]
        %v690 = vsel %vm674, %v392, %v689
        %691 = vst [vmem:[%s672 + $0x18] sm:$0xf] %v690
        %692 = vst [vmem:[%s672 + $0x1c] sm:$0xf] %v401
        %v693 = vld [vmem:[%s672 + $0x20] sm:$0x1]
        %v694 = vsel %vm207, %v402, %v693
        %695 = vst [vmem:[%s672 + $0x20] sm:$0x1] %v694
        %v696 = vld [vmem:[%s672 + $0x24] sm:$0xf]
        %v697 = vsel %vm674, %v409, %v696
        %698 = vst [vmem:[%s672 + $0x24] sm:$0xf] %v697
        %699 = vst [vmem:[%s672 + $0x28] sm:$0xf] %v418
        %v700 = vld [vmem:[%s672 + $0x2c] sm:$0x1]
        %v701 = vsel %vm207, %v419, %v700
        %702 = vst [vmem:[%s672 + $0x2c] sm:$0x1] %v701
        %v703 = vld [vmem:[%s672 + $0x30] sm:$0xf]
        %v704 = vsel %vm674, %v426, %v703
        %705 = vst [vmem:[%s672 + $0x30] sm:$0xf] %v704
        %706 = vst [vmem:[%s672 + $0x34] sm:$0xf] %v435
        %v707 = vld [vmem:[%s672 + $0x38] sm:$0x1]
        %v708 = vsel %vm207, %v436, %v707
        %709 = vst [vmem:[%s672 + $0x38] sm:$0x1] %v708
        %v710 = vld [vmem:[%s672 + $0x3c] sm:$0xf]
        %v711 = vsel %vm674, %v443, %v710
        %712 = vst [vmem:[%s672 + $0x3c] sm:$0xf] %v711
        %713 = vst [vmem:[%s672 + $0x40] sm:$0xf] %v452
        %v714 = vld [vmem:[%s672 + $0x44] sm:$0x1]
        %v715 = vsel %vm207, %v453, %v714
        %716 = vst [vmem:[%s672 + $0x44] sm:$0x1] %v715
        %v717 = vld [vmem:[%s672 + $0x48] sm:$0xf]
        %v718 = vsel %vm674, %v460, %v717
        %719 = vst [vmem:[%s672 + $0x48] sm:$0xf] %v718
        %720 = vst [vmem:[%s672 + $0x4c] sm:$0xf] %v469
        %v721 = vld [vmem:[%s672 + $0x50] sm:$0x1]
        %v722 = vsel %vm207, %v470, %v721
        %723 = vst [vmem:[%s672 + $0x50] sm:$0x1] %v722
        %v724 = vld [vmem:[%s672 + $0x54] sm:$0xf]
        %v725 = vsel %vm674, %v477, %v724
        %726 = vst [vmem:[%s672 + $0x54] sm:$0xf] %v725
        %727 = vst [vmem:[%s672 + $0x58] sm:$0xf] %v486
        %v728 = vld [vmem:[%s672 + $0x5c] sm:$0x1]
        %v729 = vsel %vm207, %v487, %v728
        %730 = vst [vmem:[%s672 + $0x5c] sm:$0x1] %v729
        %v731 = vld [vmem:[%s672 + $0x60] sm:$0xf]
        %v732 = vsel %vm674, %v494, %v731
        %733 = vst [vmem:[%s672 + $0x60] sm:$0xf] %v732
        %734 = vst [vmem:[%s672 + $0x64] sm:$0xf] %v503
        %v735 = vld [vmem:[%s672 + $0x68] sm:$0x1]
        %v736 = vsel %vm207, %v504, %v735
        %737 = vst [vmem:[%s672 + $0x68] sm:$0x1] %v736
        %v738 = vld [vmem:[%s672 + $0x6c] sm:$0xf]
        %v739 = vsel %vm674, %v511, %v738
        %740 = vst [vmem:[%s672 + $0x6c] sm:$0xf] %v739
        %741 = vst [vmem:[%s672 + $0x70] sm:$0xf] %v520
        %v742 = vld [vmem:[%s672 + $0x74] sm:$0x1]
        %v743 = vsel %vm207, %v521, %v742
        %744 = vst [vmem:[%s672 + $0x74] sm:$0x1] %v743
        %v745 = vld [vmem:[%s672 + $0x78] sm:$0xf]
        %v746 = vsel %vm674, %v528, %v745
        %747 = vst [vmem:[%s672 + $0x78] sm:$0xf] %v746
        %748 = vst [vmem:[%s672 + $0x7c] sm:$0xf] %v537
        %v749 = vld [vmem:[%s672 + $0x80] sm:$0x1]
        %v750 = vsel %vm207, %v538, %v749
        %751 = vst [vmem:[%s672 + $0x80] sm:$0x1] %v750
        %v752 = vld [vmem:[%s672 + $0x84] sm:$0xf]
        %v753 = vsel %vm674, %v545, %v752
        %754 = vst [vmem:[%s672 + $0x84] sm:$0xf] %v753
        %755 = vst [vmem:[%s672 + $0x88] sm:$0xf] %v554
        %v756 = vld [vmem:[%s672 + $0x8c] sm:$0x1]
        %v757 = vsel %vm207, %v555, %v756
        %758 = vst [vmem:[%s672 + $0x8c] sm:$0x1] %v757
        %v759 = vld [vmem:[%s672 + $0x90] sm:$0xf]
        %v760 = vsel %vm674, %v562, %v759
        %761 = vst [vmem:[%s672 + $0x90] sm:$0xf] %v760
        %762 = vst [vmem:[%s672 + $0x94] sm:$0xf] %v571
        %v763 = vld [vmem:[%s672 + $0x98] sm:$0x1]
        %v764 = vsel %vm207, %v572, %v763
        %765 = vst [vmem:[%s672 + $0x98] sm:$0x1] %v764
        %v766 = vld [vmem:[%s672 + $0x9c] sm:$0xf]
        %v767 = vsel %vm674, %v579, %v766
        %768 = vst [vmem:[%s672 + $0x9c] sm:$0xf] %v767
        %769 = vst [vmem:[%s672 + $0xa0] sm:$0xf] %v588
        %v770 = vld [vmem:[%s672 + $0xa4] sm:$0x1]
        %v771 = vsel %vm207, %v589, %v770
        %772 = vst [vmem:[%s672 + $0xa4] sm:$0x1] %v771
        %v773 = vld [vmem:[%s672 + $0xa8] sm:$0xf]
        %v774 = vsel %vm674, %v596, %v773
        %775 = vst [vmem:[%s672 + $0xa8] sm:$0xf] %v774
        %776 = vst [vmem:[%s672 + $0xac] sm:$0xf] %v605
        %v777 = vld [vmem:[%s672 + $0xb0] sm:$0x1]
        %v778 = vsel %vm207, %v606, %v777
        %779 = vst [vmem:[%s672 + $0xb0] sm:$0x1] %v778
        %v780 = vld [vmem:[%s672 + $0xb4] sm:$0xf]
        %v781 = vsel %vm674, %v613, %v780
        %782 = vst [vmem:[%s672 + $0xb4] sm:$0xf] %v781
        %783 = vst [vmem:[%s672 + $0xb8] sm:$0xf] %v622
        %v784 = vld [vmem:[%s672 + $0xbc] sm:$0x1]
        %v785 = vsel %vm207, %v623, %v784
        %786 = vst [vmem:[%s672 + $0xbc] sm:$0x1] %v785
        %v787 = vld [vmem:[%s672] sm:$0xf]
        %v788 = vld [vmem:[%s672 + $0x4] sm:$0xf]
        %v789 = vld [vmem:[%s672 + $0x8] sm:$0x1]
        %v790 = vld [vmem:[%s672 + $0xc] sm:$0xf]
        %v791 = vld [vmem:[%s672 + $0x10] sm:$0xf]
        %v792 = vld [vmem:[%s672 + $0x14] sm:$0x1]
        %v793 = vld [vmem:[%s672 + $0x18] sm:$0xf]
        %v794 = vld [vmem:[%s672 + $0x1c] sm:$0xf]
        %v795 = vld [vmem:[%s672 + $0x20] sm:$0x1]
        %v796 = vld [vmem:[%s672 + $0x24] sm:$0xf]
        %v797 = vld [vmem:[%s672 + $0x28] sm:$0xf]
        %v798 = vld [vmem:[%s672 + $0x2c] sm:$0x1]
        %v799 = vld [vmem:[%s672 + $0x30] sm:$0xf]
        %v800 = vld [vmem:[%s672 + $0x34] sm:$0xf]
        %v801 = vld [vmem:[%s672 + $0x38] sm:$0x1]
        %v802 = vld [vmem:[%s672 + $0x3c] sm:$0xf]
        %v803 = vld [vmem:[%s672 + $0x40] sm:$0xf]
        %v804 = vld [vmem:[%s672 + $0x44] sm:$0x1]
        %v805 = vld [vmem:[%s672 + $0x48] sm:$0xf]
        %v806 = vld [vmem:[%s672 + $0x4c] sm:$0xf]
        %v807 = vld [vmem:[%s672 + $0x50] sm:$0x1]
        %v808 = vld [vmem:[%s672 + $0x54] sm:$0xf]
        %v809 = vld [vmem:[%s672 + $0x58] sm:$0xf]
        %v810 = vld [vmem:[%s672 + $0x5c] sm:$0x1]
        %v811 = vld [vmem:[%s672 + $0x60] sm:$0xf]
        %v812 = vld [vmem:[%s672 + $0x64] sm:$0xf]
        %v813 = vld [vmem:[%s672 + $0x68] sm:$0x1]
        %v814 = vld [vmem:[%s672 + $0x6c] sm:$0xf]
        %v815 = vld [vmem:[%s672 + $0x70] sm:$0xf]
        %v816 = vld [vmem:[%s672 + $0x74] sm:$0x1]
        %v817 = vld [vmem:[%s672 + $0x78] sm:$0xf]
        %v818 = vld [vmem:[%s672 + $0x7c] sm:$0xf]
        %v819 = vld [vmem:[%s672 + $0x80] sm:$0x1]
        %v820 = vld [vmem:[%s672 + $0x84] sm:$0xf]
        %v821 = vld [vmem:[%s672 + $0x88] sm:$0xf]
        %v822 = vld [vmem:[%s672 + $0x8c] sm:$0x1]
        %v823 = vld [vmem:[%s672 + $0x90] sm:$0xf]
        %v824 = vld [vmem:[%s672 + $0x94] sm:$0xf]
        %v825 = vld [vmem:[%s672 + $0x98] sm:$0x1]
        %v826 = vld [vmem:[%s672 + $0x9c] sm:$0xf]
        %v827 = vld [vmem:[%s672 + $0xa0] sm:$0xf]
        %v828 = vld [vmem:[%s672 + $0xa4] sm:$0x1]
        %v829 = vld [vmem:[%s672 + $0xa8] sm:$0xf]
        %v830 = vld [vmem:[%s672 + $0xac] sm:$0xf]
        %v831 = vld [vmem:[%s672 + $0xb0] sm:$0x1]
        %v832 = vld [vmem:[%s672 + $0xb4] sm:$0xf]
        %v833 = vld [vmem:[%s672 + $0xb8] sm:$0xf]
        %v834 = vld [vmem:[%s672 + $0xbc] sm:$0x1]
        %v835 = vld [vmem:[%s672 + $0xc0] sm:$0xf]
        %v836 = vld [vmem:[%s672 + $0xc4] sm:$0xf]
        %v837 = vld [vmem:[%s672 + $0xc8] sm:$0x1]
        %v890 = vunpack.c.l.s4 1966171168
        %v891 = vunpack.c.0.s8 %v890
        %v892 = vlaneseq
        %v893 = vshrl.u32 %v892, 7
        %v894 = vsub.s32 %v891, %v893
        %v895 = vrot.slane %v787, %v894
        %v896 = vcombine.high %v895, %v895
        %v898 = vunpack.c.l.s4 1966171168
        %v899 = vunpack.c.0.s8 %v898
        %v900 = vlaneseq
        %v901 = vshrl.u32 %v900, 7
        %v902 = vsub.s32 %v899, %v901
        %v903 = vrot.slane %v895, %v902
        %v905 = vunpack.c.l.s4 1966171168
        %v906 = vunpack.c.0.s8 %v905
        %v907 = vlaneseq
        %v908 = vshrl.u32 %v907, 7
        %v909 = vsub.s32 %v906, %v908
        %v910 = vrot.slane %v896, %v909
        %v911 = vcombine.high %v903, %v903
        %v912 = vcombine.high %v910, %v910
        %v914 = vunpack.c.l.s4 1966171168
        %v915 = vunpack.c.0.s8 %v914
        %v916 = vlaneseq
        %v917 = vshrl.u32 %v916, 7
        %v918 = vsub.s32 %v915, %v917
        %v919 = vrot.slane %v788, %v918
        %v920 = vcombine.high %v919, %v919
        %v922 = vunpack.c.l.s4 1966171168
        %v923 = vunpack.c.0.s8 %v922
        %v924 = vlaneseq
        %v925 = vshrl.u32 %v924, 7
        %v926 = vsub.s32 %v923, %v925
        %v927 = vrot.slane %v919, %v926
        %v929 = vunpack.c.l.s4 1966171168
        %v930 = vunpack.c.0.s8 %v929
        %v931 = vlaneseq
        %v932 = vshrl.u32 %v931, 7
        %v933 = vsub.s32 %v930, %v932
        %v934 = vrot.slane %v920, %v933
        %v935 = vcombine.high %v927, %v927
        %v936 = vcombine.high %v934, %v934
        %v938 = vunpack.c.l.s4 1966171168
        %v939 = vunpack.c.0.s8 %v938
        %v940 = vlaneseq
        %v941 = vshrl.u32 %v940, 7
        %v942 = vsub.s32 %v939, %v941
        %v943 = vrot.slane %v789, %v942
        %v945 = vunpack.c.l.s4 1966171168
        %v946 = vunpack.c.0.s8 %v945
        %v947 = vlaneseq
        %v948 = vshrl.u32 %v947, 7
        %v949 = vsub.s32 %v946, %v948
        %v950 = vrot.slane %v943, %v949
        %v952 = vunpack.c.l.s4 1966171168
        %v953 = vunpack.c.0.s8 %v952
        %v954 = vlaneseq
        %v955 = vshrl.u32 %v954, 7
        %v956 = vsub.s32 %v953, %v955
        %v957 = vrot.slane %v790, %v956
        %v958 = vcombine.high %v957, %v957
        %v960 = vunpack.c.l.s4 1966171168
        %v961 = vunpack.c.0.s8 %v960
        %v962 = vlaneseq
        %v963 = vshrl.u32 %v962, 7
        %v964 = vsub.s32 %v961, %v963
        %v965 = vrot.slane %v957, %v964
        %v967 = vunpack.c.l.s4 1966171168
        %v968 = vunpack.c.0.s8 %v967
        %v969 = vlaneseq
        %v970 = vshrl.u32 %v969, 7
        %v971 = vsub.s32 %v968, %v970
        %v972 = vrot.slane %v958, %v971
        %v973 = vcombine.high %v965, %v965
        %v974 = vcombine.high %v972, %v972
        %v976 = vunpack.c.l.s4 1966171168
        %v977 = vunpack.c.0.s8 %v976
        %v978 = vlaneseq
        %v979 = vshrl.u32 %v978, 7
        %v980 = vsub.s32 %v977, %v979
        %v981 = vrot.slane %v791, %v980
        %v982 = vcombine.high %v981, %v981
        %v984 = vunpack.c.l.s4 1966171168
        %v985 = vunpack.c.0.s8 %v984
        %v986 = vlaneseq
        %v987 = vshrl.u32 %v986, 7
        %v988 = vsub.s32 %v985, %v987
        %v989 = vrot.slane %v981, %v988
        %v991 = vunpack.c.l.s4 1966171168
        %v992 = vunpack.c.0.s8 %v991
        %v993 = vlaneseq
        %v994 = vshrl.u32 %v993, 7
        %v995 = vsub.s32 %v992, %v994
        %v996 = vrot.slane %v982, %v995
        %v997 = vcombine.high %v989, %v989
        %v998 = vcombine.high %v996, %v996
        %v1000 = vunpack.c.l.s4 1966171168
        %v1001 = vunpack.c.0.s8 %v1000
        %v1002 = vlaneseq
        %v1003 = vshrl.u32 %v1002, 7
        %v1004 = vsub.s32 %v1001, %v1003
        %v1005 = vrot.slane %v792, %v1004
        %v1007 = vunpack.c.l.s4 1966171168
        %v1008 = vunpack.c.0.s8 %v1007
        %v1009 = vlaneseq
        %v1010 = vshrl.u32 %v1009, 7
        %v1011 = vsub.s32 %v1008, %v1010
        %v1012 = vrot.slane %v1005, %v1011
        %v1014 = vunpack.c.l.s4 1966171168
        %v1015 = vunpack.c.0.s8 %v1014
        %v1016 = vlaneseq
        %v1017 = vshrl.u32 %v1016, 7
        %v1018 = vsub.s32 %v1015, %v1017
        %v1019 = vrot.slane %v793, %v1018
        %v1020 = vcombine.high %v1019, %v1019
        %v1022 = vunpack.c.l.s4 1966171168
        %v1023 = vunpack.c.0.s8 %v1022
        %v1024 = vlaneseq
        %v1025 = vshrl.u32 %v1024, 7
        %v1026 = vsub.s32 %v1023, %v1025
        %v1027 = vrot.slane %v1019, %v1026
        %v1029 = vunpack.c.l.s4 1966171168
        %v1030 = vunpack.c.0.s8 %v1029
        %v1031 = vlaneseq
        %v1032 = vshrl.u32 %v1031, 7
        %v1033 = vsub.s32 %v1030, %v1032
        %v1034 = vrot.slane %v1020, %v1033
        %v1035 = vcombine.high %v1027, %v1027
        %v1036 = vcombine.high %v1034, %v1034
        %v1038 = vunpack.c.l.s4 1966171168
        %v1039 = vunpack.c.0.s8 %v1038
        %v1040 = vlaneseq
        %v1041 = vshrl.u32 %v1040, 7
        %v1042 = vsub.s32 %v1039, %v1041
        %v1043 = vrot.slane %v794, %v1042
        %v1044 = vcombine.high %v1043, %v1043
        %v1046 = vunpack.c.l.s4 1966171168
        %v1047 = vunpack.c.0.s8 %v1046
        %v1048 = vlaneseq
        %v1049 = vshrl.u32 %v1048, 7
        %v1050 = vsub.s32 %v1047, %v1049
        %v1051 = vrot.slane %v1043, %v1050
        %v1053 = vunpack.c.l.s4 1966171168
        %v1054 = vunpack.c.0.s8 %v1053
        %v1055 = vlaneseq
        %v1056 = vshrl.u32 %v1055, 7
        %v1057 = vsub.s32 %v1054, %v1056
        %v1058 = vrot.slane %v1044, %v1057
        %v1059 = vcombine.high %v1051, %v1051
        %v1060 = vcombine.high %v1058, %v1058
        %v1062 = vunpack.c.l.s4 1966171168
        %v1063 = vunpack.c.0.s8 %v1062
        %v1064 = vlaneseq
        %v1065 = vshrl.u32 %v1064, 7
        %v1066 = vsub.s32 %v1063, %v1065
        %v1067 = vrot.slane %v795, %v1066
        %v1069 = vunpack.c.l.s4 1966171168
        %v1070 = vunpack.c.0.s8 %v1069
        %v1071 = vlaneseq
        %v1072 = vshrl.u32 %v1071, 7
        %v1073 = vsub.s32 %v1070, %v1072
        %v1074 = vrot.slane %v1067, %v1073
        %v1076 = vunpack.c.l.s4 1966171168
        %v1077 = vunpack.c.0.s8 %v1076
        %v1078 = vlaneseq
        %v1079 = vshrl.u32 %v1078, 7
        %v1080 = vsub.s32 %v1077, %v1079
        %v1081 = vrot.slane %v796, %v1080
        %v1082 = vcombine.high %v1081, %v1081
        %v1084 = vunpack.c.l.s4 1966171168
        %v1085 = vunpack.c.0.s8 %v1084
        %v1086 = vlaneseq
        %v1087 = vshrl.u32 %v1086, 7
        %v1088 = vsub.s32 %v1085, %v1087
        %v1089 = vrot.slane %v1081, %v1088
        %v1091 = vunpack.c.l.s4 1966171168
        %v1092 = vunpack.c.0.s8 %v1091
        %v1093 = vlaneseq
        %v1094 = vshrl.u32 %v1093, 7
        %v1095 = vsub.s32 %v1092, %v1094
        %v1096 = vrot.slane %v1082, %v1095
        %v1097 = vcombine.high %v1089, %v1089
        %v1098 = vcombine.high %v1096, %v1096
        %v1100 = vunpack.c.l.s4 1966171168
        %v1101 = vunpack.c.0.s8 %v1100
        %v1102 = vlaneseq
        %v1103 = vshrl.u32 %v1102, 7
        %v1104 = vsub.s32 %v1101, %v1103
        %v1105 = vrot.slane %v797, %v1104
        %v1106 = vcombine.high %v1105, %v1105
        %v1108 = vunpack.c.l.s4 1966171168
        %v1109 = vunpack.c.0.s8 %v1108
        %v1110 = vlaneseq
        %v1111 = vshrl.u32 %v1110, 7
        %v1112 = vsub.s32 %v1109, %v1111
        %v1113 = vrot.slane %v1105, %v1112
        %v1115 = vunpack.c.l.s4 1966171168
        %v1116 = vunpack.c.0.s8 %v1115
        %v1117 = vlaneseq
        %v1118 = vshrl.u32 %v1117, 7
        %v1119 = vsub.s32 %v1116, %v1118
        %v1120 = vrot.slane %v1106, %v1119
        %v1121 = vcombine.high %v1113, %v1113
        %v1122 = vcombine.high %v1120, %v1120
        %v1124 = vunpack.c.l.s4 1966171168
        %v1125 = vunpack.c.0.s8 %v1124
        %v1126 = vlaneseq
        %v1127 = vshrl.u32 %v1126, 7
        %v1128 = vsub.s32 %v1125, %v1127
        %v1129 = vrot.slane %v798, %v1128
        %v1131 = vunpack.c.l.s4 1966171168
        %v1132 = vunpack.c.0.s8 %v1131
        %v1133 = vlaneseq
        %v1134 = vshrl.u32 %v1133, 7
        %v1135 = vsub.s32 %v1132, %v1134
        %v1136 = vrot.slane %v1129, %v1135
        %v1138 = vunpack.c.l.s4 1966171168
        %v1139 = vunpack.c.0.s8 %v1138
        %v1140 = vlaneseq
        %v1141 = vshrl.u32 %v1140, 7
        %v1142 = vsub.s32 %v1139, %v1141
        %v1143 = vrot.slane %v799, %v1142
        %v1144 = vcombine.high %v1143, %v1143
        %v1146 = vunpack.c.l.s4 1966171168
        %v1147 = vunpack.c.0.s8 %v1146
        %v1148 = vlaneseq
        %v1149 = vshrl.u32 %v1148, 7
        %v1150 = vsub.s32 %v1147, %v1149
        %v1151 = vrot.slane %v1143, %v1150
        %v1153 = vunpack.c.l.s4 1966171168
        %v1154 = vunpack.c.0.s8 %v1153
        %v1155 = vlaneseq
        %v1156 = vshrl.u32 %v1155, 7
        %v1157 = vsub.s32 %v1154, %v1156
        %v1158 = vrot.slane %v1144, %v1157
        %v1159 = vcombine.high %v1151, %v1151
        %v1160 = vcombine.high %v1158, %v1158
        %v1162 = vunpack.c.l.s4 1966171168
        %v1163 = vunpack.c.0.s8 %v1162
        %v1164 = vlaneseq
        %v1165 = vshrl.u32 %v1164, 7
        %v1166 = vsub.s32 %v1163, %v1165
        %v1167 = vrot.slane %v800, %v1166
        %v1168 = vcombine.high %v1167, %v1167
        %v1170 = vunpack.c.l.s4 1966171168
        %v1171 = vunpack.c.0.s8 %v1170
        %v1172 = vlaneseq
        %v1173 = vshrl.u32 %v1172, 7
        %v1174 = vsub.s32 %v1171, %v1173
        %v1175 = vrot.slane %v1167, %v1174
        %v1177 = vunpack.c.l.s4 1966171168
        %v1178 = vunpack.c.0.s8 %v1177
        %v1179 = vlaneseq
        %v1180 = vshrl.u32 %v1179, 7
        %v1181 = vsub.s32 %v1178, %v1180
        %v1182 = vrot.slane %v1168, %v1181
        %v1183 = vcombine.high %v1175, %v1175
        %v1184 = vcombine.high %v1182, %v1182
        %v1186 = vunpack.c.l.s4 1966171168
        %v1187 = vunpack.c.0.s8 %v1186
        %v1188 = vlaneseq
        %v1189 = vshrl.u32 %v1188, 7
        %v1190 = vsub.s32 %v1187, %v1189
        %v1191 = vrot.slane %v801, %v1190
        %v1193 = vunpack.c.l.s4 1966171168
        %v1194 = vunpack.c.0.s8 %v1193
        %v1195 = vlaneseq
        %v1196 = vshrl.u32 %v1195, 7
        %v1197 = vsub.s32 %v1194, %v1196
        %v1198 = vrot.slane %v1191, %v1197
        %v1200 = vunpack.c.l.s4 1966171168
        %v1201 = vunpack.c.0.s8 %v1200
        %v1202 = vlaneseq
        %v1203 = vshrl.u32 %v1202, 7
        %v1204 = vsub.s32 %v1201, %v1203
        %v1205 = vrot.slane %v802, %v1204
        %v1206 = vcombine.high %v1205, %v1205
        %v1208 = vunpack.c.l.s4 1966171168
        %v1209 = vunpack.c.0.s8 %v1208
        %v1210 = vlaneseq
        %v1211 = vshrl.u32 %v1210, 7
        %v1212 = vsub.s32 %v1209, %v1211
        %v1213 = vrot.slane %v1205, %v1212
        %v1215 = vunpack.c.l.s4 1966171168
        %v1216 = vunpack.c.0.s8 %v1215
        %v1217 = vlaneseq
        %v1218 = vshrl.u32 %v1217, 7
        %v1219 = vsub.s32 %v1216, %v1218
        %v1220 = vrot.slane %v1206, %v1219
        %v1221 = vcombine.high %v1213, %v1213
        %v1222 = vcombine.high %v1220, %v1220
        %v1224 = vunpack.c.l.s4 1966171168
        %v1225 = vunpack.c.0.s8 %v1224
        %v1226 = vlaneseq
        %v1227 = vshrl.u32 %v1226, 7
        %v1228 = vsub.s32 %v1225, %v1227
        %v1229 = vrot.slane %v803, %v1228
        %v1230 = vcombine.high %v1229, %v1229
        %v1232 = vunpack.c.l.s4 1966171168
        %v1233 = vunpack.c.0.s8 %v1232
        %v1234 = vlaneseq
        %v1235 = vshrl.u32 %v1234, 7
        %v1236 = vsub.s32 %v1233, %v1235
        %v1237 = vrot.slane %v1229, %v1236
        %v1239 = vunpack.c.l.s4 1966171168
        %v1240 = vunpack.c.0.s8 %v1239
        %v1241 = vlaneseq
        %v1242 = vshrl.u32 %v1241, 7
        %v1243 = vsub.s32 %v1240, %v1242
        %v1244 = vrot.slane %v1230, %v1243
        %v1245 = vcombine.high %v1237, %v1237
        %v1246 = vcombine.high %v1244, %v1244
        %v1248 = vunpack.c.l.s4 1966171168
        %v1249 = vunpack.c.0.s8 %v1248
        %v1250 = vlaneseq
        %v1251 = vshrl.u32 %v1250, 7
        %v1252 = vsub.s32 %v1249, %v1251
        %v1253 = vrot.slane %v804, %v1252
        %v1255 = vunpack.c.l.s4 1966171168
        %v1256 = vunpack.c.0.s8 %v1255
        %v1257 = vlaneseq
        %v1258 = vshrl.u32 %v1257, 7
        %v1259 = vsub.s32 %v1256, %v1258
        %v1260 = vrot.slane %v1253, %v1259
        %v1262 = vunpack.c.l.s4 1966171168
        %v1263 = vunpack.c.0.s8 %v1262
        %v1264 = vlaneseq
        %v1265 = vshrl.u32 %v1264, 7
        %v1266 = vsub.s32 %v1263, %v1265
        %v1267 = vrot.slane %v805, %v1266
        %v1268 = vcombine.high %v1267, %v1267
        %v1270 = vunpack.c.l.s4 1966171168
        %v1271 = vunpack.c.0.s8 %v1270
        %v1272 = vlaneseq
        %v1273 = vshrl.u32 %v1272, 7
        %v1274 = vsub.s32 %v1271, %v1273
        %v1275 = vrot.slane %v1267, %v1274
        %v1277 = vunpack.c.l.s4 1966171168
        %v1278 = vunpack.c.0.s8 %v1277
        %v1279 = vlaneseq
        %v1280 = vshrl.u32 %v1279, 7
        %v1281 = vsub.s32 %v1278, %v1280
        %v1282 = vrot.slane %v1268, %v1281
        %v1283 = vcombine.high %v1275, %v1275
        %v1284 = vcombine.high %v1282, %v1282
        %v1286 = vunpack.c.l.s4 1966171168
        %v1287 = vunpack.c.0.s8 %v1286
        %v1288 = vlaneseq
        %v1289 = vshrl.u32 %v1288, 7
        %v1290 = vsub.s32 %v1287, %v1289
        %v1291 = vrot.slane %v806, %v1290
        %v1292 = vcombine.high %v1291, %v1291
        %v1294 = vunpack.c.l.s4 1966171168
        %v1295 = vunpack.c.0.s8 %v1294
        %v1296 = vlaneseq
        %v1297 = vshrl.u32 %v1296, 7
        %v1298 = vsub.s32 %v1295, %v1297
        %v1299 = vrot.slane %v1291, %v1298
        %v1301 = vunpack.c.l.s4 1966171168
        %v1302 = vunpack.c.0.s8 %v1301
        %v1303 = vlaneseq
        %v1304 = vshrl.u32 %v1303, 7
        %v1305 = vsub.s32 %v1302, %v1304
        %v1306 = vrot.slane %v1292, %v1305
        %v1307 = vcombine.high %v1299, %v1299
        %v1308 = vcombine.high %v1306, %v1306
        %v1310 = vunpack.c.l.s4 1966171168
        %v1311 = vunpack.c.0.s8 %v1310
        %v1312 = vlaneseq
        %v1313 = vshrl.u32 %v1312, 7
        %v1314 = vsub.s32 %v1311, %v1313
        %v1315 = vrot.slane %v807, %v1314
        %v1317 = vunpack.c.l.s4 1966171168
        %v1318 = vunpack.c.0.s8 %v1317
        %v1319 = vlaneseq
        %v1320 = vshrl.u32 %v1319, 7
        %v1321 = vsub.s32 %v1318, %v1320
        %v1322 = vrot.slane %v1315, %v1321
        %v1324 = vunpack.c.l.s4 1966171168
        %v1325 = vunpack.c.0.s8 %v1324
        %v1326 = vlaneseq
        %v1327 = vshrl.u32 %v1326, 7
        %v1328 = vsub.s32 %v1325, %v1327
        %v1329 = vrot.slane %v808, %v1328
        %v1330 = vcombine.high %v1329, %v1329
        %v1332 = vunpack.c.l.s4 1966171168
        %v1333 = vunpack.c.0.s8 %v1332
        %v1334 = vlaneseq
        %v1335 = vshrl.u32 %v1334, 7
        %v1336 = vsub.s32 %v1333, %v1335
        %v1337 = vrot.slane %v1329, %v1336
        %v1339 = vunpack.c.l.s4 1966171168
        %v1340 = vunpack.c.0.s8 %v1339
        %v1341 = vlaneseq
        %v1342 = vshrl.u32 %v1341, 7
        %v1343 = vsub.s32 %v1340, %v1342
        %v1344 = vrot.slane %v1330, %v1343
        %v1345 = vcombine.high %v1337, %v1337
        %v1346 = vcombine.high %v1344, %v1344
        %v1348 = vunpack.c.l.s4 1966171168
        %v1349 = vunpack.c.0.s8 %v1348
        %v1350 = vlaneseq
        %v1351 = vshrl.u32 %v1350, 7
        %v1352 = vsub.s32 %v1349, %v1351
        %v1353 = vrot.slane %v809, %v1352
        %v1354 = vcombine.high %v1353, %v1353
        %v1356 = vunpack.c.l.s4 1966171168
        %v1357 = vunpack.c.0.s8 %v1356
        %v1358 = vlaneseq
        %v1359 = vshrl.u32 %v1358, 7
        %v1360 = vsub.s32 %v1357, %v1359
        %v1361 = vrot.slane %v1353, %v1360
        %v1363 = vunpack.c.l.s4 1966171168
        %v1364 = vunpack.c.0.s8 %v1363
        %v1365 = vlaneseq
        %v1366 = vshrl.u32 %v1365, 7
        %v1367 = vsub.s32 %v1364, %v1366
        %v1368 = vrot.slane %v1354, %v1367
        %v1369 = vcombine.high %v1361, %v1361
        %v1370 = vcombine.high %v1368, %v1368
        %v1372 = vunpack.c.l.s4 1966171168
        %v1373 = vunpack.c.0.s8 %v1372
        %v1374 = vlaneseq
        %v1375 = vshrl.u32 %v1374, 7
        %v1376 = vsub.s32 %v1373, %v1375
        %v1377 = vrot.slane %v810, %v1376
        %v1379 = vunpack.c.l.s4 1966171168
        %v1380 = vunpack.c.0.s8 %v1379
        %v1381 = vlaneseq
        %v1382 = vshrl.u32 %v1381, 7
        %v1383 = vsub.s32 %v1380, %v1382
        %v1384 = vrot.slane %v1377, %v1383
        %v1386 = vunpack.c.l.s4 1966171168
        %v1387 = vunpack.c.0.s8 %v1386
        %v1388 = vlaneseq
        %v1389 = vshrl.u32 %v1388, 7
        %v1390 = vsub.s32 %v1387, %v1389
        %v1391 = vrot.slane %v811, %v1390
        %v1392 = vcombine.high %v1391, %v1391
        %v1394 = vunpack.c.l.s4 1966171168
        %v1395 = vunpack.c.0.s8 %v1394
        %v1396 = vlaneseq
        %v1397 = vshrl.u32 %v1396, 7
        %v1398 = vsub.s32 %v1395, %v1397
        %v1399 = vrot.slane %v1391, %v1398
        %v1401 = vunpack.c.l.s4 1966171168
        %v1402 = vunpack.c.0.s8 %v1401
        %v1403 = vlaneseq
        %v1404 = vshrl.u32 %v1403, 7
        %v1405 = vsub.s32 %v1402, %v1404
        %v1406 = vrot.slane %v1392, %v1405
        %v1407 = vcombine.high %v1399, %v1399
        %v1408 = vcombine.high %v1406, %v1406
        %v1410 = vunpack.c.l.s4 1966171168
        %v1411 = vunpack.c.0.s8 %v1410
        %v1412 = vlaneseq
        %v1413 = vshrl.u32 %v1412, 7
        %v1414 = vsub.s32 %v1411, %v1413
        %v1415 = vrot.slane %v812, %v1414
        %v1416 = vcombine.high %v1415, %v1415
        %v1418 = vunpack.c.l.s4 1966171168
        %v1419 = vunpack.c.0.s8 %v1418
        %v1420 = vlaneseq
        %v1421 = vshrl.u32 %v1420, 7
        %v1422 = vsub.s32 %v1419, %v1421
        %v1423 = vrot.slane %v1415, %v1422
        %v1425 = vunpack.c.l.s4 1966171168
        %v1426 = vunpack.c.0.s8 %v1425
        %v1427 = vlaneseq
        %v1428 = vshrl.u32 %v1427, 7
        %v1429 = vsub.s32 %v1426, %v1428
        %v1430 = vrot.slane %v1416, %v1429
        %v1431 = vcombine.high %v1423, %v1423
        %v1432 = vcombine.high %v1430, %v1430
        %v1434 = vunpack.c.l.s4 1966171168
        %v1435 = vunpack.c.0.s8 %v1434
        %v1436 = vlaneseq
        %v1437 = vshrl.u32 %v1436, 7
        %v1438 = vsub.s32 %v1435, %v1437
        %v1439 = vrot.slane %v813, %v1438
        %v1441 = vunpack.c.l.s4 1966171168
        %v1442 = vunpack.c.0.s8 %v1441
        %v1443 = vlaneseq
        %v1444 = vshrl.u32 %v1443, 7
        %v1445 = vsub.s32 %v1442, %v1444
        %v1446 = vrot.slane %v1439, %v1445
        %v1448 = vunpack.c.l.s4 1966171168
        %v1449 = vunpack.c.0.s8 %v1448
        %v1450 = vlaneseq
        %v1451 = vshrl.u32 %v1450, 7
        %v1452 = vsub.s32 %v1449, %v1451
        %v1453 = vrot.slane %v814, %v1452
        %v1454 = vcombine.high %v1453, %v1453
        %v1456 = vunpack.c.l.s4 1966171168
        %v1457 = vunpack.c.0.s8 %v1456
        %v1458 = vlaneseq
        %v1459 = vshrl.u32 %v1458, 7
        %v1460 = vsub.s32 %v1457, %v1459
        %v1461 = vrot.slane %v1453, %v1460
        %v1463 = vunpack.c.l.s4 1966171168
        %v1464 = vunpack.c.0.s8 %v1463
        %v1465 = vlaneseq
        %v1466 = vshrl.u32 %v1465, 7
        %v1467 = vsub.s32 %v1464, %v1466
        %v1468 = vrot.slane %v1454, %v1467
        %v1469 = vcombine.high %v1461, %v1461
        %v1470 = vcombine.high %v1468, %v1468
        %v1472 = vunpack.c.l.s4 1966171168
        %v1473 = vunpack.c.0.s8 %v1472
        %v1474 = vlaneseq
        %v1475 = vshrl.u32 %v1474, 7
        %v1476 = vsub.s32 %v1473, %v1475
        %v1477 = vrot.slane %v815, %v1476
        %v1478 = vcombine.high %v1477, %v1477
        %v1480 = vunpack.c.l.s4 1966171168
        %v1481 = vunpack.c.0.s8 %v1480
        %v1482 = vlaneseq
        %v1483 = vshrl.u32 %v1482, 7
        %v1484 = vsub.s32 %v1481, %v1483
        %v1485 = vrot.slane %v1477, %v1484
        %v1487 = vunpack.c.l.s4 1966171168
        %v1488 = vunpack.c.0.s8 %v1487
        %v1489 = vlaneseq
        %v1490 = vshrl.u32 %v1489, 7
        %v1491 = vsub.s32 %v1488, %v1490
        %v1492 = vrot.slane %v1478, %v1491
        %v1493 = vcombine.high %v1485, %v1485
        %v1494 = vcombine.high %v1492, %v1492
        %v1496 = vunpack.c.l.s4 1966171168
        %v1497 = vunpack.c.0.s8 %v1496
        %v1498 = vlaneseq
        %v1499 = vshrl.u32 %v1498, 7
        %v1500 = vsub.s32 %v1497, %v1499
        %v1501 = vrot.slane %v816, %v1500
        %v1503 = vunpack.c.l.s4 1966171168
        %v1504 = vunpack.c.0.s8 %v1503
        %v1505 = vlaneseq
        %v1506 = vshrl.u32 %v1505, 7
        %v1507 = vsub.s32 %v1504, %v1506
        %v1508 = vrot.slane %v1501, %v1507
        %v1510 = vunpack.c.l.s4 1966171168
        %v1511 = vunpack.c.0.s8 %v1510
        %v1512 = vlaneseq
        %v1513 = vshrl.u32 %v1512, 7
        %v1514 = vsub.s32 %v1511, %v1513
        %v1515 = vrot.slane %v817, %v1514
        %v1516 = vcombine.high %v1515, %v1515
        %v1518 = vunpack.c.l.s4 1966171168
        %v1519 = vunpack.c.0.s8 %v1518
        %v1520 = vlaneseq
        %v1521 = vshrl.u32 %v1520, 7
        %v1522 = vsub.s32 %v1519, %v1521
        %v1523 = vrot.slane %v1515, %v1522
        %v1525 = vunpack.c.l.s4 1966171168
        %v1526 = vunpack.c.0.s8 %v1525
        %v1527 = vlaneseq
        %v1528 = vshrl.u32 %v1527, 7
        %v1529 = vsub.s32 %v1526, %v1528
        %v1530 = vrot.slane %v1516, %v1529
        %v1531 = vcombine.high %v1523, %v1523
        %v1532 = vcombine.high %v1530, %v1530
        %v1534 = vunpack.c.l.s4 1966171168
        %v1535 = vunpack.c.0.s8 %v1534
        %v1536 = vlaneseq
        %v1537 = vshrl.u32 %v1536, 7
        %v1538 = vsub.s32 %v1535, %v1537
        %v1539 = vrot.slane %v818, %v1538
        %v1540 = vcombine.high %v1539, %v1539
        %v1542 = vunpack.c.l.s4 1966171168
        %v1543 = vunpack.c.0.s8 %v1542
        %v1544 = vlaneseq
        %v1545 = vshrl.u32 %v1544, 7
        %v1546 = vsub.s32 %v1543, %v1545
        %v1547 = vrot.slane %v1539, %v1546
        %v1549 = vunpack.c.l.s4 1966171168
        %v1550 = vunpack.c.0.s8 %v1549
        %v1551 = vlaneseq
        %v1552 = vshrl.u32 %v1551, 7
        %v1553 = vsub.s32 %v1550, %v1552
        %v1554 = vrot.slane %v1540, %v1553
        %v1555 = vcombine.high %v1547, %v1547
        %v1556 = vcombine.high %v1554, %v1554
        %v1558 = vunpack.c.l.s4 1966171168
        %v1559 = vunpack.c.0.s8 %v1558
        %v1560 = vlaneseq
        %v1561 = vshrl.u32 %v1560, 7
        %v1562 = vsub.s32 %v1559, %v1561
        %v1563 = vrot.slane %v819, %v1562
        %v1565 = vunpack.c.l.s4 1966171168
        %v1566 = vunpack.c.0.s8 %v1565
        %v1567 = vlaneseq
        %v1568 = vshrl.u32 %v1567, 7
        %v1569 = vsub.s32 %v1566, %v1568
        %v1570 = vrot.slane %v1563, %v1569
        %v1572 = vunpack.c.l.s4 1966171168
        %v1573 = vunpack.c.0.s8 %v1572
        %v1574 = vlaneseq
        %v1575 = vshrl.u32 %v1574, 7
        %v1576 = vsub.s32 %v1573, %v1575
        %v1577 = vrot.slane %v820, %v1576
        %v1578 = vcombine.high %v1577, %v1577
        %v1580 = vunpack.c.l.s4 1966171168
        %v1581 = vunpack.c.0.s8 %v1580
        %v1582 = vlaneseq
        %v1583 = vshrl.u32 %v1582, 7
        %v1584 = vsub.s32 %v1581, %v1583
        %v1585 = vrot.slane %v1577, %v1584
        %v1587 = vunpack.c.l.s4 1966171168
        %v1588 = vunpack.c.0.s8 %v1587
        %v1589 = vlaneseq
        %v1590 = vshrl.u32 %v1589, 7
        %v1591 = vsub.s32 %v1588, %v1590
        %v1592 = vrot.slane %v1578, %v1591
        %v1593 = vcombine.high %v1585, %v1585
        %v1594 = vcombine.high %v1592, %v1592
        %v1596 = vunpack.c.l.s4 1966171168
        %v1597 = vunpack.c.0.s8 %v1596
        %v1598 = vlaneseq
        %v1599 = vshrl.u32 %v1598, 7
        %v1600 = vsub.s32 %v1597, %v1599
        %v1601 = vrot.slane %v821, %v1600
        %v1602 = vcombine.high %v1601, %v1601
        %v1604 = vunpack.c.l.s4 1966171168
        %v1605 = vunpack.c.0.s8 %v1604
        %v1606 = vlaneseq
        %v1607 = vshrl.u32 %v1606, 7
        %v1608 = vsub.s32 %v1605, %v1607
        %v1609 = vrot.slane %v1601, %v1608
        %v1611 = vunpack.c.l.s4 1966171168
        %v1612 = vunpack.c.0.s8 %v1611
        %v1613 = vlaneseq
        %v1614 = vshrl.u32 %v1613, 7
        %v1615 = vsub.s32 %v1612, %v1614
        %v1616 = vrot.slane %v1602, %v1615
        %v1617 = vcombine.high %v1609, %v1609
        %v1618 = vcombine.high %v1616, %v1616
        %v1620 = vunpack.c.l.s4 1966171168
        %v1621 = vunpack.c.0.s8 %v1620
        %v1622 = vlaneseq
        %v1623 = vshrl.u32 %v1622, 7
        %v1624 = vsub.s32 %v1621, %v1623
        %v1625 = vrot.slane %v822, %v1624
        %v1627 = vunpack.c.l.s4 1966171168
        %v1628 = vunpack.c.0.s8 %v1627
        %v1629 = vlaneseq
        %v1630 = vshrl.u32 %v1629, 7
        %v1631 = vsub.s32 %v1628, %v1630
        %v1632 = vrot.slane %v1625, %v1631
        %v1634 = vunpack.c.l.s4 1966171168
        %v1635 = vunpack.c.0.s8 %v1634
        %v1636 = vlaneseq
        %v1637 = vshrl.u32 %v1636, 7
        %v1638 = vsub.s32 %v1635, %v1637
        %v1639 = vrot.slane %v823, %v1638
        %v1640 = vcombine.high %v1639, %v1639
        %v1642 = vunpack.c.l.s4 1966171168
        %v1643 = vunpack.c.0.s8 %v1642
        %v1644 = vlaneseq
        %v1645 = vshrl.u32 %v1644, 7
        %v1646 = vsub.s32 %v1643, %v1645
        %v1647 = vrot.slane %v1639, %v1646
        %v1649 = vunpack.c.l.s4 1966171168
        %v1650 = vunpack.c.0.s8 %v1649
        %v1651 = vlaneseq
        %v1652 = vshrl.u32 %v1651, 7
        %v1653 = vsub.s32 %v1650, %v1652
        %v1654 = vrot.slane %v1640, %v1653
        %v1655 = vcombine.high %v1647, %v1647
        %v1656 = vcombine.high %v1654, %v1654
        %v1658 = vunpack.c.l.s4 1966171168
        %v1659 = vunpack.c.0.s8 %v1658
        %v1660 = vlaneseq
        %v1661 = vshrl.u32 %v1660, 7
        %v1662 = vsub.s32 %v1659, %v1661
        %v1663 = vrot.slane %v824, %v1662
        %v1664 = vcombine.high %v1663, %v1663
        %v1666 = vunpack.c.l.s4 1966171168
        %v1667 = vunpack.c.0.s8 %v1666
        %v1668 = vlaneseq
        %v1669 = vshrl.u32 %v1668, 7
        %v1670 = vsub.s32 %v1667, %v1669
        %v1671 = vrot.slane %v1663, %v1670
        %v1673 = vunpack.c.l.s4 1966171168
        %v1674 = vunpack.c.0.s8 %v1673
        %v1675 = vlaneseq
        %v1676 = vshrl.u32 %v1675, 7
        %v1677 = vsub.s32 %v1674, %v1676
        %v1678 = vrot.slane %v1664, %v1677
        %v1679 = vcombine.high %v1671, %v1671
        %v1680 = vcombine.high %v1678, %v1678
        %v1682 = vunpack.c.l.s4 1966171168
        %v1683 = vunpack.c.0.s8 %v1682
        %v1684 = vlaneseq
        %v1685 = vshrl.u32 %v1684, 7
        %v1686 = vsub.s32 %v1683, %v1685
        %v1687 = vrot.slane %v825, %v1686
        %v1689 = vunpack.c.l.s4 1966171168
        %v1690 = vunpack.c.0.s8 %v1689
        %v1691 = vlaneseq
        %v1692 = vshrl.u32 %v1691, 7
        %v1693 = vsub.s32 %v1690, %v1692
        %v1694 = vrot.slane %v1687, %v1693
        %v1696 = vunpack.c.l.s4 1966171168
        %v1697 = vunpack.c.0.s8 %v1696
        %v1698 = vlaneseq
        %v1699 = vshrl.u32 %v1698, 7
        %v1700 = vsub.s32 %v1697, %v1699
        %v1701 = vrot.slane %v826, %v1700
        %v1702 = vcombine.high %v1701, %v1701
        %v1704 = vunpack.c.l.s4 1966171168
        %v1705 = vunpack.c.0.s8 %v1704
        %v1706 = vlaneseq
        %v1707 = vshrl.u32 %v1706, 7
        %v1708 = vsub.s32 %v1705, %v1707
        %v1709 = vrot.slane %v1701, %v1708
        %v1711 = vunpack.c.l.s4 1966171168
        %v1712 = vunpack.c.0.s8 %v1711
        %v1713 = vlaneseq
        %v1714 = vshrl.u32 %v1713, 7
        %v1715 = vsub.s32 %v1712, %v1714
        %v1716 = vrot.slane %v1702, %v1715
        %v1717 = vcombine.high %v1709, %v1709
        %v1718 = vcombine.high %v1716, %v1716
        %v1720 = vunpack.c.l.s4 1966171168
        %v1721 = vunpack.c.0.s8 %v1720
        %v1722 = vlaneseq
        %v1723 = vshrl.u32 %v1722, 7
        %v1724 = vsub.s32 %v1721, %v1723
        %v1725 = vrot.slane %v827, %v1724
        %v1726 = vcombine.high %v1725, %v1725
        %v1728 = vunpack.c.l.s4 1966171168
        %v1729 = vunpack.c.0.s8 %v1728
        %v1730 = vlaneseq
        %v1731 = vshrl.u32 %v1730, 7
        %v1732 = vsub.s32 %v1729, %v1731
        %v1733 = vrot.slane %v1725, %v1732
        %v1735 = vunpack.c.l.s4 1966171168
        %v1736 = vunpack.c.0.s8 %v1735
        %v1737 = vlaneseq
        %v1738 = vshrl.u32 %v1737, 7
        %v1739 = vsub.s32 %v1736, %v1738
        %v1740 = vrot.slane %v1726, %v1739
        %v1741 = vcombine.high %v1733, %v1733
        %v1742 = vcombine.high %v1740, %v1740
        %v1744 = vunpack.c.l.s4 1966171168
        %v1745 = vunpack.c.0.s8 %v1744
        %v1746 = vlaneseq
        %v1747 = vshrl.u32 %v1746, 7
        %v1748 = vsub.s32 %v1745, %v1747
        %v1749 = vrot.slane %v828, %v1748
        %v1751 = vunpack.c.l.s4 1966171168
        %v1752 = vunpack.c.0.s8 %v1751
        %v1753 = vlaneseq
        %v1754 = vshrl.u32 %v1753, 7
        %v1755 = vsub.s32 %v1752, %v1754
        %v1756 = vrot.slane %v1749, %v1755
        %v1758 = vunpack.c.l.s4 1966171168
        %v1759 = vunpack.c.0.s8 %v1758
        %v1760 = vlaneseq
        %v1761 = vshrl.u32 %v1760, 7
        %v1762 = vsub.s32 %v1759, %v1761
        %v1763 = vrot.slane %v829, %v1762
        %v1764 = vcombine.high %v1763, %v1763
        %v1766 = vunpack.c.l.s4 1966171168
        %v1767 = vunpack.c.0.s8 %v1766
        %v1768 = vlaneseq
        %v1769 = vshrl.u32 %v1768, 7
        %v1770 = vsub.s32 %v1767, %v1769
        %v1771 = vrot.slane %v1763, %v1770
        %v1773 = vunpack.c.l.s4 1966171168
        %v1774 = vunpack.c.0.s8 %v1773
        %v1775 = vlaneseq
        %v1776 = vshrl.u32 %v1775, 7
        %v1777 = vsub.s32 %v1774, %v1776
        %v1778 = vrot.slane %v1764, %v1777
        %v1779 = vcombine.high %v1771, %v1771
        %v1780 = vcombine.high %v1778, %v1778
        %v1782 = vunpack.c.l.s4 1966171168
        %v1783 = vunpack.c.0.s8 %v1782
        %v1784 = vlaneseq
        %v1785 = vshrl.u32 %v1784, 7
        %v1786 = vsub.s32 %v1783, %v1785
        %v1787 = vrot.slane %v830, %v1786
        %v1788 = vcombine.high %v1787, %v1787
        %v1790 = vunpack.c.l.s4 1966171168
        %v1791 = vunpack.c.0.s8 %v1790
        %v1792 = vlaneseq
        %v1793 = vshrl.u32 %v1792, 7
        %v1794 = vsub.s32 %v1791, %v1793
        %v1795 = vrot.slane %v1787, %v1794
        %v1797 = vunpack.c.l.s4 1966171168
        %v1798 = vunpack.c.0.s8 %v1797
        %v1799 = vlaneseq
        %v1800 = vshrl.u32 %v1799, 7
        %v1801 = vsub.s32 %v1798, %v1800
        %v1802 = vrot.slane %v1788, %v1801
        %v1803 = vcombine.high %v1795, %v1795
        %v1804 = vcombine.high %v1802, %v1802
        %v1806 = vunpack.c.l.s4 1966171168
        %v1807 = vunpack.c.0.s8 %v1806
        %v1808 = vlaneseq
        %v1809 = vshrl.u32 %v1808, 7
        %v1810 = vsub.s32 %v1807, %v1809
        %v1811 = vrot.slane %v831, %v1810
        %v1813 = vunpack.c.l.s4 1966171168
        %v1814 = vunpack.c.0.s8 %v1813
        %v1815 = vlaneseq
        %v1816 = vshrl.u32 %v1815, 7
        %v1817 = vsub.s32 %v1814, %v1816
        %v1818 = vrot.slane %v1811, %v1817
        %v1820 = vunpack.c.l.s4 1966171168
        %v1821 = vunpack.c.0.s8 %v1820
        %v1822 = vlaneseq
        %v1823 = vshrl.u32 %v1822, 7
        %v1824 = vsub.s32 %v1821, %v1823
        %v1825 = vrot.slane %v832, %v1824
        %v1826 = vcombine.high %v1825, %v1825
        %v1828 = vunpack.c.l.s4 1966171168
        %v1829 = vunpack.c.0.s8 %v1828
        %v1830 = vlaneseq
        %v1831 = vshrl.u32 %v1830, 7
        %v1832 = vsub.s32 %v1829, %v1831
        %v1833 = vrot.slane %v1825, %v1832
        %v1835 = vunpack.c.l.s4 1966171168
        %v1836 = vunpack.c.0.s8 %v1835
        %v1837 = vlaneseq
        %v1838 = vshrl.u32 %v1837, 7
        %v1839 = vsub.s32 %v1836, %v1838
        %v1840 = vrot.slane %v1826, %v1839
        %v1841 = vcombine.high %v1833, %v1833
        %v1842 = vcombine.high %v1840, %v1840
        %v1844 = vunpack.c.l.s4 1966171168
        %v1845 = vunpack.c.0.s8 %v1844
        %v1846 = vlaneseq
        %v1847 = vshrl.u32 %v1846, 7
        %v1848 = vsub.s32 %v1845, %v1847
        %v1849 = vrot.slane %v833, %v1848
        %v1850 = vcombine.high %v1849, %v1849
        %v1852 = vunpack.c.l.s4 1966171168
        %v1853 = vunpack.c.0.s8 %v1852
        %v1854 = vlaneseq
        %v1855 = vshrl.u32 %v1854, 7
        %v1856 = vsub.s32 %v1853, %v1855
        %v1857 = vrot.slane %v1849, %v1856
        %v1859 = vunpack.c.l.s4 1966171168
        %v1860 = vunpack.c.0.s8 %v1859
        %v1861 = vlaneseq
        %v1862 = vshrl.u32 %v1861, 7
        %v1863 = vsub.s32 %v1860, %v1862
        %v1864 = vrot.slane %v1850, %v1863
        %v1865 = vcombine.high %v1857, %v1857
        %v1866 = vcombine.high %v1864, %v1864
        %v1868 = vunpack.c.l.s4 1966171168
        %v1869 = vunpack.c.0.s8 %v1868
        %v1870 = vlaneseq
        %v1871 = vshrl.u32 %v1870, 7
        %v1872 = vsub.s32 %v1869, %v1871
        %v1873 = vrot.slane %v834, %v1872
        %v1875 = vunpack.c.l.s4 1966171168
        %v1876 = vunpack.c.0.s8 %v1875
        %v1877 = vlaneseq
        %v1878 = vshrl.u32 %v1877, 7
        %v1879 = vsub.s32 %v1876, %v1878
        %v1880 = vrot.slane %v1873, %v1879
        %v1882 = vunpack.c.l.s4 1966171168
        %v1883 = vunpack.c.0.s8 %v1882
        %v1884 = vlaneseq
        %v1885 = vshrl.u32 %v1884, 7
        %v1886 = vsub.s32 %v1883, %v1885
        %v1887 = vrot.slane %v835, %v1886
        %v1888 = vcombine.high %v1887, %v1887
        %v1890 = vunpack.c.l.s4 1966171168
        %v1891 = vunpack.c.0.s8 %v1890
        %v1892 = vlaneseq
        %v1893 = vshrl.u32 %v1892, 7
        %v1894 = vsub.s32 %v1891, %v1893
        %v1895 = vrot.slane %v1887, %v1894
        %v1897 = vunpack.c.l.s4 1966171168
        %v1898 = vunpack.c.0.s8 %v1897
        %v1899 = vlaneseq
        %v1900 = vshrl.u32 %v1899, 7
        %v1901 = vsub.s32 %v1898, %v1900
        %v1902 = vrot.slane %v1888, %v1901
        %v1903 = vcombine.high %v1895, %v1895
        %v1904 = vcombine.high %v1902, %v1902
        %v1906 = vunpack.c.l.s4 1966171168
        %v1907 = vunpack.c.0.s8 %v1906
        %v1908 = vlaneseq
        %v1909 = vshrl.u32 %v1908, 7
        %v1910 = vsub.s32 %v1907, %v1909
        %v1911 = vrot.slane %v836, %v1910
        %v1912 = vcombine.high %v1911, %v1911
        %v1914 = vunpack.c.l.s4 1966171168
        %v1915 = vunpack.c.0.s8 %v1914
        %v1916 = vlaneseq
        %v1917 = vshrl.u32 %v1916, 7
        %v1918 = vsub.s32 %v1915, %v1917
        %v1919 = vrot.slane %v1911, %v1918
        %v1921 = vunpack.c.l.s4 1966171168
        %v1922 = vunpack.c.0.s8 %v1921
        %v1923 = vlaneseq
        %v1924 = vshrl.u32 %v1923, 7
        %v1925 = vsub.s32 %v1922, %v1924
        %v1926 = vrot.slane %v1912, %v1925
        %v1927 = vcombine.high %v1919, %v1919
        %v1928 = vcombine.high %v1926, %v1926
        %v1930 = vunpack.c.l.s4 1966171168
        %v1931 = vunpack.c.0.s8 %v1930
        %v1932 = vlaneseq
        %v1933 = vshrl.u32 %v1932, 7
        %v1934 = vsub.s32 %v1931, %v1933
        %v1935 = vrot.slane %v837, %v1934
        %v1937 = vunpack.c.l.s4 1966171168
        %v1938 = vunpack.c.0.s8 %v1937
        %v1939 = vlaneseq
        %v1940 = vshrl.u32 %v1939, 7
        %v1941 = vsub.s32 %v1938, %v1940
        %v1942 = vrot.slane %v1935, %v1941
        %v1943 = vunpack.i.h.s16 %v903
        %v1944 = vunpack.i.l.s16 %v910
        %v1945 = vunpack.i.h.s16 %v910
        %v1946 = vunpack.i.l.s16 %v911
        %v1947 = vunpack.i.h.s16 %v911
        %v1948 = vunpack.i.l.s16 %v912
        %v1949 = vunpack.i.h.s16 %v912
        %v1950 = vunpack.i.l.s16 %v927
        %v1951 = vunpack.i.h.s16 %v927
        %v1952 = vunpack.i.l.s16 %v934
        %v1953 = vunpack.i.h.s16 %v934
        %v1954 = vunpack.i.l.s16 %v935
        %v1955 = vunpack.i.h.s16 %v935
        %v1956 = vunpack.i.l.s16 %v936
        %v1957 = vunpack.i.h.s16 %v936
        %v1958 = vunpack.i.l.s16 %v950
        %v1959 = vunpack.i.h.s16 %v950
        %v1960 = vunpack.i.h.s16 %v965
        %v1961 = vunpack.i.l.s16 %v972
        %v1962 = vunpack.i.h.s16 %v972
        %v1963 = vunpack.i.l.s16 %v973
        %v1964 = vunpack.i.h.s16 %v973
        %v1965 = vunpack.i.l.s16 %v974
        %v1966 = vunpack.i.h.s16 %v974
        %v1967 = vunpack.i.l.s16 %v989
        %v1968 = vunpack.i.h.s16 %v989
        %v1969 = vunpack.i.l.s16 %v996
        %v1970 = vunpack.i.h.s16 %v996
        %v1971 = vunpack.i.l.s16 %v997
        %v1972 = vunpack.i.h.s16 %v997
        %v1973 = vunpack.i.l.s16 %v998
        %v1974 = vunpack.i.h.s16 %v998
        %v1975 = vunpack.i.l.s16 %v1012
        %v1976 = vunpack.i.h.s16 %v1012
        %v1977 = vunpack.i.h.s16 %v1027
        %v1978 = vunpack.i.l.s16 %v1034
        %v1979 = vunpack.i.h.s16 %v1034
        %v1980 = vunpack.i.l.s16 %v1035
        %v1981 = vunpack.i.h.s16 %v1035
        %v1982 = vunpack.i.l.s16 %v1036
        %v1983 = vunpack.i.h.s16 %v1036
        %v1984 = vunpack.i.l.s16 %v1051
        %v1985 = vunpack.i.h.s16 %v1051
        %v1986 = vunpack.i.l.s16 %v1058
        %v1987 = vunpack.i.h.s16 %v1058
        %v1988 = vunpack.i.l.s16 %v1059
        %v1989 = vunpack.i.h.s16 %v1059
        %v1990 = vunpack.i.l.s16 %v1060
        %v1991 = vunpack.i.h.s16 %v1060
        %v1992 = vunpack.i.l.s16 %v1074
        %v1993 = vunpack.i.h.s16 %v1074
        %v1994 = vunpack.i.h.s16 %v1089
        %v1995 = vunpack.i.l.s16 %v1096
        %v1996 = vunpack.i.h.s16 %v1096
        %v1997 = vunpack.i.l.s16 %v1097
        %v1998 = vunpack.i.h.s16 %v1097
        %v1999 = vunpack.i.l.s16 %v1098
        %v2000 = vunpack.i.h.s16 %v1098
        %v2001 = vunpack.i.l.s16 %v1113
        %v2002 = vunpack.i.h.s16 %v1113
        %v2003 = vunpack.i.l.s16 %v1120
        %v2004 = vunpack.i.h.s16 %v1120
        %v2005 = vunpack.i.l.s16 %v1121
        %v2006 = vunpack.i.h.s16 %v1121
        %v2007 = vunpack.i.l.s16 %v1122
        %v2008 = vunpack.i.h.s16 %v1122
        %v2009 = vunpack.i.l.s16 %v1136
        %v2010 = vunpack.i.h.s16 %v1136
        %v2011 = vunpack.i.h.s16 %v1151
        %v2012 = vunpack.i.l.s16 %v1158
        %v2013 = vunpack.i.h.s16 %v1158
        %v2014 = vunpack.i.l.s16 %v1159
        %v2015 = vunpack.i.h.s16 %v1159
        %v2016 = vunpack.i.l.s16 %v1160
        %v2017 = vunpack.i.h.s16 %v1160
        %v2018 = vunpack.i.l.s16 %v1175
        %v2019 = vunpack.i.h.s16 %v1175
        %v2020 = vunpack.i.l.s16 %v1182
        %v2021 = vunpack.i.h.s16 %v1182
        %v2022 = vunpack.i.l.s16 %v1183
        %v2023 = vunpack.i.h.s16 %v1183
        %v2024 = vunpack.i.l.s16 %v1184
        %v2025 = vunpack.i.h.s16 %v1184
        %v2026 = vunpack.i.l.s16 %v1198
        %v2027 = vunpack.i.h.s16 %v1198
        %v2028 = vunpack.i.h.s16 %v1213
        %v2029 = vunpack.i.l.s16 %v1220
        %v2030 = vunpack.i.h.s16 %v1220
        %v2031 = vunpack.i.l.s16 %v1221
        %v2032 = vunpack.i.h.s16 %v1221
        %v2033 = vunpack.i.l.s16 %v1222
        %v2034 = vunpack.i.h.s16 %v1222
        %v2035 = vunpack.i.l.s16 %v1237
        %v2036 = vunpack.i.h.s16 %v1237
        %v2037 = vunpack.i.l.s16 %v1244
        %v2038 = vunpack.i.h.s16 %v1244
        %v2039 = vunpack.i.l.s16 %v1245
        %v2040 = vunpack.i.h.s16 %v1245
        %v2041 = vunpack.i.l.s16 %v1246
        %v2042 = vunpack.i.h.s16 %v1246
        %v2043 = vunpack.i.l.s16 %v1260
        %v2044 = vunpack.i.h.s16 %v1260
        %v2045 = vunpack.i.h.s16 %v1275
        %v2046 = vunpack.i.l.s16 %v1282
        %v2047 = vunpack.i.h.s16 %v1282
        %v2048 = vunpack.i.l.s16 %v1283
        %v2049 = vunpack.i.h.s16 %v1283
        %v2050 = vunpack.i.l.s16 %v1284
        %v2051 = vunpack.i.h.s16 %v1284
        %v2052 = vunpack.i.l.s16 %v1299
        %v2053 = vunpack.i.h.s16 %v1299
        %v2054 = vunpack.i.l.s16 %v1306
        %v2055 = vunpack.i.h.s16 %v1306
        %v2056 = vunpack.i.l.s16 %v1307
        %v2057 = vunpack.i.h.s16 %v1307
        %v2058 = vunpack.i.l.s16 %v1308
        %v2059 = vunpack.i.h.s16 %v1308
        %v2060 = vunpack.i.l.s16 %v1322
        %v2061 = vunpack.i.h.s16 %v1322
        %v2062 = vunpack.i.h.s16 %v1337
        %v2063 = vunpack.i.l.s16 %v1344
        %v2064 = vunpack.i.h.s16 %v1344
        %v2065 = vunpack.i.l.s16 %v1345
        %v2066 = vunpack.i.h.s16 %v1345
        %v2067 = vunpack.i.l.s16 %v1346
        %v2068 = vunpack.i.h.s16 %v1346
        %v2069 = vunpack.i.l.s16 %v1361
        %v2070 = vunpack.i.h.s16 %v1361
        %v2071 = vunpack.i.l.s16 %v1368
        %v2072 = vunpack.i.h.s16 %v1368
        %v2073 = vunpack.i.l.s16 %v1369
        %v2074 = vunpack.i.h.s16 %v1369
        %v2075 = vunpack.i.l.s16 %v1370
        %v2076 = vunpack.i.h.s16 %v1370
        %v2077 = vunpack.i.l.s16 %v1384
        %v2078 = vunpack.i.h.s16 %v1384
        %v2079 = vunpack.i.h.s16 %v1399
        %v2080 = vunpack.i.l.s16 %v1406
        %v2081 = vunpack.i.h.s16 %v1406
        %v2082 = vunpack.i.l.s16 %v1407
        %v2083 = vunpack.i.h.s16 %v1407
        %v2084 = vunpack.i.l.s16 %v1408
        %v2085 = vunpack.i.h.s16 %v1408
        %v2086 = vunpack.i.l.s16 %v1423
        %v2087 = vunpack.i.h.s16 %v1423
        %v2088 = vunpack.i.l.s16 %v1430
        %v2089 = vunpack.i.h.s16 %v1430
        %v2090 = vunpack.i.l.s16 %v1431
        %v2091 = vunpack.i.h.s16 %v1431
        %v2092 = vunpack.i.l.s16 %v1432
        %v2093 = vunpack.i.h.s16 %v1432
        %v2094 = vunpack.i.l.s16 %v1446
        %v2095 = vunpack.i.h.s16 %v1446
        %v2096 = vunpack.i.h.s16 %v1461
        %v2097 = vunpack.i.l.s16 %v1468
        %v2098 = vunpack.i.h.s16 %v1468
        %v2099 = vunpack.i.l.s16 %v1469
        %v2100 = vunpack.i.h.s16 %v1469
        %v2101 = vunpack.i.l.s16 %v1470
        %v2102 = vunpack.i.h.s16 %v1470
        %v2103 = vunpack.i.l.s16 %v1485
        %v2104 = vunpack.i.h.s16 %v1485
        %v2105 = vunpack.i.l.s16 %v1492
        %v2106 = vunpack.i.h.s16 %v1492
        %v2107 = vunpack.i.l.s16 %v1493
        %v2108 = vunpack.i.h.s16 %v1493
        %v2109 = vunpack.i.l.s16 %v1494
        %v2110 = vunpack.i.h.s16 %v1494
        %v2111 = vunpack.i.l.s16 %v1508
        %v2112 = vunpack.i.h.s16 %v1508
        %v2113 = vunpack.i.h.s16 %v1523
        %v2114 = vunpack.i.l.s16 %v1530
        %v2115 = vunpack.i.h.s16 %v1530
        %v2116 = vunpack.i.l.s16 %v1531
        %v2117 = vunpack.i.h.s16 %v1531
        %v2118 = vunpack.i.l.s16 %v1532
        %v2119 = vunpack.i.h.s16 %v1532
        %v2120 = vunpack.i.l.s16 %v1547
        %v2121 = vunpack.i.h.s16 %v1547
        %v2122 = vunpack.i.l.s16 %v1554
        %v2123 = vunpack.i.h.s16 %v1554
        %v2124 = vunpack.i.l.s16 %v1555
        %v2125 = vunpack.i.h.s16 %v1555
        %v2126 = vunpack.i.l.s16 %v1556
        %v2127 = vunpack.i.h.s16 %v1556
        %v2128 = vunpack.i.l.s16 %v1570
        %v2129 = vunpack.i.h.s16 %v1570
        %v2130 = vunpack.i.h.s16 %v1585
        %v2131 = vunpack.i.l.s16 %v1592
        %v2132 = vunpack.i.h.s16 %v1592
        %v2133 = vunpack.i.l.s16 %v1593
        %v2134 = vunpack.i.h.s16 %v1593
        %v2135 = vunpack.i.l.s16 %v1594
        %v2136 = vunpack.i.h.s16 %v1594
        %v2137 = vunpack.i.l.s16 %v1609
        %v2138 = vunpack.i.h.s16 %v1609
        %v2139 = vunpack.i.l.s16 %v1616
        %v2140 = vunpack.i.h.s16 %v1616
        %v2141 = vunpack.i.l.s16 %v1617
        %v2142 = vunpack.i.h.s16 %v1617
        %v2143 = vunpack.i.l.s16 %v1618
        %v2144 = vunpack.i.h.s16 %v1618
        %v2145 = vunpack.i.l.s16 %v1632
        %v2146 = vunpack.i.h.s16 %v1632
        %v2147 = vunpack.i.h.s16 %v1647
        %v2148 = vunpack.i.l.s16 %v1654
        %v2149 = vunpack.i.h.s16 %v1654
        %v2150 = vunpack.i.l.s16 %v1655
        %v2151 = vunpack.i.h.s16 %v1655
        %v2152 = vunpack.i.l.s16 %v1656
        %v2153 = vunpack.i.h.s16 %v1656
        %v2154 = vunpack.i.l.s16 %v1671
        %v2155 = vunpack.i.h.s16 %v1671
        %v2156 = vunpack.i.l.s16 %v1678
        %v2157 = vunpack.i.h.s16 %v1678
        %v2158 = vunpack.i.l.s16 %v1679
        %v2159 = vunpack.i.h.s16 %v1679
        %v2160 = vunpack.i.l.s16 %v1680
        %v2161 = vunpack.i.h.s16 %v1680
        %v2162 = vunpack.i.l.s16 %v1694
        %v2163 = vunpack.i.h.s16 %v1694
        %v2164 = vunpack.i.h.s16 %v1709
        %v2165 = vunpack.i.l.s16 %v1716
        %v2166 = vunpack.i.h.s16 %v1716
        %v2167 = vunpack.i.l.s16 %v1717
        %v2168 = vunpack.i.h.s16 %v1717
        %v2169 = vunpack.i.l.s16 %v1718
        %v2170 = vunpack.i.h.s16 %v1718
        %v2171 = vunpack.i.l.s16 %v1733
        %v2172 = vunpack.i.h.s16 %v1733
        %v2173 = vunpack.i.l.s16 %v1740
        %v2174 = vunpack.i.h.s16 %v1740
        %v2175 = vunpack.i.l.s16 %v1741
        %v2176 = vunpack.i.h.s16 %v1741
        %v2177 = vunpack.i.l.s16 %v1742
        %v2178 = vunpack.i.h.s16 %v1742
        %v2179 = vunpack.i.l.s16 %v1756
        %v2180 = vunpack.i.h.s16 %v1756
        %v2181 = vunpack.i.h.s16 %v1771
        %v2182 = vunpack.i.l.s16 %v1778
        %v2183 = vunpack.i.h.s16 %v1778
        %v2184 = vunpack.i.l.s16 %v1779
        %v2185 = vunpack.i.h.s16 %v1779
        %v2186 = vunpack.i.l.s16 %v1780
        %v2187 = vunpack.i.h.s16 %v1780
        %v2188 = vunpack.i.l.s16 %v1795
        %v2189 = vunpack.i.h.s16 %v1795
        %v2190 = vunpack.i.l.s16 %v1802
        %v2191 = vunpack.i.h.s16 %v1802
        %v2192 = vunpack.i.l.s16 %v1803
        %v2193 = vunpack.i.h.s16 %v1803
        %v2194 = vunpack.i.l.s16 %v1804
        %v2195 = vunpack.i.h.s16 %v1804
        %v2196 = vunpack.i.l.s16 %v1818
        %v2197 = vunpack.i.h.s16 %v1818
        %v2198 = vunpack.i.h.s16 %v1833
        %v2199 = vunpack.i.l.s16 %v1840
        %v2200 = vunpack.i.h.s16 %v1840
        %v2201 = vunpack.i.l.s16 %v1841
        %v2202 = vunpack.i.h.s16 %v1841
        %v2203 = vunpack.i.l.s16 %v1842
        %v2204 = vunpack.i.h.s16 %v1842
        %v2205 = vunpack.i.l.s16 %v1857
        %v2206 = vunpack.i.h.s16 %v1857
        %v2207 = vunpack.i.l.s16 %v1864
        %v2208 = vunpack.i.h.s16 %v1864
        %v2209 = vunpack.i.l.s16 %v1865
        %v2210 = vunpack.i.h.s16 %v1865
        %v2211 = vunpack.i.l.s16 %v1866
        %v2212 = vunpack.i.h.s16 %v1866
        %v2213 = vunpack.i.l.s16 %v1880
        %v2214 = vunpack.i.h.s16 %v1880
        %v2215 = vunpack.i.h.s16 %v1895
        %v2216 = vunpack.i.l.s16 %v1902
        %v2217 = vunpack.i.h.s16 %v1902
        %v2218 = vunpack.i.l.s16 %v1903
        %v2219 = vunpack.i.h.s16 %v1903
        %v2220 = vunpack.i.l.s16 %v1904
        %v2221 = vunpack.i.h.s16 %v1904
        %v2222 = vunpack.i.l.s16 %v1919
        %v2223 = vunpack.i.h.s16 %v1919
        %v2224 = vunpack.i.l.s16 %v1926
        %v2225 = vunpack.i.h.s16 %v1926
        %v2226 = vunpack.i.l.s16 %v1927
        %v2227 = vunpack.i.h.s16 %v1927
        %v2228 = vunpack.i.l.s16 %v1928
        %v2229 = vunpack.i.h.s16 %v1928
        %v2230 = vunpack.i.l.s16 %v1942
        %v2231 = vunpack.i.h.s16 %v1942
        %v2232 = vpack.i.b16 %v1944, %v1943
        %v2233 = vpack.i.b16 %v1946, %v1945
        %v2234 = vpack.i.b16 %v1948, %v1947
        %v2235 = vpack.i.b16 %v1950, %v1949
        %v2236 = vpack.i.b16 %v1952, %v1951
        %v2237 = vpack.i.b16 %v1954, %v1953
        %v2238 = vpack.i.b16 %v1956, %v1955
        %v2239 = vpack.i.b16 %v1958, %v1957
        %v2240 = vpack.i.b16 %v1960, %v1959
        %v2241 = vpack.i.b16 %v1962, %v1961
        %v2242 = vpack.i.b16 %v1964, %v1963
        %v2243 = vpack.i.b16 %v1966, %v1965
        %v2244 = vpack.i.b16 %v1968, %v1967
        %v2245 = vpack.i.b16 %v1970, %v1969
        %v2246 = vpack.i.b16 %v1972, %v1971
        %v2247 = vpack.i.b16 %v1974, %v1973
        %v2248 = vpack.i.b16 %v1976, %v1975
        %v2249 = vpack.i.b16 %v1978, %v1977
        %v2250 = vpack.i.b16 %v1980, %v1979
        %v2251 = vpack.i.b16 %v1982, %v1981
        %v2252 = vpack.i.b16 %v1984, %v1983
        %v2253 = vpack.i.b16 %v1986, %v1985
        %v2254 = vpack.i.b16 %v1988, %v1987
        %v2255 = vpack.i.b16 %v1990, %v1989
        %v2256 = vpack.i.b16 %v1992, %v1991
        %v2257 = vpack.i.b16 %v1994, %v1993
        %v2258 = vpack.i.b16 %v1996, %v1995
        %v2259 = vpack.i.b16 %v1998, %v1997
        %v2260 = vpack.i.b16 %v2000, %v1999
        %v2261 = vpack.i.b16 %v2002, %v2001
        %v2262 = vpack.i.b16 %v2004, %v2003
        %v2263 = vpack.i.b16 %v2006, %v2005
        %v2264 = vpack.i.b16 %v2008, %v2007
        %v2265 = vpack.i.b16 %v2010, %v2009
        %v2266 = vpack.i.b16 %v2012, %v2011
        %v2267 = vpack.i.b16 %v2014, %v2013
        %v2268 = vpack.i.b16 %v2016, %v2015
        %v2269 = vpack.i.b16 %v2018, %v2017
        %v2270 = vpack.i.b16 %v2020, %v2019
        %v2271 = vpack.i.b16 %v2022, %v2021
        %v2272 = vpack.i.b16 %v2024, %v2023
        %v2273 = vpack.i.b16 %v2026, %v2025
        %v2274 = vpack.i.b16 %v2028, %v2027
        %v2275 = vpack.i.b16 %v2030, %v2029
        %v2276 = vpack.i.b16 %v2032, %v2031
        %v2277 = vpack.i.b16 %v2034, %v2033
        %v2278 = vpack.i.b16 %v2036, %v2035
        %v2279 = vpack.i.b16 %v2038, %v2037
        %v2280 = vpack.i.b16 %v2040, %v2039
        %v2281 = vpack.i.b16 %v2042, %v2041
        %v2282 = vpack.i.b16 %v2044, %v2043
        %v2283 = vpack.i.b16 %v2046, %v2045
        %v2284 = vpack.i.b16 %v2048, %v2047
        %v2285 = vpack.i.b16 %v2050, %v2049
        %v2286 = vpack.i.b16 %v2052, %v2051
        %v2287 = vpack.i.b16 %v2054, %v2053
        %v2288 = vpack.i.b16 %v2056, %v2055
        %v2289 = vpack.i.b16 %v2058, %v2057
        %v2290 = vpack.i.b16 %v2060, %v2059
        %v2291 = vpack.i.b16 %v2062, %v2061
        %v2292 = vpack.i.b16 %v2064, %v2063
        %v2293 = vpack.i.b16 %v2066, %v2065
        %v2294 = vpack.i.b16 %v2068, %v2067
        %v2295 = vpack.i.b16 %v2070, %v2069
        %v2296 = vpack.i.b16 %v2072, %v2071
        %v2297 = vpack.i.b16 %v2074, %v2073
        %v2298 = vpack.i.b16 %v2076, %v2075
        %v2299 = vpack.i.b16 %v2078, %v2077
        %v2300 = vpack.i.b16 %v2080, %v2079
        %v2301 = vpack.i.b16 %v2082, %v2081
        %v2302 = vpack.i.b16 %v2084, %v2083
        %v2303 = vpack.i.b16 %v2086, %v2085
        %v2304 = vpack.i.b16 %v2088, %v2087
        %v2305 = vpack.i.b16 %v2090, %v2089
        %v2306 = vpack.i.b16 %v2092, %v2091
        %v2307 = vpack.i.b16 %v2094, %v2093
        %v2308 = vpack.i.b16 %v2096, %v2095
        %v2309 = vpack.i.b16 %v2098, %v2097
        %v2310 = vpack.i.b16 %v2100, %v2099
        %v2311 = vpack.i.b16 %v2102, %v2101
        %v2312 = vpack.i.b16 %v2104, %v2103
        %v2313 = vpack.i.b16 %v2106, %v2105
        %v2314 = vpack.i.b16 %v2108, %v2107
        %v2315 = vpack.i.b16 %v2110, %v2109
        %v2316 = vpack.i.b16 %v2112, %v2111
        %v2317 = vpack.i.b16 %v2114, %v2113
        %v2318 = vpack.i.b16 %v2116, %v2115
        %v2319 = vpack.i.b16 %v2118, %v2117
        %v2320 = vpack.i.b16 %v2120, %v2119
        %v2321 = vpack.i.b16 %v2122, %v2121
        %v2322 = vpack.i.b16 %v2124, %v2123
        %v2323 = vpack.i.b16 %v2126, %v2125
        %v2324 = vpack.i.b16 %v2128, %v2127
        %v2325 = vpack.i.b16 %v2130, %v2129
        %v2326 = vpack.i.b16 %v2132, %v2131
        %v2327 = vpack.i.b16 %v2134, %v2133
        %v2328 = vpack.i.b16 %v2136, %v2135
        %v2329 = vpack.i.b16 %v2138, %v2137
        %v2330 = vpack.i.b16 %v2140, %v2139
        %v2331 = vpack.i.b16 %v2142, %v2141
        %v2332 = vpack.i.b16 %v2144, %v2143
        %v2333 = vpack.i.b16 %v2146, %v2145
        %v2334 = vpack.i.b16 %v2148, %v2147
        %v2335 = vpack.i.b16 %v2150, %v2149
        %v2336 = vpack.i.b16 %v2152, %v2151
        %v2337 = vpack.i.b16 %v2154, %v2153
        %v2338 = vpack.i.b16 %v2156, %v2155
        %v2339 = vpack.i.b16 %v2158, %v2157
        %v2340 = vpack.i.b16 %v2160, %v2159
        %v2341 = vpack.i.b16 %v2162, %v2161
        %v2342 = vpack.i.b16 %v2164, %v2163
        %v2343 = vpack.i.b16 %v2166, %v2165
        %v2344 = vpack.i.b16 %v2168, %v2167
        %v2345 = vpack.i.b16 %v2170, %v2169
        %v2346 = vpack.i.b16 %v2172, %v2171
        %v2347 = vpack.i.b16 %v2174, %v2173
        %v2348 = vpack.i.b16 %v2176, %v2175
        %v2349 = vpack.i.b16 %v2178, %v2177
        %v2350 = vpack.i.b16 %v2180, %v2179
        %v2351 = vpack.i.b16 %v2182, %v2181
        %v2352 = vpack.i.b16 %v2184, %v2183
        %v2353 = vpack.i.b16 %v2186, %v2185
        %v2354 = vpack.i.b16 %v2188, %v2187
        %v2355 = vpack.i.b16 %v2190, %v2189
        %v2356 = vpack.i.b16 %v2192, %v2191
        %v2357 = vpack.i.b16 %v2194, %v2193
        %v2358 = vpack.i.b16 %v2196, %v2195
        %v2359 = vpack.i.b16 %v2198, %v2197
        %v2360 = vpack.i.b16 %v2200, %v2199
        %v2361 = vpack.i.b16 %v2202, %v2201
        %v2362 = vpack.i.b16 %v2204, %v2203
        %v2363 = vpack.i.b16 %v2206, %v2205
        %v2364 = vpack.i.b16 %v2208, %v2207
        %v2365 = vpack.i.b16 %v2210, %v2209
        %v2366 = vpack.i.b16 %v2212, %v2211
        %v2367 = vpack.i.b16 %v2214, %v2213
        %v2368 = vpack.i.b16 %v2216, %v2215
        %v2369 = vpack.i.b16 %v2218, %v2217
        %v2370 = vpack.i.b16 %v2220, %v2219
        %v2371 = vpack.i.b16 %v2222, %v2221
        %v2372 = vpack.i.b16 %v2224, %v2223
        %v2373 = vpack.i.b16 %v2226, %v2225
        %v2374 = vpack.i.b16 %v2228, %v2227
        %v2375 = vpack.i.b16 %v2230, %v2229
        %v2377 = vcombine.low %v2232, %v2234
        %v2378 = vcombine.low %v2233, %v2235
        %v2380 = vunpack.c.l.s4 1935823168
        %v2381 = vunpack.c.0.s8 %v2380
        %v2382 = vlaneseq
        %v2383 = vshrl.u32 %v2382, 7
        %v2384 = vsub.s32 %v2381, %v2383
        %v2385 = vrot.slane %v2377, %v2384
        %v2387 = vunpack.c.l.s4 1935823168
        %v2388 = vunpack.c.0.s8 %v2387
        %v2389 = vlaneseq
        %v2390 = vshrl.u32 %v2389, 7
        %v2391 = vsub.s32 %v2388, %v2390
        %v2392 = vrot.slane %v2378, %v2391
        %v2393 = vcombine.low %v2385, %v2392
        %v2395 = vunpack.c.l.s4 1935823168
        %v2396 = vunpack.c.0.s8 %v2395
        %v2397 = vlaneseq
        %v2398 = vshrl.u32 %v2397, 7
        %v2399 = vsub.s32 %v2396, %v2398
        %v2400 = vrot.slane %v2393, %v2399
        %v2401 = vcombine.low %v2236, %v2238
        %v2402 = vcombine.low %v2237, %v2239
        %v2404 = vunpack.c.l.s4 1935823168
        %v2405 = vunpack.c.0.s8 %v2404
        %v2406 = vlaneseq
        %v2407 = vshrl.u32 %v2406, 7
        %v2408 = vsub.s32 %v2405, %v2407
        %v2409 = vrot.slane %v2401, %v2408
        %v2411 = vunpack.c.l.s4 1935823168
        %v2412 = vunpack.c.0.s8 %v2411
        %v2413 = vlaneseq
        %v2414 = vshrl.u32 %v2413, 7
        %v2415 = vsub.s32 %v2412, %v2414
        %v2416 = vrot.slane %v2402, %v2415
        %v2417 = vcombine.low %v2409, %v2416
        %v2419 = vunpack.c.l.s4 1935823168
        %v2420 = vunpack.c.0.s8 %v2419
        %v2421 = vlaneseq
        %v2422 = vshrl.u32 %v2421, 7
        %v2423 = vsub.s32 %v2420, %v2422
        %v2424 = vrot.slane %v2417, %v2423
        %v2425 = vcombine.low %v2240, %v2242
        %v2426 = vcombine.low %v2241, %v2243
        %v2428 = vunpack.c.l.s4 1935823168
        %v2429 = vunpack.c.0.s8 %v2428
        %v2430 = vlaneseq
        %v2431 = vshrl.u32 %v2430, 7
        %v2432 = vsub.s32 %v2429, %v2431
        %v2433 = vrot.slane %v2425, %v2432
        %v2435 = vunpack.c.l.s4 1935823168
        %v2436 = vunpack.c.0.s8 %v2435
        %v2437 = vlaneseq
        %v2438 = vshrl.u32 %v2437, 7
        %v2439 = vsub.s32 %v2436, %v2438
        %v2440 = vrot.slane %v2426, %v2439
        %v2441 = vcombine.low %v2433, %v2440
        %v2443 = vunpack.c.l.s4 1935823168
        %v2444 = vunpack.c.0.s8 %v2443
        %v2445 = vlaneseq
        %v2446 = vshrl.u32 %v2445, 7
        %v2447 = vsub.s32 %v2444, %v2446
        %v2448 = vrot.slane %v2441, %v2447
        %v2449 = vcombine.low %v2244, %v2246
        %v2450 = vcombine.low %v2245, %v2247
        %v2452 = vunpack.c.l.s4 1935823168
        %v2453 = vunpack.c.0.s8 %v2452
        %v2454 = vlaneseq
        %v2455 = vshrl.u32 %v2454, 7
        %v2456 = vsub.s32 %v2453, %v2455
        %v2457 = vrot.slane %v2449, %v2456
        %v2459 = vunpack.c.l.s4 1935823168
        %v2460 = vunpack.c.0.s8 %v2459
        %v2461 = vlaneseq
        %v2462 = vshrl.u32 %v2461, 7
        %v2463 = vsub.s32 %v2460, %v2462
        %v2464 = vrot.slane %v2450, %v2463
        %v2465 = vcombine.low %v2457, %v2464
        %v2467 = vunpack.c.l.s4 1935823168
        %v2468 = vunpack.c.0.s8 %v2467
        %v2469 = vlaneseq
        %v2470 = vshrl.u32 %v2469, 7
        %v2471 = vsub.s32 %v2468, %v2470
        %v2472 = vrot.slane %v2465, %v2471
        %v2473 = vcombine.low %v2248, %v2250
        %v2474 = vcombine.low %v2249, %v2251
        %v2476 = vunpack.c.l.s4 1935823168
        %v2477 = vunpack.c.0.s8 %v2476
        %v2478 = vlaneseq
        %v2479 = vshrl.u32 %v2478, 7
        %v2480 = vsub.s32 %v2477, %v2479
        %v2481 = vrot.slane %v2473, %v2480
        %v2483 = vunpack.c.l.s4 1935823168
        %v2484 = vunpack.c.0.s8 %v2483
        %v2485 = vlaneseq
        %v2486 = vshrl.u32 %v2485, 7
        %v2487 = vsub.s32 %v2484, %v2486
        %v2488 = vrot.slane %v2474, %v2487
        %v2489 = vcombine.low %v2481, %v2488
        %v2491 = vunpack.c.l.s4 1935823168
        %v2492 = vunpack.c.0.s8 %v2491
        %v2493 = vlaneseq
        %v2494 = vshrl.u32 %v2493, 7
        %v2495 = vsub.s32 %v2492, %v2494
        %v2496 = vrot.slane %v2489, %v2495
        %v2497 = vcombine.low %v2252, %v2254
        %v2498 = vcombine.low %v2253, %v2255
        %v2500 = vunpack.c.l.s4 1935823168
        %v2501 = vunpack.c.0.s8 %v2500
        %v2502 = vlaneseq
        %v2503 = vshrl.u32 %v2502, 7
        %v2504 = vsub.s32 %v2501, %v2503
        %v2505 = vrot.slane %v2497, %v2504
        %v2507 = vunpack.c.l.s4 1935823168
        %v2508 = vunpack.c.0.s8 %v2507
        %v2509 = vlaneseq
        %v2510 = vshrl.u32 %v2509, 7
        %v2511 = vsub.s32 %v2508, %v2510
        %v2512 = vrot.slane %v2498, %v2511
        %v2513 = vcombine.low %v2505, %v2512
        %v2515 = vunpack.c.l.s4 1935823168
        %v2516 = vunpack.c.0.s8 %v2515
        %v2517 = vlaneseq
        %v2518 = vshrl.u32 %v2517, 7
        %v2519 = vsub.s32 %v2516, %v2518
        %v2520 = vrot.slane %v2513, %v2519
        %v2521 = vcombine.low %v2256, %v2258
        %v2522 = vcombine.low %v2257, %v2259
        %v2524 = vunpack.c.l.s4 1935823168
        %v2525 = vunpack.c.0.s8 %v2524
        %v2526 = vlaneseq
        %v2527 = vshrl.u32 %v2526, 7
        %v2528 = vsub.s32 %v2525, %v2527
        %v2529 = vrot.slane %v2521, %v2528
        %v2531 = vunpack.c.l.s4 1935823168
        %v2532 = vunpack.c.0.s8 %v2531
        %v2533 = vlaneseq
        %v2534 = vshrl.u32 %v2533, 7
        %v2535 = vsub.s32 %v2532, %v2534
        %v2536 = vrot.slane %v2522, %v2535
        %v2537 = vcombine.low %v2529, %v2536
        %v2539 = vunpack.c.l.s4 1935823168
        %v2540 = vunpack.c.0.s8 %v2539
        %v2541 = vlaneseq
        %v2542 = vshrl.u32 %v2541, 7
        %v2543 = vsub.s32 %v2540, %v2542
        %v2544 = vrot.slane %v2537, %v2543
        %v2545 = vcombine.low %v2260, %v2262
        %v2546 = vcombine.low %v2261, %v2263
        %v2548 = vunpack.c.l.s4 1935823168
        %v2549 = vunpack.c.0.s8 %v2548
        %v2550 = vlaneseq
        %v2551 = vshrl.u32 %v2550, 7
        %v2552 = vsub.s32 %v2549, %v2551
        %v2553 = vrot.slane %v2545, %v2552
        %v2555 = vunpack.c.l.s4 1935823168
        %v2556 = vunpack.c.0.s8 %v2555
        %v2557 = vlaneseq
        %v2558 = vshrl.u32 %v2557, 7
        %v2559 = vsub.s32 %v2556, %v2558
        %v2560 = vrot.slane %v2546, %v2559
        %v2561 = vcombine.low %v2553, %v2560
        %v2563 = vunpack.c.l.s4 1935823168
        %v2564 = vunpack.c.0.s8 %v2563
        %v2565 = vlaneseq
        %v2566 = vshrl.u32 %v2565, 7
        %v2567 = vsub.s32 %v2564, %v2566
        %v2568 = vrot.slane %v2561, %v2567
        %v2569 = vcombine.low %v2264, %v2266
        %v2570 = vcombine.low %v2265, %v2267
        %v2572 = vunpack.c.l.s4 1935823168
        %v2573 = vunpack.c.0.s8 %v2572
        %v2574 = vlaneseq
        %v2575 = vshrl.u32 %v2574, 7
        %v2576 = vsub.s32 %v2573, %v2575
        %v2577 = vrot.slane %v2569, %v2576
        %v2579 = vunpack.c.l.s4 1935823168
        %v2580 = vunpack.c.0.s8 %v2579
        %v2581 = vlaneseq
        %v2582 = vshrl.u32 %v2581, 7
        %v2583 = vsub.s32 %v2580, %v2582
        %v2584 = vrot.slane %v2570, %v2583
        %v2585 = vcombine.low %v2577, %v2584
        %v2587 = vunpack.c.l.s4 1935823168
        %v2588 = vunpack.c.0.s8 %v2587
        %v2589 = vlaneseq
        %v2590 = vshrl.u32 %v2589, 7
        %v2591 = vsub.s32 %v2588, %v2590
        %v2592 = vrot.slane %v2585, %v2591
        %v2593 = vcombine.low %v2268, %v2270
        %v2594 = vcombine.low %v2269, %v2271
        %v2596 = vunpack.c.l.s4 1935823168
        %v2597 = vunpack.c.0.s8 %v2596
        %v2598 = vlaneseq
        %v2599 = vshrl.u32 %v2598, 7
        %v2600 = vsub.s32 %v2597, %v2599
        %v2601 = vrot.slane %v2593, %v2600
        %v2603 = vunpack.c.l.s4 1935823168
        %v2604 = vunpack.c.0.s8 %v2603
        %v2605 = vlaneseq
        %v2606 = vshrl.u32 %v2605, 7
        %v2607 = vsub.s32 %v2604, %v2606
        %v2608 = vrot.slane %v2594, %v2607
        %v2609 = vcombine.low %v2601, %v2608
        %v2611 = vunpack.c.l.s4 1935823168
        %v2612 = vunpack.c.0.s8 %v2611
        %v2613 = vlaneseq
        %v2614 = vshrl.u32 %v2613, 7
        %v2615 = vsub.s32 %v2612, %v2614
        %v2616 = vrot.slane %v2609, %v2615
        %v2617 = vcombine.low %v2272, %v2274
        %v2618 = vcombine.low %v2273, %v2275
        %v2620 = vunpack.c.l.s4 1935823168
        %v2621 = vunpack.c.0.s8 %v2620
        %v2622 = vlaneseq
        %v2623 = vshrl.u32 %v2622, 7
        %v2624 = vsub.s32 %v2621, %v2623
        %v2625 = vrot.slane %v2617, %v2624
        %v2627 = vunpack.c.l.s4 1935823168
        %v2628 = vunpack.c.0.s8 %v2627
        %v2629 = vlaneseq
        %v2630 = vshrl.u32 %v2629, 7
        %v2631 = vsub.s32 %v2628, %v2630
        %v2632 = vrot.slane %v2618, %v2631
        %v2633 = vcombine.low %v2625, %v2632
        %v2635 = vunpack.c.l.s4 1935823168
        %v2636 = vunpack.c.0.s8 %v2635
        %v2637 = vlaneseq
        %v2638 = vshrl.u32 %v2637, 7
        %v2639 = vsub.s32 %v2636, %v2638
        %v2640 = vrot.slane %v2633, %v2639
        %v2641 = vcombine.low %v2276, %v2278
        %v2642 = vcombine.low %v2277, %v2279
        %v2644 = vunpack.c.l.s4 1935823168
        %v2645 = vunpack.c.0.s8 %v2644
        %v2646 = vlaneseq
        %v2647 = vshrl.u32 %v2646, 7
        %v2648 = vsub.s32 %v2645, %v2647
        %v2649 = vrot.slane %v2641, %v2648
        %v2651 = vunpack.c.l.s4 1935823168
        %v2652 = vunpack.c.0.s8 %v2651
        %v2653 = vlaneseq
        %v2654 = vshrl.u32 %v2653, 7
        %v2655 = vsub.s32 %v2652, %v2654
        %v2656 = vrot.slane %v2642, %v2655
        %v2657 = vcombine.low %v2649, %v2656
        %v2659 = vunpack.c.l.s4 1935823168
        %v2660 = vunpack.c.0.s8 %v2659
        %v2661 = vlaneseq
        %v2662 = vshrl.u32 %v2661, 7
        %v2663 = vsub.s32 %v2660, %v2662
        %v2664 = vrot.slane %v2657, %v2663
        %v2665 = vcombine.low %v2280, %v2282
        %v2666 = vcombine.low %v2281, %v2283
        %v2668 = vunpack.c.l.s4 1935823168
        %v2669 = vunpack.c.0.s8 %v2668
        %v2670 = vlaneseq
        %v2671 = vshrl.u32 %v2670, 7
        %v2672 = vsub.s32 %v2669, %v2671
        %v2673 = vrot.slane %v2665, %v2672
        %v2675 = vunpack.c.l.s4 1935823168
        %v2676 = vunpack.c.0.s8 %v2675
        %v2677 = vlaneseq
        %v2678 = vshrl.u32 %v2677, 7
        %v2679 = vsub.s32 %v2676, %v2678
        %v2680 = vrot.slane %v2666, %v2679
        %v2681 = vcombine.low %v2673, %v2680
        %v2683 = vunpack.c.l.s4 1935823168
        %v2684 = vunpack.c.0.s8 %v2683
        %v2685 = vlaneseq
        %v2686 = vshrl.u32 %v2685, 7
        %v2687 = vsub.s32 %v2684, %v2686
        %v2688 = vrot.slane %v2681, %v2687
        %v2689 = vcombine.low %v2284, %v2286
        %v2690 = vcombine.low %v2285, %v2287
        %v2692 = vunpack.c.l.s4 1935823168
        %v2693 = vunpack.c.0.s8 %v2692
        %v2694 = vlaneseq
        %v2695 = vshrl.u32 %v2694, 7
        %v2696 = vsub.s32 %v2693, %v2695
        %v2697 = vrot.slane %v2689, %v2696
        %v2699 = vunpack.c.l.s4 1935823168
        %v2700 = vunpack.c.0.s8 %v2699
        %v2701 = vlaneseq
        %v2702 = vshrl.u32 %v2701, 7
        %v2703 = vsub.s32 %v2700, %v2702
        %v2704 = vrot.slane %v2690, %v2703
        %v2705 = vcombine.low %v2697, %v2704
        %v2707 = vunpack.c.l.s4 1935823168
        %v2708 = vunpack.c.0.s8 %v2707
        %v2709 = vlaneseq
        %v2710 = vshrl.u32 %v2709, 7
        %v2711 = vsub.s32 %v2708, %v2710
        %v2712 = vrot.slane %v2705, %v2711
        %v2713 = vcombine.low %v2288, %v2290
        %v2714 = vcombine.low %v2289, %v2291
        %v2716 = vunpack.c.l.s4 1935823168
        %v2717 = vunpack.c.0.s8 %v2716
        %v2718 = vlaneseq
        %v2719 = vshrl.u32 %v2718, 7
        %v2720 = vsub.s32 %v2717, %v2719
        %v2721 = vrot.slane %v2713, %v2720
        %v2723 = vunpack.c.l.s4 1935823168
        %v2724 = vunpack.c.0.s8 %v2723
        %v2725 = vlaneseq
        %v2726 = vshrl.u32 %v2725, 7
        %v2727 = vsub.s32 %v2724, %v2726
        %v2728 = vrot.slane %v2714, %v2727
        %v2729 = vcombine.low %v2721, %v2728
        %v2731 = vunpack.c.l.s4 1935823168
        %v2732 = vunpack.c.0.s8 %v2731
        %v2733 = vlaneseq
        %v2734 = vshrl.u32 %v2733, 7
        %v2735 = vsub.s32 %v2732, %v2734
        %v2736 = vrot.slane %v2729, %v2735
        %v2737 = vcombine.low %v2292, %v2294
        %v2738 = vcombine.low %v2293, %v2295
        %v2740 = vunpack.c.l.s4 1935823168
        %v2741 = vunpack.c.0.s8 %v2740
        %v2742 = vlaneseq
        %v2743 = vshrl.u32 %v2742, 7
        %v2744 = vsub.s32 %v2741, %v2743
        %v2745 = vrot.slane %v2737, %v2744
        %v2747 = vunpack.c.l.s4 1935823168
        %v2748 = vunpack.c.0.s8 %v2747
        %v2749 = vlaneseq
        %v2750 = vshrl.u32 %v2749, 7
        %v2751 = vsub.s32 %v2748, %v2750
        %v2752 = vrot.slane %v2738, %v2751
        %v2753 = vcombine.low %v2745, %v2752
        %v2755 = vunpack.c.l.s4 1935823168
        %v2756 = vunpack.c.0.s8 %v2755
        %v2757 = vlaneseq
        %v2758 = vshrl.u32 %v2757, 7
        %v2759 = vsub.s32 %v2756, %v2758
        %v2760 = vrot.slane %v2753, %v2759
        %v2761 = vcombine.low %v2296, %v2298
        %v2762 = vcombine.low %v2297, %v2299
        %v2764 = vunpack.c.l.s4 1935823168
        %v2765 = vunpack.c.0.s8 %v2764
        %v2766 = vlaneseq
        %v2767 = vshrl.u32 %v2766, 7
        %v2768 = vsub.s32 %v2765, %v2767
        %v2769 = vrot.slane %v2761, %v2768
        %v2771 = vunpack.c.l.s4 1935823168
        %v2772 = vunpack.c.0.s8 %v2771
        %v2773 = vlaneseq
        %v2774 = vshrl.u32 %v2773, 7
        %v2775 = vsub.s32 %v2772, %v2774
        %v2776 = vrot.slane %v2762, %v2775
        %v2777 = vcombine.low %v2769, %v2776
        %v2779 = vunpack.c.l.s4 1935823168
        %v2780 = vunpack.c.0.s8 %v2779
        %v2781 = vlaneseq
        %v2782 = vshrl.u32 %v2781, 7
        %v2783 = vsub.s32 %v2780, %v2782
        %v2784 = vrot.slane %v2777, %v2783
        %v2785 = vcombine.low %v2300, %v2302
        %v2786 = vcombine.low %v2301, %v2303
        %v2788 = vunpack.c.l.s4 1935823168
        %v2789 = vunpack.c.0.s8 %v2788
        %v2790 = vlaneseq
        %v2791 = vshrl.u32 %v2790, 7
        %v2792 = vsub.s32 %v2789, %v2791
        %v2793 = vrot.slane %v2785, %v2792
        %v2795 = vunpack.c.l.s4 1935823168
        %v2796 = vunpack.c.0.s8 %v2795
        %v2797 = vlaneseq
        %v2798 = vshrl.u32 %v2797, 7
        %v2799 = vsub.s32 %v2796, %v2798
        %v2800 = vrot.slane %v2786, %v2799
        %v2801 = vcombine.low %v2793, %v2800
        %v2803 = vunpack.c.l.s4 1935823168
        %v2804 = vunpack.c.0.s8 %v2803
        %v2805 = vlaneseq
        %v2806 = vshrl.u32 %v2805, 7
        %v2807 = vsub.s32 %v2804, %v2806
        %v2808 = vrot.slane %v2801, %v2807
        %v2809 = vcombine.low %v2304, %v2306
        %v2810 = vcombine.low %v2305, %v2307
        %v2812 = vunpack.c.l.s4 1935823168
        %v2813 = vunpack.c.0.s8 %v2812
        %v2814 = vlaneseq
        %v2815 = vshrl.u32 %v2814, 7
        %v2816 = vsub.s32 %v2813, %v2815
        %v2817 = vrot.slane %v2809, %v2816
        %v2819 = vunpack.c.l.s4 1935823168
        %v2820 = vunpack.c.0.s8 %v2819
        %v2821 = vlaneseq
        %v2822 = vshrl.u32 %v2821, 7
        %v2823 = vsub.s32 %v2820, %v2822
        %v2824 = vrot.slane %v2810, %v2823
        %v2825 = vcombine.low %v2817, %v2824
        %v2827 = vunpack.c.l.s4 1935823168
        %v2828 = vunpack.c.0.s8 %v2827
        %v2829 = vlaneseq
        %v2830 = vshrl.u32 %v2829, 7
        %v2831 = vsub.s32 %v2828, %v2830
        %v2832 = vrot.slane %v2825, %v2831
        %v2833 = vcombine.low %v2308, %v2310
        %v2834 = vcombine.low %v2309, %v2311
        %v2836 = vunpack.c.l.s4 1935823168
        %v2837 = vunpack.c.0.s8 %v2836
        %v2838 = vlaneseq
        %v2839 = vshrl.u32 %v2838, 7
        %v2840 = vsub.s32 %v2837, %v2839
        %v2841 = vrot.slane %v2833, %v2840
        %v2843 = vunpack.c.l.s4 1935823168
        %v2844 = vunpack.c.0.s8 %v2843
        %v2845 = vlaneseq
        %v2846 = vshrl.u32 %v2845, 7
        %v2847 = vsub.s32 %v2844, %v2846
        %v2848 = vrot.slane %v2834, %v2847
        %v2849 = vcombine.low %v2841, %v2848
        %v2851 = vunpack.c.l.s4 1935823168
        %v2852 = vunpack.c.0.s8 %v2851
        %v2853 = vlaneseq
        %v2854 = vshrl.u32 %v2853, 7
        %v2855 = vsub.s32 %v2852, %v2854
        %v2856 = vrot.slane %v2849, %v2855
        %v2857 = vcombine.low %v2312, %v2314
        %v2858 = vcombine.low %v2313, %v2315
        %v2860 = vunpack.c.l.s4 1935823168
        %v2861 = vunpack.c.0.s8 %v2860
        %v2862 = vlaneseq
        %v2863 = vshrl.u32 %v2862, 7
        %v2864 = vsub.s32 %v2861, %v2863
        %v2865 = vrot.slane %v2857, %v2864
        %v2867 = vunpack.c.l.s4 1935823168
        %v2868 = vunpack.c.0.s8 %v2867
        %v2869 = vlaneseq
        %v2870 = vshrl.u32 %v2869, 7
        %v2871 = vsub.s32 %v2868, %v2870
        %v2872 = vrot.slane %v2858, %v2871
        %v2873 = vcombine.low %v2865, %v2872
        %v2875 = vunpack.c.l.s4 1935823168
        %v2876 = vunpack.c.0.s8 %v2875
        %v2877 = vlaneseq
        %v2878 = vshrl.u32 %v2877, 7
        %v2879 = vsub.s32 %v2876, %v2878
        %v2880 = vrot.slane %v2873, %v2879
        %v2881 = vcombine.low %v2316, %v2318
        %v2882 = vcombine.low %v2317, %v2319
        %v2884 = vunpack.c.l.s4 1935823168
        %v2885 = vunpack.c.0.s8 %v2884
        %v2886 = vlaneseq
        %v2887 = vshrl.u32 %v2886, 7
        %v2888 = vsub.s32 %v2885, %v2887
        %v2889 = vrot.slane %v2881, %v2888
        %v2891 = vunpack.c.l.s4 1935823168
        %v2892 = vunpack.c.0.s8 %v2891
        %v2893 = vlaneseq
        %v2894 = vshrl.u32 %v2893, 7
        %v2895 = vsub.s32 %v2892, %v2894
        %v2896 = vrot.slane %v2882, %v2895
        %v2897 = vcombine.low %v2889, %v2896
        %v2899 = vunpack.c.l.s4 1935823168
        %v2900 = vunpack.c.0.s8 %v2899
        %v2901 = vlaneseq
        %v2902 = vshrl.u32 %v2901, 7
        %v2903 = vsub.s32 %v2900, %v2902
        %v2904 = vrot.slane %v2897, %v2903
        %v2905 = vcombine.low %v2320, %v2322
        %v2906 = vcombine.low %v2321, %v2323
        %v2908 = vunpack.c.l.s4 1935823168
        %v2909 = vunpack.c.0.s8 %v2908
        %v2910 = vlaneseq
        %v2911 = vshrl.u32 %v2910, 7
        %v2912 = vsub.s32 %v2909, %v2911
        %v2913 = vrot.slane %v2905, %v2912
        %v2915 = vunpack.c.l.s4 1935823168
        %v2916 = vunpack.c.0.s8 %v2915
        %v2917 = vlaneseq
        %v2918 = vshrl.u32 %v2917, 7
        %v2919 = vsub.s32 %v2916, %v2918
        %v2920 = vrot.slane %v2906, %v2919
        %v2921 = vcombine.low %v2913, %v2920
        %v2923 = vunpack.c.l.s4 1935823168
        %v2924 = vunpack.c.0.s8 %v2923
        %v2925 = vlaneseq
        %v2926 = vshrl.u32 %v2925, 7
        %v2927 = vsub.s32 %v2924, %v2926
        %v2928 = vrot.slane %v2921, %v2927
        %v2929 = vcombine.low %v2324, %v2326
        %v2930 = vcombine.low %v2325, %v2327
        %v2932 = vunpack.c.l.s4 1935823168
        %v2933 = vunpack.c.0.s8 %v2932
        %v2934 = vlaneseq
        %v2935 = vshrl.u32 %v2934, 7
        %v2936 = vsub.s32 %v2933, %v2935
        %v2937 = vrot.slane %v2929, %v2936
        %v2939 = vunpack.c.l.s4 1935823168
        %v2940 = vunpack.c.0.s8 %v2939
        %v2941 = vlaneseq
        %v2942 = vshrl.u32 %v2941, 7
        %v2943 = vsub.s32 %v2940, %v2942
        %v2944 = vrot.slane %v2930, %v2943
        %v2945 = vcombine.low %v2937, %v2944
        %v2947 = vunpack.c.l.s4 1935823168
        %v2948 = vunpack.c.0.s8 %v2947
        %v2949 = vlaneseq
        %v2950 = vshrl.u32 %v2949, 7
        %v2951 = vsub.s32 %v2948, %v2950
        %v2952 = vrot.slane %v2945, %v2951
        %v2953 = vcombine.low %v2328, %v2330
        %v2954 = vcombine.low %v2329, %v2331
        %v2956 = vunpack.c.l.s4 1935823168
        %v2957 = vunpack.c.0.s8 %v2956
        %v2958 = vlaneseq
        %v2959 = vshrl.u32 %v2958, 7
        %v2960 = vsub.s32 %v2957, %v2959
        %v2961 = vrot.slane %v2953, %v2960
        %v2963 = vunpack.c.l.s4 1935823168
        %v2964 = vunpack.c.0.s8 %v2963
        %v2965 = vlaneseq
        %v2966 = vshrl.u32 %v2965, 7
        %v2967 = vsub.s32 %v2964, %v2966
        %v2968 = vrot.slane %v2954, %v2967
        %v2969 = vcombine.low %v2961, %v2968
        %v2971 = vunpack.c.l.s4 1935823168
        %v2972 = vunpack.c.0.s8 %v2971
        %v2973 = vlaneseq
        %v2974 = vshrl.u32 %v2973, 7
        %v2975 = vsub.s32 %v2972, %v2974
        %v2976 = vrot.slane %v2969, %v2975
        %v2977 = vcombine.low %v2332, %v2334
        %v2978 = vcombine.low %v2333, %v2335
        %v2980 = vunpack.c.l.s4 1935823168
        %v2981 = vunpack.c.0.s8 %v2980
        %v2982 = vlaneseq
        %v2983 = vshrl.u32 %v2982, 7
        %v2984 = vsub.s32 %v2981, %v2983
        %v2985 = vrot.slane %v2977, %v2984
        %v2987 = vunpack.c.l.s4 1935823168
        %v2988 = vunpack.c.0.s8 %v2987
        %v2989 = vlaneseq
        %v2990 = vshrl.u32 %v2989, 7
        %v2991 = vsub.s32 %v2988, %v2990
        %v2992 = vrot.slane %v2978, %v2991
        %v2993 = vcombine.low %v2985, %v2992
        %v2995 = vunpack.c.l.s4 1935823168
        %v2996 = vunpack.c.0.s8 %v2995
        %v2997 = vlaneseq
        %v2998 = vshrl.u32 %v2997, 7
        %v2999 = vsub.s32 %v2996, %v2998
        %v3000 = vrot.slane %v2993, %v2999
        %v3001 = vcombine.low %v2336, %v2338
        %v3002 = vcombine.low %v2337, %v2339
        %v3004 = vunpack.c.l.s4 1935823168
        %v3005 = vunpack.c.0.s8 %v3004
        %v3006 = vlaneseq
        %v3007 = vshrl.u32 %v3006, 7
        %v3008 = vsub.s32 %v3005, %v3007
        %v3009 = vrot.slane %v3001, %v3008
        %v3011 = vunpack.c.l.s4 1935823168
        %v3012 = vunpack.c.0.s8 %v3011
        %v3013 = vlaneseq
        %v3014 = vshrl.u32 %v3013, 7
        %v3015 = vsub.s32 %v3012, %v3014
        %v3016 = vrot.slane %v3002, %v3015
        %v3017 = vcombine.low %v3009, %v3016
        %v3019 = vunpack.c.l.s4 1935823168
        %v3020 = vunpack.c.0.s8 %v3019
        %v3021 = vlaneseq
        %v3022 = vshrl.u32 %v3021, 7
        %v3023 = vsub.s32 %v3020, %v3022
        %v3024 = vrot.slane %v3017, %v3023
        %v3025 = vcombine.low %v2340, %v2342
        %v3026 = vcombine.low %v2341, %v2343
        %v3028 = vunpack.c.l.s4 1935823168
        %v3029 = vunpack.c.0.s8 %v3028
        %v3030 = vlaneseq
        %v3031 = vshrl.u32 %v3030, 7
        %v3032 = vsub.s32 %v3029, %v3031
        %v3033 = vrot.slane %v3025, %v3032
        %v3035 = vunpack.c.l.s4 1935823168
        %v3036 = vunpack.c.0.s8 %v3035
        %v3037 = vlaneseq
        %v3038 = vshrl.u32 %v3037, 7
        %v3039 = vsub.s32 %v3036, %v3038
        %v3040 = vrot.slane %v3026, %v3039
        %v3041 = vcombine.low %v3033, %v3040
        %v3043 = vunpack.c.l.s4 1935823168
        %v3044 = vunpack.c.0.s8 %v3043
        %v3045 = vlaneseq
        %v3046 = vshrl.u32 %v3045, 7
        %v3047 = vsub.s32 %v3044, %v3046
        %v3048 = vrot.slane %v3041, %v3047
        %v3049 = vcombine.low %v2344, %v2346
        %v3050 = vcombine.low %v2345, %v2347
        %v3052 = vunpack.c.l.s4 1935823168
        %v3053 = vunpack.c.0.s8 %v3052
        %v3054 = vlaneseq
        %v3055 = vshrl.u32 %v3054, 7
        %v3056 = vsub.s32 %v3053, %v3055
        %v3057 = vrot.slane %v3049, %v3056
        %v3059 = vunpack.c.l.s4 1935823168
        %v3060 = vunpack.c.0.s8 %v3059
        %v3061 = vlaneseq
        %v3062 = vshrl.u32 %v3061, 7
        %v3063 = vsub.s32 %v3060, %v3062
        %v3064 = vrot.slane %v3050, %v3063
        %v3065 = vcombine.low %v3057, %v3064
        %v3067 = vunpack.c.l.s4 1935823168
        %v3068 = vunpack.c.0.s8 %v3067
        %v3069 = vlaneseq
        %v3070 = vshrl.u32 %v3069, 7
        %v3071 = vsub.s32 %v3068, %v3070
        %v3072 = vrot.slane %v3065, %v3071
        %v3073 = vcombine.low %v2348, %v2350
        %v3074 = vcombine.low %v2349, %v2351
        %v3076 = vunpack.c.l.s4 1935823168
        %v3077 = vunpack.c.0.s8 %v3076
        %v3078 = vlaneseq
        %v3079 = vshrl.u32 %v3078, 7
        %v3080 = vsub.s32 %v3077, %v3079
        %v3081 = vrot.slane %v3073, %v3080
        %v3083 = vunpack.c.l.s4 1935823168
        %v3084 = vunpack.c.0.s8 %v3083
        %v3085 = vlaneseq
        %v3086 = vshrl.u32 %v3085, 7
        %v3087 = vsub.s32 %v3084, %v3086
        %v3088 = vrot.slane %v3074, %v3087
        %v3089 = vcombine.low %v3081, %v3088
        %v3091 = vunpack.c.l.s4 1935823168
        %v3092 = vunpack.c.0.s8 %v3091
        %v3093 = vlaneseq
        %v3094 = vshrl.u32 %v3093, 7
        %v3095 = vsub.s32 %v3092, %v3094
        %v3096 = vrot.slane %v3089, %v3095
        %v3097 = vcombine.low %v2352, %v2354
        %v3098 = vcombine.low %v2353, %v2355
        %v3100 = vunpack.c.l.s4 1935823168
        %v3101 = vunpack.c.0.s8 %v3100
        %v3102 = vlaneseq
        %v3103 = vshrl.u32 %v3102, 7
        %v3104 = vsub.s32 %v3101, %v3103
        %v3105 = vrot.slane %v3097, %v3104
        %v3107 = vunpack.c.l.s4 1935823168
        %v3108 = vunpack.c.0.s8 %v3107
        %v3109 = vlaneseq
        %v3110 = vshrl.u32 %v3109, 7
        %v3111 = vsub.s32 %v3108, %v3110
        %v3112 = vrot.slane %v3098, %v3111
        %v3113 = vcombine.low %v3105, %v3112
        %v3115 = vunpack.c.l.s4 1935823168
        %v3116 = vunpack.c.0.s8 %v3115
        %v3117 = vlaneseq
        %v3118 = vshrl.u32 %v3117, 7
        %v3119 = vsub.s32 %v3116, %v3118
        %v3120 = vrot.slane %v3113, %v3119
        %v3121 = vcombine.low %v2356, %v2358
        %v3122 = vcombine.low %v2357, %v2359
        %v3124 = vunpack.c.l.s4 1935823168
        %v3125 = vunpack.c.0.s8 %v3124
        %v3126 = vlaneseq
        %v3127 = vshrl.u32 %v3126, 7
        %v3128 = vsub.s32 %v3125, %v3127
        %v3129 = vrot.slane %v3121, %v3128
        %v3131 = vunpack.c.l.s4 1935823168
        %v3132 = vunpack.c.0.s8 %v3131
        %v3133 = vlaneseq
        %v3134 = vshrl.u32 %v3133, 7
        %v3135 = vsub.s32 %v3132, %v3134
        %v3136 = vrot.slane %v3122, %v3135
        %v3137 = vcombine.low %v3129, %v3136
        %v3139 = vunpack.c.l.s4 1935823168
        %v3140 = vunpack.c.0.s8 %v3139
        %v3141 = vlaneseq
        %v3142 = vshrl.u32 %v3141, 7
        %v3143 = vsub.s32 %v3140, %v3142
        %v3144 = vrot.slane %v3137, %v3143
        %v3145 = vcombine.low %v2360, %v2362
        %v3146 = vcombine.low %v2361, %v2363
        %v3148 = vunpack.c.l.s4 1935823168
        %v3149 = vunpack.c.0.s8 %v3148
        %v3150 = vlaneseq
        %v3151 = vshrl.u32 %v3150, 7
        %v3152 = vsub.s32 %v3149, %v3151
        %v3153 = vrot.slane %v3145, %v3152
        %v3155 = vunpack.c.l.s4 1935823168
        %v3156 = vunpack.c.0.s8 %v3155
        %v3157 = vlaneseq
        %v3158 = vshrl.u32 %v3157, 7
        %v3159 = vsub.s32 %v3156, %v3158
        %v3160 = vrot.slane %v3146, %v3159
        %v3161 = vcombine.low %v3153, %v3160
        %v3163 = vunpack.c.l.s4 1935823168
        %v3164 = vunpack.c.0.s8 %v3163
        %v3165 = vlaneseq
        %v3166 = vshrl.u32 %v3165, 7
        %v3167 = vsub.s32 %v3164, %v3166
        %v3168 = vrot.slane %v3161, %v3167
        %v3169 = vcombine.low %v2364, %v2366
        %v3170 = vcombine.low %v2365, %v2367
        %v3172 = vunpack.c.l.s4 1935823168
        %v3173 = vunpack.c.0.s8 %v3172
        %v3174 = vlaneseq
        %v3175 = vshrl.u32 %v3174, 7
        %v3176 = vsub.s32 %v3173, %v3175
        %v3177 = vrot.slane %v3169, %v3176
        %v3179 = vunpack.c.l.s4 1935823168
        %v3180 = vunpack.c.0.s8 %v3179
        %v3181 = vlaneseq
        %v3182 = vshrl.u32 %v3181, 7
        %v3183 = vsub.s32 %v3180, %v3182
        %v3184 = vrot.slane %v3170, %v3183
        %v3185 = vcombine.low %v3177, %v3184
        %v3187 = vunpack.c.l.s4 1935823168
        %v3188 = vunpack.c.0.s8 %v3187
        %v3189 = vlaneseq
        %v3190 = vshrl.u32 %v3189, 7
        %v3191 = vsub.s32 %v3188, %v3190
        %v3192 = vrot.slane %v3185, %v3191
        %v3193 = vcombine.low %v2368, %v2370
        %v3194 = vcombine.low %v2369, %v2371
        %v3196 = vunpack.c.l.s4 1935823168
        %v3197 = vunpack.c.0.s8 %v3196
        %v3198 = vlaneseq
        %v3199 = vshrl.u32 %v3198, 7
        %v3200 = vsub.s32 %v3197, %v3199
        %v3201 = vrot.slane %v3193, %v3200
        %v3203 = vunpack.c.l.s4 1935823168
        %v3204 = vunpack.c.0.s8 %v3203
        %v3205 = vlaneseq
        %v3206 = vshrl.u32 %v3205, 7
        %v3207 = vsub.s32 %v3204, %v3206
        %v3208 = vrot.slane %v3194, %v3207
        %v3209 = vcombine.low %v3201, %v3208
        %v3211 = vunpack.c.l.s4 1935823168
        %v3212 = vunpack.c.0.s8 %v3211
        %v3213 = vlaneseq
        %v3214 = vshrl.u32 %v3213, 7
        %v3215 = vsub.s32 %v3212, %v3214
        %v3216 = vrot.slane %v3209, %v3215
        %v3217 = vcombine.low %v2372, %v2374
        %v3218 = vcombine.low %v2373, %v2375
        %v3220 = vunpack.c.l.s4 1935823168
        %v3221 = vunpack.c.0.s8 %v3220
        %v3222 = vlaneseq
        %v3223 = vshrl.u32 %v3222, 7
        %v3224 = vsub.s32 %v3221, %v3223
        %v3225 = vrot.slane %v3217, %v3224
        %v3227 = vunpack.c.l.s4 1935823168
        %v3228 = vunpack.c.0.s8 %v3227
        %v3229 = vlaneseq
        %v3230 = vshrl.u32 %v3229, 7
        %v3231 = vsub.s32 %v3228, %v3230
        %v3232 = vrot.slane %v3218, %v3231
        %v3233 = vcombine.low %v3225, %v3232
        %v3235 = vunpack.c.l.s4 1935823168
        %v3236 = vunpack.c.0.s8 %v3235
        %v3237 = vlaneseq
        %v3238 = vshrl.u32 %v3237, 7
        %v3239 = vsub.s32 %v3236, %v3238
        %v3240 = vrot.slane %v3233, %v3239
        %v3242 = vunpack.c.l.s4 1935823168
        %v3243 = vunpack.c.0.s8 %v3242
        %v3244 = vlaneseq
        %v3245 = vshrl.u32 %v3244, 7
        %v3246 = vsub.s32 %v3243, %v3245
        %v3247 = vrot.slane %v2231, %v3246
        %v3249 = vunpack.c.l.s4 1935823168
        %v3250 = vunpack.c.0.s8 %v3249
        %v3251 = vlaneseq
        %v3252 = vshrl.u32 %v3251, 7
        %v3253 = vsub.s32 %v3250, %v3252
        %v3254 = vrot.slane %v3247, %v3253
        %3292 = vst [vmem:[#allocation3] sm:$0xf] %v2400
        %3293 = vst [vmem:[#allocation3 + $0x10] sm:$0xf] %v2424
        %3294 = vst [vmem:[#allocation3 + $0x20] sm:$0xf] %v2448
        %3295 = vst [vmem:[#allocation3 + $0x30] sm:$0xf] %v2472
        %3296 = vst [vmem:[#allocation3 + $0x40] sm:$0xf] %v2496
        %3297 = vst [vmem:[#allocation3 + $0x50] sm:$0xf] %v2520
        %3298 = vst [vmem:[#allocation3 + $0x60] sm:$0xf] %v2544
        %3299 = vst [vmem:[#allocation3 + $0x70] sm:$0xf] %v2568
        %3300 = vst [vmem:[#allocation3 + $0x80] sm:$0xf] %v2592
        %3301 = vst [vmem:[#allocation3 + $0x90] sm:$0xf] %v2616
        %3302 = vst [vmem:[#allocation3 + $0xa0] sm:$0xf] %v2640
        %3303 = vst [vmem:[#allocation3 + $0xb0] sm:$0xf] %v2664
        %3304 = vst [vmem:[#allocation3 + $0xc0] sm:$0xf] %v2688
        %3305 = vst [vmem:[#allocation3 + $0xd0] sm:$0xf] %v2712
        %3306 = vst [vmem:[#allocation3 + $0xe0] sm:$0xf] %v2736
        %3307 = vst [vmem:[#allocation3 + $0xf0] sm:$0xf] %v2760
        %3308 = vst [vmem:[#allocation3 + $0x100] sm:$0xf] %v2784
        %3309 = vst [vmem:[#allocation3 + $0x110] sm:$0xf] %v2808
        %3310 = vst [vmem:[#allocation3 + $0x120] sm:$0xf] %v2832
        %3311 = vst [vmem:[#allocation3 + $0x130] sm:$0xf] %v2856
        %3312 = vst [vmem:[#allocation3 + $0x140] sm:$0xf] %v2880
        %3313 = vst [vmem:[#allocation3 + $0x150] sm:$0xf] %v2904
        %3314 = vst [vmem:[#allocation3 + $0x160] sm:$0xf] %v2928
        %3315 = vst [vmem:[#allocation3 + $0x170] sm:$0xf] %v2952
        %3316 = vst [vmem:[#allocation3 + $0x180] sm:$0xf] %v2976
        %3317 = vst [vmem:[#allocation3 + $0x190] sm:$0xf] %v3000
        %3318 = vst [vmem:[#allocation3 + $0x1a0] sm:$0xf] %v3024
        %3319 = vst [vmem:[#allocation3 + $0x1b0] sm:$0xf] %v3048
        %3320 = vst [vmem:[#allocation3 + $0x1c0] sm:$0xf] %v3072
        %3321 = vst [vmem:[#allocation3 + $0x1d0] sm:$0xf] %v3096
        %3322 = vst [vmem:[#allocation3 + $0x1e0] sm:$0xf] %v3120
        %3323 = vst [vmem:[#allocation3 + $0x1f0] sm:$0xf] %v3144
        %3324 = vst [vmem:[#allocation3 + $0x200] sm:$0xf] %v3168
        %3325 = vst [vmem:[#allocation3 + $0x210] sm:$0xf] %v3192
        %3326 = vst [vmem:[#allocation3 + $0x220] sm:$0xf] %v3216
        %3327 = vst [vmem:[#allocation3 + $0x230] sm:$0xf] %v3240
        %v3328 = vld [vmem:[#allocation3 + $0x240] sm:$0x1]
        %v3329 = vsel %vm207, %v3254, %v3328
        %3330 = vst [vmem:[#allocation3 + $0x240] sm:$0x1] %v3329
        %v3331 = vld [vmem:[%s672] sm:$0xf]
        %v3332 = vld [vmem:[%s672 + $0x4] sm:$0xf]
        %v3333 = vld [vmem:[%s672 + $0x8] sm:$0x1]
        %v3334 = vld [vmem:[%s672 + $0xc] sm:$0xf]
        %v3335 = vld [vmem:[%s672 + $0x10] sm:$0xf]
        %v3336 = vld [vmem:[%s672 + $0x14] sm:$0x1]
        %v3337 = vld [vmem:[%s672 + $0x18] sm:$0xf]
        %v3338 = vld [vmem:[%s672 + $0x1c] sm:$0xf]
        %v3339 = vld [vmem:[%s672 + $0x20] sm:$0x1]
        %v3340 = vld [vmem:[%s672 + $0x24] sm:$0xf]
        %v3341 = vld [vmem:[%s672 + $0x28] sm:$0xf]
        %v3342 = vld [vmem:[%s672 + $0x2c] sm:$0x1]
        %v3343 = vld [vmem:[%s672 + $0x30] sm:$0xf]
        %v3344 = vld [vmem:[%s672 + $0x34] sm:$0xf]
        %v3345 = vld [vmem:[%s672 + $0x38] sm:$0x1]
        %v3346 = vld [vmem:[%s672 + $0x3c] sm:$0xf]
        %v3347 = vld [vmem:[%s672 + $0x40] sm:$0xf]
        %v3348 = vld [vmem:[%s672 + $0x44] sm:$0x1]
        %v3349 = vld [vmem:[%s672 + $0x48] sm:$0xf]
        %v3350 = vld [vmem:[%s672 + $0x4c] sm:$0xf]
        %v3351 = vld [vmem:[%s672 + $0x50] sm:$0x1]
        %v3352 = vld [vmem:[%s672 + $0x54] sm:$0xf]
        %v3353 = vld [vmem:[%s672 + $0x58] sm:$0xf]
        %v3354 = vld [vmem:[%s672 + $0x5c] sm:$0x1]
        %v3355 = vld [vmem:[%s672 + $0x60] sm:$0xf]
        %v3356 = vld [vmem:[%s672 + $0x64] sm:$0xf]
        %v3357 = vld [vmem:[%s672 + $0x68] sm:$0x1]
        %v3358 = vld [vmem:[%s672 + $0x6c] sm:$0xf]
        %v3359 = vld [vmem:[%s672 + $0x70] sm:$0xf]
        %v3360 = vld [vmem:[%s672 + $0x74] sm:$0x1]
        %v3361 = vld [vmem:[%s672 + $0x78] sm:$0xf]
        %v3362 = vld [vmem:[%s672 + $0x7c] sm:$0xf]
        %v3363 = vld [vmem:[%s672 + $0x80] sm:$0x1]
        %v3364 = vld [vmem:[%s672 + $0x84] sm:$0xf]
        %v3365 = vld [vmem:[%s672 + $0x88] sm:$0xf]
        %v3366 = vld [vmem:[%s672 + $0x8c] sm:$0x1]
        %v3367 = vld [vmem:[%s672 + $0x90] sm:$0xf]
        %v3368 = vld [vmem:[%s672 + $0x94] sm:$0xf]
        %v3369 = vld [vmem:[%s672 + $0x98] sm:$0x1]
        %v3370 = vld [vmem:[%s672 + $0x9c] sm:$0xf]
        %v3371 = vld [vmem:[%s672 + $0xa0] sm:$0xf]
        %v3372 = vld [vmem:[%s672 + $0xa4] sm:$0x1]
        %v3373 = vld [vmem:[%s672 + $0xa8] sm:$0xf]
        %v3374 = vld [vmem:[%s672 + $0xac] sm:$0xf]
        %v3375 = vld [vmem:[%s672 + $0xb0] sm:$0x1]
        %v3376 = vld [vmem:[%s672 + $0xb4] sm:$0xf]
        %v3377 = vld [vmem:[%s672 + $0xb8] sm:$0xf]
        %v3378 = vld [vmem:[%s672 + $0xbc] sm:$0x1]
        %v3379 = vld [vmem:[%s672 + $0xc0] sm:$0xf]
        %v3380 = vld [vmem:[%s672 + $0xc4] sm:$0xf]
        %v3381 = vld [vmem:[%s672 + $0xc8] sm:$0x1]
        %v3434 = vunpack.c.l.s4 1966171168
        %v3435 = vunpack.c.0.s8 %v3434
        %v3436 = vlaneseq
        %v3437 = vshrl.u32 %v3436, 7
        %v3438 = vsub.s32 %v3435, %v3437
        %v3439 = vrot.slane %v3331, %v3438
        %v3440 = vcombine.high %v3439, %v3439
        %v3442 = vunpack.c.l.s4 1966171168
        %v3443 = vunpack.c.0.s8 %v3442
        %v3444 = vlaneseq
        %v3445 = vshrl.u32 %v3444, 7
        %v3446 = vsub.s32 %v3443, %v3445
        %v3447 = vrot.slane %v3439, %v3446
        %v3449 = vunpack.c.l.s4 1966171168
        %v3450 = vunpack.c.0.s8 %v3449
        %v3451 = vlaneseq
        %v3452 = vshrl.u32 %v3451, 7
        %v3453 = vsub.s32 %v3450, %v3452
        %v3454 = vrot.slane %v3440, %v3453
        %v3455 = vcombine.high %v3447, %v3447
        %v3456 = vcombine.high %v3454, %v3454
        %v3458 = vunpack.c.l.s4 1966171168
        %v3459 = vunpack.c.0.s8 %v3458
        %v3460 = vlaneseq
        %v3461 = vshrl.u32 %v3460, 7
        %v3462 = vsub.s32 %v3459, %v3461
        %v3463 = vrot.slane %v3332, %v3462
        %v3464 = vcombine.high %v3463, %v3463
        %v3466 = vunpack.c.l.s4 1966171168
        %v3467 = vunpack.c.0.s8 %v3466
        %v3468 = vlaneseq
        %v3469 = vshrl.u32 %v3468, 7
        %v3470 = vsub.s32 %v3467, %v3469
        %v3471 = vrot.slane %v3463, %v3470
        %v3473 = vunpack.c.l.s4 1966171168
        %v3474 = vunpack.c.0.s8 %v3473
        %v3475 = vlaneseq
        %v3476 = vshrl.u32 %v3475, 7
        %v3477 = vsub.s32 %v3474, %v3476
        %v3478 = vrot.slane %v3464, %v3477
        %v3479 = vcombine.high %v3471, %v3471
        %v3480 = vcombine.high %v3478, %v3478
        %v3482 = vunpack.c.l.s4 1966171168
        %v3483 = vunpack.c.0.s8 %v3482
        %v3484 = vlaneseq
        %v3485 = vshrl.u32 %v3484, 7
        %v3486 = vsub.s32 %v3483, %v3485
        %v3487 = vrot.slane %v3333, %v3486
        %v3489 = vunpack.c.l.s4 1966171168
        %v3490 = vunpack.c.0.s8 %v3489
        %v3491 = vlaneseq
        %v3492 = vshrl.u32 %v3491, 7
        %v3493 = vsub.s32 %v3490, %v3492
        %v3494 = vrot.slane %v3487, %v3493
        %v3496 = vunpack.c.l.s4 1966171168
        %v3497 = vunpack.c.0.s8 %v3496
        %v3498 = vlaneseq
        %v3499 = vshrl.u32 %v3498, 7
        %v3500 = vsub.s32 %v3497, %v3499
        %v3501 = vrot.slane %v3334, %v3500
        %v3502 = vcombine.high %v3501, %v3501
        %v3504 = vunpack.c.l.s4 1966171168
        %v3505 = vunpack.c.0.s8 %v3504
        %v3506 = vlaneseq
        %v3507 = vshrl.u32 %v3506, 7
        %v3508 = vsub.s32 %v3505, %v3507
        %v3509 = vrot.slane %v3501, %v3508
        %v3511 = vunpack.c.l.s4 1966171168
        %v3512 = vunpack.c.0.s8 %v3511
        %v3513 = vlaneseq
        %v3514 = vshrl.u32 %v3513, 7
        %v3515 = vsub.s32 %v3512, %v3514
        %v3516 = vrot.slane %v3502, %v3515
        %v3517 = vcombine.high %v3509, %v3509
        %v3518 = vcombine.high %v3516, %v3516
        %v3520 = vunpack.c.l.s4 1966171168
        %v3521 = vunpack.c.0.s8 %v3520
        %v3522 = vlaneseq
        %v3523 = vshrl.u32 %v3522, 7
        %v3524 = vsub.s32 %v3521, %v3523
        %v3525 = vrot.slane %v3335, %v3524
        %v3526 = vcombine.high %v3525, %v3525
        %v3528 = vunpack.c.l.s4 1966171168
        %v3529 = vunpack.c.0.s8 %v3528
        %v3530 = vlaneseq
        %v3531 = vshrl.u32 %v3530, 7
        %v3532 = vsub.s32 %v3529, %v3531
        %v3533 = vrot.slane %v3525, %v3532
        %v3535 = vunpack.c.l.s4 1966171168
        %v3536 = vunpack.c.0.s8 %v3535
        %v3537 = vlaneseq
        %v3538 = vshrl.u32 %v3537, 7
        %v3539 = vsub.s32 %v3536, %v3538
        %v3540 = vrot.slane %v3526, %v3539
        %v3541 = vcombine.high %v3533, %v3533
        %v3542 = vcombine.high %v3540, %v3540
        %v3544 = vunpack.c.l.s4 1966171168
        %v3545 = vunpack.c.0.s8 %v3544
        %v3546 = vlaneseq
        %v3547 = vshrl.u32 %v3546, 7
        %v3548 = vsub.s32 %v3545, %v3547
        %v3549 = vrot.slane %v3336, %v3548
        %v3551 = vunpack.c.l.s4 1966171168
        %v3552 = vunpack.c.0.s8 %v3551
        %v3553 = vlaneseq
        %v3554 = vshrl.u32 %v3553, 7
        %v3555 = vsub.s32 %v3552, %v3554
        %v3556 = vrot.slane %v3549, %v3555
        %v3558 = vunpack.c.l.s4 1966171168
        %v3559 = vunpack.c.0.s8 %v3558
        %v3560 = vlaneseq
        %v3561 = vshrl.u32 %v3560, 7
        %v3562 = vsub.s32 %v3559, %v3561
        %v3563 = vrot.slane %v3337, %v3562
        %v3564 = vcombine.high %v3563, %v3563
        %v3566 = vunpack.c.l.s4 1966171168
        %v3567 = vunpack.c.0.s8 %v3566
        %v3568 = vlaneseq
        %v3569 = vshrl.u32 %v3568, 7
        %v3570 = vsub.s32 %v3567, %v3569
        %v3571 = vrot.slane %v3563, %v3570
        %v3573 = vunpack.c.l.s4 1966171168
        %v3574 = vunpack.c.0.s8 %v3573
        %v3575 = vlaneseq
        %v3576 = vshrl.u32 %v3575, 7
        %v3577 = vsub.s32 %v3574, %v3576
        %v3578 = vrot.slane %v3564, %v3577
        %v3579 = vcombine.high %v3571, %v3571
        %v3580 = vcombine.high %v3578, %v3578
        %v3582 = vunpack.c.l.s4 1966171168
        %v3583 = vunpack.c.0.s8 %v3582
        %v3584 = vlaneseq
        %v3585 = vshrl.u32 %v3584, 7
        %v3586 = vsub.s32 %v3583, %v3585
        %v3587 = vrot.slane %v3338, %v3586
        %v3588 = vcombine.high %v3587, %v3587
        %v3590 = vunpack.c.l.s4 1966171168
        %v3591 = vunpack.c.0.s8 %v3590
        %v3592 = vlaneseq
        %v3593 = vshrl.u32 %v3592, 7
        %v3594 = vsub.s32 %v3591, %v3593
        %v3595 = vrot.slane %v3587, %v3594
        %v3597 = vunpack.c.l.s4 1966171168
        %v3598 = vunpack.c.0.s8 %v3597
        %v3599 = vlaneseq
        %v3600 = vshrl.u32 %v3599, 7
        %v3601 = vsub.s32 %v3598, %v3600
        %v3602 = vrot.slane %v3588, %v3601
        %v3603 = vcombine.high %v3595, %v3595
        %v3604 = vcombine.high %v3602, %v3602
        %v3606 = vunpack.c.l.s4 1966171168
        %v3607 = vunpack.c.0.s8 %v3606
        %v3608 = vlaneseq
        %v3609 = vshrl.u32 %v3608, 7
        %v3610 = vsub.s32 %v3607, %v3609
        %v3611 = vrot.slane %v3339, %v3610
        %v3613 = vunpack.c.l.s4 1966171168
        %v3614 = vunpack.c.0.s8 %v3613
        %v3615 = vlaneseq
        %v3616 = vshrl.u32 %v3615, 7
        %v3617 = vsub.s32 %v3614, %v3616
        %v3618 = vrot.slane %v3611, %v3617
        %v3620 = vunpack.c.l.s4 1966171168
        %v3621 = vunpack.c.0.s8 %v3620
        %v3622 = vlaneseq
        %v3623 = vshrl.u32 %v3622, 7
        %v3624 = vsub.s32 %v3621, %v3623
        %v3625 = vrot.slane %v3340, %v3624
        %v3626 = vcombine.high %v3625, %v3625
        %v3628 = vunpack.c.l.s4 1966171168
        %v3629 = vunpack.c.0.s8 %v3628
        %v3630 = vlaneseq
        %v3631 = vshrl.u32 %v3630, 7
        %v3632 = vsub.s32 %v3629, %v3631
        %v3633 = vrot.slane %v3625, %v3632
        %v3635 = vunpack.c.l.s4 1966171168
        %v3636 = vunpack.c.0.s8 %v3635
        %v3637 = vlaneseq
        %v3638 = vshrl.u32 %v3637, 7
        %v3639 = vsub.s32 %v3636, %v3638
        %v3640 = vrot.slane %v3626, %v3639
        %v3641 = vcombine.high %v3633, %v3633
        %v3642 = vcombine.high %v3640, %v3640
        %v3644 = vunpack.c.l.s4 1966171168
        %v3645 = vunpack.c.0.s8 %v3644
        %v3646 = vlaneseq
        %v3647 = vshrl.u32 %v3646, 7
        %v3648 = vsub.s32 %v3645, %v3647
        %v3649 = vrot.slane %v3341, %v3648
        %v3650 = vcombine.high %v3649, %v3649
        %v3652 = vunpack.c.l.s4 1966171168
        %v3653 = vunpack.c.0.s8 %v3652
        %v3654 = vlaneseq
        %v3655 = vshrl.u32 %v3654, 7
        %v3656 = vsub.s32 %v3653, %v3655
        %v3657 = vrot.slane %v3649, %v3656
        %v3659 = vunpack.c.l.s4 1966171168
        %v3660 = vunpack.c.0.s8 %v3659
        %v3661 = vlaneseq
        %v3662 = vshrl.u32 %v3661, 7
        %v3663 = vsub.s32 %v3660, %v3662
        %v3664 = vrot.slane %v3650, %v3663
        %v3665 = vcombine.high %v3657, %v3657
        %v3666 = vcombine.high %v3664, %v3664
        %v3668 = vunpack.c.l.s4 1966171168
        %v3669 = vunpack.c.0.s8 %v3668
        %v3670 = vlaneseq
        %v3671 = vshrl.u32 %v3670, 7
        %v3672 = vsub.s32 %v3669, %v3671
        %v3673 = vrot.slane %v3342, %v3672
        %v3675 = vunpack.c.l.s4 1966171168
        %v3676 = vunpack.c.0.s8 %v3675
        %v3677 = vlaneseq
        %v3678 = vshrl.u32 %v3677, 7
        %v3679 = vsub.s32 %v3676, %v3678
        %v3680 = vrot.slane %v3673, %v3679
        %v3682 = vunpack.c.l.s4 1966171168
        %v3683 = vunpack.c.0.s8 %v3682
        %v3684 = vlaneseq
        %v3685 = vshrl.u32 %v3684, 7
        %v3686 = vsub.s32 %v3683, %v3685
        %v3687 = vrot.slane %v3343, %v3686
        %v3688 = vcombine.high %v3687, %v3687
        %v3690 = vunpack.c.l.s4 1966171168
        %v3691 = vunpack.c.0.s8 %v3690
        %v3692 = vlaneseq
        %v3693 = vshrl.u32 %v3692, 7
        %v3694 = vsub.s32 %v3691, %v3693
        %v3695 = vrot.slane %v3687, %v3694
        %v3697 = vunpack.c.l.s4 1966171168
        %v3698 = vunpack.c.0.s8 %v3697
        %v3699 = vlaneseq
        %v3700 = vshrl.u32 %v3699, 7
        %v3701 = vsub.s32 %v3698, %v3700
        %v3702 = vrot.slane %v3688, %v3701
        %v3703 = vcombine.high %v3695, %v3695
        %v3704 = vcombine.high %v3702, %v3702
        %v3706 = vunpack.c.l.s4 1966171168
        %v3707 = vunpack.c.0.s8 %v3706
        %v3708 = vlaneseq
        %v3709 = vshrl.u32 %v3708, 7
        %v3710 = vsub.s32 %v3707, %v3709
        %v3711 = vrot.slane %v3344, %v3710
        %v3712 = vcombine.high %v3711, %v3711
        %v3714 = vunpack.c.l.s4 1966171168
        %v3715 = vunpack.c.0.s8 %v3714
        %v3716 = vlaneseq
        %v3717 = vshrl.u32 %v3716, 7
        %v3718 = vsub.s32 %v3715, %v3717
        %v3719 = vrot.slane %v3711, %v3718
        %v3721 = vunpack.c.l.s4 1966171168
        %v3722 = vunpack.c.0.s8 %v3721
        %v3723 = vlaneseq
        %v3724 = vshrl.u32 %v3723, 7
        %v3725 = vsub.s32 %v3722, %v3724
        %v3726 = vrot.slane %v3712, %v3725
        %v3727 = vcombine.high %v3719, %v3719
        %v3728 = vcombine.high %v3726, %v3726
        %v3730 = vunpack.c.l.s4 1966171168
        %v3731 = vunpack.c.0.s8 %v3730
        %v3732 = vlaneseq
        %v3733 = vshrl.u32 %v3732, 7
        %v3734 = vsub.s32 %v3731, %v3733
        %v3735 = vrot.slane %v3345, %v3734
        %v3737 = vunpack.c.l.s4 1966171168
        %v3738 = vunpack.c.0.s8 %v3737
        %v3739 = vlaneseq
        %v3740 = vshrl.u32 %v3739, 7
        %v3741 = vsub.s32 %v3738, %v3740
        %v3742 = vrot.slane %v3735, %v3741
        %v3744 = vunpack.c.l.s4 1966171168
        %v3745 = vunpack.c.0.s8 %v3744
        %v3746 = vlaneseq
        %v3747 = vshrl.u32 %v3746, 7
        %v3748 = vsub.s32 %v3745, %v3747
        %v3749 = vrot.slane %v3346, %v3748
        %v3750 = vcombine.high %v3749, %v3749
        %v3752 = vunpack.c.l.s4 1966171168
        %v3753 = vunpack.c.0.s8 %v3752
        %v3754 = vlaneseq
        %v3755 = vshrl.u32 %v3754, 7
        %v3756 = vsub.s32 %v3753, %v3755
        %v3757 = vrot.slane %v3749, %v3756
        %v3759 = vunpack.c.l.s4 1966171168
        %v3760 = vunpack.c.0.s8 %v3759
        %v3761 = vlaneseq
        %v3762 = vshrl.u32 %v3761, 7
        %v3763 = vsub.s32 %v3760, %v3762
        %v3764 = vrot.slane %v3750, %v3763
        %v3765 = vcombine.high %v3757, %v3757
        %v3766 = vcombine.high %v3764, %v3764
        %v3768 = vunpack.c.l.s4 1966171168
        %v3769 = vunpack.c.0.s8 %v3768
        %v3770 = vlaneseq
        %v3771 = vshrl.u32 %v3770, 7
        %v3772 = vsub.s32 %v3769, %v3771
        %v3773 = vrot.slane %v3347, %v3772
        %v3774 = vcombine.high %v3773, %v3773
        %v3776 = vunpack.c.l.s4 1966171168
        %v3777 = vunpack.c.0.s8 %v3776
        %v3778 = vlaneseq
        %v3779 = vshrl.u32 %v3778, 7
        %v3780 = vsub.s32 %v3777, %v3779
        %v3781 = vrot.slane %v3773, %v3780
        %v3783 = vunpack.c.l.s4 1966171168
        %v3784 = vunpack.c.0.s8 %v3783
        %v3785 = vlaneseq
        %v3786 = vshrl.u32 %v3785, 7
        %v3787 = vsub.s32 %v3784, %v3786
        %v3788 = vrot.slane %v3774, %v3787
        %v3789 = vcombine.high %v3781, %v3781
        %v3790 = vcombine.high %v3788, %v3788
        %v3792 = vunpack.c.l.s4 1966171168
        %v3793 = vunpack.c.0.s8 %v3792
        %v3794 = vlaneseq
        %v3795 = vshrl.u32 %v3794, 7
        %v3796 = vsub.s32 %v3793, %v3795
        %v3797 = vrot.slane %v3348, %v3796
        %v3799 = vunpack.c.l.s4 1966171168
        %v3800 = vunpack.c.0.s8 %v3799
        %v3801 = vlaneseq
        %v3802 = vshrl.u32 %v3801, 7
        %v3803 = vsub.s32 %v3800, %v3802
        %v3804 = vrot.slane %v3797, %v3803
        %v3806 = vunpack.c.l.s4 1966171168
        %v3807 = vunpack.c.0.s8 %v3806
        %v3808 = vlaneseq
        %v3809 = vshrl.u32 %v3808, 7
        %v3810 = vsub.s32 %v3807, %v3809
        %v3811 = vrot.slane %v3349, %v3810
        %v3812 = vcombine.high %v3811, %v3811
        %v3814 = vunpack.c.l.s4 1966171168
        %v3815 = vunpack.c.0.s8 %v3814
        %v3816 = vlaneseq
        %v3817 = vshrl.u32 %v3816, 7
        %v3818 = vsub.s32 %v3815, %v3817
        %v3819 = vrot.slane %v3811, %v3818
        %v3821 = vunpack.c.l.s4 1966171168
        %v3822 = vunpack.c.0.s8 %v3821
        %v3823 = vlaneseq
        %v3824 = vshrl.u32 %v3823, 7
        %v3825 = vsub.s32 %v3822, %v3824
        %v3826 = vrot.slane %v3812, %v3825
        %v3827 = vcombine.high %v3819, %v3819
        %v3828 = vcombine.high %v3826, %v3826
        %v3830 = vunpack.c.l.s4 1966171168
        %v3831 = vunpack.c.0.s8 %v3830
        %v3832 = vlaneseq
        %v3833 = vshrl.u32 %v3832, 7
        %v3834 = vsub.s32 %v3831, %v3833
        %v3835 = vrot.slane %v3350, %v3834
        %v3836 = vcombine.high %v3835, %v3835
        %v3838 = vunpack.c.l.s4 1966171168
        %v3839 = vunpack.c.0.s8 %v3838
        %v3840 = vlaneseq
        %v3841 = vshrl.u32 %v3840, 7
        %v3842 = vsub.s32 %v3839, %v3841
        %v3843 = vrot.slane %v3835, %v3842
        %v3845 = vunpack.c.l.s4 1966171168
        %v3846 = vunpack.c.0.s8 %v3845
        %v3847 = vlaneseq
        %v3848 = vshrl.u32 %v3847, 7
        %v3849 = vsub.s32 %v3846, %v3848
        %v3850 = vrot.slane %v3836, %v3849
        %v3851 = vcombine.high %v3843, %v3843
        %v3852 = vcombine.high %v3850, %v3850
        %v3854 = vunpack.c.l.s4 1966171168
        %v3855 = vunpack.c.0.s8 %v3854
        %v3856 = vlaneseq
        %v3857 = vshrl.u32 %v3856, 7
        %v3858 = vsub.s32 %v3855, %v3857
        %v3859 = vrot.slane %v3351, %v3858
        %v3861 = vunpack.c.l.s4 1966171168
        %v3862 = vunpack.c.0.s8 %v3861
        %v3863 = vlaneseq
        %v3864 = vshrl.u32 %v3863, 7
        %v3865 = vsub.s32 %v3862, %v3864
        %v3866 = vrot.slane %v3859, %v3865
        %v3868 = vunpack.c.l.s4 1966171168
        %v3869 = vunpack.c.0.s8 %v3868
        %v3870 = vlaneseq
        %v3871 = vshrl.u32 %v3870, 7
        %v3872 = vsub.s32 %v3869, %v3871
        %v3873 = vrot.slane %v3352, %v3872
        %v3874 = vcombine.high %v3873, %v3873
        %v3876 = vunpack.c.l.s4 1966171168
        %v3877 = vunpack.c.0.s8 %v3876
        %v3878 = vlaneseq
        %v3879 = vshrl.u32 %v3878, 7
        %v3880 = vsub.s32 %v3877, %v3879
        %v3881 = vrot.slane %v3873, %v3880
        %v3883 = vunpack.c.l.s4 1966171168
        %v3884 = vunpack.c.0.s8 %v3883
        %v3885 = vlaneseq
        %v3886 = vshrl.u32 %v3885, 7
        %v3887 = vsub.s32 %v3884, %v3886
        %v3888 = vrot.slane %v3874, %v3887
        %v3889 = vcombine.high %v3881, %v3881
        %v3890 = vcombine.high %v3888, %v3888
        %v3892 = vunpack.c.l.s4 1966171168
        %v3893 = vunpack.c.0.s8 %v3892
        %v3894 = vlaneseq
        %v3895 = vshrl.u32 %v3894, 7
        %v3896 = vsub.s32 %v3893, %v3895
        %v3897 = vrot.slane %v3353, %v3896
        %v3898 = vcombine.high %v3897, %v3897
        %v3900 = vunpack.c.l.s4 1966171168
        %v3901 = vunpack.c.0.s8 %v3900
        %v3902 = vlaneseq
        %v3903 = vshrl.u32 %v3902, 7
        %v3904 = vsub.s32 %v3901, %v3903
        %v3905 = vrot.slane %v3897, %v3904
        %v3907 = vunpack.c.l.s4 1966171168
        %v3908 = vunpack.c.0.s8 %v3907
        %v3909 = vlaneseq
        %v3910 = vshrl.u32 %v3909, 7
        %v3911 = vsub.s32 %v3908, %v3910
        %v3912 = vrot.slane %v3898, %v3911
        %v3913 = vcombine.high %v3905, %v3905
        %v3914 = vcombine.high %v3912, %v3912
        %v3916 = vunpack.c.l.s4 1966171168
        %v3917 = vunpack.c.0.s8 %v3916
        %v3918 = vlaneseq
        %v3919 = vshrl.u32 %v3918, 7
        %v3920 = vsub.s32 %v3917, %v3919
        %v3921 = vrot.slane %v3354, %v3920
        %v3923 = vunpack.c.l.s4 1966171168
        %v3924 = vunpack.c.0.s8 %v3923
        %v3925 = vlaneseq
        %v3926 = vshrl.u32 %v3925, 7
        %v3927 = vsub.s32 %v3924, %v3926
        %v3928 = vrot.slane %v3921, %v3927
        %v3930 = vunpack.c.l.s4 1966171168
        %v3931 = vunpack.c.0.s8 %v3930
        %v3932 = vlaneseq
        %v3933 = vshrl.u32 %v3932, 7
        %v3934 = vsub.s32 %v3931, %v3933
        %v3935 = vrot.slane %v3355, %v3934
        %v3936 = vcombine.high %v3935, %v3935
        %v3938 = vunpack.c.l.s4 1966171168
        %v3939 = vunpack.c.0.s8 %v3938
        %v3940 = vlaneseq
        %v3941 = vshrl.u32 %v3940, 7
        %v3942 = vsub.s32 %v3939, %v3941
        %v3943 = vrot.slane %v3935, %v3942
        %v3945 = vunpack.c.l.s4 1966171168
        %v3946 = vunpack.c.0.s8 %v3945
        %v3947 = vlaneseq
        %v3948 = vshrl.u32 %v3947, 7
        %v3949 = vsub.s32 %v3946, %v3948
        %v3950 = vrot.slane %v3936, %v3949
        %v3951 = vcombine.high %v3943, %v3943
        %v3952 = vcombine.high %v3950, %v3950
        %v3954 = vunpack.c.l.s4 1966171168
        %v3955 = vunpack.c.0.s8 %v3954
        %v3956 = vlaneseq
        %v3957 = vshrl.u32 %v3956, 7
        %v3958 = vsub.s32 %v3955, %v3957
        %v3959 = vrot.slane %v3356, %v3958
        %v3960 = vcombine.high %v3959, %v3959
        %v3962 = vunpack.c.l.s4 1966171168
        %v3963 = vunpack.c.0.s8 %v3962
        %v3964 = vlaneseq
        %v3965 = vshrl.u32 %v3964, 7
        %v3966 = vsub.s32 %v3963, %v3965
        %v3967 = vrot.slane %v3959, %v3966
        %v3969 = vunpack.c.l.s4 1966171168
        %v3970 = vunpack.c.0.s8 %v3969
        %v3971 = vlaneseq
        %v3972 = vshrl.u32 %v3971, 7
        %v3973 = vsub.s32 %v3970, %v3972
        %v3974 = vrot.slane %v3960, %v3973
        %v3975 = vcombine.high %v3967, %v3967
        %v3976 = vcombine.high %v3974, %v3974
        %v3978 = vunpack.c.l.s4 1966171168
        %v3979 = vunpack.c.0.s8 %v3978
        %v3980 = vlaneseq
        %v3981 = vshrl.u32 %v3980, 7
        %v3982 = vsub.s32 %v3979, %v3981
        %v3983 = vrot.slane %v3357, %v3982
        %v3985 = vunpack.c.l.s4 1966171168
        %v3986 = vunpack.c.0.s8 %v3985
        %v3987 = vlaneseq
        %v3988 = vshrl.u32 %v3987, 7
        %v3989 = vsub.s32 %v3986, %v3988
        %v3990 = vrot.slane %v3983, %v3989
        %v3992 = vunpack.c.l.s4 1966171168
        %v3993 = vunpack.c.0.s8 %v3992
        %v3994 = vlaneseq
        %v3995 = vshrl.u32 %v3994, 7
        %v3996 = vsub.s32 %v3993, %v3995
        %v3997 = vrot.slane %v3358, %v3996
        %v3998 = vcombine.high %v3997, %v3997
        %v4000 = vunpack.c.l.s4 1966171168
        %v4001 = vunpack.c.0.s8 %v4000
        %v4002 = vlaneseq
        %v4003 = vshrl.u32 %v4002, 7
        %v4004 = vsub.s32 %v4001, %v4003
        %v4005 = vrot.slane %v3997, %v4004
        %v4007 = vunpack.c.l.s4 1966171168
        %v4008 = vunpack.c.0.s8 %v4007
        %v4009 = vlaneseq
        %v4010 = vshrl.u32 %v4009, 7
        %v4011 = vsub.s32 %v4008, %v4010
        %v4012 = vrot.slane %v3998, %v4011
        %v4013 = vcombine.high %v4005, %v4005
        %v4014 = vcombine.high %v4012, %v4012
        %v4016 = vunpack.c.l.s4 1966171168
        %v4017 = vunpack.c.0.s8 %v4016
        %v4018 = vlaneseq
        %v4019 = vshrl.u32 %v4018, 7
        %v4020 = vsub.s32 %v4017, %v4019
        %v4021 = vrot.slane %v3359, %v4020
        %v4022 = vcombine.high %v4021, %v4021
        %v4024 = vunpack.c.l.s4 1966171168
        %v4025 = vunpack.c.0.s8 %v4024
        %v4026 = vlaneseq
        %v4027 = vshrl.u32 %v4026, 7
        %v4028 = vsub.s32 %v4025, %v4027
        %v4029 = vrot.slane %v4021, %v4028
        %v4031 = vunpack.c.l.s4 1966171168
        %v4032 = vunpack.c.0.s8 %v4031
        %v4033 = vlaneseq
        %v4034 = vshrl.u32 %v4033, 7
        %v4035 = vsub.s32 %v4032, %v4034
        %v4036 = vrot.slane %v4022, %v4035
        %v4037 = vcombine.high %v4029, %v4029
        %v4038 = vcombine.high %v4036, %v4036
        %v4040 = vunpack.c.l.s4 1966171168
        %v4041 = vunpack.c.0.s8 %v4040
        %v4042 = vlaneseq
        %v4043 = vshrl.u32 %v4042, 7
        %v4044 = vsub.s32 %v4041, %v4043
        %v4045 = vrot.slane %v3360, %v4044
        %v4047 = vunpack.c.l.s4 1966171168
        %v4048 = vunpack.c.0.s8 %v4047
        %v4049 = vlaneseq
        %v4050 = vshrl.u32 %v4049, 7
        %v4051 = vsub.s32 %v4048, %v4050
        %v4052 = vrot.slane %v4045, %v4051
        %v4054 = vunpack.c.l.s4 1966171168
        %v4055 = vunpack.c.0.s8 %v4054
        %v4056 = vlaneseq
        %v4057 = vshrl.u32 %v4056, 7
        %v4058 = vsub.s32 %v4055, %v4057
        %v4059 = vrot.slane %v3361, %v4058
        %v4060 = vcombine.high %v4059, %v4059
        %v4062 = vunpack.c.l.s4 1966171168
        %v4063 = vunpack.c.0.s8 %v4062
        %v4064 = vlaneseq
        %v4065 = vshrl.u32 %v4064, 7
        %v4066 = vsub.s32 %v4063, %v4065
        %v4067 = vrot.slane %v4059, %v4066
        %v4069 = vunpack.c.l.s4 1966171168
        %v4070 = vunpack.c.0.s8 %v4069
        %v4071 = vlaneseq
        %v4072 = vshrl.u32 %v4071, 7
        %v4073 = vsub.s32 %v4070, %v4072
        %v4074 = vrot.slane %v4060, %v4073
        %v4075 = vcombine.high %v4067, %v4067
        %v4076 = vcombine.high %v4074, %v4074
        %v4078 = vunpack.c.l.s4 1966171168
        %v4079 = vunpack.c.0.s8 %v4078
        %v4080 = vlaneseq
        %v4081 = vshrl.u32 %v4080, 7
        %v4082 = vsub.s32 %v4079, %v4081
        %v4083 = vrot.slane %v3362, %v4082
        %v4084 = vcombine.high %v4083, %v4083
        %v4086 = vunpack.c.l.s4 1966171168
        %v4087 = vunpack.c.0.s8 %v4086
        %v4088 = vlaneseq
        %v4089 = vshrl.u32 %v4088, 7
        %v4090 = vsub.s32 %v4087, %v4089
        %v4091 = vrot.slane %v4083, %v4090
        %v4093 = vunpack.c.l.s4 1966171168
        %v4094 = vunpack.c.0.s8 %v4093
        %v4095 = vlaneseq
        %v4096 = vshrl.u32 %v4095, 7
        %v4097 = vsub.s32 %v4094, %v4096
        %v4098 = vrot.slane %v4084, %v4097
        %v4099 = vcombine.high %v4091, %v4091
        %v4100 = vcombine.high %v4098, %v4098
        %v4102 = vunpack.c.l.s4 1966171168
        %v4103 = vunpack.c.0.s8 %v4102
        %v4104 = vlaneseq
        %v4105 = vshrl.u32 %v4104, 7
        %v4106 = vsub.s32 %v4103, %v4105
        %v4107 = vrot.slane %v3363, %v4106
        %v4109 = vunpack.c.l.s4 1966171168
        %v4110 = vunpack.c.0.s8 %v4109
        %v4111 = vlaneseq
        %v4112 = vshrl.u32 %v4111, 7
        %v4113 = vsub.s32 %v4110, %v4112
        %v4114 = vrot.slane %v4107, %v4113
        %v4116 = vunpack.c.l.s4 1966171168
        %v4117 = vunpack.c.0.s8 %v4116
        %v4118 = vlaneseq
        %v4119 = vshrl.u32 %v4118, 7
        %v4120 = vsub.s32 %v4117, %v4119
        %v4121 = vrot.slane %v3364, %v4120
        %v4122 = vcombine.high %v4121, %v4121
        %v4124 = vunpack.c.l.s4 1966171168
        %v4125 = vunpack.c.0.s8 %v4124
        %v4126 = vlaneseq
        %v4127 = vshrl.u32 %v4126, 7
        %v4128 = vsub.s32 %v4125, %v4127
        %v4129 = vrot.slane %v4121, %v4128
        %v4131 = vunpack.c.l.s4 1966171168
        %v4132 = vunpack.c.0.s8 %v4131
        %v4133 = vlaneseq
        %v4134 = vshrl.u32 %v4133, 7
        %v4135 = vsub.s32 %v4132, %v4134
        %v4136 = vrot.slane %v4122, %v4135
        %v4137 = vcombine.high %v4129, %v4129
        %v4138 = vcombine.high %v4136, %v4136
        %v4140 = vunpack.c.l.s4 1966171168
        %v4141 = vunpack.c.0.s8 %v4140
        %v4142 = vlaneseq
        %v4143 = vshrl.u32 %v4142, 7
        %v4144 = vsub.s32 %v4141, %v4143
        %v4145 = vrot.slane %v3365, %v4144
        %v4146 = vcombine.high %v4145, %v4145
        %v4148 = vunpack.c.l.s4 1966171168
        %v4149 = vunpack.c.0.s8 %v4148
        %v4150 = vlaneseq
        %v4151 = vshrl.u32 %v4150, 7
        %v4152 = vsub.s32 %v4149, %v4151
        %v4153 = vrot.slane %v4145, %v4152
        %v4155 = vunpack.c.l.s4 1966171168
        %v4156 = vunpack.c.0.s8 %v4155
        %v4157 = vlaneseq
        %v4158 = vshrl.u32 %v4157, 7
        %v4159 = vsub.s32 %v4156, %v4158
        %v4160 = vrot.slane %v4146, %v4159
        %v4161 = vcombine.high %v4153, %v4153
        %v4162 = vcombine.high %v4160, %v4160
        %v4164 = vunpack.c.l.s4 1966171168
        %v4165 = vunpack.c.0.s8 %v4164
        %v4166 = vlaneseq
        %v4167 = vshrl.u32 %v4166, 7
        %v4168 = vsub.s32 %v4165, %v4167
        %v4169 = vrot.slane %v3366, %v4168
        %v4171 = vunpack.c.l.s4 1966171168
        %v4172 = vunpack.c.0.s8 %v4171
        %v4173 = vlaneseq
        %v4174 = vshrl.u32 %v4173, 7
        %v4175 = vsub.s32 %v4172, %v4174
        %v4176 = vrot.slane %v4169, %v4175
        %v4178 = vunpack.c.l.s4 1966171168
        %v4179 = vunpack.c.0.s8 %v4178
        %v4180 = vlaneseq
        %v4181 = vshrl.u32 %v4180, 7
        %v4182 = vsub.s32 %v4179, %v4181
        %v4183 = vrot.slane %v3367, %v4182
        %v4184 = vcombine.high %v4183, %v4183
        %v4186 = vunpack.c.l.s4 1966171168
        %v4187 = vunpack.c.0.s8 %v4186
        %v4188 = vlaneseq
        %v4189 = vshrl.u32 %v4188, 7
        %v4190 = vsub.s32 %v4187, %v4189
        %v4191 = vrot.slane %v4183, %v4190
        %v4193 = vunpack.c.l.s4 1966171168
        %v4194 = vunpack.c.0.s8 %v4193
        %v4195 = vlaneseq
        %v4196 = vshrl.u32 %v4195, 7
        %v4197 = vsub.s32 %v4194, %v4196
        %v4198 = vrot.slane %v4184, %v4197
        %v4199 = vcombine.high %v4191, %v4191
        %v4200 = vcombine.high %v4198, %v4198
        %v4202 = vunpack.c.l.s4 1966171168
        %v4203 = vunpack.c.0.s8 %v4202
        %v4204 = vlaneseq
        %v4205 = vshrl.u32 %v4204, 7
        %v4206 = vsub.s32 %v4203, %v4205
        %v4207 = vrot.slane %v3368, %v4206
        %v4208 = vcombine.high %v4207, %v4207
        %v4210 = vunpack.c.l.s4 1966171168
        %v4211 = vunpack.c.0.s8 %v4210
        %v4212 = vlaneseq
        %v4213 = vshrl.u32 %v4212, 7
        %v4214 = vsub.s32 %v4211, %v4213
        %v4215 = vrot.slane %v4207, %v4214
        %v4217 = vunpack.c.l.s4 1966171168
        %v4218 = vunpack.c.0.s8 %v4217
        %v4219 = vlaneseq
        %v4220 = vshrl.u32 %v4219, 7
        %v4221 = vsub.s32 %v4218, %v4220
        %v4222 = vrot.slane %v4208, %v4221
        %v4223 = vcombine.high %v4215, %v4215
        %v4224 = vcombine.high %v4222, %v4222
        %v4226 = vunpack.c.l.s4 1966171168
        %v4227 = vunpack.c.0.s8 %v4226
        %v4228 = vlaneseq
        %v4229 = vshrl.u32 %v4228, 7
        %v4230 = vsub.s32 %v4227, %v4229
        %v4231 = vrot.slane %v3369, %v4230
        %v4233 = vunpack.c.l.s4 1966171168
        %v4234 = vunpack.c.0.s8 %v4233
        %v4235 = vlaneseq
        %v4236 = vshrl.u32 %v4235, 7
        %v4237 = vsub.s32 %v4234, %v4236
        %v4238 = vrot.slane %v4231, %v4237
        %v4240 = vunpack.c.l.s4 1966171168
        %v4241 = vunpack.c.0.s8 %v4240
        %v4242 = vlaneseq
        %v4243 = vshrl.u32 %v4242, 7
        %v4244 = vsub.s32 %v4241, %v4243
        %v4245 = vrot.slane %v3370, %v4244
        %v4246 = vcombine.high %v4245, %v4245
        %v4248 = vunpack.c.l.s4 1966171168
        %v4249 = vunpack.c.0.s8 %v4248
        %v4250 = vlaneseq
        %v4251 = vshrl.u32 %v4250, 7
        %v4252 = vsub.s32 %v4249, %v4251
        %v4253 = vrot.slane %v4245, %v4252
        %v4255 = vunpack.c.l.s4 1966171168
        %v4256 = vunpack.c.0.s8 %v4255
        %v4257 = vlaneseq
        %v4258 = vshrl.u32 %v4257, 7
        %v4259 = vsub.s32 %v4256, %v4258
        %v4260 = vrot.slane %v4246, %v4259
        %v4261 = vcombine.high %v4253, %v4253
        %v4262 = vcombine.high %v4260, %v4260
        %v4264 = vunpack.c.l.s4 1966171168
        %v4265 = vunpack.c.0.s8 %v4264
        %v4266 = vlaneseq
        %v4267 = vshrl.u32 %v4266, 7
        %v4268 = vsub.s32 %v4265, %v4267
        %v4269 = vrot.slane %v3371, %v4268
        %v4270 = vcombine.high %v4269, %v4269
        %v4272 = vunpack.c.l.s4 1966171168
        %v4273 = vunpack.c.0.s8 %v4272
        %v4274 = vlaneseq
        %v4275 = vshrl.u32 %v4274, 7
        %v4276 = vsub.s32 %v4273, %v4275
        %v4277 = vrot.slane %v4269, %v4276
        %v4279 = vunpack.c.l.s4 1966171168
        %v4280 = vunpack.c.0.s8 %v4279
        %v4281 = vlaneseq
        %v4282 = vshrl.u32 %v4281, 7
        %v4283 = vsub.s32 %v4280, %v4282
        %v4284 = vrot.slane %v4270, %v4283
        %v4285 = vcombine.high %v4277, %v4277
        %v4286 = vcombine.high %v4284, %v4284
        %v4288 = vunpack.c.l.s4 1966171168
        %v4289 = vunpack.c.0.s8 %v4288
        %v4290 = vlaneseq
        %v4291 = vshrl.u32 %v4290, 7
        %v4292 = vsub.s32 %v4289, %v4291
        %v4293 = vrot.slane %v3372, %v4292
        %v4295 = vunpack.c.l.s4 1966171168
        %v4296 = vunpack.c.0.s8 %v4295
        %v4297 = vlaneseq
        %v4298 = vshrl.u32 %v4297, 7
        %v4299 = vsub.s32 %v4296, %v4298
        %v4300 = vrot.slane %v4293, %v4299
        %v4302 = vunpack.c.l.s4 1966171168
        %v4303 = vunpack.c.0.s8 %v4302
        %v4304 = vlaneseq
        %v4305 = vshrl.u32 %v4304, 7
        %v4306 = vsub.s32 %v4303, %v4305
        %v4307 = vrot.slane %v3373, %v4306
        %v4308 = vcombine.high %v4307, %v4307
        %v4310 = vunpack.c.l.s4 1966171168
        %v4311 = vunpack.c.0.s8 %v4310
        %v4312 = vlaneseq
        %v4313 = vshrl.u32 %v4312, 7
        %v4314 = vsub.s32 %v4311, %v4313
        %v4315 = vrot.slane %v4307, %v4314
        %v4317 = vunpack.c.l.s4 1966171168
        %v4318 = vunpack.c.0.s8 %v4317
        %v4319 = vlaneseq
        %v4320 = vshrl.u32 %v4319, 7
        %v4321 = vsub.s32 %v4318, %v4320
        %v4322 = vrot.slane %v4308, %v4321
        %v4323 = vcombine.high %v4315, %v4315
        %v4324 = vcombine.high %v4322, %v4322
        %v4326 = vunpack.c.l.s4 1966171168
        %v4327 = vunpack.c.0.s8 %v4326
        %v4328 = vlaneseq
        %v4329 = vshrl.u32 %v4328, 7
        %v4330 = vsub.s32 %v4327, %v4329
        %v4331 = vrot.slane %v3374, %v4330
        %v4332 = vcombine.high %v4331, %v4331
        %v4334 = vunpack.c.l.s4 1966171168
        %v4335 = vunpack.c.0.s8 %v4334
        %v4336 = vlaneseq
        %v4337 = vshrl.u32 %v4336, 7
        %v4338 = vsub.s32 %v4335, %v4337
        %v4339 = vrot.slane %v4331, %v4338
        %v4341 = vunpack.c.l.s4 1966171168
        %v4342 = vunpack.c.0.s8 %v4341
        %v4343 = vlaneseq
        %v4344 = vshrl.u32 %v4343, 7
        %v4345 = vsub.s32 %v4342, %v4344
        %v4346 = vrot.slane %v4332, %v4345
        %v4347 = vcombine.high %v4339, %v4339
        %v4348 = vcombine.high %v4346, %v4346
        %v4350 = vunpack.c.l.s4 1966171168
        %v4351 = vunpack.c.0.s8 %v4350
        %v4352 = vlaneseq
        %v4353 = vshrl.u32 %v4352, 7
        %v4354 = vsub.s32 %v4351, %v4353
        %v4355 = vrot.slane %v3375, %v4354
        %v4357 = vunpack.c.l.s4 1966171168
        %v4358 = vunpack.c.0.s8 %v4357
        %v4359 = vlaneseq
        %v4360 = vshrl.u32 %v4359, 7
        %v4361 = vsub.s32 %v4358, %v4360
        %v4362 = vrot.slane %v4355, %v4361
        %v4364 = vunpack.c.l.s4 1966171168
        %v4365 = vunpack.c.0.s8 %v4364
        %v4366 = vlaneseq
        %v4367 = vshrl.u32 %v4366, 7
        %v4368 = vsub.s32 %v4365, %v4367
        %v4369 = vrot.slane %v3376, %v4368
        %v4370 = vcombine.high %v4369, %v4369
        %v4372 = vunpack.c.l.s4 1966171168
        %v4373 = vunpack.c.0.s8 %v4372
        %v4374 = vlaneseq
        %v4375 = vshrl.u32 %v4374, 7
        %v4376 = vsub.s32 %v4373, %v4375
        %v4377 = vrot.slane %v4369, %v4376
        %v4379 = vunpack.c.l.s4 1966171168
        %v4380 = vunpack.c.0.s8 %v4379
        %v4381 = vlaneseq
        %v4382 = vshrl.u32 %v4381, 7
        %v4383 = vsub.s32 %v4380, %v4382
        %v4384 = vrot.slane %v4370, %v4383
        %v4385 = vcombine.high %v4377, %v4377
        %v4386 = vcombine.high %v4384, %v4384
        %v4388 = vunpack.c.l.s4 1966171168
        %v4389 = vunpack.c.0.s8 %v4388
        %v4390 = vlaneseq
        %v4391 = vshrl.u32 %v4390, 7
        %v4392 = vsub.s32 %v4389, %v4391
        %v4393 = vrot.slane %v3377, %v4392
        %v4394 = vcombine.high %v4393, %v4393
        %v4396 = vunpack.c.l.s4 1966171168
        %v4397 = vunpack.c.0.s8 %v4396
        %v4398 = vlaneseq
        %v4399 = vshrl.u32 %v4398, 7
        %v4400 = vsub.s32 %v4397, %v4399
        %v4401 = vrot.slane %v4393, %v4400
        %v4403 = vunpack.c.l.s4 1966171168
        %v4404 = vunpack.c.0.s8 %v4403
        %v4405 = vlaneseq
        %v4406 = vshrl.u32 %v4405, 7
        %v4407 = vsub.s32 %v4404, %v4406
        %v4408 = vrot.slane %v4394, %v4407
        %v4409 = vcombine.high %v4401, %v4401
        %v4410 = vcombine.high %v4408, %v4408
        %v4412 = vunpack.c.l.s4 1966171168
        %v4413 = vunpack.c.0.s8 %v4412
        %v4414 = vlaneseq
        %v4415 = vshrl.u32 %v4414, 7
        %v4416 = vsub.s32 %v4413, %v4415
        %v4417 = vrot.slane %v3378, %v4416
        %v4419 = vunpack.c.l.s4 1966171168
        %v4420 = vunpack.c.0.s8 %v4419
        %v4421 = vlaneseq
        %v4422 = vshrl.u32 %v4421, 7
        %v4423 = vsub.s32 %v4420, %v4422
        %v4424 = vrot.slane %v4417, %v4423
        %v4426 = vunpack.c.l.s4 1966171168
        %v4427 = vunpack.c.0.s8 %v4426
        %v4428 = vlaneseq
        %v4429 = vshrl.u32 %v4428, 7
        %v4430 = vsub.s32 %v4427, %v4429
        %v4431 = vrot.slane %v3379, %v4430
        %v4432 = vcombine.high %v4431, %v4431
        %v4434 = vunpack.c.l.s4 1966171168
        %v4435 = vunpack.c.0.s8 %v4434
        %v4436 = vlaneseq
        %v4437 = vshrl.u32 %v4436, 7
        %v4438 = vsub.s32 %v4435, %v4437
        %v4439 = vrot.slane %v4431, %v4438
        %v4441 = vunpack.c.l.s4 1966171168
        %v4442 = vunpack.c.0.s8 %v4441
        %v4443 = vlaneseq
        %v4444 = vshrl.u32 %v4443, 7
        %v4445 = vsub.s32 %v4442, %v4444
        %v4446 = vrot.slane %v4432, %v4445
        %v4447 = vcombine.high %v4439, %v4439
        %v4448 = vcombine.high %v4446, %v4446
        %v4450 = vunpack.c.l.s4 1966171168
        %v4451 = vunpack.c.0.s8 %v4450
        %v4452 = vlaneseq
        %v4453 = vshrl.u32 %v4452, 7
        %v4454 = vsub.s32 %v4451, %v4453
        %v4455 = vrot.slane %v3380, %v4454
        %v4456 = vcombine.high %v4455, %v4455
        %v4458 = vunpack.c.l.s4 1966171168
        %v4459 = vunpack.c.0.s8 %v4458
        %v4460 = vlaneseq
        %v4461 = vshrl.u32 %v4460, 7
        %v4462 = vsub.s32 %v4459, %v4461
        %v4463 = vrot.slane %v4455, %v4462
        %v4465 = vunpack.c.l.s4 1966171168
        %v4466 = vunpack.c.0.s8 %v4465
        %v4467 = vlaneseq
        %v4468 = vshrl.u32 %v4467, 7
        %v4469 = vsub.s32 %v4466, %v4468
        %v4470 = vrot.slane %v4456, %v4469
        %v4471 = vcombine.high %v4463, %v4463
        %v4472 = vcombine.high %v4470, %v4470
        %v4474 = vunpack.c.l.s4 1966171168
        %v4475 = vunpack.c.0.s8 %v4474
        %v4476 = vlaneseq
        %v4477 = vshrl.u32 %v4476, 7
        %v4478 = vsub.s32 %v4475, %v4477
        %v4479 = vrot.slane %v3381, %v4478
        %v4481 = vunpack.c.l.s4 1966171168
        %v4482 = vunpack.c.0.s8 %v4481
        %v4483 = vlaneseq
        %v4484 = vshrl.u32 %v4483, 7
        %v4485 = vsub.s32 %v4482, %v4484
        %v4486 = vrot.slane %v4479, %v4485
        %v4487 = vunpack.i.l.s16 %v3447
        %v4488 = vunpack.i.h.s16 %v3447
        %v4489 = vunpack.i.l.s16 %v3454
        %v4490 = vunpack.i.h.s16 %v3454
        %v4491 = vunpack.i.l.s16 %v3455
        %v4492 = vunpack.i.h.s16 %v3455
        %v4493 = vunpack.i.l.s16 %v3456
        %v4494 = vunpack.i.h.s16 %v3456
        %v4495 = vunpack.i.l.s16 %v3471
        %v4496 = vunpack.i.h.s16 %v3471
        %v4497 = vunpack.i.l.s16 %v3478
        %v4498 = vunpack.i.h.s16 %v3478
        %v4499 = vunpack.i.l.s16 %v3479
        %v4500 = vunpack.i.h.s16 %v3479
        %v4501 = vunpack.i.l.s16 %v3480
        %v4502 = vunpack.i.h.s16 %v3480
        %v4503 = vunpack.i.l.s16 %v3494
        %v4504 = vunpack.i.l.s16 %v3509
        %v4505 = vunpack.i.h.s16 %v3509
        %v4506 = vunpack.i.l.s16 %v3516
        %v4507 = vunpack.i.h.s16 %v3516
        %v4508 = vunpack.i.l.s16 %v3517
        %v4509 = vunpack.i.h.s16 %v3517
        %v4510 = vunpack.i.l.s16 %v3518
        %v4511 = vunpack.i.h.s16 %v3518
        %v4512 = vunpack.i.l.s16 %v3533
        %v4513 = vunpack.i.h.s16 %v3533
        %v4514 = vunpack.i.l.s16 %v3540
        %v4515 = vunpack.i.h.s16 %v3540
        %v4516 = vunpack.i.l.s16 %v3541
        %v4517 = vunpack.i.h.s16 %v3541
        %v4518 = vunpack.i.l.s16 %v3542
        %v4519 = vunpack.i.h.s16 %v3542
        %v4520 = vunpack.i.l.s16 %v3556
        %v4521 = vunpack.i.l.s16 %v3571
        %v4522 = vunpack.i.h.s16 %v3571
        %v4523 = vunpack.i.l.s16 %v3578
        %v4524 = vunpack.i.h.s16 %v3578
        %v4525 = vunpack.i.l.s16 %v3579
        %v4526 = vunpack.i.h.s16 %v3579
        %v4527 = vunpack.i.l.s16 %v3580
        %v4528 = vunpack.i.h.s16 %v3580
        %v4529 = vunpack.i.l.s16 %v3595
        %v4530 = vunpack.i.h.s16 %v3595
        %v4531 = vunpack.i.l.s16 %v3602
        %v4532 = vunpack.i.h.s16 %v3602
        %v4533 = vunpack.i.l.s16 %v3603
        %v4534 = vunpack.i.h.s16 %v3603
        %v4535 = vunpack.i.l.s16 %v3604
        %v4536 = vunpack.i.h.s16 %v3604
        %v4537 = vunpack.i.l.s16 %v3618
        %v4538 = vunpack.i.l.s16 %v3633
        %v4539 = vunpack.i.h.s16 %v3633
        %v4540 = vunpack.i.l.s16 %v3640
        %v4541 = vunpack.i.h.s16 %v3640
        %v4542 = vunpack.i.l.s16 %v3641
        %v4543 = vunpack.i.h.s16 %v3641
        %v4544 = vunpack.i.l.s16 %v3642
        %v4545 = vunpack.i.h.s16 %v3642
        %v4546 = vunpack.i.l.s16 %v3657
        %v4547 = vunpack.i.h.s16 %v3657
        %v4548 = vunpack.i.l.s16 %v3664
        %v4549 = vunpack.i.h.s16 %v3664
        %v4550 = vunpack.i.l.s16 %v3665
        %v4551 = vunpack.i.h.s16 %v3665
        %v4552 = vunpack.i.l.s16 %v3666
        %v4553 = vunpack.i.h.s16 %v3666
        %v4554 = vunpack.i.l.s16 %v3680
        %v4555 = vunpack.i.l.s16 %v3695
        %v4556 = vunpack.i.h.s16 %v3695
        %v4557 = vunpack.i.l.s16 %v3702
        %v4558 = vunpack.i.h.s16 %v3702
        %v4559 = vunpack.i.l.s16 %v3703
        %v4560 = vunpack.i.h.s16 %v3703
        %v4561 = vunpack.i.l.s16 %v3704
        %v4562 = vunpack.i.h.s16 %v3704
        %v4563 = vunpack.i.l.s16 %v3719
        %v4564 = vunpack.i.h.s16 %v3719
        %v4565 = vunpack.i.l.s16 %v3726
        %v4566 = vunpack.i.h.s16 %v3726
        %v4567 = vunpack.i.l.s16 %v3727
        %v4568 = vunpack.i.h.s16 %v3727
        %v4569 = vunpack.i.l.s16 %v3728
        %v4570 = vunpack.i.h.s16 %v3728
        %v4571 = vunpack.i.l.s16 %v3742
        %v4572 = vunpack.i.l.s16 %v3757
        %v4573 = vunpack.i.h.s16 %v3757
        %v4574 = vunpack.i.l.s16 %v3764
        %v4575 = vunpack.i.h.s16 %v3764
        %v4576 = vunpack.i.l.s16 %v3765
        %v4577 = vunpack.i.h.s16 %v3765
        %v4578 = vunpack.i.l.s16 %v3766
        %v4579 = vunpack.i.h.s16 %v3766
        %v4580 = vunpack.i.l.s16 %v3781
        %v4581 = vunpack.i.h.s16 %v3781
        %v4582 = vunpack.i.l.s16 %v3788
        %v4583 = vunpack.i.h.s16 %v3788
        %v4584 = vunpack.i.l.s16 %v3789
        %v4585 = vunpack.i.h.s16 %v3789
        %v4586 = vunpack.i.l.s16 %v3790
        %v4587 = vunpack.i.h.s16 %v3790
        %v4588 = vunpack.i.l.s16 %v3804
        %v4589 = vunpack.i.l.s16 %v3819
        %v4590 = vunpack.i.h.s16 %v3819
        %v4591 = vunpack.i.l.s16 %v3826
        %v4592 = vunpack.i.h.s16 %v3826
        %v4593 = vunpack.i.l.s16 %v3827
        %v4594 = vunpack.i.h.s16 %v3827
        %v4595 = vunpack.i.l.s16 %v3828
        %v4596 = vunpack.i.h.s16 %v3828
        %v4597 = vunpack.i.l.s16 %v3843
        %v4598 = vunpack.i.h.s16 %v3843
        %v4599 = vunpack.i.l.s16 %v3850
        %v4600 = vunpack.i.h.s16 %v3850
        %v4601 = vunpack.i.l.s16 %v3851
        %v4602 = vunpack.i.h.s16 %v3851
        %v4603 = vunpack.i.l.s16 %v3852
        %v4604 = vunpack.i.h.s16 %v3852
        %v4605 = vunpack.i.l.s16 %v3866
        %v4606 = vunpack.i.l.s16 %v3881
        %v4607 = vunpack.i.h.s16 %v3881
        %v4608 = vunpack.i.l.s16 %v3888
        %v4609 = vunpack.i.h.s16 %v3888
        %v4610 = vunpack.i.l.s16 %v3889
        %v4611 = vunpack.i.h.s16 %v3889
        %v4612 = vunpack.i.l.s16 %v3890
        %v4613 = vunpack.i.h.s16 %v3890
        %v4614 = vunpack.i.l.s16 %v3905
        %v4615 = vunpack.i.h.s16 %v3905
        %v4616 = vunpack.i.l.s16 %v3912
        %v4617 = vunpack.i.h.s16 %v3912
        %v4618 = vunpack.i.l.s16 %v3913
        %v4619 = vunpack.i.h.s16 %v3913
        %v4620 = vunpack.i.l.s16 %v3914
        %v4621 = vunpack.i.h.s16 %v3914
        %v4622 = vunpack.i.l.s16 %v3928
        %v4623 = vunpack.i.l.s16 %v3943
        %v4624 = vunpack.i.h.s16 %v3943
        %v4625 = vunpack.i.l.s16 %v3950
        %v4626 = vunpack.i.h.s16 %v3950
        %v4627 = vunpack.i.l.s16 %v3951
        %v4628 = vunpack.i.h.s16 %v3951
        %v4629 = vunpack.i.l.s16 %v3952
        %v4630 = vunpack.i.h.s16 %v3952
        %v4631 = vunpack.i.l.s16 %v3967
        %v4632 = vunpack.i.h.s16 %v3967
        %v4633 = vunpack.i.l.s16 %v3974
        %v4634 = vunpack.i.h.s16 %v3974
        %v4635 = vunpack.i.l.s16 %v3975
        %v4636 = vunpack.i.h.s16 %v3975
        %v4637 = vunpack.i.l.s16 %v3976
        %v4638 = vunpack.i.h.s16 %v3976
        %v4639 = vunpack.i.l.s16 %v3990
        %v4640 = vunpack.i.l.s16 %v4005
        %v4641 = vunpack.i.h.s16 %v4005
        %v4642 = vunpack.i.l.s16 %v4012
        %v4643 = vunpack.i.h.s16 %v4012
        %v4644 = vunpack.i.l.s16 %v4013
        %v4645 = vunpack.i.h.s16 %v4013
        %v4646 = vunpack.i.l.s16 %v4014
        %v4647 = vunpack.i.h.s16 %v4014
        %v4648 = vunpack.i.l.s16 %v4029
        %v4649 = vunpack.i.h.s16 %v4029
        %v4650 = vunpack.i.l.s16 %v4036
        %v4651 = vunpack.i.h.s16 %v4036
        %v4652 = vunpack.i.l.s16 %v4037
        %v4653 = vunpack.i.h.s16 %v4037
        %v4654 = vunpack.i.l.s16 %v4038
        %v4655 = vunpack.i.h.s16 %v4038
        %v4656 = vunpack.i.l.s16 %v4052
        %v4657 = vunpack.i.l.s16 %v4067
        %v4658 = vunpack.i.h.s16 %v4067
        %v4659 = vunpack.i.l.s16 %v4074
        %v4660 = vunpack.i.h.s16 %v4074
        %v4661 = vunpack.i.l.s16 %v4075
        %v4662 = vunpack.i.h.s16 %v4075
        %v4663 = vunpack.i.l.s16 %v4076
        %v4664 = vunpack.i.h.s16 %v4076
        %v4665 = vunpack.i.l.s16 %v4091
        %v4666 = vunpack.i.h.s16 %v4091
        %v4667 = vunpack.i.l.s16 %v4098
        %v4668 = vunpack.i.h.s16 %v4098
        %v4669 = vunpack.i.l.s16 %v4099
        %v4670 = vunpack.i.h.s16 %v4099
        %v4671 = vunpack.i.l.s16 %v4100
        %v4672 = vunpack.i.h.s16 %v4100
        %v4673 = vunpack.i.l.s16 %v4114
        %v4674 = vunpack.i.l.s16 %v4129
        %v4675 = vunpack.i.h.s16 %v4129
        %v4676 = vunpack.i.l.s16 %v4136
        %v4677 = vunpack.i.h.s16 %v4136
        %v4678 = vunpack.i.l.s16 %v4137
        %v4679 = vunpack.i.h.s16 %v4137
        %v4680 = vunpack.i.l.s16 %v4138
        %v4681 = vunpack.i.h.s16 %v4138
        %v4682 = vunpack.i.l.s16 %v4153
        %v4683 = vunpack.i.h.s16 %v4153
        %v4684 = vunpack.i.l.s16 %v4160
        %v4685 = vunpack.i.h.s16 %v4160
        %v4686 = vunpack.i.l.s16 %v4161
        %v4687 = vunpack.i.h.s16 %v4161
        %v4688 = vunpack.i.l.s16 %v4162
        %v4689 = vunpack.i.h.s16 %v4162
        %v4690 = vunpack.i.l.s16 %v4176
        %v4691 = vunpack.i.l.s16 %v4191
        %v4692 = vunpack.i.h.s16 %v4191
        %v4693 = vunpack.i.l.s16 %v4198
        %v4694 = vunpack.i.h.s16 %v4198
        %v4695 = vunpack.i.l.s16 %v4199
        %v4696 = vunpack.i.h.s16 %v4199
        %v4697 = vunpack.i.l.s16 %v4200
        %v4698 = vunpack.i.h.s16 %v4200
        %v4699 = vunpack.i.l.s16 %v4215
        %v4700 = vunpack.i.h.s16 %v4215
        %v4701 = vunpack.i.l.s16 %v4222
        %v4702 = vunpack.i.h.s16 %v4222
        %v4703 = vunpack.i.l.s16 %v4223
        %v4704 = vunpack.i.h.s16 %v4223
        %v4705 = vunpack.i.l.s16 %v4224
        %v4706 = vunpack.i.h.s16 %v4224
        %v4707 = vunpack.i.l.s16 %v4238
        %v4708 = vunpack.i.l.s16 %v4253
        %v4709 = vunpack.i.h.s16 %v4253
        %v4710 = vunpack.i.l.s16 %v4260
        %v4711 = vunpack.i.h.s16 %v4260
        %v4712 = vunpack.i.l.s16 %v4261
        %v4713 = vunpack.i.h.s16 %v4261
        %v4714 = vunpack.i.l.s16 %v4262
        %v4715 = vunpack.i.h.s16 %v4262
        %v4716 = vunpack.i.l.s16 %v4277
        %v4717 = vunpack.i.h.s16 %v4277
        %v4718 = vunpack.i.l.s16 %v4284
        %v4719 = vunpack.i.h.s16 %v4284
        %v4720 = vunpack.i.l.s16 %v4285
        %v4721 = vunpack.i.h.s16 %v4285
        %v4722 = vunpack.i.l.s16 %v4286
        %v4723 = vunpack.i.h.s16 %v4286
        %v4724 = vunpack.i.l.s16 %v4300
        %v4725 = vunpack.i.l.s16 %v4315
        %v4726 = vunpack.i.h.s16 %v4315
        %v4727 = vunpack.i.l.s16 %v4322
        %v4728 = vunpack.i.h.s16 %v4322
        %v4729 = vunpack.i.l.s16 %v4323
        %v4730 = vunpack.i.h.s16 %v4323
        %v4731 = vunpack.i.l.s16 %v4324
        %v4732 = vunpack.i.h.s16 %v4324
        %v4733 = vunpack.i.l.s16 %v4339
        %v4734 = vunpack.i.h.s16 %v4339
        %v4735 = vunpack.i.l.s16 %v4346
        %v4736 = vunpack.i.h.s16 %v4346
        %v4737 = vunpack.i.l.s16 %v4347
        %v4738 = vunpack.i.h.s16 %v4347
        %v4739 = vunpack.i.l.s16 %v4348
        %v4740 = vunpack.i.h.s16 %v4348
        %v4741 = vunpack.i.l.s16 %v4362
        %v4742 = vunpack.i.l.s16 %v4377
        %v4743 = vunpack.i.h.s16 %v4377
        %v4744 = vunpack.i.l.s16 %v4384
        %v4745 = vunpack.i.h.s16 %v4384
        %v4746 = vunpack.i.l.s16 %v4385
        %v4747 = vunpack.i.h.s16 %v4385
        %v4748 = vunpack.i.l.s16 %v4386
        %v4749 = vunpack.i.h.s16 %v4386
        %v4750 = vunpack.i.l.s16 %v4401
        %v4751 = vunpack.i.h.s16 %v4401
        %v4752 = vunpack.i.l.s16 %v4408
        %v4753 = vunpack.i.h.s16 %v4408
        %v4754 = vunpack.i.l.s16 %v4409
        %v4755 = vunpack.i.h.s16 %v4409
        %v4756 = vunpack.i.l.s16 %v4410
        %v4757 = vunpack.i.h.s16 %v4410
        %v4758 = vunpack.i.l.s16 %v4424
        %v4759 = vunpack.i.l.s16 %v4439
        %v4760 = vunpack.i.h.s16 %v4439
        %v4761 = vunpack.i.l.s16 %v4446
        %v4762 = vunpack.i.h.s16 %v4446
        %v4763 = vunpack.i.l.s16 %v4447
        %v4764 = vunpack.i.h.s16 %v4447
        %v4765 = vunpack.i.l.s16 %v4448
        %v4766 = vunpack.i.h.s16 %v4448
        %v4767 = vunpack.i.l.s16 %v4463
        %v4768 = vunpack.i.h.s16 %v4463
        %v4769 = vunpack.i.l.s16 %v4470
        %v4770 = vunpack.i.h.s16 %v4470
        %v4771 = vunpack.i.l.s16 %v4471
        %v4772 = vunpack.i.h.s16 %v4471
        %v4773 = vunpack.i.l.s16 %v4472
        %v4774 = vunpack.i.h.s16 %v4472
        %v4775 = vunpack.i.l.s16 %v4486
        %v4776 = vpack.i.b16 %v4488, %v4487
        %v4777 = vpack.i.b16 %v4490, %v4489
        %v4778 = vpack.i.b16 %v4492, %v4491
        %v4779 = vpack.i.b16 %v4494, %v4493
        %v4780 = vpack.i.b16 %v4496, %v4495
        %v4781 = vpack.i.b16 %v4498, %v4497
        %v4782 = vpack.i.b16 %v4500, %v4499
        %v4783 = vpack.i.b16 %v4502, %v4501
        %v4784 = vpack.i.b16 %v4504, %v4503
        %v4785 = vpack.i.b16 %v4506, %v4505
        %v4786 = vpack.i.b16 %v4508, %v4507
        %v4787 = vpack.i.b16 %v4510, %v4509
        %v4788 = vpack.i.b16 %v4512, %v4511
        %v4789 = vpack.i.b16 %v4514, %v4513
        %v4790 = vpack.i.b16 %v4516, %v4515
        %v4791 = vpack.i.b16 %v4518, %v4517
        %v4792 = vpack.i.b16 %v4520, %v4519
        %v4793 = vpack.i.b16 %v4522, %v4521
        %v4794 = vpack.i.b16 %v4524, %v4523
        %v4795 = vpack.i.b16 %v4526, %v4525
        %v4796 = vpack.i.b16 %v4528, %v4527
        %v4797 = vpack.i.b16 %v4530, %v4529
        %v4798 = vpack.i.b16 %v4532, %v4531
        %v4799 = vpack.i.b16 %v4534, %v4533
        %v4800 = vpack.i.b16 %v4536, %v4535
        %v4801 = vpack.i.b16 %v4538, %v4537
        %v4802 = vpack.i.b16 %v4540, %v4539
        %v4803 = vpack.i.b16 %v4542, %v4541
        %v4804 = vpack.i.b16 %v4544, %v4543
        %v4805 = vpack.i.b16 %v4546, %v4545
        %v4806 = vpack.i.b16 %v4548, %v4547
        %v4807 = vpack.i.b16 %v4550, %v4549
        %v4808 = vpack.i.b16 %v4552, %v4551
        %v4809 = vpack.i.b16 %v4554, %v4553
        %v4810 = vpack.i.b16 %v4556, %v4555
        %v4811 = vpack.i.b16 %v4558, %v4557
        %v4812 = vpack.i.b16 %v4560, %v4559
        %v4813 = vpack.i.b16 %v4562, %v4561
        %v4814 = vpack.i.b16 %v4564, %v4563
        %v4815 = vpack.i.b16 %v4566, %v4565
        %v4816 = vpack.i.b16 %v4568, %v4567
        %v4817 = vpack.i.b16 %v4570, %v4569
        %v4818 = vpack.i.b16 %v4572, %v4571
        %v4819 = vpack.i.b16 %v4574, %v4573
        %v4820 = vpack.i.b16 %v4576, %v4575
        %v4821 = vpack.i.b16 %v4578, %v4577
        %v4822 = vpack.i.b16 %v4580, %v4579
        %v4823 = vpack.i.b16 %v4582, %v4581
        %v4824 = vpack.i.b16 %v4584, %v4583
        %v4825 = vpack.i.b16 %v4586, %v4585
        %v4826 = vpack.i.b16 %v4588, %v4587
        %v4827 = vpack.i.b16 %v4590, %v4589
        %v4828 = vpack.i.b16 %v4592, %v4591
        %v4829 = vpack.i.b16 %v4594, %v4593
        %v4830 = vpack.i.b16 %v4596, %v4595
        %v4831 = vpack.i.b16 %v4598, %v4597
        %v4832 = vpack.i.b16 %v4600, %v4599
        %v4833 = vpack.i.b16 %v4602, %v4601
        %v4834 = vpack.i.b16 %v4604, %v4603
        %v4835 = vpack.i.b16 %v4606, %v4605
        %v4836 = vpack.i.b16 %v4608, %v4607
        %v4837 = vpack.i.b16 %v4610, %v4609
        %v4838 = vpack.i.b16 %v4612, %v4611
        %v4839 = vpack.i.b16 %v4614, %v4613
        %v4840 = vpack.i.b16 %v4616, %v4615
        %v4841 = vpack.i.b16 %v4618, %v4617
        %v4842 = vpack.i.b16 %v4620, %v4619
        %v4843 = vpack.i.b16 %v4622, %v4621
        %v4844 = vpack.i.b16 %v4624, %v4623
        %v4845 = vpack.i.b16 %v4626, %v4625
        %v4846 = vpack.i.b16 %v4628, %v4627
        %v4847 = vpack.i.b16 %v4630, %v4629
        %v4848 = vpack.i.b16 %v4632, %v4631
        %v4849 = vpack.i.b16 %v4634, %v4633
        %v4850 = vpack.i.b16 %v4636, %v4635
        %v4851 = vpack.i.b16 %v4638, %v4637
        %v4852 = vpack.i.b16 %v4640, %v4639
        %v4853 = vpack.i.b16 %v4642, %v4641
        %v4854 = vpack.i.b16 %v4644, %v4643
        %v4855 = vpack.i.b16 %v4646, %v4645
        %v4856 = vpack.i.b16 %v4648, %v4647
        %v4857 = vpack.i.b16 %v4650, %v4649
        %v4858 = vpack.i.b16 %v4652, %v4651
        %v4859 = vpack.i.b16 %v4654, %v4653
        %v4860 = vpack.i.b16 %v4656, %v4655
        %v4861 = vpack.i.b16 %v4658, %v4657
        %v4862 = vpack.i.b16 %v4660, %v4659
        %v4863 = vpack.i.b16 %v4662, %v4661
        %v4864 = vpack.i.b16 %v4664, %v4663
        %v4865 = vpack.i.b16 %v4666, %v4665
        %v4866 = vpack.i.b16 %v4668, %v4667
        %v4867 = vpack.i.b16 %v4670, %v4669
        %v4868 = vpack.i.b16 %v4672, %v4671
        %v4869 = vpack.i.b16 %v4674, %v4673
        %v4870 = vpack.i.b16 %v4676, %v4675
        %v4871 = vpack.i.b16 %v4678, %v4677
        %v4872 = vpack.i.b16 %v4680, %v4679
        %v4873 = vpack.i.b16 %v4682, %v4681
        %v4874 = vpack.i.b16 %v4684, %v4683
        %v4875 = vpack.i.b16 %v4686, %v4685
        %v4876 = vpack.i.b16 %v4688, %v4687
        %v4877 = vpack.i.b16 %v4690, %v4689
        %v4878 = vpack.i.b16 %v4692, %v4691
        %v4879 = vpack.i.b16 %v4694, %v4693
        %v4880 = vpack.i.b16 %v4696, %v4695
        %v4881 = vpack.i.b16 %v4698, %v4697
        %v4882 = vpack.i.b16 %v4700, %v4699
        %v4883 = vpack.i.b16 %v4702, %v4701
        %v4884 = vpack.i.b16 %v4704, %v4703
        %v4885 = vpack.i.b16 %v4706, %v4705
        %v4886 = vpack.i.b16 %v4708, %v4707
        %v4887 = vpack.i.b16 %v4710, %v4709
        %v4888 = vpack.i.b16 %v4712, %v4711
        %v4889 = vpack.i.b16 %v4714, %v4713
        %v4890 = vpack.i.b16 %v4716, %v4715
        %v4891 = vpack.i.b16 %v4718, %v4717
        %v4892 = vpack.i.b16 %v4720, %v4719
        %v4893 = vpack.i.b16 %v4722, %v4721
        %v4894 = vpack.i.b16 %v4724, %v4723
        %v4895 = vpack.i.b16 %v4726, %v4725
        %v4896 = vpack.i.b16 %v4728, %v4727
        %v4897 = vpack.i.b16 %v4730, %v4729
        %v4898 = vpack.i.b16 %v4732, %v4731
        %v4899 = vpack.i.b16 %v4734, %v4733
        %v4900 = vpack.i.b16 %v4736, %v4735
        %v4901 = vpack.i.b16 %v4738, %v4737
        %v4902 = vpack.i.b16 %v4740, %v4739
        %v4903 = vpack.i.b16 %v4742, %v4741
        %v4904 = vpack.i.b16 %v4744, %v4743
        %v4905 = vpack.i.b16 %v4746, %v4745
        %v4906 = vpack.i.b16 %v4748, %v4747
        %v4907 = vpack.i.b16 %v4750, %v4749
        %v4908 = vpack.i.b16 %v4752, %v4751
        %v4909 = vpack.i.b16 %v4754, %v4753
        %v4910 = vpack.i.b16 %v4756, %v4755
        %v4911 = vpack.i.b16 %v4758, %v4757
        %v4912 = vpack.i.b16 %v4760, %v4759
        %v4913 = vpack.i.b16 %v4762, %v4761
        %v4914 = vpack.i.b16 %v4764, %v4763
        %v4915 = vpack.i.b16 %v4766, %v4765
        %v4916 = vpack.i.b16 %v4768, %v4767
        %v4917 = vpack.i.b16 %v4770, %v4769
        %v4918 = vpack.i.b16 %v4772, %v4771
        %v4919 = vpack.i.b16 %v4774, %v4773
        %v4921 = vcombine.low %v4776, %v4778
        %v4922 = vcombine.low %v4777, %v4779
        %v4924 = vunpack.c.l.s4 1935823168
        %v4925 = vunpack.c.0.s8 %v4924
        %v4926 = vlaneseq
        %v4927 = vshrl.u32 %v4926, 7
        %v4928 = vsub.s32 %v4925, %v4927
        %v4929 = vrot.slane %v4921, %v4928
        %v4931 = vunpack.c.l.s4 1935823168
        %v4932 = vunpack.c.0.s8 %v4931
        %v4933 = vlaneseq
        %v4934 = vshrl.u32 %v4933, 7
        %v4935 = vsub.s32 %v4932, %v4934
        %v4936 = vrot.slane %v4922, %v4935
        %v4937 = vcombine.low %v4929, %v4936
        %v4939 = vunpack.c.l.s4 1935823168
        %v4940 = vunpack.c.0.s8 %v4939
        %v4941 = vlaneseq
        %v4942 = vshrl.u32 %v4941, 7
        %v4943 = vsub.s32 %v4940, %v4942
        %v4944 = vrot.slane %v4937, %v4943
        %v4945 = vcombine.low %v4780, %v4782
        %v4946 = vcombine.low %v4781, %v4783
        %v4948 = vunpack.c.l.s4 1935823168
        %v4949 = vunpack.c.0.s8 %v4948
        %v4950 = vlaneseq
        %v4951 = vshrl.u32 %v4950, 7
        %v4952 = vsub.s32 %v4949, %v4951
        %v4953 = vrot.slane %v4945, %v4952
        %v4955 = vunpack.c.l.s4 1935823168
        %v4956 = vunpack.c.0.s8 %v4955
        %v4957 = vlaneseq
        %v4958 = vshrl.u32 %v4957, 7
        %v4959 = vsub.s32 %v4956, %v4958
        %v4960 = vrot.slane %v4946, %v4959
        %v4961 = vcombine.low %v4953, %v4960
        %v4963 = vunpack.c.l.s4 1935823168
        %v4964 = vunpack.c.0.s8 %v4963
        %v4965 = vlaneseq
        %v4966 = vshrl.u32 %v4965, 7
        %v4967 = vsub.s32 %v4964, %v4966
        %v4968 = vrot.slane %v4961, %v4967
        %v4969 = vcombine.low %v4784, %v4786
        %v4970 = vcombine.low %v4785, %v4787
        %v4972 = vunpack.c.l.s4 1935823168
        %v4973 = vunpack.c.0.s8 %v4972
        %v4974 = vlaneseq
        %v4975 = vshrl.u32 %v4974, 7
        %v4976 = vsub.s32 %v4973, %v4975
        %v4977 = vrot.slane %v4969, %v4976
        %v4979 = vunpack.c.l.s4 1935823168
        %v4980 = vunpack.c.0.s8 %v4979
        %v4981 = vlaneseq
        %v4982 = vshrl.u32 %v4981, 7
        %v4983 = vsub.s32 %v4980, %v4982
        %v4984 = vrot.slane %v4970, %v4983
        %v4985 = vcombine.low %v4977, %v4984
        %v4987 = vunpack.c.l.s4 1935823168
        %v4988 = vunpack.c.0.s8 %v4987
        %v4989 = vlaneseq
        %v4990 = vshrl.u32 %v4989, 7
        %v4991 = vsub.s32 %v4988, %v4990
        %v4992 = vrot.slane %v4985, %v4991
        %v4993 = vcombine.low %v4788, %v4790
        %v4994 = vcombine.low %v4789, %v4791
        %v4996 = vunpack.c.l.s4 1935823168
        %v4997 = vunpack.c.0.s8 %v4996
        %v4998 = vlaneseq
        %v4999 = vshrl.u32 %v4998, 7
        %v5000 = vsub.s32 %v4997, %v4999
        %v5001 = vrot.slane %v4993, %v5000
        %v5003 = vunpack.c.l.s4 1935823168
        %v5004 = vunpack.c.0.s8 %v5003
        %v5005 = vlaneseq
        %v5006 = vshrl.u32 %v5005, 7
        %v5007 = vsub.s32 %v5004, %v5006
        %v5008 = vrot.slane %v4994, %v5007
        %v5009 = vcombine.low %v5001, %v5008
        %v5011 = vunpack.c.l.s4 1935823168
        %v5012 = vunpack.c.0.s8 %v5011
        %v5013 = vlaneseq
        %v5014 = vshrl.u32 %v5013, 7
        %v5015 = vsub.s32 %v5012, %v5014
        %v5016 = vrot.slane %v5009, %v5015
        %v5017 = vcombine.low %v4792, %v4794
        %v5018 = vcombine.low %v4793, %v4795
        %v5020 = vunpack.c.l.s4 1935823168
        %v5021 = vunpack.c.0.s8 %v5020
        %v5022 = vlaneseq
        %v5023 = vshrl.u32 %v5022, 7
        %v5024 = vsub.s32 %v5021, %v5023
        %v5025 = vrot.slane %v5017, %v5024
        %v5027 = vunpack.c.l.s4 1935823168
        %v5028 = vunpack.c.0.s8 %v5027
        %v5029 = vlaneseq
        %v5030 = vshrl.u32 %v5029, 7
        %v5031 = vsub.s32 %v5028, %v5030
        %v5032 = vrot.slane %v5018, %v5031
        %v5033 = vcombine.low %v5025, %v5032
        %v5035 = vunpack.c.l.s4 1935823168
        %v5036 = vunpack.c.0.s8 %v5035
        %v5037 = vlaneseq
        %v5038 = vshrl.u32 %v5037, 7
        %v5039 = vsub.s32 %v5036, %v5038
        %v5040 = vrot.slane %v5033, %v5039
        %v5041 = vcombine.low %v4796, %v4798
        %v5042 = vcombine.low %v4797, %v4799
        %v5044 = vunpack.c.l.s4 1935823168
        %v5045 = vunpack.c.0.s8 %v5044
        %v5046 = vlaneseq
        %v5047 = vshrl.u32 %v5046, 7
        %v5048 = vsub.s32 %v5045, %v5047
        %v5049 = vrot.slane %v5041, %v5048
        %v5051 = vunpack.c.l.s4 1935823168
        %v5052 = vunpack.c.0.s8 %v5051
        %v5053 = vlaneseq
        %v5054 = vshrl.u32 %v5053, 7
        %v5055 = vsub.s32 %v5052, %v5054
        %v5056 = vrot.slane %v5042, %v5055
        %v5057 = vcombine.low %v5049, %v5056
        %v5059 = vunpack.c.l.s4 1935823168
        %v5060 = vunpack.c.0.s8 %v5059
        %v5061 = vlaneseq
        %v5062 = vshrl.u32 %v5061, 7
        %v5063 = vsub.s32 %v5060, %v5062
        %v5064 = vrot.slane %v5057, %v5063
        %v5065 = vcombine.low %v4800, %v4802
        %v5066 = vcombine.low %v4801, %v4803
        %v5068 = vunpack.c.l.s4 1935823168
        %v5069 = vunpack.c.0.s8 %v5068
        %v5070 = vlaneseq
        %v5071 = vshrl.u32 %v5070, 7
        %v5072 = vsub.s32 %v5069, %v5071
        %v5073 = vrot.slane %v5065, %v5072
        %v5075 = vunpack.c.l.s4 1935823168
        %v5076 = vunpack.c.0.s8 %v5075
        %v5077 = vlaneseq
        %v5078 = vshrl.u32 %v5077, 7
        %v5079 = vsub.s32 %v5076, %v5078
        %v5080 = vrot.slane %v5066, %v5079
        %v5081 = vcombine.low %v5073, %v5080
        %v5083 = vunpack.c.l.s4 1935823168
        %v5084 = vunpack.c.0.s8 %v5083
        %v5085 = vlaneseq
        %v5086 = vshrl.u32 %v5085, 7
        %v5087 = vsub.s32 %v5084, %v5086
        %v5088 = vrot.slane %v5081, %v5087
        %v5089 = vcombine.low %v4804, %v4806
        %v5090 = vcombine.low %v4805, %v4807
        %v5092 = vunpack.c.l.s4 1935823168
        %v5093 = vunpack.c.0.s8 %v5092
        %v5094 = vlaneseq
        %v5095 = vshrl.u32 %v5094, 7
        %v5096 = vsub.s32 %v5093, %v5095
        %v5097 = vrot.slane %v5089, %v5096
        %v5099 = vunpack.c.l.s4 1935823168
        %v5100 = vunpack.c.0.s8 %v5099
        %v5101 = vlaneseq
        %v5102 = vshrl.u32 %v5101, 7
        %v5103 = vsub.s32 %v5100, %v5102
        %v5104 = vrot.slane %v5090, %v5103
        %v5105 = vcombine.low %v5097, %v5104
        %v5107 = vunpack.c.l.s4 1935823168
        %v5108 = vunpack.c.0.s8 %v5107
        %v5109 = vlaneseq
        %v5110 = vshrl.u32 %v5109, 7
        %v5111 = vsub.s32 %v5108, %v5110
        %v5112 = vrot.slane %v5105, %v5111
        %v5113 = vcombine.low %v4808, %v4810
        %v5114 = vcombine.low %v4809, %v4811
        %v5116 = vunpack.c.l.s4 1935823168
        %v5117 = vunpack.c.0.s8 %v5116
        %v5118 = vlaneseq
        %v5119 = vshrl.u32 %v5118, 7
        %v5120 = vsub.s32 %v5117, %v5119
        %v5121 = vrot.slane %v5113, %v5120
        %v5123 = vunpack.c.l.s4 1935823168
        %v5124 = vunpack.c.0.s8 %v5123
        %v5125 = vlaneseq
        %v5126 = vshrl.u32 %v5125, 7
        %v5127 = vsub.s32 %v5124, %v5126
        %v5128 = vrot.slane %v5114, %v5127
        %v5129 = vcombine.low %v5121, %v5128
        %v5131 = vunpack.c.l.s4 1935823168
        %v5132 = vunpack.c.0.s8 %v5131
        %v5133 = vlaneseq
        %v5134 = vshrl.u32 %v5133, 7
        %v5135 = vsub.s32 %v5132, %v5134
        %v5136 = vrot.slane %v5129, %v5135
        %v5137 = vcombine.low %v4812, %v4814
        %v5138 = vcombine.low %v4813, %v4815
        %v5140 = vunpack.c.l.s4 1935823168
        %v5141 = vunpack.c.0.s8 %v5140
        %v5142 = vlaneseq
        %v5143 = vshrl.u32 %v5142, 7
        %v5144 = vsub.s32 %v5141, %v5143
        %v5145 = vrot.slane %v5137, %v5144
        %v5147 = vunpack.c.l.s4 1935823168
        %v5148 = vunpack.c.0.s8 %v5147
        %v5149 = vlaneseq
        %v5150 = vshrl.u32 %v5149, 7
        %v5151 = vsub.s32 %v5148, %v5150
        %v5152 = vrot.slane %v5138, %v5151
        %v5153 = vcombine.low %v5145, %v5152
        %v5155 = vunpack.c.l.s4 1935823168
        %v5156 = vunpack.c.0.s8 %v5155
        %v5157 = vlaneseq
        %v5158 = vshrl.u32 %v5157, 7
        %v5159 = vsub.s32 %v5156, %v5158
        %v5160 = vrot.slane %v5153, %v5159
        %v5161 = vcombine.low %v4816, %v4818
        %v5162 = vcombine.low %v4817, %v4819
        %v5164 = vunpack.c.l.s4 1935823168
        %v5165 = vunpack.c.0.s8 %v5164
        %v5166 = vlaneseq
        %v5167 = vshrl.u32 %v5166, 7
        %v5168 = vsub.s32 %v5165, %v5167
        %v5169 = vrot.slane %v5161, %v5168
        %v5171 = vunpack.c.l.s4 1935823168
        %v5172 = vunpack.c.0.s8 %v5171
        %v5173 = vlaneseq
        %v5174 = vshrl.u32 %v5173, 7
        %v5175 = vsub.s32 %v5172, %v5174
        %v5176 = vrot.slane %v5162, %v5175
        %v5177 = vcombine.low %v5169, %v5176
        %v5179 = vunpack.c.l.s4 1935823168
        %v5180 = vunpack.c.0.s8 %v5179
        %v5181 = vlaneseq
        %v5182 = vshrl.u32 %v5181, 7
        %v5183 = vsub.s32 %v5180, %v5182
        %v5184 = vrot.slane %v5177, %v5183
        %v5185 = vcombine.low %v4820, %v4822
        %v5186 = vcombine.low %v4821, %v4823
        %v5188 = vunpack.c.l.s4 1935823168
        %v5189 = vunpack.c.0.s8 %v5188
        %v5190 = vlaneseq
        %v5191 = vshrl.u32 %v5190, 7
        %v5192 = vsub.s32 %v5189, %v5191
        %v5193 = vrot.slane %v5185, %v5192
        %v5195 = vunpack.c.l.s4 1935823168
        %v5196 = vunpack.c.0.s8 %v5195
        %v5197 = vlaneseq
        %v5198 = vshrl.u32 %v5197, 7
        %v5199 = vsub.s32 %v5196, %v5198
        %v5200 = vrot.slane %v5186, %v5199
        %v5201 = vcombine.low %v5193, %v5200
        %v5203 = vunpack.c.l.s4 1935823168
        %v5204 = vunpack.c.0.s8 %v5203
        %v5205 = vlaneseq
        %v5206 = vshrl.u32 %v5205, 7
        %v5207 = vsub.s32 %v5204, %v5206
        %v5208 = vrot.slane %v5201, %v5207
        %v5209 = vcombine.low %v4824, %v4826
        %v5210 = vcombine.low %v4825, %v4827
        %v5212 = vunpack.c.l.s4 1935823168
        %v5213 = vunpack.c.0.s8 %v5212
        %v5214 = vlaneseq
        %v5215 = vshrl.u32 %v5214, 7
        %v5216 = vsub.s32 %v5213, %v5215
        %v5217 = vrot.slane %v5209, %v5216
        %v5219 = vunpack.c.l.s4 1935823168
        %v5220 = vunpack.c.0.s8 %v5219
        %v5221 = vlaneseq
        %v5222 = vshrl.u32 %v5221, 7
        %v5223 = vsub.s32 %v5220, %v5222
        %v5224 = vrot.slane %v5210, %v5223
        %v5225 = vcombine.low %v5217, %v5224
        %v5227 = vunpack.c.l.s4 1935823168
        %v5228 = vunpack.c.0.s8 %v5227
        %v5229 = vlaneseq
        %v5230 = vshrl.u32 %v5229, 7
        %v5231 = vsub.s32 %v5228, %v5230
        %v5232 = vrot.slane %v5225, %v5231
        %v5233 = vcombine.low %v4828, %v4830
        %v5234 = vcombine.low %v4829, %v4831
        %v5236 = vunpack.c.l.s4 1935823168
        %v5237 = vunpack.c.0.s8 %v5236
        %v5238 = vlaneseq
        %v5239 = vshrl.u32 %v5238, 7
        %v5240 = vsub.s32 %v5237, %v5239
        %v5241 = vrot.slane %v5233, %v5240
        %v5243 = vunpack.c.l.s4 1935823168
        %v5244 = vunpack.c.0.s8 %v5243
        %v5245 = vlaneseq
        %v5246 = vshrl.u32 %v5245, 7
        %v5247 = vsub.s32 %v5244, %v5246
        %v5248 = vrot.slane %v5234, %v5247
        %v5249 = vcombine.low %v5241, %v5248
        %v5251 = vunpack.c.l.s4 1935823168
        %v5252 = vunpack.c.0.s8 %v5251
        %v5253 = vlaneseq
        %v5254 = vshrl.u32 %v5253, 7
        %v5255 = vsub.s32 %v5252, %v5254
        %v5256 = vrot.slane %v5249, %v5255
        %v5257 = vcombine.low %v4832, %v4834
        %v5258 = vcombine.low %v4833, %v4835
        %v5260 = vunpack.c.l.s4 1935823168
        %v5261 = vunpack.c.0.s8 %v5260
        %v5262 = vlaneseq
        %v5263 = vshrl.u32 %v5262, 7
        %v5264 = vsub.s32 %v5261, %v5263
        %v5265 = vrot.slane %v5257, %v5264
        %v5267 = vunpack.c.l.s4 1935823168
        %v5268 = vunpack.c.0.s8 %v5267
        %v5269 = vlaneseq
        %v5270 = vshrl.u32 %v5269, 7
        %v5271 = vsub.s32 %v5268, %v5270
        %v5272 = vrot.slane %v5258, %v5271
        %v5273 = vcombine.low %v5265, %v5272
        %v5275 = vunpack.c.l.s4 1935823168
        %v5276 = vunpack.c.0.s8 %v5275
        %v5277 = vlaneseq
        %v5278 = vshrl.u32 %v5277, 7
        %v5279 = vsub.s32 %v5276, %v5278
        %v5280 = vrot.slane %v5273, %v5279
        %v5281 = vcombine.low %v4836, %v4838
        %v5282 = vcombine.low %v4837, %v4839
        %v5284 = vunpack.c.l.s4 1935823168
        %v5285 = vunpack.c.0.s8 %v5284
        %v5286 = vlaneseq
        %v5287 = vshrl.u32 %v5286, 7
        %v5288 = vsub.s32 %v5285, %v5287
        %v5289 = vrot.slane %v5281, %v5288
        %v5291 = vunpack.c.l.s4 1935823168
        %v5292 = vunpack.c.0.s8 %v5291
        %v5293 = vlaneseq
        %v5294 = vshrl.u32 %v5293, 7
        %v5295 = vsub.s32 %v5292, %v5294
        %v5296 = vrot.slane %v5282, %v5295
        %v5297 = vcombine.low %v5289, %v5296
        %v5299 = vunpack.c.l.s4 1935823168
        %v5300 = vunpack.c.0.s8 %v5299
        %v5301 = vlaneseq
        %v5302 = vshrl.u32 %v5301, 7
        %v5303 = vsub.s32 %v5300, %v5302
        %v5304 = vrot.slane %v5297, %v5303
        %v5305 = vcombine.low %v4840, %v4842
        %v5306 = vcombine.low %v4841, %v4843
        %v5308 = vunpack.c.l.s4 1935823168
        %v5309 = vunpack.c.0.s8 %v5308
        %v5310 = vlaneseq
        %v5311 = vshrl.u32 %v5310, 7
        %v5312 = vsub.s32 %v5309, %v5311
        %v5313 = vrot.slane %v5305, %v5312
        %v5315 = vunpack.c.l.s4 1935823168
        %v5316 = vunpack.c.0.s8 %v5315
        %v5317 = vlaneseq
        %v5318 = vshrl.u32 %v5317, 7
        %v5319 = vsub.s32 %v5316, %v5318
        %v5320 = vrot.slane %v5306, %v5319
        %v5321 = vcombine.low %v5313, %v5320
        %v5323 = vunpack.c.l.s4 1935823168
        %v5324 = vunpack.c.0.s8 %v5323
        %v5325 = vlaneseq
        %v5326 = vshrl.u32 %v5325, 7
        %v5327 = vsub.s32 %v5324, %v5326
        %v5328 = vrot.slane %v5321, %v5327
        %v5329 = vcombine.low %v4844, %v4846
        %v5330 = vcombine.low %v4845, %v4847
        %v5332 = vunpack.c.l.s4 1935823168
        %v5333 = vunpack.c.0.s8 %v5332
        %v5334 = vlaneseq
        %v5335 = vshrl.u32 %v5334, 7
        %v5336 = vsub.s32 %v5333, %v5335
        %v5337 = vrot.slane %v5329, %v5336
        %v5339 = vunpack.c.l.s4 1935823168
        %v5340 = vunpack.c.0.s8 %v5339
        %v5341 = vlaneseq
        %v5342 = vshrl.u32 %v5341, 7
        %v5343 = vsub.s32 %v5340, %v5342
        %v5344 = vrot.slane %v5330, %v5343
        %v5345 = vcombine.low %v5337, %v5344
        %v5347 = vunpack.c.l.s4 1935823168
        %v5348 = vunpack.c.0.s8 %v5347
        %v5349 = vlaneseq
        %v5350 = vshrl.u32 %v5349, 7
        %v5351 = vsub.s32 %v5348, %v5350
        %v5352 = vrot.slane %v5345, %v5351
        %v5353 = vcombine.low %v4848, %v4850
        %v5354 = vcombine.low %v4849, %v4851
        %v5356 = vunpack.c.l.s4 1935823168
        %v5357 = vunpack.c.0.s8 %v5356
        %v5358 = vlaneseq
        %v5359 = vshrl.u32 %v5358, 7
        %v5360 = vsub.s32 %v5357, %v5359
        %v5361 = vrot.slane %v5353, %v5360
        %v5363 = vunpack.c.l.s4 1935823168
        %v5364 = vunpack.c.0.s8 %v5363
        %v5365 = vlaneseq
        %v5366 = vshrl.u32 %v5365, 7
        %v5367 = vsub.s32 %v5364, %v5366
        %v5368 = vrot.slane %v5354, %v5367
        %v5369 = vcombine.low %v5361, %v5368
        %v5371 = vunpack.c.l.s4 1935823168
        %v5372 = vunpack.c.0.s8 %v5371
        %v5373 = vlaneseq
        %v5374 = vshrl.u32 %v5373, 7
        %v5375 = vsub.s32 %v5372, %v5374
        %v5376 = vrot.slane %v5369, %v5375
        %v5377 = vcombine.low %v4852, %v4854
        %v5378 = vcombine.low %v4853, %v4855
        %v5380 = vunpack.c.l.s4 1935823168
        %v5381 = vunpack.c.0.s8 %v5380
        %v5382 = vlaneseq
        %v5383 = vshrl.u32 %v5382, 7
        %v5384 = vsub.s32 %v5381, %v5383
        %v5385 = vrot.slane %v5377, %v5384
        %v5387 = vunpack.c.l.s4 1935823168
        %v5388 = vunpack.c.0.s8 %v5387
        %v5389 = vlaneseq
        %v5390 = vshrl.u32 %v5389, 7
        %v5391 = vsub.s32 %v5388, %v5390
        %v5392 = vrot.slane %v5378, %v5391
        %v5393 = vcombine.low %v5385, %v5392
        %v5395 = vunpack.c.l.s4 1935823168
        %v5396 = vunpack.c.0.s8 %v5395
        %v5397 = vlaneseq
        %v5398 = vshrl.u32 %v5397, 7
        %v5399 = vsub.s32 %v5396, %v5398
        %v5400 = vrot.slane %v5393, %v5399
        %v5401 = vcombine.low %v4856, %v4858
        %v5402 = vcombine.low %v4857, %v4859
        %v5404 = vunpack.c.l.s4 1935823168
        %v5405 = vunpack.c.0.s8 %v5404
        %v5406 = vlaneseq
        %v5407 = vshrl.u32 %v5406, 7
        %v5408 = vsub.s32 %v5405, %v5407
        %v5409 = vrot.slane %v5401, %v5408
        %v5411 = vunpack.c.l.s4 1935823168
        %v5412 = vunpack.c.0.s8 %v5411
        %v5413 = vlaneseq
        %v5414 = vshrl.u32 %v5413, 7
        %v5415 = vsub.s32 %v5412, %v5414
        %v5416 = vrot.slane %v5402, %v5415
        %v5417 = vcombine.low %v5409, %v5416
        %v5419 = vunpack.c.l.s4 1935823168
        %v5420 = vunpack.c.0.s8 %v5419
        %v5421 = vlaneseq
        %v5422 = vshrl.u32 %v5421, 7
        %v5423 = vsub.s32 %v5420, %v5422
        %v5424 = vrot.slane %v5417, %v5423
        %v5425 = vcombine.low %v4860, %v4862
        %v5426 = vcombine.low %v4861, %v4863
        %v5428 = vunpack.c.l.s4 1935823168
        %v5429 = vunpack.c.0.s8 %v5428
        %v5430 = vlaneseq
        %v5431 = vshrl.u32 %v5430, 7
        %v5432 = vsub.s32 %v5429, %v5431
        %v5433 = vrot.slane %v5425, %v5432
        %v5435 = vunpack.c.l.s4 1935823168
        %v5436 = vunpack.c.0.s8 %v5435
        %v5437 = vlaneseq
        %v5438 = vshrl.u32 %v5437, 7
        %v5439 = vsub.s32 %v5436, %v5438
        %v5440 = vrot.slane %v5426, %v5439
        %v5441 = vcombine.low %v5433, %v5440
        %v5443 = vunpack.c.l.s4 1935823168
        %v5444 = vunpack.c.0.s8 %v5443
        %v5445 = vlaneseq
        %v5446 = vshrl.u32 %v5445, 7
        %v5447 = vsub.s32 %v5444, %v5446
        %v5448 = vrot.slane %v5441, %v5447
        %v5449 = vcombine.low %v4864, %v4866
        %v5450 = vcombine.low %v4865, %v4867
        %v5452 = vunpack.c.l.s4 1935823168
        %v5453 = vunpack.c.0.s8 %v5452
        %v5454 = vlaneseq
        %v5455 = vshrl.u32 %v5454, 7
        %v5456 = vsub.s32 %v5453, %v5455
        %v5457 = vrot.slane %v5449, %v5456
        %v5459 = vunpack.c.l.s4 1935823168
        %v5460 = vunpack.c.0.s8 %v5459
        %v5461 = vlaneseq
        %v5462 = vshrl.u32 %v5461, 7
        %v5463 = vsub.s32 %v5460, %v5462
        %v5464 = vrot.slane %v5450, %v5463
        %v5465 = vcombine.low %v5457, %v5464
        %v5467 = vunpack.c.l.s4 1935823168
        %v5468 = vunpack.c.0.s8 %v5467
        %v5469 = vlaneseq
        %v5470 = vshrl.u32 %v5469, 7
        %v5471 = vsub.s32 %v5468, %v5470
        %v5472 = vrot.slane %v5465, %v5471
        %v5473 = vcombine.low %v4868, %v4870
        %v5474 = vcombine.low %v4869, %v4871
        %v5476 = vunpack.c.l.s4 1935823168
        %v5477 = vunpack.c.0.s8 %v5476
        %v5478 = vlaneseq
        %v5479 = vshrl.u32 %v5478, 7
        %v5480 = vsub.s32 %v5477, %v5479
        %v5481 = vrot.slane %v5473, %v5480
        %v5483 = vunpack.c.l.s4 1935823168
        %v5484 = vunpack.c.0.s8 %v5483
        %v5485 = vlaneseq
        %v5486 = vshrl.u32 %v5485, 7
        %v5487 = vsub.s32 %v5484, %v5486
        %v5488 = vrot.slane %v5474, %v5487
        %v5489 = vcombine.low %v5481, %v5488
        %v5491 = vunpack.c.l.s4 1935823168
        %v5492 = vunpack.c.0.s8 %v5491
        %v5493 = vlaneseq
        %v5494 = vshrl.u32 %v5493, 7
        %v5495 = vsub.s32 %v5492, %v5494
        %v5496 = vrot.slane %v5489, %v5495
        %v5497 = vcombine.low %v4872, %v4874
        %v5498 = vcombine.low %v4873, %v4875
        %v5500 = vunpack.c.l.s4 1935823168
        %v5501 = vunpack.c.0.s8 %v5500
        %v5502 = vlaneseq
        %v5503 = vshrl.u32 %v5502, 7
        %v5504 = vsub.s32 %v5501, %v5503
        %v5505 = vrot.slane %v5497, %v5504
        %v5507 = vunpack.c.l.s4 1935823168
        %v5508 = vunpack.c.0.s8 %v5507
        %v5509 = vlaneseq
        %v5510 = vshrl.u32 %v5509, 7
        %v5511 = vsub.s32 %v5508, %v5510
        %v5512 = vrot.slane %v5498, %v5511
        %v5513 = vcombine.low %v5505, %v5512
        %v5515 = vunpack.c.l.s4 1935823168
        %v5516 = vunpack.c.0.s8 %v5515
        %v5517 = vlaneseq
        %v5518 = vshrl.u32 %v5517, 7
        %v5519 = vsub.s32 %v5516, %v5518
        %v5520 = vrot.slane %v5513, %v5519
        %v5521 = vcombine.low %v4876, %v4878
        %v5522 = vcombine.low %v4877, %v4879
        %v5524 = vunpack.c.l.s4 1935823168
        %v5525 = vunpack.c.0.s8 %v5524
        %v5526 = vlaneseq
        %v5527 = vshrl.u32 %v5526, 7
        %v5528 = vsub.s32 %v5525, %v5527
        %v5529 = vrot.slane %v5521, %v5528
        %v5531 = vunpack.c.l.s4 1935823168
        %v5532 = vunpack.c.0.s8 %v5531
        %v5533 = vlaneseq
        %v5534 = vshrl.u32 %v5533, 7
        %v5535 = vsub.s32 %v5532, %v5534
        %v5536 = vrot.slane %v5522, %v5535
        %v5537 = vcombine.low %v5529, %v5536
        %v5539 = vunpack.c.l.s4 1935823168
        %v5540 = vunpack.c.0.s8 %v5539
        %v5541 = vlaneseq
        %v5542 = vshrl.u32 %v5541, 7
        %v5543 = vsub.s32 %v5540, %v5542
        %v5544 = vrot.slane %v5537, %v5543
        %v5545 = vcombine.low %v4880, %v4882
        %v5546 = vcombine.low %v4881, %v4883
        %v5548 = vunpack.c.l.s4 1935823168
        %v5549 = vunpack.c.0.s8 %v5548
        %v5550 = vlaneseq
        %v5551 = vshrl.u32 %v5550, 7
        %v5552 = vsub.s32 %v5549, %v5551
        %v5553 = vrot.slane %v5545, %v5552
        %v5555 = vunpack.c.l.s4 1935823168
        %v5556 = vunpack.c.0.s8 %v5555
        %v5557 = vlaneseq
        %v5558 = vshrl.u32 %v5557, 7
        %v5559 = vsub.s32 %v5556, %v5558
        %v5560 = vrot.slane %v5546, %v5559
        %v5561 = vcombine.low %v5553, %v5560
        %v5563 = vunpack.c.l.s4 1935823168
        %v5564 = vunpack.c.0.s8 %v5563
        %v5565 = vlaneseq
        %v5566 = vshrl.u32 %v5565, 7
        %v5567 = vsub.s32 %v5564, %v5566
        %v5568 = vrot.slane %v5561, %v5567
        %v5569 = vcombine.low %v4884, %v4886
        %v5570 = vcombine.low %v4885, %v4887
        %v5572 = vunpack.c.l.s4 1935823168
        %v5573 = vunpack.c.0.s8 %v5572
        %v5574 = vlaneseq
        %v5575 = vshrl.u32 %v5574, 7
        %v5576 = vsub.s32 %v5573, %v5575
        %v5577 = vrot.slane %v5569, %v5576
        %v5579 = vunpack.c.l.s4 1935823168
        %v5580 = vunpack.c.0.s8 %v5579
        %v5581 = vlaneseq
        %v5582 = vshrl.u32 %v5581, 7
        %v5583 = vsub.s32 %v5580, %v5582
        %v5584 = vrot.slane %v5570, %v5583
        %v5585 = vcombine.low %v5577, %v5584
        %v5587 = vunpack.c.l.s4 1935823168
        %v5588 = vunpack.c.0.s8 %v5587
        %v5589 = vlaneseq
        %v5590 = vshrl.u32 %v5589, 7
        %v5591 = vsub.s32 %v5588, %v5590
        %v5592 = vrot.slane %v5585, %v5591
        %v5593 = vcombine.low %v4888, %v4890
        %v5594 = vcombine.low %v4889, %v4891
        %v5596 = vunpack.c.l.s4 1935823168
        %v5597 = vunpack.c.0.s8 %v5596
        %v5598 = vlaneseq
        %v5599 = vshrl.u32 %v5598, 7
        %v5600 = vsub.s32 %v5597, %v5599
        %v5601 = vrot.slane %v5593, %v5600
        %v5603 = vunpack.c.l.s4 1935823168
        %v5604 = vunpack.c.0.s8 %v5603
        %v5605 = vlaneseq
        %v5606 = vshrl.u32 %v5605, 7
        %v5607 = vsub.s32 %v5604, %v5606
        %v5608 = vrot.slane %v5594, %v5607
        %v5609 = vcombine.low %v5601, %v5608
        %v5611 = vunpack.c.l.s4 1935823168
        %v5612 = vunpack.c.0.s8 %v5611
        %v5613 = vlaneseq
        %v5614 = vshrl.u32 %v5613, 7
        %v5615 = vsub.s32 %v5612, %v5614
        %v5616 = vrot.slane %v5609, %v5615
        %v5617 = vcombine.low %v4892, %v4894
        %v5618 = vcombine.low %v4893, %v4895
        %v5620 = vunpack.c.l.s4 1935823168
        %v5621 = vunpack.c.0.s8 %v5620
        %v5622 = vlaneseq
        %v5623 = vshrl.u32 %v5622, 7
        %v5624 = vsub.s32 %v5621, %v5623
        %v5625 = vrot.slane %v5617, %v5624
        %v5627 = vunpack.c.l.s4 1935823168
        %v5628 = vunpack.c.0.s8 %v5627
        %v5629 = vlaneseq
        %v5630 = vshrl.u32 %v5629, 7
        %v5631 = vsub.s32 %v5628, %v5630
        %v5632 = vrot.slane %v5618, %v5631
        %v5633 = vcombine.low %v5625, %v5632
        %v5635 = vunpack.c.l.s4 1935823168
        %v5636 = vunpack.c.0.s8 %v5635
        %v5637 = vlaneseq
        %v5638 = vshrl.u32 %v5637, 7
        %v5639 = vsub.s32 %v5636, %v5638
        %v5640 = vrot.slane %v5633, %v5639
        %v5641 = vcombine.low %v4896, %v4898
        %v5642 = vcombine.low %v4897, %v4899
        %v5644 = vunpack.c.l.s4 1935823168
        %v5645 = vunpack.c.0.s8 %v5644
        %v5646 = vlaneseq
        %v5647 = vshrl.u32 %v5646, 7
        %v5648 = vsub.s32 %v5645, %v5647
        %v5649 = vrot.slane %v5641, %v5648
        %v5651 = vunpack.c.l.s4 1935823168
        %v5652 = vunpack.c.0.s8 %v5651
        %v5653 = vlaneseq
        %v5654 = vshrl.u32 %v5653, 7
        %v5655 = vsub.s32 %v5652, %v5654
        %v5656 = vrot.slane %v5642, %v5655
        %v5657 = vcombine.low %v5649, %v5656
        %v5659 = vunpack.c.l.s4 1935823168
        %v5660 = vunpack.c.0.s8 %v5659
        %v5661 = vlaneseq
        %v5662 = vshrl.u32 %v5661, 7
        %v5663 = vsub.s32 %v5660, %v5662
        %v5664 = vrot.slane %v5657, %v5663
        %v5665 = vcombine.low %v4900, %v4902
        %v5666 = vcombine.low %v4901, %v4903
        %v5668 = vunpack.c.l.s4 1935823168
        %v5669 = vunpack.c.0.s8 %v5668
        %v5670 = vlaneseq
        %v5671 = vshrl.u32 %v5670, 7
        %v5672 = vsub.s32 %v5669, %v5671
        %v5673 = vrot.slane %v5665, %v5672
        %v5675 = vunpack.c.l.s4 1935823168
        %v5676 = vunpack.c.0.s8 %v5675
        %v5677 = vlaneseq
        %v5678 = vshrl.u32 %v5677, 7
        %v5679 = vsub.s32 %v5676, %v5678
        %v5680 = vrot.slane %v5666, %v5679
        %v5681 = vcombine.low %v5673, %v5680
        %v5683 = vunpack.c.l.s4 1935823168
        %v5684 = vunpack.c.0.s8 %v5683
        %v5685 = vlaneseq
        %v5686 = vshrl.u32 %v5685, 7
        %v5687 = vsub.s32 %v5684, %v5686
        %v5688 = vrot.slane %v5681, %v5687
        %v5689 = vcombine.low %v4904, %v4906
        %v5690 = vcombine.low %v4905, %v4907
        %v5692 = vunpack.c.l.s4 1935823168
        %v5693 = vunpack.c.0.s8 %v5692
        %v5694 = vlaneseq
        %v5695 = vshrl.u32 %v5694, 7
        %v5696 = vsub.s32 %v5693, %v5695
        %v5697 = vrot.slane %v5689, %v5696
        %v5699 = vunpack.c.l.s4 1935823168
        %v5700 = vunpack.c.0.s8 %v5699
        %v5701 = vlaneseq
        %v5702 = vshrl.u32 %v5701, 7
        %v5703 = vsub.s32 %v5700, %v5702
        %v5704 = vrot.slane %v5690, %v5703
        %v5705 = vcombine.low %v5697, %v5704
        %v5707 = vunpack.c.l.s4 1935823168
        %v5708 = vunpack.c.0.s8 %v5707
        %v5709 = vlaneseq
        %v5710 = vshrl.u32 %v5709, 7
        %v5711 = vsub.s32 %v5708, %v5710
        %v5712 = vrot.slane %v5705, %v5711
        %v5713 = vcombine.low %v4908, %v4910
        %v5714 = vcombine.low %v4909, %v4911
        %v5716 = vunpack.c.l.s4 1935823168
        %v5717 = vunpack.c.0.s8 %v5716
        %v5718 = vlaneseq
        %v5719 = vshrl.u32 %v5718, 7
        %v5720 = vsub.s32 %v5717, %v5719
        %v5721 = vrot.slane %v5713, %v5720
        %v5723 = vunpack.c.l.s4 1935823168
        %v5724 = vunpack.c.0.s8 %v5723
        %v5725 = vlaneseq
        %v5726 = vshrl.u32 %v5725, 7
        %v5727 = vsub.s32 %v5724, %v5726
        %v5728 = vrot.slane %v5714, %v5727
        %v5729 = vcombine.low %v5721, %v5728
        %v5731 = vunpack.c.l.s4 1935823168
        %v5732 = vunpack.c.0.s8 %v5731
        %v5733 = vlaneseq
        %v5734 = vshrl.u32 %v5733, 7
        %v5735 = vsub.s32 %v5732, %v5734
        %v5736 = vrot.slane %v5729, %v5735
        %v5737 = vcombine.low %v4912, %v4914
        %v5738 = vcombine.low %v4913, %v4915
        %v5740 = vunpack.c.l.s4 1935823168
        %v5741 = vunpack.c.0.s8 %v5740
        %v5742 = vlaneseq
        %v5743 = vshrl.u32 %v5742, 7
        %v5744 = vsub.s32 %v5741, %v5743
        %v5745 = vrot.slane %v5737, %v5744
        %v5747 = vunpack.c.l.s4 1935823168
        %v5748 = vunpack.c.0.s8 %v5747
        %v5749 = vlaneseq
        %v5750 = vshrl.u32 %v5749, 7
        %v5751 = vsub.s32 %v5748, %v5750
        %v5752 = vrot.slane %v5738, %v5751
        %v5753 = vcombine.low %v5745, %v5752
        %v5755 = vunpack.c.l.s4 1935823168
        %v5756 = vunpack.c.0.s8 %v5755
        %v5757 = vlaneseq
        %v5758 = vshrl.u32 %v5757, 7
        %v5759 = vsub.s32 %v5756, %v5758
        %v5760 = vrot.slane %v5753, %v5759
        %v5761 = vcombine.low %v4916, %v4918
        %v5762 = vcombine.low %v4917, %v4919
        %v5764 = vunpack.c.l.s4 1935823168
        %v5765 = vunpack.c.0.s8 %v5764
        %v5766 = vlaneseq
        %v5767 = vshrl.u32 %v5766, 7
        %v5768 = vsub.s32 %v5765, %v5767
        %v5769 = vrot.slane %v5761, %v5768
        %v5771 = vunpack.c.l.s4 1935823168
        %v5772 = vunpack.c.0.s8 %v5771
        %v5773 = vlaneseq
        %v5774 = vshrl.u32 %v5773, 7
        %v5775 = vsub.s32 %v5772, %v5774
        %v5776 = vrot.slane %v5762, %v5775
        %v5777 = vcombine.low %v5769, %v5776
        %v5779 = vunpack.c.l.s4 1935823168
        %v5780 = vunpack.c.0.s8 %v5779
        %v5781 = vlaneseq
        %v5782 = vshrl.u32 %v5781, 7
        %v5783 = vsub.s32 %v5780, %v5782
        %v5784 = vrot.slane %v5777, %v5783
        %v5786 = vunpack.c.l.s4 1935823168
        %v5787 = vunpack.c.0.s8 %v5786
        %v5788 = vlaneseq
        %v5789 = vshrl.u32 %v5788, 7
        %v5790 = vsub.s32 %v5787, %v5789
        %v5791 = vrot.slane %v4775, %v5790
        %v5793 = vunpack.c.l.s4 1935823168
        %v5794 = vunpack.c.0.s8 %v5793
        %v5795 = vlaneseq
        %v5796 = vshrl.u32 %v5795, 7
        %v5797 = vsub.s32 %v5794, %v5796
        %v5798 = vrot.slane %v5791, %v5797
        %5836 = vst [vmem:[#allocation3 + $0x4] sm:$0xf] %v4944
        %5837 = vst [vmem:[#allocation3 + $0x14] sm:$0xf] %v4968
        %5838 = vst [vmem:[#allocation3 + $0x24] sm:$0xf] %v4992
        %5839 = vst [vmem:[#allocation3 + $0x34] sm:$0xf] %v5016
        %5840 = vst [vmem:[#allocation3 + $0x44] sm:$0xf] %v5040
        %5841 = vst [vmem:[#allocation3 + $0x54] sm:$0xf] %v5064
        %5842 = vst [vmem:[#allocation3 + $0x64] sm:$0xf] %v5088
        %5843 = vst [vmem:[#allocation3 + $0x74] sm:$0xf] %v5112
        %5844 = vst [vmem:[#allocation3 + $0x84] sm:$0xf] %v5136
        %5845 = vst [vmem:[#allocation3 + $0x94] sm:$0xf] %v5160
        %5846 = vst [vmem:[#allocation3 + $0xa4] sm:$0xf] %v5184
        %5847 = vst [vmem:[#allocation3 + $0xb4] sm:$0xf] %v5208
        %5848 = vst [vmem:[#allocation3 + $0xc4] sm:$0xf] %v5232
        %5849 = vst [vmem:[#allocation3 + $0xd4] sm:$0xf] %v5256
        %5850 = vst [vmem:[#allocation3 + $0xe4] sm:$0xf] %v5280
        %5851 = vst [vmem:[#allocation3 + $0xf4] sm:$0xf] %v5304
        %5852 = vst [vmem:[#allocation3 + $0x104] sm:$0xf] %v5328
        %5853 = vst [vmem:[#allocation3 + $0x114] sm:$0xf] %v5352
        %5854 = vst [vmem:[#allocation3 + $0x124] sm:$0xf] %v5376
        %5855 = vst [vmem:[#allocation3 + $0x134] sm:$0xf] %v5400
        %5856 = vst [vmem:[#allocation3 + $0x144] sm:$0xf] %v5424
        %5857 = vst [vmem:[#allocation3 + $0x154] sm:$0xf] %v5448
        %5858 = vst [vmem:[#allocation3 + $0x164] sm:$0xf] %v5472
        %5859 = vst [vmem:[#allocation3 + $0x174] sm:$0xf] %v5496
        %5860 = vst [vmem:[#allocation3 + $0x184] sm:$0xf] %v5520
        %5861 = vst [vmem:[#allocation3 + $0x194] sm:$0xf] %v5544
        %5862 = vst [vmem:[#allocation3 + $0x1a4] sm:$0xf] %v5568
        %5863 = vst [vmem:[#allocation3 + $0x1b4] sm:$0xf] %v5592
        %5864 = vst [vmem:[#allocation3 + $0x1c4] sm:$0xf] %v5616
        %5865 = vst [vmem:[#allocation3 + $0x1d4] sm:$0xf] %v5640
        %5866 = vst [vmem:[#allocation3 + $0x1e4] sm:$0xf] %v5664
        %5867 = vst [vmem:[#allocation3 + $0x1f4] sm:$0xf] %v5688
        %5868 = vst [vmem:[#allocation3 + $0x204] sm:$0xf] %v5712
        %5869 = vst [vmem:[#allocation3 + $0x214] sm:$0xf] %v5736
        %5870 = vst [vmem:[#allocation3 + $0x224] sm:$0xf] %v5760
        %5871 = vst [vmem:[#allocation3 + $0x234] sm:$0xf] %v5784
        %v5872 = vld [vmem:[#allocation3 + $0x244] sm:$0x1]
        %v5873 = vsel %vm207, %v5798, %v5872
        %5874 = vst [vmem:[#allocation3 + $0x244] sm:$0x1] %v5873
        %v5875 = vld [vmem:[#allocation2] sm:$0xf]
        %v5876 = vld [vmem:[#allocation2 + $0x4] sm:$0xf]
        %v5877 = vld [vmem:[#allocation2 + $0x8] sm:$0x1]
        %v5878 = vld [vmem:[#allocation2 + $0xc] sm:$0xf]
        %v5879 = vld [vmem:[#allocation2 + $0x10] sm:$0xf]
        %v5880 = vld [vmem:[#allocation2 + $0x14] sm:$0x1]
        %v5881 = vld [vmem:[#allocation2 + $0x18] sm:$0xf]
        %v5882 = vld [vmem:[#allocation2 + $0x1c] sm:$0xf]
        %v5883 = vld [vmem:[#allocation2 + $0x20] sm:$0x1]
        %v5884 = vld [vmem:[#allocation2 + $0x24] sm:$0xf]
        %v5885 = vld [vmem:[#allocation2 + $0x28] sm:$0xf]
        %v5886 = vld [vmem:[#allocation2 + $0x2c] sm:$0x1]
        %v5887 = vld [vmem:[#allocation2 + $0x30] sm:$0xf]
        %v5888 = vld [vmem:[#allocation2 + $0x34] sm:$0xf]
        %v5889 = vld [vmem:[#allocation2 + $0x38] sm:$0x1]
        %v5890 = vld [vmem:[#allocation2 + $0x3c] sm:$0xf]
        %v5891 = vld [vmem:[#allocation2 + $0x40] sm:$0xf]
        %v5892 = vld [vmem:[#allocation2 + $0x44] sm:$0x1]
        %v5893 = vld [vmem:[#allocation2 + $0x48] sm:$0xf]
        %v5894 = vld [vmem:[#allocation2 + $0x4c] sm:$0xf]
        %v5895 = vld [vmem:[#allocation2 + $0x50] sm:$0x1]
        %v5896 = vld [vmem:[#allocation2 + $0x54] sm:$0xf]
        %v5897 = vld [vmem:[#allocation2 + $0x58] sm:$0xf]
        %v5898 = vld [vmem:[#allocation2 + $0x5c] sm:$0x1]
        %v5899 = vld [vmem:[#allocation2 + $0x60] sm:$0xf]
        %v5900 = vld [vmem:[#allocation2 + $0x64] sm:$0xf]
        %v5901 = vld [vmem:[#allocation2 + $0x68] sm:$0x1]
        %v5902 = vld [vmem:[#allocation2 + $0x6c] sm:$0xf]
        %v5903 = vld [vmem:[#allocation2 + $0x70] sm:$0xf]
        %v5904 = vld [vmem:[#allocation2 + $0x74] sm:$0x1]
        %v5905 = vld [vmem:[#allocation2 + $0x78] sm:$0xf]
        %v5906 = vld [vmem:[#allocation2 + $0x7c] sm:$0xf]
        %v5907 = vld [vmem:[#allocation2 + $0x80] sm:$0x1]
        %v5908 = vld [vmem:[#allocation2 + $0x84] sm:$0xf]
        %v5909 = vld [vmem:[#allocation2 + $0x88] sm:$0xf]
        %v5910 = vld [vmem:[#allocation2 + $0x8c] sm:$0x1]
        %v5911 = vld [vmem:[#allocation2 + $0x90] sm:$0xf]
        %v5912 = vld [vmem:[#allocation2 + $0x94] sm:$0xf]
        %v5913 = vld [vmem:[#allocation2 + $0x98] sm:$0x1]
        %v5914 = vld [vmem:[#allocation2 + $0x9c] sm:$0xf]
        %v5915 = vld [vmem:[#allocation2 + $0xa0] sm:$0xf]
        %v5916 = vld [vmem:[#allocation2 + $0xa4] sm:$0x1]
        %v5917 = vld [vmem:[#allocation2 + $0xa8] sm:$0xf]
        %v5918 = vld [vmem:[#allocation2 + $0xac] sm:$0xf]
        %v5919 = vld [vmem:[#allocation2 + $0xb0] sm:$0x1]
        %v5920 = vld [vmem:[#allocation2 + $0xb4] sm:$0xf]
        %v5921 = vld [vmem:[#allocation2 + $0xb8] sm:$0xf]
        %v5922 = vld [vmem:[#allocation2 + $0xbc] sm:$0x1]
        %v5923 = vld [vmem:[#allocation2 + $0xc0] sm:$0xf]
        %v5924 = vld [vmem:[#allocation2 + $0xc4] sm:$0xf]
        %v5925 = vld [vmem:[#allocation2 + $0xc8] sm:$0x1]
        %v5978 = vunpack.c.l.s4 1966171168
        %v5979 = vunpack.c.0.s8 %v5978
        %v5980 = vlaneseq
        %v5981 = vshrl.u32 %v5980, 7
        %v5982 = vsub.s32 %v5979, %v5981
        %v5983 = vrot.slane %v5875, %v5982
        %v5984 = vcombine.high %v5983, %v5983
        %v5986 = vunpack.c.l.s4 1966171168
        %v5987 = vunpack.c.0.s8 %v5986
        %v5988 = vlaneseq
        %v5989 = vshrl.u32 %v5988, 7
        %v5990 = vsub.s32 %v5987, %v5989
        %v5991 = vrot.slane %v5983, %v5990
        %v5993 = vunpack.c.l.s4 1966171168
        %v5994 = vunpack.c.0.s8 %v5993
        %v5995 = vlaneseq
        %v5996 = vshrl.u32 %v5995, 7
        %v5997 = vsub.s32 %v5994, %v5996
        %v5998 = vrot.slane %v5984, %v5997
        %v5999 = vcombine.high %v5991, %v5991
        %v6000 = vcombine.high %v5998, %v5998
        %v6002 = vunpack.c.l.s4 1966171168
        %v6003 = vunpack.c.0.s8 %v6002
        %v6004 = vlaneseq
        %v6005 = vshrl.u32 %v6004, 7
        %v6006 = vsub.s32 %v6003, %v6005
        %v6007 = vrot.slane %v5876, %v6006
        %v6008 = vcombine.high %v6007, %v6007
        %v6010 = vunpack.c.l.s4 1966171168
        %v6011 = vunpack.c.0.s8 %v6010
        %v6012 = vlaneseq
        %v6013 = vshrl.u32 %v6012, 7
        %v6014 = vsub.s32 %v6011, %v6013
        %v6015 = vrot.slane %v6007, %v6014
        %v6017 = vunpack.c.l.s4 1966171168
        %v6018 = vunpack.c.0.s8 %v6017
        %v6019 = vlaneseq
        %v6020 = vshrl.u32 %v6019, 7
        %v6021 = vsub.s32 %v6018, %v6020
        %v6022 = vrot.slane %v6008, %v6021
        %v6023 = vcombine.high %v6015, %v6015
        %v6024 = vcombine.high %v6022, %v6022
        %v6026 = vunpack.c.l.s4 1966171168
        %v6027 = vunpack.c.0.s8 %v6026
        %v6028 = vlaneseq
        %v6029 = vshrl.u32 %v6028, 7
        %v6030 = vsub.s32 %v6027, %v6029
        %v6031 = vrot.slane %v5877, %v6030
        %v6033 = vunpack.c.l.s4 1966171168
        %v6034 = vunpack.c.0.s8 %v6033
        %v6035 = vlaneseq
        %v6036 = vshrl.u32 %v6035, 7
        %v6037 = vsub.s32 %v6034, %v6036
        %v6038 = vrot.slane %v6031, %v6037
        %v6040 = vunpack.c.l.s4 1966171168
        %v6041 = vunpack.c.0.s8 %v6040
        %v6042 = vlaneseq
        %v6043 = vshrl.u32 %v6042, 7
        %v6044 = vsub.s32 %v6041, %v6043
        %v6045 = vrot.slane %v5878, %v6044
        %v6046 = vcombine.high %v6045, %v6045
        %v6048 = vunpack.c.l.s4 1966171168
        %v6049 = vunpack.c.0.s8 %v6048
        %v6050 = vlaneseq
        %v6051 = vshrl.u32 %v6050, 7
        %v6052 = vsub.s32 %v6049, %v6051
        %v6053 = vrot.slane %v6045, %v6052
        %v6055 = vunpack.c.l.s4 1966171168
        %v6056 = vunpack.c.0.s8 %v6055
        %v6057 = vlaneseq
        %v6058 = vshrl.u32 %v6057, 7
        %v6059 = vsub.s32 %v6056, %v6058
        %v6060 = vrot.slane %v6046, %v6059
        %v6061 = vcombine.high %v6053, %v6053
        %v6062 = vcombine.high %v6060, %v6060
        %v6064 = vunpack.c.l.s4 1966171168
        %v6065 = vunpack.c.0.s8 %v6064
        %v6066 = vlaneseq
        %v6067 = vshrl.u32 %v6066, 7
        %v6068 = vsub.s32 %v6065, %v6067
        %v6069 = vrot.slane %v5879, %v6068
        %v6070 = vcombine.high %v6069, %v6069
        %v6072 = vunpack.c.l.s4 1966171168
        %v6073 = vunpack.c.0.s8 %v6072
        %v6074 = vlaneseq
        %v6075 = vshrl.u32 %v6074, 7
        %v6076 = vsub.s32 %v6073, %v6075
        %v6077 = vrot.slane %v6069, %v6076
        %v6079 = vunpack.c.l.s4 1966171168
        %v6080 = vunpack.c.0.s8 %v6079
        %v6081 = vlaneseq
        %v6082 = vshrl.u32 %v6081, 7
        %v6083 = vsub.s32 %v6080, %v6082
        %v6084 = vrot.slane %v6070, %v6083
        %v6085 = vcombine.high %v6077, %v6077
        %v6086 = vcombine.high %v6084, %v6084
        %v6088 = vunpack.c.l.s4 1966171168
        %v6089 = vunpack.c.0.s8 %v6088
        %v6090 = vlaneseq
        %v6091 = vshrl.u32 %v6090, 7
        %v6092 = vsub.s32 %v6089, %v6091
        %v6093 = vrot.slane %v5880, %v6092
        %v6095 = vunpack.c.l.s4 1966171168
        %v6096 = vunpack.c.0.s8 %v6095
        %v6097 = vlaneseq
        %v6098 = vshrl.u32 %v6097, 7
        %v6099 = vsub.s32 %v6096, %v6098
        %v6100 = vrot.slane %v6093, %v6099
        %v6102 = vunpack.c.l.s4 1966171168
        %v6103 = vunpack.c.0.s8 %v6102
        %v6104 = vlaneseq
        %v6105 = vshrl.u32 %v6104, 7
        %v6106 = vsub.s32 %v6103, %v6105
        %v6107 = vrot.slane %v5881, %v6106
        %v6108 = vcombine.high %v6107, %v6107
        %v6110 = vunpack.c.l.s4 1966171168
        %v6111 = vunpack.c.0.s8 %v6110
        %v6112 = vlaneseq
        %v6113 = vshrl.u32 %v6112, 7
        %v6114 = vsub.s32 %v6111, %v6113
        %v6115 = vrot.slane %v6107, %v6114
        %v6117 = vunpack.c.l.s4 1966171168
        %v6118 = vunpack.c.0.s8 %v6117
        %v6119 = vlaneseq
        %v6120 = vshrl.u32 %v6119, 7
        %v6121 = vsub.s32 %v6118, %v6120
        %v6122 = vrot.slane %v6108, %v6121
        %v6123 = vcombine.high %v6115, %v6115
        %v6124 = vcombine.high %v6122, %v6122
        %v6126 = vunpack.c.l.s4 1966171168
        %v6127 = vunpack.c.0.s8 %v6126
        %v6128 = vlaneseq
        %v6129 = vshrl.u32 %v6128, 7
        %v6130 = vsub.s32 %v6127, %v6129
        %v6131 = vrot.slane %v5882, %v6130
        %v6132 = vcombine.high %v6131, %v6131
        %v6134 = vunpack.c.l.s4 1966171168
        %v6135 = vunpack.c.0.s8 %v6134
        %v6136 = vlaneseq
        %v6137 = vshrl.u32 %v6136, 7
        %v6138 = vsub.s32 %v6135, %v6137
        %v6139 = vrot.slane %v6131, %v6138
        %v6141 = vunpack.c.l.s4 1966171168
        %v6142 = vunpack.c.0.s8 %v6141
        %v6143 = vlaneseq
        %v6144 = vshrl.u32 %v6143, 7
        %v6145 = vsub.s32 %v6142, %v6144
        %v6146 = vrot.slane %v6132, %v6145
        %v6147 = vcombine.high %v6139, %v6139
        %v6148 = vcombine.high %v6146, %v6146
        %v6150 = vunpack.c.l.s4 1966171168
        %v6151 = vunpack.c.0.s8 %v6150
        %v6152 = vlaneseq
        %v6153 = vshrl.u32 %v6152, 7
        %v6154 = vsub.s32 %v6151, %v6153
        %v6155 = vrot.slane %v5883, %v6154
        %v6157 = vunpack.c.l.s4 1966171168
        %v6158 = vunpack.c.0.s8 %v6157
        %v6159 = vlaneseq
        %v6160 = vshrl.u32 %v6159, 7
        %v6161 = vsub.s32 %v6158, %v6160
        %v6162 = vrot.slane %v6155, %v6161
        %v6164 = vunpack.c.l.s4 1966171168
        %v6165 = vunpack.c.0.s8 %v6164
        %v6166 = vlaneseq
        %v6167 = vshrl.u32 %v6166, 7
        %v6168 = vsub.s32 %v6165, %v6167
        %v6169 = vrot.slane %v5884, %v6168
        %v6170 = vcombine.high %v6169, %v6169
        %v6172 = vunpack.c.l.s4 1966171168
        %v6173 = vunpack.c.0.s8 %v6172
        %v6174 = vlaneseq
        %v6175 = vshrl.u32 %v6174, 7
        %v6176 = vsub.s32 %v6173, %v6175
        %v6177 = vrot.slane %v6169, %v6176
        %v6179 = vunpack.c.l.s4 1966171168
        %v6180 = vunpack.c.0.s8 %v6179
        %v6181 = vlaneseq
        %v6182 = vshrl.u32 %v6181, 7
        %v6183 = vsub.s32 %v6180, %v6182
        %v6184 = vrot.slane %v6170, %v6183
        %v6185 = vcombine.high %v6177, %v6177
        %v6186 = vcombine.high %v6184, %v6184
        %v6188 = vunpack.c.l.s4 1966171168
        %v6189 = vunpack.c.0.s8 %v6188
        %v6190 = vlaneseq
        %v6191 = vshrl.u32 %v6190, 7
        %v6192 = vsub.s32 %v6189, %v6191
        %v6193 = vrot.slane %v5885, %v6192
        %v6194 = vcombine.high %v6193, %v6193
        %v6196 = vunpack.c.l.s4 1966171168
        %v6197 = vunpack.c.0.s8 %v6196
        %v6198 = vlaneseq
        %v6199 = vshrl.u32 %v6198, 7
        %v6200 = vsub.s32 %v6197, %v6199
        %v6201 = vrot.slane %v6193, %v6200
        %v6203 = vunpack.c.l.s4 1966171168
        %v6204 = vunpack.c.0.s8 %v6203
        %v6205 = vlaneseq
        %v6206 = vshrl.u32 %v6205, 7
        %v6207 = vsub.s32 %v6204, %v6206
        %v6208 = vrot.slane %v6194, %v6207
        %v6209 = vcombine.high %v6201, %v6201
        %v6210 = vcombine.high %v6208, %v6208
        %v6212 = vunpack.c.l.s4 1966171168
        %v6213 = vunpack.c.0.s8 %v6212
        %v6214 = vlaneseq
        %v6215 = vshrl.u32 %v6214, 7
        %v6216 = vsub.s32 %v6213, %v6215
        %v6217 = vrot.slane %v5886, %v6216
        %v6219 = vunpack.c.l.s4 1966171168
        %v6220 = vunpack.c.0.s8 %v6219
        %v6221 = vlaneseq
        %v6222 = vshrl.u32 %v6221, 7
        %v6223 = vsub.s32 %v6220, %v6222
        %v6224 = vrot.slane %v6217, %v6223
        %v6226 = vunpack.c.l.s4 1966171168
        %v6227 = vunpack.c.0.s8 %v6226
        %v6228 = vlaneseq
        %v6229 = vshrl.u32 %v6228, 7
        %v6230 = vsub.s32 %v6227, %v6229
        %v6231 = vrot.slane %v5887, %v6230
        %v6232 = vcombine.high %v6231, %v6231
        %v6234 = vunpack.c.l.s4 1966171168
        %v6235 = vunpack.c.0.s8 %v6234
        %v6236 = vlaneseq
        %v6237 = vshrl.u32 %v6236, 7
        %v6238 = vsub.s32 %v6235, %v6237
        %v6239 = vrot.slane %v6231, %v6238
        %v6241 = vunpack.c.l.s4 1966171168
        %v6242 = vunpack.c.0.s8 %v6241
        %v6243 = vlaneseq
        %v6244 = vshrl.u32 %v6243, 7
        %v6245 = vsub.s32 %v6242, %v6244
        %v6246 = vrot.slane %v6232, %v6245
        %v6247 = vcombine.high %v6239, %v6239
        %v6248 = vcombine.high %v6246, %v6246
        %v6250 = vunpack.c.l.s4 1966171168
        %v6251 = vunpack.c.0.s8 %v6250
        %v6252 = vlaneseq
        %v6253 = vshrl.u32 %v6252, 7
        %v6254 = vsub.s32 %v6251, %v6253
        %v6255 = vrot.slane %v5888, %v6254
        %v6256 = vcombine.high %v6255, %v6255
        %v6258 = vunpack.c.l.s4 1966171168
        %v6259 = vunpack.c.0.s8 %v6258
        %v6260 = vlaneseq
        %v6261 = vshrl.u32 %v6260, 7
        %v6262 = vsub.s32 %v6259, %v6261
        %v6263 = vrot.slane %v6255, %v6262
        %v6265 = vunpack.c.l.s4 1966171168
        %v6266 = vunpack.c.0.s8 %v6265
        %v6267 = vlaneseq
        %v6268 = vshrl.u32 %v6267, 7
        %v6269 = vsub.s32 %v6266, %v6268
        %v6270 = vrot.slane %v6256, %v6269
        %v6271 = vcombine.high %v6263, %v6263
        %v6272 = vcombine.high %v6270, %v6270
        %v6274 = vunpack.c.l.s4 1966171168
        %v6275 = vunpack.c.0.s8 %v6274
        %v6276 = vlaneseq
        %v6277 = vshrl.u32 %v6276, 7
        %v6278 = vsub.s32 %v6275, %v6277
        %v6279 = vrot.slane %v5889, %v6278
        %v6281 = vunpack.c.l.s4 1966171168
        %v6282 = vunpack.c.0.s8 %v6281
        %v6283 = vlaneseq
        %v6284 = vshrl.u32 %v6283, 7
        %v6285 = vsub.s32 %v6282, %v6284
        %v6286 = vrot.slane %v6279, %v6285
        %v6288 = vunpack.c.l.s4 1966171168
        %v6289 = vunpack.c.0.s8 %v6288
        %v6290 = vlaneseq
        %v6291 = vshrl.u32 %v6290, 7
        %v6292 = vsub.s32 %v6289, %v6291
        %v6293 = vrot.slane %v5890, %v6292
        %v6294 = vcombine.high %v6293, %v6293
        %v6296 = vunpack.c.l.s4 1966171168
        %v6297 = vunpack.c.0.s8 %v6296
        %v6298 = vlaneseq
        %v6299 = vshrl.u32 %v6298, 7
        %v6300 = vsub.s32 %v6297, %v6299
        %v6301 = vrot.slane %v6293, %v6300
        %v6303 = vunpack.c.l.s4 1966171168
        %v6304 = vunpack.c.0.s8 %v6303
        %v6305 = vlaneseq
        %v6306 = vshrl.u32 %v6305, 7
        %v6307 = vsub.s32 %v6304, %v6306
        %v6308 = vrot.slane %v6294, %v6307
        %v6309 = vcombine.high %v6301, %v6301
        %v6310 = vcombine.high %v6308, %v6308
        %v6312 = vunpack.c.l.s4 1966171168
        %v6313 = vunpack.c.0.s8 %v6312
        %v6314 = vlaneseq
        %v6315 = vshrl.u32 %v6314, 7
        %v6316 = vsub.s32 %v6313, %v6315
        %v6317 = vrot.slane %v5891, %v6316
        %v6318 = vcombine.high %v6317, %v6317
        %v6320 = vunpack.c.l.s4 1966171168
        %v6321 = vunpack.c.0.s8 %v6320
        %v6322 = vlaneseq
        %v6323 = vshrl.u32 %v6322, 7
        %v6324 = vsub.s32 %v6321, %v6323
        %v6325 = vrot.slane %v6317, %v6324
        %v6327 = vunpack.c.l.s4 1966171168
        %v6328 = vunpack.c.0.s8 %v6327
        %v6329 = vlaneseq
        %v6330 = vshrl.u32 %v6329, 7
        %v6331 = vsub.s32 %v6328, %v6330
        %v6332 = vrot.slane %v6318, %v6331
        %v6333 = vcombine.high %v6325, %v6325
        %v6334 = vcombine.high %v6332, %v6332
        %v6336 = vunpack.c.l.s4 1966171168
        %v6337 = vunpack.c.0.s8 %v6336
        %v6338 = vlaneseq
        %v6339 = vshrl.u32 %v6338, 7
        %v6340 = vsub.s32 %v6337, %v6339
        %v6341 = vrot.slane %v5892, %v6340
        %v6343 = vunpack.c.l.s4 1966171168
        %v6344 = vunpack.c.0.s8 %v6343
        %v6345 = vlaneseq
        %v6346 = vshrl.u32 %v6345, 7
        %v6347 = vsub.s32 %v6344, %v6346
        %v6348 = vrot.slane %v6341, %v6347
        %v6350 = vunpack.c.l.s4 1966171168
        %v6351 = vunpack.c.0.s8 %v6350
        %v6352 = vlaneseq
        %v6353 = vshrl.u32 %v6352, 7
        %v6354 = vsub.s32 %v6351, %v6353
        %v6355 = vrot.slane %v5893, %v6354
        %v6356 = vcombine.high %v6355, %v6355
        %v6358 = vunpack.c.l.s4 1966171168
        %v6359 = vunpack.c.0.s8 %v6358
        %v6360 = vlaneseq
        %v6361 = vshrl.u32 %v6360, 7
        %v6362 = vsub.s32 %v6359, %v6361
        %v6363 = vrot.slane %v6355, %v6362
        %v6365 = vunpack.c.l.s4 1966171168
        %v6366 = vunpack.c.0.s8 %v6365
        %v6367 = vlaneseq
        %v6368 = vshrl.u32 %v6367, 7
        %v6369 = vsub.s32 %v6366, %v6368
        %v6370 = vrot.slane %v6356, %v6369
        %v6371 = vcombine.high %v6363, %v6363
        %v6372 = vcombine.high %v6370, %v6370
        %v6374 = vunpack.c.l.s4 1966171168
        %v6375 = vunpack.c.0.s8 %v6374
        %v6376 = vlaneseq
        %v6377 = vshrl.u32 %v6376, 7
        %v6378 = vsub.s32 %v6375, %v6377
        %v6379 = vrot.slane %v5894, %v6378
        %v6380 = vcombine.high %v6379, %v6379
        %v6382 = vunpack.c.l.s4 1966171168
        %v6383 = vunpack.c.0.s8 %v6382
        %v6384 = vlaneseq
        %v6385 = vshrl.u32 %v6384, 7
        %v6386 = vsub.s32 %v6383, %v6385
        %v6387 = vrot.slane %v6379, %v6386
        %v6389 = vunpack.c.l.s4 1966171168
        %v6390 = vunpack.c.0.s8 %v6389
        %v6391 = vlaneseq
        %v6392 = vshrl.u32 %v6391, 7
        %v6393 = vsub.s32 %v6390, %v6392
        %v6394 = vrot.slane %v6380, %v6393
        %v6395 = vcombine.high %v6387, %v6387
        %v6396 = vcombine.high %v6394, %v6394
        %v6398 = vunpack.c.l.s4 1966171168
        %v6399 = vunpack.c.0.s8 %v6398
        %v6400 = vlaneseq
        %v6401 = vshrl.u32 %v6400, 7
        %v6402 = vsub.s32 %v6399, %v6401
        %v6403 = vrot.slane %v5895, %v6402
        %v6405 = vunpack.c.l.s4 1966171168
        %v6406 = vunpack.c.0.s8 %v6405
        %v6407 = vlaneseq
        %v6408 = vshrl.u32 %v6407, 7
        %v6409 = vsub.s32 %v6406, %v6408
        %v6410 = vrot.slane %v6403, %v6409
        %v6412 = vunpack.c.l.s4 1966171168
        %v6413 = vunpack.c.0.s8 %v6412
        %v6414 = vlaneseq
        %v6415 = vshrl.u32 %v6414, 7
        %v6416 = vsub.s32 %v6413, %v6415
        %v6417 = vrot.slane %v5896, %v6416
        %v6418 = vcombine.high %v6417, %v6417
        %v6420 = vunpack.c.l.s4 1966171168
        %v6421 = vunpack.c.0.s8 %v6420
        %v6422 = vlaneseq
        %v6423 = vshrl.u32 %v6422, 7
        %v6424 = vsub.s32 %v6421, %v6423
        %v6425 = vrot.slane %v6417, %v6424
        %v6427 = vunpack.c.l.s4 1966171168
        %v6428 = vunpack.c.0.s8 %v6427
        %v6429 = vlaneseq
        %v6430 = vshrl.u32 %v6429, 7
        %v6431 = vsub.s32 %v6428, %v6430
        %v6432 = vrot.slane %v6418, %v6431
        %v6433 = vcombine.high %v6425, %v6425
        %v6434 = vcombine.high %v6432, %v6432
        %v6436 = vunpack.c.l.s4 1966171168
        %v6437 = vunpack.c.0.s8 %v6436
        %v6438 = vlaneseq
        %v6439 = vshrl.u32 %v6438, 7
        %v6440 = vsub.s32 %v6437, %v6439
        %v6441 = vrot.slane %v5897, %v6440
        %v6442 = vcombine.high %v6441, %v6441
        %v6444 = vunpack.c.l.s4 1966171168
        %v6445 = vunpack.c.0.s8 %v6444
        %v6446 = vlaneseq
        %v6447 = vshrl.u32 %v6446, 7
        %v6448 = vsub.s32 %v6445, %v6447
        %v6449 = vrot.slane %v6441, %v6448
        %v6451 = vunpack.c.l.s4 1966171168
        %v6452 = vunpack.c.0.s8 %v6451
        %v6453 = vlaneseq
        %v6454 = vshrl.u32 %v6453, 7
        %v6455 = vsub.s32 %v6452, %v6454
        %v6456 = vrot.slane %v6442, %v6455
        %v6457 = vcombine.high %v6449, %v6449
        %v6458 = vcombine.high %v6456, %v6456
        %v6460 = vunpack.c.l.s4 1966171168
        %v6461 = vunpack.c.0.s8 %v6460
        %v6462 = vlaneseq
        %v6463 = vshrl.u32 %v6462, 7
        %v6464 = vsub.s32 %v6461, %v6463
        %v6465 = vrot.slane %v5898, %v6464
        %v6467 = vunpack.c.l.s4 1966171168
        %v6468 = vunpack.c.0.s8 %v6467
        %v6469 = vlaneseq
        %v6470 = vshrl.u32 %v6469, 7
        %v6471 = vsub.s32 %v6468, %v6470
        %v6472 = vrot.slane %v6465, %v6471
        %v6474 = vunpack.c.l.s4 1966171168
        %v6475 = vunpack.c.0.s8 %v6474
        %v6476 = vlaneseq
        %v6477 = vshrl.u32 %v6476, 7
        %v6478 = vsub.s32 %v6475, %v6477
        %v6479 = vrot.slane %v5899, %v6478
        %v6480 = vcombine.high %v6479, %v6479
        %v6482 = vunpack.c.l.s4 1966171168
        %v6483 = vunpack.c.0.s8 %v6482
        %v6484 = vlaneseq
        %v6485 = vshrl.u32 %v6484, 7
        %v6486 = vsub.s32 %v6483, %v6485
        %v6487 = vrot.slane %v6479, %v6486
        %v6489 = vunpack.c.l.s4 1966171168
        %v6490 = vunpack.c.0.s8 %v6489
        %v6491 = vlaneseq
        %v6492 = vshrl.u32 %v6491, 7
        %v6493 = vsub.s32 %v6490, %v6492
        %v6494 = vrot.slane %v6480, %v6493
        %v6495 = vcombine.high %v6487, %v6487
        %v6496 = vcombine.high %v6494, %v6494
        %v6498 = vunpack.c.l.s4 1966171168
        %v6499 = vunpack.c.0.s8 %v6498
        %v6500 = vlaneseq
        %v6501 = vshrl.u32 %v6500, 7
        %v6502 = vsub.s32 %v6499, %v6501
        %v6503 = vrot.slane %v5900, %v6502
        %v6504 = vcombine.high %v6503, %v6503
        %v6506 = vunpack.c.l.s4 1966171168
        %v6507 = vunpack.c.0.s8 %v6506
        %v6508 = vlaneseq
        %v6509 = vshrl.u32 %v6508, 7
        %v6510 = vsub.s32 %v6507, %v6509
        %v6511 = vrot.slane %v6503, %v6510
        %v6513 = vunpack.c.l.s4 1966171168
        %v6514 = vunpack.c.0.s8 %v6513
        %v6515 = vlaneseq
        %v6516 = vshrl.u32 %v6515, 7
        %v6517 = vsub.s32 %v6514, %v6516
        %v6518 = vrot.slane %v6504, %v6517
        %v6519 = vcombine.high %v6511, %v6511
        %v6520 = vcombine.high %v6518, %v6518
        %v6522 = vunpack.c.l.s4 1966171168
        %v6523 = vunpack.c.0.s8 %v6522
        %v6524 = vlaneseq
        %v6525 = vshrl.u32 %v6524, 7
        %v6526 = vsub.s32 %v6523, %v6525
        %v6527 = vrot.slane %v5901, %v6526
        %v6529 = vunpack.c.l.s4 1966171168
        %v6530 = vunpack.c.0.s8 %v6529
        %v6531 = vlaneseq
        %v6532 = vshrl.u32 %v6531, 7
        %v6533 = vsub.s32 %v6530, %v6532
        %v6534 = vrot.slane %v6527, %v6533
        %v6536 = vunpack.c.l.s4 1966171168
        %v6537 = vunpack.c.0.s8 %v6536
        %v6538 = vlaneseq
        %v6539 = vshrl.u32 %v6538, 7
        %v6540 = vsub.s32 %v6537, %v6539
        %v6541 = vrot.slane %v5902, %v6540
        %v6542 = vcombine.high %v6541, %v6541
        %v6544 = vunpack.c.l.s4 1966171168
        %v6545 = vunpack.c.0.s8 %v6544
        %v6546 = vlaneseq
        %v6547 = vshrl.u32 %v6546, 7
        %v6548 = vsub.s32 %v6545, %v6547
        %v6549 = vrot.slane %v6541, %v6548
        %v6551 = vunpack.c.l.s4 1966171168
        %v6552 = vunpack.c.0.s8 %v6551
        %v6553 = vlaneseq
        %v6554 = vshrl.u32 %v6553, 7
        %v6555 = vsub.s32 %v6552, %v6554
        %v6556 = vrot.slane %v6542, %v6555
        %v6557 = vcombine.high %v6549, %v6549
        %v6558 = vcombine.high %v6556, %v6556
        %v6560 = vunpack.c.l.s4 1966171168
        %v6561 = vunpack.c.0.s8 %v6560
        %v6562 = vlaneseq
        %v6563 = vshrl.u32 %v6562, 7
        %v6564 = vsub.s32 %v6561, %v6563
        %v6565 = vrot.slane %v5903, %v6564
        %v6566 = vcombine.high %v6565, %v6565
        %v6568 = vunpack.c.l.s4 1966171168
        %v6569 = vunpack.c.0.s8 %v6568
        %v6570 = vlaneseq
        %v6571 = vshrl.u32 %v6570, 7
        %v6572 = vsub.s32 %v6569, %v6571
        %v6573 = vrot.slane %v6565, %v6572
        %v6575 = vunpack.c.l.s4 1966171168
        %v6576 = vunpack.c.0.s8 %v6575
        %v6577 = vlaneseq
        %v6578 = vshrl.u32 %v6577, 7
        %v6579 = vsub.s32 %v6576, %v6578
        %v6580 = vrot.slane %v6566, %v6579
        %v6581 = vcombine.high %v6573, %v6573
        %v6582 = vcombine.high %v6580, %v6580
        %v6584 = vunpack.c.l.s4 1966171168
        %v6585 = vunpack.c.0.s8 %v6584
        %v6586 = vlaneseq
        %v6587 = vshrl.u32 %v6586, 7
        %v6588 = vsub.s32 %v6585, %v6587
        %v6589 = vrot.slane %v5904, %v6588
        %v6591 = vunpack.c.l.s4 1966171168
        %v6592 = vunpack.c.0.s8 %v6591
        %v6593 = vlaneseq
        %v6594 = vshrl.u32 %v6593, 7
        %v6595 = vsub.s32 %v6592, %v6594
        %v6596 = vrot.slane %v6589, %v6595
        %v6598 = vunpack.c.l.s4 1966171168
        %v6599 = vunpack.c.0.s8 %v6598
        %v6600 = vlaneseq
        %v6601 = vshrl.u32 %v6600, 7
        %v6602 = vsub.s32 %v6599, %v6601
        %v6603 = vrot.slane %v5905, %v6602
        %v6604 = vcombine.high %v6603, %v6603
        %v6606 = vunpack.c.l.s4 1966171168
        %v6607 = vunpack.c.0.s8 %v6606
        %v6608 = vlaneseq
        %v6609 = vshrl.u32 %v6608, 7
        %v6610 = vsub.s32 %v6607, %v6609
        %v6611 = vrot.slane %v6603, %v6610
        %v6613 = vunpack.c.l.s4 1966171168
        %v6614 = vunpack.c.0.s8 %v6613
        %v6615 = vlaneseq
        %v6616 = vshrl.u32 %v6615, 7
        %v6617 = vsub.s32 %v6614, %v6616
        %v6618 = vrot.slane %v6604, %v6617
        %v6619 = vcombine.high %v6611, %v6611
        %v6620 = vcombine.high %v6618, %v6618
        %v6622 = vunpack.c.l.s4 1966171168
        %v6623 = vunpack.c.0.s8 %v6622
        %v6624 = vlaneseq
        %v6625 = vshrl.u32 %v6624, 7
        %v6626 = vsub.s32 %v6623, %v6625
        %v6627 = vrot.slane %v5906, %v6626
        %v6628 = vcombine.high %v6627, %v6627
        %v6630 = vunpack.c.l.s4 1966171168
        %v6631 = vunpack.c.0.s8 %v6630
        %v6632 = vlaneseq
        %v6633 = vshrl.u32 %v6632, 7
        %v6634 = vsub.s32 %v6631, %v6633
        %v6635 = vrot.slane %v6627, %v6634
        %v6637 = vunpack.c.l.s4 1966171168
        %v6638 = vunpack.c.0.s8 %v6637
        %v6639 = vlaneseq
        %v6640 = vshrl.u32 %v6639, 7
        %v6641 = vsub.s32 %v6638, %v6640
        %v6642 = vrot.slane %v6628, %v6641
        %v6643 = vcombine.high %v6635, %v6635
        %v6644 = vcombine.high %v6642, %v6642
        %v6646 = vunpack.c.l.s4 1966171168
        %v6647 = vunpack.c.0.s8 %v6646
        %v6648 = vlaneseq
        %v6649 = vshrl.u32 %v6648, 7
        %v6650 = vsub.s32 %v6647, %v6649
        %v6651 = vrot.slane %v5907, %v6650
        %v6653 = vunpack.c.l.s4 1966171168
        %v6654 = vunpack.c.0.s8 %v6653
        %v6655 = vlaneseq
        %v6656 = vshrl.u32 %v6655, 7
        %v6657 = vsub.s32 %v6654, %v6656
        %v6658 = vrot.slane %v6651, %v6657
        %v6660 = vunpack.c.l.s4 1966171168
        %v6661 = vunpack.c.0.s8 %v6660
        %v6662 = vlaneseq
        %v6663 = vshrl.u32 %v6662, 7
        %v6664 = vsub.s32 %v6661, %v6663
        %v6665 = vrot.slane %v5908, %v6664
        %v6666 = vcombine.high %v6665, %v6665
        %v6668 = vunpack.c.l.s4 1966171168
        %v6669 = vunpack.c.0.s8 %v6668
        %v6670 = vlaneseq
        %v6671 = vshrl.u32 %v6670, 7
        %v6672 = vsub.s32 %v6669, %v6671
        %v6673 = vrot.slane %v6665, %v6672
        %v6675 = vunpack.c.l.s4 1966171168
        %v6676 = vunpack.c.0.s8 %v6675
        %v6677 = vlaneseq
        %v6678 = vshrl.u32 %v6677, 7
        %v6679 = vsub.s32 %v6676, %v6678
        %v6680 = vrot.slane %v6666, %v6679
        %v6681 = vcombine.high %v6673, %v6673
        %v6682 = vcombine.high %v6680, %v6680
        %v6684 = vunpack.c.l.s4 1966171168
        %v6685 = vunpack.c.0.s8 %v6684
        %v6686 = vlaneseq
        %v6687 = vshrl.u32 %v6686, 7
        %v6688 = vsub.s32 %v6685, %v6687
        %v6689 = vrot.slane %v5909, %v6688
        %v6690 = vcombine.high %v6689, %v6689
        %v6692 = vunpack.c.l.s4 1966171168
        %v6693 = vunpack.c.0.s8 %v6692
        %v6694 = vlaneseq
        %v6695 = vshrl.u32 %v6694, 7
        %v6696 = vsub.s32 %v6693, %v6695
        %v6697 = vrot.slane %v6689, %v6696
        %v6699 = vunpack.c.l.s4 1966171168
        %v6700 = vunpack.c.0.s8 %v6699
        %v6701 = vlaneseq
        %v6702 = vshrl.u32 %v6701, 7
        %v6703 = vsub.s32 %v6700, %v6702
        %v6704 = vrot.slane %v6690, %v6703
        %v6705 = vcombine.high %v6697, %v6697
        %v6706 = vcombine.high %v6704, %v6704
        %v6708 = vunpack.c.l.s4 1966171168
        %v6709 = vunpack.c.0.s8 %v6708
        %v6710 = vlaneseq
        %v6711 = vshrl.u32 %v6710, 7
        %v6712 = vsub.s32 %v6709, %v6711
        %v6713 = vrot.slane %v5910, %v6712
        %v6715 = vunpack.c.l.s4 1966171168
        %v6716 = vunpack.c.0.s8 %v6715
        %v6717 = vlaneseq
        %v6718 = vshrl.u32 %v6717, 7
        %v6719 = vsub.s32 %v6716, %v6718
        %v6720 = vrot.slane %v6713, %v6719
        %v6722 = vunpack.c.l.s4 1966171168
        %v6723 = vunpack.c.0.s8 %v6722
        %v6724 = vlaneseq
        %v6725 = vshrl.u32 %v6724, 7
        %v6726 = vsub.s32 %v6723, %v6725
        %v6727 = vrot.slane %v5911, %v6726
        %v6728 = vcombine.high %v6727, %v6727
        %v6730 = vunpack.c.l.s4 1966171168
        %v6731 = vunpack.c.0.s8 %v6730
        %v6732 = vlaneseq
        %v6733 = vshrl.u32 %v6732, 7
        %v6734 = vsub.s32 %v6731, %v6733
        %v6735 = vrot.slane %v6727, %v6734
        %v6737 = vunpack.c.l.s4 1966171168
        %v6738 = vunpack.c.0.s8 %v6737
        %v6739 = vlaneseq
        %v6740 = vshrl.u32 %v6739, 7
        %v6741 = vsub.s32 %v6738, %v6740
        %v6742 = vrot.slane %v6728, %v6741
        %v6743 = vcombine.high %v6735, %v6735
        %v6744 = vcombine.high %v6742, %v6742
        %v6746 = vunpack.c.l.s4 1966171168
        %v6747 = vunpack.c.0.s8 %v6746
        %v6748 = vlaneseq
        %v6749 = vshrl.u32 %v6748, 7
        %v6750 = vsub.s32 %v6747, %v6749
        %v6751 = vrot.slane %v5912, %v6750
        %v6752 = vcombine.high %v6751, %v6751
        %v6754 = vunpack.c.l.s4 1966171168
        %v6755 = vunpack.c.0.s8 %v6754
        %v6756 = vlaneseq
        %v6757 = vshrl.u32 %v6756, 7
        %v6758 = vsub.s32 %v6755, %v6757
        %v6759 = vrot.slane %v6751, %v6758
        %v6761 = vunpack.c.l.s4 1966171168
        %v6762 = vunpack.c.0.s8 %v6761
        %v6763 = vlaneseq
        %v6764 = vshrl.u32 %v6763, 7
        %v6765 = vsub.s32 %v6762, %v6764
        %v6766 = vrot.slane %v6752, %v6765
        %v6767 = vcombine.high %v6759, %v6759
        %v6768 = vcombine.high %v6766, %v6766
        %v6770 = vunpack.c.l.s4 1966171168
        %v6771 = vunpack.c.0.s8 %v6770
        %v6772 = vlaneseq
        %v6773 = vshrl.u32 %v6772, 7
        %v6774 = vsub.s32 %v6771, %v6773
        %v6775 = vrot.slane %v5913, %v6774
        %v6777 = vunpack.c.l.s4 1966171168
        %v6778 = vunpack.c.0.s8 %v6777
        %v6779 = vlaneseq
        %v6780 = vshrl.u32 %v6779, 7
        %v6781 = vsub.s32 %v6778, %v6780
        %v6782 = vrot.slane %v6775, %v6781
        %v6784 = vunpack.c.l.s4 1966171168
        %v6785 = vunpack.c.0.s8 %v6784
        %v6786 = vlaneseq
        %v6787 = vshrl.u32 %v6786, 7
        %v6788 = vsub.s32 %v6785, %v6787
        %v6789 = vrot.slane %v5914, %v6788
        %v6790 = vcombine.high %v6789, %v6789
        %v6792 = vunpack.c.l.s4 1966171168
        %v6793 = vunpack.c.0.s8 %v6792
        %v6794 = vlaneseq
        %v6795 = vshrl.u32 %v6794, 7
        %v6796 = vsub.s32 %v6793, %v6795
        %v6797 = vrot.slane %v6789, %v6796
        %v6799 = vunpack.c.l.s4 1966171168
        %v6800 = vunpack.c.0.s8 %v6799
        %v6801 = vlaneseq
        %v6802 = vshrl.u32 %v6801, 7
        %v6803 = vsub.s32 %v6800, %v6802
        %v6804 = vrot.slane %v6790, %v6803
        %v6805 = vcombine.high %v6797, %v6797
        %v6806 = vcombine.high %v6804, %v6804
        %v6808 = vunpack.c.l.s4 1966171168
        %v6809 = vunpack.c.0.s8 %v6808
        %v6810 = vlaneseq
        %v6811 = vshrl.u32 %v6810, 7
        %v6812 = vsub.s32 %v6809, %v6811
        %v6813 = vrot.slane %v5915, %v6812
        %v6814 = vcombine.high %v6813, %v6813
        %v6816 = vunpack.c.l.s4 1966171168
        %v6817 = vunpack.c.0.s8 %v6816
        %v6818 = vlaneseq
        %v6819 = vshrl.u32 %v6818, 7
        %v6820 = vsub.s32 %v6817, %v6819
        %v6821 = vrot.slane %v6813, %v6820
        %v6823 = vunpack.c.l.s4 1966171168
        %v6824 = vunpack.c.0.s8 %v6823
        %v6825 = vlaneseq
        %v6826 = vshrl.u32 %v6825, 7
        %v6827 = vsub.s32 %v6824, %v6826
        %v6828 = vrot.slane %v6814, %v6827
        %v6829 = vcombine.high %v6821, %v6821
        %v6830 = vcombine.high %v6828, %v6828
        %v6832 = vunpack.c.l.s4 1966171168
        %v6833 = vunpack.c.0.s8 %v6832
        %v6834 = vlaneseq
        %v6835 = vshrl.u32 %v6834, 7
        %v6836 = vsub.s32 %v6833, %v6835
        %v6837 = vrot.slane %v5916, %v6836
        %v6839 = vunpack.c.l.s4 1966171168
        %v6840 = vunpack.c.0.s8 %v6839
        %v6841 = vlaneseq
        %v6842 = vshrl.u32 %v6841, 7
        %v6843 = vsub.s32 %v6840, %v6842
        %v6844 = vrot.slane %v6837, %v6843
        %v6846 = vunpack.c.l.s4 1966171168
        %v6847 = vunpack.c.0.s8 %v6846
        %v6848 = vlaneseq
        %v6849 = vshrl.u32 %v6848, 7
        %v6850 = vsub.s32 %v6847, %v6849
        %v6851 = vrot.slane %v5917, %v6850
        %v6852 = vcombine.high %v6851, %v6851
        %v6854 = vunpack.c.l.s4 1966171168
        %v6855 = vunpack.c.0.s8 %v6854
        %v6856 = vlaneseq
        %v6857 = vshrl.u32 %v6856, 7
        %v6858 = vsub.s32 %v6855, %v6857
        %v6859 = vrot.slane %v6851, %v6858
        %v6861 = vunpack.c.l.s4 1966171168
        %v6862 = vunpack.c.0.s8 %v6861
        %v6863 = vlaneseq
        %v6864 = vshrl.u32 %v6863, 7
        %v6865 = vsub.s32 %v6862, %v6864
        %v6866 = vrot.slane %v6852, %v6865
        %v6867 = vcombine.high %v6859, %v6859
        %v6868 = vcombine.high %v6866, %v6866
        %v6870 = vunpack.c.l.s4 1966171168
        %v6871 = vunpack.c.0.s8 %v6870
        %v6872 = vlaneseq
        %v6873 = vshrl.u32 %v6872, 7
        %v6874 = vsub.s32 %v6871, %v6873
        %v6875 = vrot.slane %v5918, %v6874
        %v6876 = vcombine.high %v6875, %v6875
        %v6878 = vunpack.c.l.s4 1966171168
        %v6879 = vunpack.c.0.s8 %v6878
        %v6880 = vlaneseq
        %v6881 = vshrl.u32 %v6880, 7
        %v6882 = vsub.s32 %v6879, %v6881
        %v6883 = vrot.slane %v6875, %v6882
        %v6885 = vunpack.c.l.s4 1966171168
        %v6886 = vunpack.c.0.s8 %v6885
        %v6887 = vlaneseq
        %v6888 = vshrl.u32 %v6887, 7
        %v6889 = vsub.s32 %v6886, %v6888
        %v6890 = vrot.slane %v6876, %v6889
        %v6891 = vcombine.high %v6883, %v6883
        %v6892 = vcombine.high %v6890, %v6890
        %v6894 = vunpack.c.l.s4 1966171168
        %v6895 = vunpack.c.0.s8 %v6894
        %v6896 = vlaneseq
        %v6897 = vshrl.u32 %v6896, 7
        %v6898 = vsub.s32 %v6895, %v6897
        %v6899 = vrot.slane %v5919, %v6898
        %v6901 = vunpack.c.l.s4 1966171168
        %v6902 = vunpack.c.0.s8 %v6901
        %v6903 = vlaneseq
        %v6904 = vshrl.u32 %v6903, 7
        %v6905 = vsub.s32 %v6902, %v6904
        %v6906 = vrot.slane %v6899, %v6905
        %v6908 = vunpack.c.l.s4 1966171168
        %v6909 = vunpack.c.0.s8 %v6908
        %v6910 = vlaneseq
        %v6911 = vshrl.u32 %v6910, 7
        %v6912 = vsub.s32 %v6909, %v6911
        %v6913 = vrot.slane %v5920, %v6912
        %v6914 = vcombine.high %v6913, %v6913
        %v6916 = vunpack.c.l.s4 1966171168
        %v6917 = vunpack.c.0.s8 %v6916
        %v6918 = vlaneseq
        %v6919 = vshrl.u32 %v6918, 7
        %v6920 = vsub.s32 %v6917, %v6919
        %v6921 = vrot.slane %v6913, %v6920
        %v6923 = vunpack.c.l.s4 1966171168
        %v6924 = vunpack.c.0.s8 %v6923
        %v6925 = vlaneseq
        %v6926 = vshrl.u32 %v6925, 7
        %v6927 = vsub.s32 %v6924, %v6926
        %v6928 = vrot.slane %v6914, %v6927
        %v6929 = vcombine.high %v6921, %v6921
        %v6930 = vcombine.high %v6928, %v6928
        %v6932 = vunpack.c.l.s4 1966171168
        %v6933 = vunpack.c.0.s8 %v6932
        %v6934 = vlaneseq
        %v6935 = vshrl.u32 %v6934, 7
        %v6936 = vsub.s32 %v6933, %v6935
        %v6937 = vrot.slane %v5921, %v6936
        %v6938 = vcombine.high %v6937, %v6937
        %v6940 = vunpack.c.l.s4 1966171168
        %v6941 = vunpack.c.0.s8 %v6940
        %v6942 = vlaneseq
        %v6943 = vshrl.u32 %v6942, 7
        %v6944 = vsub.s32 %v6941, %v6943
        %v6945 = vrot.slane %v6937, %v6944
        %v6947 = vunpack.c.l.s4 1966171168
        %v6948 = vunpack.c.0.s8 %v6947
        %v6949 = vlaneseq
        %v6950 = vshrl.u32 %v6949, 7
        %v6951 = vsub.s32 %v6948, %v6950
        %v6952 = vrot.slane %v6938, %v6951
        %v6953 = vcombine.high %v6945, %v6945
        %v6954 = vcombine.high %v6952, %v6952
        %v6956 = vunpack.c.l.s4 1966171168
        %v6957 = vunpack.c.0.s8 %v6956
        %v6958 = vlaneseq
        %v6959 = vshrl.u32 %v6958, 7
        %v6960 = vsub.s32 %v6957, %v6959
        %v6961 = vrot.slane %v5922, %v6960
        %v6963 = vunpack.c.l.s4 1966171168
        %v6964 = vunpack.c.0.s8 %v6963
        %v6965 = vlaneseq
        %v6966 = vshrl.u32 %v6965, 7
        %v6967 = vsub.s32 %v6964, %v6966
        %v6968 = vrot.slane %v6961, %v6967
        %v6970 = vunpack.c.l.s4 1966171168
        %v6971 = vunpack.c.0.s8 %v6970
        %v6972 = vlaneseq
        %v6973 = vshrl.u32 %v6972, 7
        %v6974 = vsub.s32 %v6971, %v6973
        %v6975 = vrot.slane %v5923, %v6974
        %v6976 = vcombine.high %v6975, %v6975
        %v6978 = vunpack.c.l.s4 1966171168
        %v6979 = vunpack.c.0.s8 %v6978
        %v6980 = vlaneseq
        %v6981 = vshrl.u32 %v6980, 7
        %v6982 = vsub.s32 %v6979, %v6981
        %v6983 = vrot.slane %v6975, %v6982
        %v6985 = vunpack.c.l.s4 1966171168
        %v6986 = vunpack.c.0.s8 %v6985
        %v6987 = vlaneseq
        %v6988 = vshrl.u32 %v6987, 7
        %v6989 = vsub.s32 %v6986, %v6988
        %v6990 = vrot.slane %v6976, %v6989
        %v6991 = vcombine.high %v6983, %v6983
        %v6992 = vcombine.high %v6990, %v6990
        %v6994 = vunpack.c.l.s4 1966171168
        %v6995 = vunpack.c.0.s8 %v6994
        %v6996 = vlaneseq
        %v6997 = vshrl.u32 %v6996, 7
        %v6998 = vsub.s32 %v6995, %v6997
        %v6999 = vrot.slane %v5924, %v6998
        %v7000 = vcombine.high %v6999, %v6999
        %v7002 = vunpack.c.l.s4 1966171168
        %v7003 = vunpack.c.0.s8 %v7002
        %v7004 = vlaneseq
        %v7005 = vshrl.u32 %v7004, 7
        %v7006 = vsub.s32 %v7003, %v7005
        %v7007 = vrot.slane %v6999, %v7006
        %v7009 = vunpack.c.l.s4 1966171168
        %v7010 = vunpack.c.0.s8 %v7009
        %v7011 = vlaneseq
        %v7012 = vshrl.u32 %v7011, 7
        %v7013 = vsub.s32 %v7010, %v7012
        %v7014 = vrot.slane %v7000, %v7013
        %v7015 = vcombine.high %v7007, %v7007
        %v7016 = vcombine.high %v7014, %v7014
        %v7018 = vunpack.c.l.s4 1966171168
        %v7019 = vunpack.c.0.s8 %v7018
        %v7020 = vlaneseq
        %v7021 = vshrl.u32 %v7020, 7
        %v7022 = vsub.s32 %v7019, %v7021
        %v7023 = vrot.slane %v5925, %v7022
        %v7025 = vunpack.c.l.s4 1966171168
        %v7026 = vunpack.c.0.s8 %v7025
        %v7027 = vlaneseq
        %v7028 = vshrl.u32 %v7027, 7
        %v7029 = vsub.s32 %v7026, %v7028
        %v7030 = vrot.slane %v7023, %v7029
        %v7031 = vunpack.i.h.s16 %v5991
        %v7032 = vunpack.i.l.s16 %v5998
        %v7033 = vunpack.i.h.s16 %v5998
        %v7034 = vunpack.i.l.s16 %v5999
        %v7035 = vunpack.i.h.s16 %v5999
        %v7036 = vunpack.i.l.s16 %v6000
        %v7037 = vunpack.i.h.s16 %v6000
        %v7038 = vunpack.i.l.s16 %v6015
        %v7039 = vunpack.i.h.s16 %v6015
        %v7040 = vunpack.i.l.s16 %v6022
        %v7041 = vunpack.i.h.s16 %v6022
        %v7042 = vunpack.i.l.s16 %v6023
        %v7043 = vunpack.i.h.s16 %v6023
        %v7044 = vunpack.i.l.s16 %v6024
        %v7045 = vunpack.i.h.s16 %v6024
        %v7046 = vunpack.i.l.s16 %v6038
        %v7047 = vunpack.i.h.s16 %v6038
        %v7048 = vunpack.i.h.s16 %v6053
        %v7049 = vunpack.i.l.s16 %v6060
        %v7050 = vunpack.i.h.s16 %v6060
        %v7051 = vunpack.i.l.s16 %v6061
        %v7052 = vunpack.i.h.s16 %v6061
        %v7053 = vunpack.i.l.s16 %v6062
        %v7054 = vunpack.i.h.s16 %v6062
        %v7055 = vunpack.i.l.s16 %v6077
        %v7056 = vunpack.i.h.s16 %v6077
        %v7057 = vunpack.i.l.s16 %v6084
        %v7058 = vunpack.i.h.s16 %v6084
        %v7059 = vunpack.i.l.s16 %v6085
        %v7060 = vunpack.i.h.s16 %v6085
        %v7061 = vunpack.i.l.s16 %v6086
        %v7062 = vunpack.i.h.s16 %v6086
        %v7063 = vunpack.i.l.s16 %v6100
        %v7064 = vunpack.i.h.s16 %v6100
        %v7065 = vunpack.i.h.s16 %v6115
        %v7066 = vunpack.i.l.s16 %v6122
        %v7067 = vunpack.i.h.s16 %v6122
        %v7068 = vunpack.i.l.s16 %v6123
        %v7069 = vunpack.i.h.s16 %v6123
        %v7070 = vunpack.i.l.s16 %v6124
        %v7071 = vunpack.i.h.s16 %v6124
        %v7072 = vunpack.i.l.s16 %v6139
        %v7073 = vunpack.i.h.s16 %v6139
        %v7074 = vunpack.i.l.s16 %v6146
        %v7075 = vunpack.i.h.s16 %v6146
        %v7076 = vunpack.i.l.s16 %v6147
        %v7077 = vunpack.i.h.s16 %v6147
        %v7078 = vunpack.i.l.s16 %v6148
        %v7079 = vunpack.i.h.s16 %v6148
        %v7080 = vunpack.i.l.s16 %v6162
        %v7081 = vunpack.i.h.s16 %v6162
        %v7082 = vunpack.i.h.s16 %v6177
        %v7083 = vunpack.i.l.s16 %v6184
        %v7084 = vunpack.i.h.s16 %v6184
        %v7085 = vunpack.i.l.s16 %v6185
        %v7086 = vunpack.i.h.s16 %v6185
        %v7087 = vunpack.i.l.s16 %v6186
        %v7088 = vunpack.i.h.s16 %v6186
        %v7089 = vunpack.i.l.s16 %v6201
        %v7090 = vunpack.i.h.s16 %v6201
        %v7091 = vunpack.i.l.s16 %v6208
        %v7092 = vunpack.i.h.s16 %v6208
        %v7093 = vunpack.i.l.s16 %v6209
        %v7094 = vunpack.i.h.s16 %v6209
        %v7095 = vunpack.i.l.s16 %v6210
        %v7096 = vunpack.i.h.s16 %v6210
        %v7097 = vunpack.i.l.s16 %v6224
        %v7098 = vunpack.i.h.s16 %v6224
        %v7099 = vunpack.i.h.s16 %v6239
        %v7100 = vunpack.i.l.s16 %v6246
        %v7101 = vunpack.i.h.s16 %v6246
        %v7102 = vunpack.i.l.s16 %v6247
        %v7103 = vunpack.i.h.s16 %v6247
        %v7104 = vunpack.i.l.s16 %v6248
        %v7105 = vunpack.i.h.s16 %v6248
        %v7106 = vunpack.i.l.s16 %v6263
        %v7107 = vunpack.i.h.s16 %v6263
        %v7108 = vunpack.i.l.s16 %v6270
        %v7109 = vunpack.i.h.s16 %v6270
        %v7110 = vunpack.i.l.s16 %v6271
        %v7111 = vunpack.i.h.s16 %v6271
        %v7112 = vunpack.i.l.s16 %v6272
        %v7113 = vunpack.i.h.s16 %v6272
        %v7114 = vunpack.i.l.s16 %v6286
        %v7115 = vunpack.i.h.s16 %v6286
        %v7116 = vunpack.i.h.s16 %v6301
        %v7117 = vunpack.i.l.s16 %v6308
        %v7118 = vunpack.i.h.s16 %v6308
        %v7119 = vunpack.i.l.s16 %v6309
        %v7120 = vunpack.i.h.s16 %v6309
        %v7121 = vunpack.i.l.s16 %v6310
        %v7122 = vunpack.i.h.s16 %v6310
        %v7123 = vunpack.i.l.s16 %v6325
        %v7124 = vunpack.i.h.s16 %v6325
        %v7125 = vunpack.i.l.s16 %v6332
        %v7126 = vunpack.i.h.s16 %v6332
        %v7127 = vunpack.i.l.s16 %v6333
        %v7128 = vunpack.i.h.s16 %v6333
        %v7129 = vunpack.i.l.s16 %v6334
        %v7130 = vunpack.i.h.s16 %v6334
        %v7131 = vunpack.i.l.s16 %v6348
        %v7132 = vunpack.i.h.s16 %v6348
        %v7133 = vunpack.i.h.s16 %v6363
        %v7134 = vunpack.i.l.s16 %v6370
        %v7135 = vunpack.i.h.s16 %v6370
        %v7136 = vunpack.i.l.s16 %v6371
        %v7137 = vunpack.i.h.s16 %v6371
        %v7138 = vunpack.i.l.s16 %v6372
        %v7139 = vunpack.i.h.s16 %v6372
        %v7140 = vunpack.i.l.s16 %v6387
        %v7141 = vunpack.i.h.s16 %v6387
        %v7142 = vunpack.i.l.s16 %v6394
        %v7143 = vunpack.i.h.s16 %v6394
        %v7144 = vunpack.i.l.s16 %v6395
        %v7145 = vunpack.i.h.s16 %v6395
        %v7146 = vunpack.i.l.s16 %v6396
        %v7147 = vunpack.i.h.s16 %v6396
        %v7148 = vunpack.i.l.s16 %v6410
        %v7149 = vunpack.i.h.s16 %v6410
        %v7150 = vunpack.i.h.s16 %v6425
        %v7151 = vunpack.i.l.s16 %v6432
        %v7152 = vunpack.i.h.s16 %v6432
        %v7153 = vunpack.i.l.s16 %v6433
        %v7154 = vunpack.i.h.s16 %v6433
        %v7155 = vunpack.i.l.s16 %v6434
        %v7156 = vunpack.i.h.s16 %v6434
        %v7157 = vunpack.i.l.s16 %v6449
        %v7158 = vunpack.i.h.s16 %v6449
        %v7159 = vunpack.i.l.s16 %v6456
        %v7160 = vunpack.i.h.s16 %v6456
        %v7161 = vunpack.i.l.s16 %v6457
        %v7162 = vunpack.i.h.s16 %v6457
        %v7163 = vunpack.i.l.s16 %v6458
        %v7164 = vunpack.i.h.s16 %v6458
        %v7165 = vunpack.i.l.s16 %v6472
        %v7166 = vunpack.i.h.s16 %v6472
        %v7167 = vunpack.i.h.s16 %v6487
        %v7168 = vunpack.i.l.s16 %v6494
        %v7169 = vunpack.i.h.s16 %v6494
        %v7170 = vunpack.i.l.s16 %v6495
        %v7171 = vunpack.i.h.s16 %v6495
        %v7172 = vunpack.i.l.s16 %v6496
        %v7173 = vunpack.i.h.s16 %v6496
        %v7174 = vunpack.i.l.s16 %v6511
        %v7175 = vunpack.i.h.s16 %v6511
        %v7176 = vunpack.i.l.s16 %v6518
        %v7177 = vunpack.i.h.s16 %v6518
        %v7178 = vunpack.i.l.s16 %v6519
        %v7179 = vunpack.i.h.s16 %v6519
        %v7180 = vunpack.i.l.s16 %v6520
        %v7181 = vunpack.i.h.s16 %v6520
        %v7182 = vunpack.i.l.s16 %v6534
        %v7183 = vunpack.i.h.s16 %v6534
        %v7184 = vunpack.i.h.s16 %v6549
        %v7185 = vunpack.i.l.s16 %v6556
        %v7186 = vunpack.i.h.s16 %v6556
        %v7187 = vunpack.i.l.s16 %v6557
        %v7188 = vunpack.i.h.s16 %v6557
        %v7189 = vunpack.i.l.s16 %v6558
        %v7190 = vunpack.i.h.s16 %v6558
        %v7191 = vunpack.i.l.s16 %v6573
        %v7192 = vunpack.i.h.s16 %v6573
        %v7193 = vunpack.i.l.s16 %v6580
        %v7194 = vunpack.i.h.s16 %v6580
        %v7195 = vunpack.i.l.s16 %v6581
        %v7196 = vunpack.i.h.s16 %v6581
        %v7197 = vunpack.i.l.s16 %v6582
        %v7198 = vunpack.i.h.s16 %v6582
        %v7199 = vunpack.i.l.s16 %v6596
        %v7200 = vunpack.i.h.s16 %v6596
        %v7201 = vunpack.i.h.s16 %v6611
        %v7202 = vunpack.i.l.s16 %v6618
        %v7203 = vunpack.i.h.s16 %v6618
        %v7204 = vunpack.i.l.s16 %v6619
        %v7205 = vunpack.i.h.s16 %v6619
        %v7206 = vunpack.i.l.s16 %v6620
        %v7207 = vunpack.i.h.s16 %v6620
        %v7208 = vunpack.i.l.s16 %v6635
        %v7209 = vunpack.i.h.s16 %v6635
        %v7210 = vunpack.i.l.s16 %v6642
        %v7211 = vunpack.i.h.s16 %v6642
        %v7212 = vunpack.i.l.s16 %v6643
        %v7213 = vunpack.i.h.s16 %v6643
        %v7214 = vunpack.i.l.s16 %v6644
        %v7215 = vunpack.i.h.s16 %v6644
        %v7216 = vunpack.i.l.s16 %v6658
        %v7217 = vunpack.i.h.s16 %v6658
        %v7218 = vunpack.i.h.s16 %v6673
        %v7219 = vunpack.i.l.s16 %v6680
        %v7220 = vunpack.i.h.s16 %v6680
        %v7221 = vunpack.i.l.s16 %v6681
        %v7222 = vunpack.i.h.s16 %v6681
        %v7223 = vunpack.i.l.s16 %v6682
        %v7224 = vunpack.i.h.s16 %v6682
        %v7225 = vunpack.i.l.s16 %v6697
        %v7226 = vunpack.i.h.s16 %v6697
        %v7227 = vunpack.i.l.s16 %v6704
        %v7228 = vunpack.i.h.s16 %v6704
        %v7229 = vunpack.i.l.s16 %v6705
        %v7230 = vunpack.i.h.s16 %v6705
        %v7231 = vunpack.i.l.s16 %v6706
        %v7232 = vunpack.i.h.s16 %v6706
        %v7233 = vunpack.i.l.s16 %v6720
        %v7234 = vunpack.i.h.s16 %v6720
        %v7235 = vunpack.i.h.s16 %v6735
        %v7236 = vunpack.i.l.s16 %v6742
        %v7237 = vunpack.i.h.s16 %v6742
        %v7238 = vunpack.i.l.s16 %v6743
        %v7239 = vunpack.i.h.s16 %v6743
        %v7240 = vunpack.i.l.s16 %v6744
        %v7241 = vunpack.i.h.s16 %v6744
        %v7242 = vunpack.i.l.s16 %v6759
        %v7243 = vunpack.i.h.s16 %v6759
        %v7244 = vunpack.i.l.s16 %v6766
        %v7245 = vunpack.i.h.s16 %v6766
        %v7246 = vunpack.i.l.s16 %v6767
        %v7247 = vunpack.i.h.s16 %v6767
        %v7248 = vunpack.i.l.s16 %v6768
        %v7249 = vunpack.i.h.s16 %v6768
        %v7250 = vunpack.i.l.s16 %v6782
        %v7251 = vunpack.i.h.s16 %v6782
        %v7252 = vunpack.i.h.s16 %v6797
        %v7253 = vunpack.i.l.s16 %v6804
        %v7254 = vunpack.i.h.s16 %v6804
        %v7255 = vunpack.i.l.s16 %v6805
        %v7256 = vunpack.i.h.s16 %v6805
        %v7257 = vunpack.i.l.s16 %v6806
        %v7258 = vunpack.i.h.s16 %v6806
        %v7259 = vunpack.i.l.s16 %v6821
        %v7260 = vunpack.i.h.s16 %v6821
        %v7261 = vunpack.i.l.s16 %v6828
        %v7262 = vunpack.i.h.s16 %v6828
        %v7263 = vunpack.i.l.s16 %v6829
        %v7264 = vunpack.i.h.s16 %v6829
        %v7265 = vunpack.i.l.s16 %v6830
        %v7266 = vunpack.i.h.s16 %v6830
        %v7267 = vunpack.i.l.s16 %v6844
        %v7268 = vunpack.i.h.s16 %v6844
        %v7269 = vunpack.i.h.s16 %v6859
        %v7270 = vunpack.i.l.s16 %v6866
        %v7271 = vunpack.i.h.s16 %v6866
        %v7272 = vunpack.i.l.s16 %v6867
        %v7273 = vunpack.i.h.s16 %v6867
        %v7274 = vunpack.i.l.s16 %v6868
        %v7275 = vunpack.i.h.s16 %v6868
        %v7276 = vunpack.i.l.s16 %v6883
        %v7277 = vunpack.i.h.s16 %v6883
        %v7278 = vunpack.i.l.s16 %v6890
        %v7279 = vunpack.i.h.s16 %v6890
        %v7280 = vunpack.i.l.s16 %v6891
        %v7281 = vunpack.i.h.s16 %v6891
        %v7282 = vunpack.i.l.s16 %v6892
        %v7283 = vunpack.i.h.s16 %v6892
        %v7284 = vunpack.i.l.s16 %v6906
        %v7285 = vunpack.i.h.s16 %v6906
        %v7286 = vunpack.i.h.s16 %v6921
        %v7287 = vunpack.i.l.s16 %v6928
        %v7288 = vunpack.i.h.s16 %v6928
        %v7289 = vunpack.i.l.s16 %v6929
        %v7290 = vunpack.i.h.s16 %v6929
        %v7291 = vunpack.i.l.s16 %v6930
        %v7292 = vunpack.i.h.s16 %v6930
        %v7293 = vunpack.i.l.s16 %v6945
        %v7294 = vunpack.i.h.s16 %v6945
        %v7295 = vunpack.i.l.s16 %v6952
        %v7296 = vunpack.i.h.s16 %v6952
        %v7297 = vunpack.i.l.s16 %v6953
        %v7298 = vunpack.i.h.s16 %v6953
        %v7299 = vunpack.i.l.s16 %v6954
        %v7300 = vunpack.i.h.s16 %v6954
        %v7301 = vunpack.i.l.s16 %v6968
        %v7302 = vunpack.i.h.s16 %v6968
        %v7303 = vunpack.i.h.s16 %v6983
        %v7304 = vunpack.i.l.s16 %v6990
        %v7305 = vunpack.i.h.s16 %v6990
        %v7306 = vunpack.i.l.s16 %v6991
        %v7307 = vunpack.i.h.s16 %v6991
        %v7308 = vunpack.i.l.s16 %v6992
        %v7309 = vunpack.i.h.s16 %v6992
        %v7310 = vunpack.i.l.s16 %v7007
        %v7311 = vunpack.i.h.s16 %v7007
        %v7312 = vunpack.i.l.s16 %v7014
        %v7313 = vunpack.i.h.s16 %v7014
        %v7314 = vunpack.i.l.s16 %v7015
        %v7315 = vunpack.i.h.s16 %v7015
        %v7316 = vunpack.i.l.s16 %v7016
        %v7317 = vunpack.i.h.s16 %v7016
        %v7318 = vunpack.i.l.s16 %v7030
        %v7319 = vunpack.i.h.s16 %v7030
        %v7320 = vpack.i.b16 %v7032, %v7031
        %v7321 = vpack.i.b16 %v7034, %v7033
        %v7322 = vpack.i.b16 %v7036, %v7035
        %v7323 = vpack.i.b16 %v7038, %v7037
        %v7324 = vpack.i.b16 %v7040, %v7039
        %v7325 = vpack.i.b16 %v7042, %v7041
        %v7326 = vpack.i.b16 %v7044, %v7043
        %v7327 = vpack.i.b16 %v7046, %v7045
        %v7328 = vpack.i.b16 %v7048, %v7047
        %v7329 = vpack.i.b16 %v7050, %v7049
        %v7330 = vpack.i.b16 %v7052, %v7051
        %v7331 = vpack.i.b16 %v7054, %v7053
        %v7332 = vpack.i.b16 %v7056, %v7055
        %v7333 = vpack.i.b16 %v7058, %v7057
        %v7334 = vpack.i.b16 %v7060, %v7059
        %v7335 = vpack.i.b16 %v7062, %v7061
        %v7336 = vpack.i.b16 %v7064, %v7063
        %v7337 = vpack.i.b16 %v7066, %v7065
        %v7338 = vpack.i.b16 %v7068, %v7067
        %v7339 = vpack.i.b16 %v7070, %v7069
        %v7340 = vpack.i.b16 %v7072, %v7071
        %v7341 = vpack.i.b16 %v7074, %v7073
        %v7342 = vpack.i.b16 %v7076, %v7075
        %v7343 = vpack.i.b16 %v7078, %v7077
        %v7344 = vpack.i.b16 %v7080, %v7079
        %v7345 = vpack.i.b16 %v7082, %v7081
        %v7346 = vpack.i.b16 %v7084, %v7083
        %v7347 = vpack.i.b16 %v7086, %v7085
        %v7348 = vpack.i.b16 %v7088, %v7087
        %v7349 = vpack.i.b16 %v7090, %v7089
        %v7350 = vpack.i.b16 %v7092, %v7091
        %v7351 = vpack.i.b16 %v7094, %v7093
        %v7352 = vpack.i.b16 %v7096, %v7095
        %v7353 = vpack.i.b16 %v7098, %v7097
        %v7354 = vpack.i.b16 %v7100, %v7099
        %v7355 = vpack.i.b16 %v7102, %v7101
        %v7356 = vpack.i.b16 %v7104, %v7103
        %v7357 = vpack.i.b16 %v7106, %v7105
        %v7358 = vpack.i.b16 %v7108, %v7107
        %v7359 = vpack.i.b16 %v7110, %v7109
        %v7360 = vpack.i.b16 %v7112, %v7111
        %v7361 = vpack.i.b16 %v7114, %v7113
        %v7362 = vpack.i.b16 %v7116, %v7115
        %v7363 = vpack.i.b16 %v7118, %v7117
        %v7364 = vpack.i.b16 %v7120, %v7119
        %v7365 = vpack.i.b16 %v7122, %v7121
        %v7366 = vpack.i.b16 %v7124, %v7123
        %v7367 = vpack.i.b16 %v7126, %v7125
        %v7368 = vpack.i.b16 %v7128, %v7127
        %v7369 = vpack.i.b16 %v7130, %v7129
        %v7370 = vpack.i.b16 %v7132, %v7131
        %v7371 = vpack.i.b16 %v7134, %v7133
        %v7372 = vpack.i.b16 %v7136, %v7135
        %v7373 = vpack.i.b16 %v7138, %v7137
        %v7374 = vpack.i.b16 %v7140, %v7139
        %v7375 = vpack.i.b16 %v7142, %v7141
        %v7376 = vpack.i.b16 %v7144, %v7143
        %v7377 = vpack.i.b16 %v7146, %v7145
        %v7378 = vpack.i.b16 %v7148, %v7147
        %v7379 = vpack.i.b16 %v7150, %v7149
        %v7380 = vpack.i.b16 %v7152, %v7151
        %v7381 = vpack.i.b16 %v7154, %v7153
        %v7382 = vpack.i.b16 %v7156, %v7155
        %v7383 = vpack.i.b16 %v7158, %v7157
        %v7384 = vpack.i.b16 %v7160, %v7159
        %v7385 = vpack.i.b16 %v7162, %v7161
        %v7386 = vpack.i.b16 %v7164, %v7163
        %v7387 = vpack.i.b16 %v7166, %v7165
        %v7388 = vpack.i.b16 %v7168, %v7167
        %v7389 = vpack.i.b16 %v7170, %v7169
        %v7390 = vpack.i.b16 %v7172, %v7171
        %v7391 = vpack.i.b16 %v7174, %v7173
        %v7392 = vpack.i.b16 %v7176, %v7175
        %v7393 = vpack.i.b16 %v7178, %v7177
        %v7394 = vpack.i.b16 %v7180, %v7179
        %v7395 = vpack.i.b16 %v7182, %v7181
        %v7396 = vpack.i.b16 %v7184, %v7183
        %v7397 = vpack.i.b16 %v7186, %v7185
        %v7398 = vpack.i.b16 %v7188, %v7187
        %v7399 = vpack.i.b16 %v7190, %v7189
        %v7400 = vpack.i.b16 %v7192, %v7191
        %v7401 = vpack.i.b16 %v7194, %v7193
        %v7402 = vpack.i.b16 %v7196, %v7195
        %v7403 = vpack.i.b16 %v7198, %v7197
        %v7404 = vpack.i.b16 %v7200, %v7199
        %v7405 = vpack.i.b16 %v7202, %v7201
        %v7406 = vpack.i.b16 %v7204, %v7203
        %v7407 = vpack.i.b16 %v7206, %v7205
        %v7408 = vpack.i.b16 %v7208, %v7207
        %v7409 = vpack.i.b16 %v7210, %v7209
        %v7410 = vpack.i.b16 %v7212, %v7211
        %v7411 = vpack.i.b16 %v7214, %v7213
        %v7412 = vpack.i.b16 %v7216, %v7215
        %v7413 = vpack.i.b16 %v7218, %v7217
        %v7414 = vpack.i.b16 %v7220, %v7219
        %v7415 = vpack.i.b16 %v7222, %v7221
        %v7416 = vpack.i.b16 %v7224, %v7223
        %v7417 = vpack.i.b16 %v7226, %v7225
        %v7418 = vpack.i.b16 %v7228, %v7227
        %v7419 = vpack.i.b16 %v7230, %v7229
        %v7420 = vpack.i.b16 %v7232, %v7231
        %v7421 = vpack.i.b16 %v7234, %v7233
        %v7422 = vpack.i.b16 %v7236, %v7235
        %v7423 = vpack.i.b16 %v7238, %v7237
        %v7424 = vpack.i.b16 %v7240, %v7239
        %v7425 = vpack.i.b16 %v7242, %v7241
        %v7426 = vpack.i.b16 %v7244, %v7243
        %v7427 = vpack.i.b16 %v7246, %v7245
        %v7428 = vpack.i.b16 %v7248, %v7247
        %v7429 = vpack.i.b16 %v7250, %v7249
        %v7430 = vpack.i.b16 %v7252, %v7251
        %v7431 = vpack.i.b16 %v7254, %v7253
        %v7432 = vpack.i.b16 %v7256, %v7255
        %v7433 = vpack.i.b16 %v7258, %v7257
        %v7434 = vpack.i.b16 %v7260, %v7259
        %v7435 = vpack.i.b16 %v7262, %v7261
        %v7436 = vpack.i.b16 %v7264, %v7263
        %v7437 = vpack.i.b16 %v7266, %v7265
        %v7438 = vpack.i.b16 %v7268, %v7267
        %v7439 = vpack.i.b16 %v7270, %v7269
        %v7440 = vpack.i.b16 %v7272, %v7271
        %v7441 = vpack.i.b16 %v7274, %v7273
        %v7442 = vpack.i.b16 %v7276, %v7275
        %v7443 = vpack.i.b16 %v7278, %v7277
        %v7444 = vpack.i.b16 %v7280, %v7279
        %v7445 = vpack.i.b16 %v7282, %v7281
        %v7446 = vpack.i.b16 %v7284, %v7283
        %v7447 = vpack.i.b16 %v7286, %v7285
        %v7448 = vpack.i.b16 %v7288, %v7287
        %v7449 = vpack.i.b16 %v7290, %v7289
        %v7450 = vpack.i.b16 %v7292, %v7291
        %v7451 = vpack.i.b16 %v7294, %v7293
        %v7452 = vpack.i.b16 %v7296, %v7295
        %v7453 = vpack.i.b16 %v7298, %v7297
        %v7454 = vpack.i.b16 %v7300, %v7299
        %v7455 = vpack.i.b16 %v7302, %v7301
        %v7456 = vpack.i.b16 %v7304, %v7303
        %v7457 = vpack.i.b16 %v7306, %v7305
        %v7458 = vpack.i.b16 %v7308, %v7307
        %v7459 = vpack.i.b16 %v7310, %v7309
        %v7460 = vpack.i.b16 %v7312, %v7311
        %v7461 = vpack.i.b16 %v7314, %v7313
        %v7462 = vpack.i.b16 %v7316, %v7315
        %v7463 = vpack.i.b16 %v7318, %v7317
        %v7465 = vcombine.low %v7320, %v7322
        %v7466 = vcombine.low %v7321, %v7323
        %v7468 = vunpack.c.l.s4 1935823168
        %v7469 = vunpack.c.0.s8 %v7468
        %v7470 = vlaneseq
        %v7471 = vshrl.u32 %v7470, 7
        %v7472 = vsub.s32 %v7469, %v7471
        %v7473 = vrot.slane %v7465, %v7472
        %v7475 = vunpack.c.l.s4 1935823168
        %v7476 = vunpack.c.0.s8 %v7475
        %v7477 = vlaneseq
        %v7478 = vshrl.u32 %v7477, 7
        %v7479 = vsub.s32 %v7476, %v7478
        %v7480 = vrot.slane %v7466, %v7479
        %v7481 = vcombine.low %v7473, %v7480
        %v7483 = vunpack.c.l.s4 1935823168
        %v7484 = vunpack.c.0.s8 %v7483
        %v7485 = vlaneseq
        %v7486 = vshrl.u32 %v7485, 7
        %v7487 = vsub.s32 %v7484, %v7486
        %v7488 = vrot.slane %v7481, %v7487
        %v7489 = vcombine.low %v7324, %v7326
        %v7490 = vcombine.low %v7325, %v7327
        %v7492 = vunpack.c.l.s4 1935823168
        %v7493 = vunpack.c.0.s8 %v7492
        %v7494 = vlaneseq
        %v7495 = vshrl.u32 %v7494, 7
        %v7496 = vsub.s32 %v7493, %v7495
        %v7497 = vrot.slane %v7489, %v7496
        %v7499 = vunpack.c.l.s4 1935823168
        %v7500 = vunpack.c.0.s8 %v7499
        %v7501 = vlaneseq
        %v7502 = vshrl.u32 %v7501, 7
        %v7503 = vsub.s32 %v7500, %v7502
        %v7504 = vrot.slane %v7490, %v7503
        %v7505 = vcombine.low %v7497, %v7504
        %v7507 = vunpack.c.l.s4 1935823168
        %v7508 = vunpack.c.0.s8 %v7507
        %v7509 = vlaneseq
        %v7510 = vshrl.u32 %v7509, 7
        %v7511 = vsub.s32 %v7508, %v7510
        %v7512 = vrot.slane %v7505, %v7511
        %v7513 = vcombine.low %v7328, %v7330
        %v7514 = vcombine.low %v7329, %v7331
        %v7516 = vunpack.c.l.s4 1935823168
        %v7517 = vunpack.c.0.s8 %v7516
        %v7518 = vlaneseq
        %v7519 = vshrl.u32 %v7518, 7
        %v7520 = vsub.s32 %v7517, %v7519
        %v7521 = vrot.slane %v7513, %v7520
        %v7523 = vunpack.c.l.s4 1935823168
        %v7524 = vunpack.c.0.s8 %v7523
        %v7525 = vlaneseq
        %v7526 = vshrl.u32 %v7525, 7
        %v7527 = vsub.s32 %v7524, %v7526
        %v7528 = vrot.slane %v7514, %v7527
        %v7529 = vcombine.low %v7521, %v7528
        %v7531 = vunpack.c.l.s4 1935823168
        %v7532 = vunpack.c.0.s8 %v7531
        %v7533 = vlaneseq
        %v7534 = vshrl.u32 %v7533, 7
        %v7535 = vsub.s32 %v7532, %v7534
        %v7536 = vrot.slane %v7529, %v7535
        %v7537 = vcombine.low %v7332, %v7334
        %v7538 = vcombine.low %v7333, %v7335
        %v7540 = vunpack.c.l.s4 1935823168
        %v7541 = vunpack.c.0.s8 %v7540
        %v7542 = vlaneseq
        %v7543 = vshrl.u32 %v7542, 7
        %v7544 = vsub.s32 %v7541, %v7543
        %v7545 = vrot.slane %v7537, %v7544
        %v7547 = vunpack.c.l.s4 1935823168
        %v7548 = vunpack.c.0.s8 %v7547
        %v7549 = vlaneseq
        %v7550 = vshrl.u32 %v7549, 7
        %v7551 = vsub.s32 %v7548, %v7550
        %v7552 = vrot.slane %v7538, %v7551
        %v7553 = vcombine.low %v7545, %v7552
        %v7555 = vunpack.c.l.s4 1935823168
        %v7556 = vunpack.c.0.s8 %v7555
        %v7557 = vlaneseq
        %v7558 = vshrl.u32 %v7557, 7
        %v7559 = vsub.s32 %v7556, %v7558
        %v7560 = vrot.slane %v7553, %v7559
        %v7561 = vcombine.low %v7336, %v7338
        %v7562 = vcombine.low %v7337, %v7339
        %v7564 = vunpack.c.l.s4 1935823168
        %v7565 = vunpack.c.0.s8 %v7564
        %v7566 = vlaneseq
        %v7567 = vshrl.u32 %v7566, 7
        %v7568 = vsub.s32 %v7565, %v7567
        %v7569 = vrot.slane %v7561, %v7568
        %v7571 = vunpack.c.l.s4 1935823168
        %v7572 = vunpack.c.0.s8 %v7571
        %v7573 = vlaneseq
        %v7574 = vshrl.u32 %v7573, 7
        %v7575 = vsub.s32 %v7572, %v7574
        %v7576 = vrot.slane %v7562, %v7575
        %v7577 = vcombine.low %v7569, %v7576
        %v7579 = vunpack.c.l.s4 1935823168
        %v7580 = vunpack.c.0.s8 %v7579
        %v7581 = vlaneseq
        %v7582 = vshrl.u32 %v7581, 7
        %v7583 = vsub.s32 %v7580, %v7582
        %v7584 = vrot.slane %v7577, %v7583
        %v7585 = vcombine.low %v7340, %v7342
        %v7586 = vcombine.low %v7341, %v7343
        %v7588 = vunpack.c.l.s4 1935823168
        %v7589 = vunpack.c.0.s8 %v7588
        %v7590 = vlaneseq
        %v7591 = vshrl.u32 %v7590, 7
        %v7592 = vsub.s32 %v7589, %v7591
        %v7593 = vrot.slane %v7585, %v7592
        %v7595 = vunpack.c.l.s4 1935823168
        %v7596 = vunpack.c.0.s8 %v7595
        %v7597 = vlaneseq
        %v7598 = vshrl.u32 %v7597, 7
        %v7599 = vsub.s32 %v7596, %v7598
        %v7600 = vrot.slane %v7586, %v7599
        %v7601 = vcombine.low %v7593, %v7600
        %v7603 = vunpack.c.l.s4 1935823168
        %v7604 = vunpack.c.0.s8 %v7603
        %v7605 = vlaneseq
        %v7606 = vshrl.u32 %v7605, 7
        %v7607 = vsub.s32 %v7604, %v7606
        %v7608 = vrot.slane %v7601, %v7607
        %v7609 = vcombine.low %v7344, %v7346
        %v7610 = vcombine.low %v7345, %v7347
        %v7612 = vunpack.c.l.s4 1935823168
        %v7613 = vunpack.c.0.s8 %v7612
        %v7614 = vlaneseq
        %v7615 = vshrl.u32 %v7614, 7
        %v7616 = vsub.s32 %v7613, %v7615
        %v7617 = vrot.slane %v7609, %v7616
        %v7619 = vunpack.c.l.s4 1935823168
        %v7620 = vunpack.c.0.s8 %v7619
        %v7621 = vlaneseq
        %v7622 = vshrl.u32 %v7621, 7
        %v7623 = vsub.s32 %v7620, %v7622
        %v7624 = vrot.slane %v7610, %v7623
        %v7625 = vcombine.low %v7617, %v7624
        %v7627 = vunpack.c.l.s4 1935823168
        %v7628 = vunpack.c.0.s8 %v7627
        %v7629 = vlaneseq
        %v7630 = vshrl.u32 %v7629, 7
        %v7631 = vsub.s32 %v7628, %v7630
        %v7632 = vrot.slane %v7625, %v7631
        %v7633 = vcombine.low %v7348, %v7350
        %v7634 = vcombine.low %v7349, %v7351
        %v7636 = vunpack.c.l.s4 1935823168
        %v7637 = vunpack.c.0.s8 %v7636
        %v7638 = vlaneseq
        %v7639 = vshrl.u32 %v7638, 7
        %v7640 = vsub.s32 %v7637, %v7639
        %v7641 = vrot.slane %v7633, %v7640
        %v7643 = vunpack.c.l.s4 1935823168
        %v7644 = vunpack.c.0.s8 %v7643
        %v7645 = vlaneseq
        %v7646 = vshrl.u32 %v7645, 7
        %v7647 = vsub.s32 %v7644, %v7646
        %v7648 = vrot.slane %v7634, %v7647
        %v7649 = vcombine.low %v7641, %v7648
        %v7651 = vunpack.c.l.s4 1935823168
        %v7652 = vunpack.c.0.s8 %v7651
        %v7653 = vlaneseq
        %v7654 = vshrl.u32 %v7653, 7
        %v7655 = vsub.s32 %v7652, %v7654
        %v7656 = vrot.slane %v7649, %v7655
        %v7657 = vcombine.low %v7352, %v7354
        %v7658 = vcombine.low %v7353, %v7355
        %v7660 = vunpack.c.l.s4 1935823168
        %v7661 = vunpack.c.0.s8 %v7660
        %v7662 = vlaneseq
        %v7663 = vshrl.u32 %v7662, 7
        %v7664 = vsub.s32 %v7661, %v7663
        %v7665 = vrot.slane %v7657, %v7664
        %v7667 = vunpack.c.l.s4 1935823168
        %v7668 = vunpack.c.0.s8 %v7667
        %v7669 = vlaneseq
        %v7670 = vshrl.u32 %v7669, 7
        %v7671 = vsub.s32 %v7668, %v7670
        %v7672 = vrot.slane %v7658, %v7671
        %v7673 = vcombine.low %v7665, %v7672
        %v7675 = vunpack.c.l.s4 1935823168
        %v7676 = vunpack.c.0.s8 %v7675
        %v7677 = vlaneseq
        %v7678 = vshrl.u32 %v7677, 7
        %v7679 = vsub.s32 %v7676, %v7678
        %v7680 = vrot.slane %v7673, %v7679
        %v7681 = vcombine.low %v7356, %v7358
        %v7682 = vcombine.low %v7357, %v7359
        %v7684 = vunpack.c.l.s4 1935823168
        %v7685 = vunpack.c.0.s8 %v7684
        %v7686 = vlaneseq
        %v7687 = vshrl.u32 %v7686, 7
        %v7688 = vsub.s32 %v7685, %v7687
        %v7689 = vrot.slane %v7681, %v7688
        %v7691 = vunpack.c.l.s4 1935823168
        %v7692 = vunpack.c.0.s8 %v7691
        %v7693 = vlaneseq
        %v7694 = vshrl.u32 %v7693, 7
        %v7695 = vsub.s32 %v7692, %v7694
        %v7696 = vrot.slane %v7682, %v7695
        %v7697 = vcombine.low %v7689, %v7696
        %v7699 = vunpack.c.l.s4 1935823168
        %v7700 = vunpack.c.0.s8 %v7699
        %v7701 = vlaneseq
        %v7702 = vshrl.u32 %v7701, 7
        %v7703 = vsub.s32 %v7700, %v7702
        %v7704 = vrot.slane %v7697, %v7703
        %v7705 = vcombine.low %v7360, %v7362
        %v7706 = vcombine.low %v7361, %v7363
        %v7708 = vunpack.c.l.s4 1935823168
        %v7709 = vunpack.c.0.s8 %v7708
        %v7710 = vlaneseq
        %v7711 = vshrl.u32 %v7710, 7
        %v7712 = vsub.s32 %v7709, %v7711
        %v7713 = vrot.slane %v7705, %v7712
        %v7715 = vunpack.c.l.s4 1935823168
        %v7716 = vunpack.c.0.s8 %v7715
        %v7717 = vlaneseq
        %v7718 = vshrl.u32 %v7717, 7
        %v7719 = vsub.s32 %v7716, %v7718
        %v7720 = vrot.slane %v7706, %v7719
        %v7721 = vcombine.low %v7713, %v7720
        %v7723 = vunpack.c.l.s4 1935823168
        %v7724 = vunpack.c.0.s8 %v7723
        %v7725 = vlaneseq
        %v7726 = vshrl.u32 %v7725, 7
        %v7727 = vsub.s32 %v7724, %v7726
        %v7728 = vrot.slane %v7721, %v7727
        %v7729 = vcombine.low %v7364, %v7366
        %v7730 = vcombine.low %v7365, %v7367
        %v7732 = vunpack.c.l.s4 1935823168
        %v7733 = vunpack.c.0.s8 %v7732
        %v7734 = vlaneseq
        %v7735 = vshrl.u32 %v7734, 7
        %v7736 = vsub.s32 %v7733, %v7735
        %v7737 = vrot.slane %v7729, %v7736
        %v7739 = vunpack.c.l.s4 1935823168
        %v7740 = vunpack.c.0.s8 %v7739
        %v7741 = vlaneseq
        %v7742 = vshrl.u32 %v7741, 7
        %v7743 = vsub.s32 %v7740, %v7742
        %v7744 = vrot.slane %v7730, %v7743
        %v7745 = vcombine.low %v7737, %v7744
        %v7747 = vunpack.c.l.s4 1935823168
        %v7748 = vunpack.c.0.s8 %v7747
        %v7749 = vlaneseq
        %v7750 = vshrl.u32 %v7749, 7
        %v7751 = vsub.s32 %v7748, %v7750
        %v7752 = vrot.slane %v7745, %v7751
        %v7753 = vcombine.low %v7368, %v7370
        %v7754 = vcombine.low %v7369, %v7371
        %v7756 = vunpack.c.l.s4 1935823168
        %v7757 = vunpack.c.0.s8 %v7756
        %v7758 = vlaneseq
        %v7759 = vshrl.u32 %v7758, 7
        %v7760 = vsub.s32 %v7757, %v7759
        %v7761 = vrot.slane %v7753, %v7760
        %v7763 = vunpack.c.l.s4 1935823168
        %v7764 = vunpack.c.0.s8 %v7763
        %v7765 = vlaneseq
        %v7766 = vshrl.u32 %v7765, 7
        %v7767 = vsub.s32 %v7764, %v7766
        %v7768 = vrot.slane %v7754, %v7767
        %v7769 = vcombine.low %v7761, %v7768
        %v7771 = vunpack.c.l.s4 1935823168
        %v7772 = vunpack.c.0.s8 %v7771
        %v7773 = vlaneseq
        %v7774 = vshrl.u32 %v7773, 7
        %v7775 = vsub.s32 %v7772, %v7774
        %v7776 = vrot.slane %v7769, %v7775
        %v7777 = vcombine.low %v7372, %v7374
        %v7778 = vcombine.low %v7373, %v7375
        %v7780 = vunpack.c.l.s4 1935823168
        %v7781 = vunpack.c.0.s8 %v7780
        %v7782 = vlaneseq
        %v7783 = vshrl.u32 %v7782, 7
        %v7784 = vsub.s32 %v7781, %v7783
        %v7785 = vrot.slane %v7777, %v7784
        %v7787 = vunpack.c.l.s4 1935823168
        %v7788 = vunpack.c.0.s8 %v7787
        %v7789 = vlaneseq
        %v7790 = vshrl.u32 %v7789, 7
        %v7791 = vsub.s32 %v7788, %v7790
        %v7792 = vrot.slane %v7778, %v7791
        %v7793 = vcombine.low %v7785, %v7792
        %v7795 = vunpack.c.l.s4 1935823168
        %v7796 = vunpack.c.0.s8 %v7795
        %v7797 = vlaneseq
        %v7798 = vshrl.u32 %v7797, 7
        %v7799 = vsub.s32 %v7796, %v7798
        %v7800 = vrot.slane %v7793, %v7799
        %v7801 = vcombine.low %v7376, %v7378
        %v7802 = vcombine.low %v7377, %v7379
        %v7804 = vunpack.c.l.s4 1935823168
        %v7805 = vunpack.c.0.s8 %v7804
        %v7806 = vlaneseq
        %v7807 = vshrl.u32 %v7806, 7
        %v7808 = vsub.s32 %v7805, %v7807
        %v7809 = vrot.slane %v7801, %v7808
        %v7811 = vunpack.c.l.s4 1935823168
        %v7812 = vunpack.c.0.s8 %v7811
        %v7813 = vlaneseq
        %v7814 = vshrl.u32 %v7813, 7
        %v7815 = vsub.s32 %v7812, %v7814
        %v7816 = vrot.slane %v7802, %v7815
        %v7817 = vcombine.low %v7809, %v7816
        %v7819 = vunpack.c.l.s4 1935823168
        %v7820 = vunpack.c.0.s8 %v7819
        %v7821 = vlaneseq
        %v7822 = vshrl.u32 %v7821, 7
        %v7823 = vsub.s32 %v7820, %v7822
        %v7824 = vrot.slane %v7817, %v7823
        %v7825 = vcombine.low %v7380, %v7382
        %v7826 = vcombine.low %v7381, %v7383
        %v7828 = vunpack.c.l.s4 1935823168
        %v7829 = vunpack.c.0.s8 %v7828
        %v7830 = vlaneseq
        %v7831 = vshrl.u32 %v7830, 7
        %v7832 = vsub.s32 %v7829, %v7831
        %v7833 = vrot.slane %v7825, %v7832
        %v7835 = vunpack.c.l.s4 1935823168
        %v7836 = vunpack.c.0.s8 %v7835
        %v7837 = vlaneseq
        %v7838 = vshrl.u32 %v7837, 7
        %v7839 = vsub.s32 %v7836, %v7838
        %v7840 = vrot.slane %v7826, %v7839
        %v7841 = vcombine.low %v7833, %v7840
        %v7843 = vunpack.c.l.s4 1935823168
        %v7844 = vunpack.c.0.s8 %v7843
        %v7845 = vlaneseq
        %v7846 = vshrl.u32 %v7845, 7
        %v7847 = vsub.s32 %v7844, %v7846
        %v7848 = vrot.slane %v7841, %v7847
        %v7849 = vcombine.low %v7384, %v7386
        %v7850 = vcombine.low %v7385, %v7387
        %v7852 = vunpack.c.l.s4 1935823168
        %v7853 = vunpack.c.0.s8 %v7852
        %v7854 = vlaneseq
        %v7855 = vshrl.u32 %v7854, 7
        %v7856 = vsub.s32 %v7853, %v7855
        %v7857 = vrot.slane %v7849, %v7856
        %v7859 = vunpack.c.l.s4 1935823168
        %v7860 = vunpack.c.0.s8 %v7859
        %v7861 = vlaneseq
        %v7862 = vshrl.u32 %v7861, 7
        %v7863 = vsub.s32 %v7860, %v7862
        %v7864 = vrot.slane %v7850, %v7863
        %v7865 = vcombine.low %v7857, %v7864
        %v7867 = vunpack.c.l.s4 1935823168
        %v7868 = vunpack.c.0.s8 %v7867
        %v7869 = vlaneseq
        %v7870 = vshrl.u32 %v7869, 7
        %v7871 = vsub.s32 %v7868, %v7870
        %v7872 = vrot.slane %v7865, %v7871
        %v7873 = vcombine.low %v7388, %v7390
        %v7874 = vcombine.low %v7389, %v7391
        %v7876 = vunpack.c.l.s4 1935823168
        %v7877 = vunpack.c.0.s8 %v7876
        %v7878 = vlaneseq
        %v7879 = vshrl.u32 %v7878, 7
        %v7880 = vsub.s32 %v7877, %v7879
        %v7881 = vrot.slane %v7873, %v7880
        %v7883 = vunpack.c.l.s4 1935823168
        %v7884 = vunpack.c.0.s8 %v7883
        %v7885 = vlaneseq
        %v7886 = vshrl.u32 %v7885, 7
        %v7887 = vsub.s32 %v7884, %v7886
        %v7888 = vrot.slane %v7874, %v7887
        %v7889 = vcombine.low %v7881, %v7888
        %v7891 = vunpack.c.l.s4 1935823168
        %v7892 = vunpack.c.0.s8 %v7891
        %v7893 = vlaneseq
        %v7894 = vshrl.u32 %v7893, 7
        %v7895 = vsub.s32 %v7892, %v7894
        %v7896 = vrot.slane %v7889, %v7895
        %v7897 = vcombine.low %v7392, %v7394
        %v7898 = vcombine.low %v7393, %v7395
        %v7900 = vunpack.c.l.s4 1935823168
        %v7901 = vunpack.c.0.s8 %v7900
        %v7902 = vlaneseq
        %v7903 = vshrl.u32 %v7902, 7
        %v7904 = vsub.s32 %v7901, %v7903
        %v7905 = vrot.slane %v7897, %v7904
        %v7907 = vunpack.c.l.s4 1935823168
        %v7908 = vunpack.c.0.s8 %v7907
        %v7909 = vlaneseq
        %v7910 = vshrl.u32 %v7909, 7
        %v7911 = vsub.s32 %v7908, %v7910
        %v7912 = vrot.slane %v7898, %v7911
        %v7913 = vcombine.low %v7905, %v7912
        %v7915 = vunpack.c.l.s4 1935823168
        %v7916 = vunpack.c.0.s8 %v7915
        %v7917 = vlaneseq
        %v7918 = vshrl.u32 %v7917, 7
        %v7919 = vsub.s32 %v7916, %v7918
        %v7920 = vrot.slane %v7913, %v7919
        %v7921 = vcombine.low %v7396, %v7398
        %v7922 = vcombine.low %v7397, %v7399
        %v7924 = vunpack.c.l.s4 1935823168
        %v7925 = vunpack.c.0.s8 %v7924
        %v7926 = vlaneseq
        %v7927 = vshrl.u32 %v7926, 7
        %v7928 = vsub.s32 %v7925, %v7927
        %v7929 = vrot.slane %v7921, %v7928
        %v7931 = vunpack.c.l.s4 1935823168
        %v7932 = vunpack.c.0.s8 %v7931
        %v7933 = vlaneseq
        %v7934 = vshrl.u32 %v7933, 7
        %v7935 = vsub.s32 %v7932, %v7934
        %v7936 = vrot.slane %v7922, %v7935
        %v7937 = vcombine.low %v7929, %v7936
        %v7939 = vunpack.c.l.s4 1935823168
        %v7940 = vunpack.c.0.s8 %v7939
        %v7941 = vlaneseq
        %v7942 = vshrl.u32 %v7941, 7
        %v7943 = vsub.s32 %v7940, %v7942
        %v7944 = vrot.slane %v7937, %v7943
        %v7945 = vcombine.low %v7400, %v7402
        %v7946 = vcombine.low %v7401, %v7403
        %v7948 = vunpack.c.l.s4 1935823168
        %v7949 = vunpack.c.0.s8 %v7948
        %v7950 = vlaneseq
        %v7951 = vshrl.u32 %v7950, 7
        %v7952 = vsub.s32 %v7949, %v7951
        %v7953 = vrot.slane %v7945, %v7952
        %v7955 = vunpack.c.l.s4 1935823168
        %v7956 = vunpack.c.0.s8 %v7955
        %v7957 = vlaneseq
        %v7958 = vshrl.u32 %v7957, 7
        %v7959 = vsub.s32 %v7956, %v7958
        %v7960 = vrot.slane %v7946, %v7959
        %v7961 = vcombine.low %v7953, %v7960
        %v7963 = vunpack.c.l.s4 1935823168
        %v7964 = vunpack.c.0.s8 %v7963
        %v7965 = vlaneseq
        %v7966 = vshrl.u32 %v7965, 7
        %v7967 = vsub.s32 %v7964, %v7966
        %v7968 = vrot.slane %v7961, %v7967
        %v7969 = vcombine.low %v7404, %v7406
        %v7970 = vcombine.low %v7405, %v7407
        %v7972 = vunpack.c.l.s4 1935823168
        %v7973 = vunpack.c.0.s8 %v7972
        %v7974 = vlaneseq
        %v7975 = vshrl.u32 %v7974, 7
        %v7976 = vsub.s32 %v7973, %v7975
        %v7977 = vrot.slane %v7969, %v7976
        %v7979 = vunpack.c.l.s4 1935823168
        %v7980 = vunpack.c.0.s8 %v7979
        %v7981 = vlaneseq
        %v7982 = vshrl.u32 %v7981, 7
        %v7983 = vsub.s32 %v7980, %v7982
        %v7984 = vrot.slane %v7970, %v7983
        %v7985 = vcombine.low %v7977, %v7984
        %v7987 = vunpack.c.l.s4 1935823168
        %v7988 = vunpack.c.0.s8 %v7987
        %v7989 = vlaneseq
        %v7990 = vshrl.u32 %v7989, 7
        %v7991 = vsub.s32 %v7988, %v7990
        %v7992 = vrot.slane %v7985, %v7991
        %v7993 = vcombine.low %v7408, %v7410
        %v7994 = vcombine.low %v7409, %v7411
        %v7996 = vunpack.c.l.s4 1935823168
        %v7997 = vunpack.c.0.s8 %v7996
        %v7998 = vlaneseq
        %v7999 = vshrl.u32 %v7998, 7
        %v8000 = vsub.s32 %v7997, %v7999
        %v8001 = vrot.slane %v7993, %v8000
        %v8003 = vunpack.c.l.s4 1935823168
        %v8004 = vunpack.c.0.s8 %v8003
        %v8005 = vlaneseq
        %v8006 = vshrl.u32 %v8005, 7
        %v8007 = vsub.s32 %v8004, %v8006
        %v8008 = vrot.slane %v7994, %v8007
        %v8009 = vcombine.low %v8001, %v8008
        %v8011 = vunpack.c.l.s4 1935823168
        %v8012 = vunpack.c.0.s8 %v8011
        %v8013 = vlaneseq
        %v8014 = vshrl.u32 %v8013, 7
        %v8015 = vsub.s32 %v8012, %v8014
        %v8016 = vrot.slane %v8009, %v8015
        %v8017 = vcombine.low %v7412, %v7414
        %v8018 = vcombine.low %v7413, %v7415
        %v8020 = vunpack.c.l.s4 1935823168
        %v8021 = vunpack.c.0.s8 %v8020
        %v8022 = vlaneseq
        %v8023 = vshrl.u32 %v8022, 7
        %v8024 = vsub.s32 %v8021, %v8023
        %v8025 = vrot.slane %v8017, %v8024
        %v8027 = vunpack.c.l.s4 1935823168
        %v8028 = vunpack.c.0.s8 %v8027
        %v8029 = vlaneseq
        %v8030 = vshrl.u32 %v8029, 7
        %v8031 = vsub.s32 %v8028, %v8030
        %v8032 = vrot.slane %v8018, %v8031
        %v8033 = vcombine.low %v8025, %v8032
        %v8035 = vunpack.c.l.s4 1935823168
        %v8036 = vunpack.c.0.s8 %v8035
        %v8037 = vlaneseq
        %v8038 = vshrl.u32 %v8037, 7
        %v8039 = vsub.s32 %v8036, %v8038
        %v8040 = vrot.slane %v8033, %v8039
        %v8041 = vcombine.low %v7416, %v7418
        %v8042 = vcombine.low %v7417, %v7419
        %v8044 = vunpack.c.l.s4 1935823168
        %v8045 = vunpack.c.0.s8 %v8044
        %v8046 = vlaneseq
        %v8047 = vshrl.u32 %v8046, 7
        %v8048 = vsub.s32 %v8045, %v8047
        %v8049 = vrot.slane %v8041, %v8048
        %v8051 = vunpack.c.l.s4 1935823168
        %v8052 = vunpack.c.0.s8 %v8051
        %v8053 = vlaneseq
        %v8054 = vshrl.u32 %v8053, 7
        %v8055 = vsub.s32 %v8052, %v8054
        %v8056 = vrot.slane %v8042, %v8055
        %v8057 = vcombine.low %v8049, %v8056
        %v8059 = vunpack.c.l.s4 1935823168
        %v8060 = vunpack.c.0.s8 %v8059
        %v8061 = vlaneseq
        %v8062 = vshrl.u32 %v8061, 7
        %v8063 = vsub.s32 %v8060, %v8062
        %v8064 = vrot.slane %v8057, %v8063
        %v8065 = vcombine.low %v7420, %v7422
        %v8066 = vcombine.low %v7421, %v7423
        %v8068 = vunpack.c.l.s4 1935823168
        %v8069 = vunpack.c.0.s8 %v8068
        %v8070 = vlaneseq
        %v8071 = vshrl.u32 %v8070, 7
        %v8072 = vsub.s32 %v8069, %v8071
        %v8073 = vrot.slane %v8065, %v8072
        %v8075 = vunpack.c.l.s4 1935823168
        %v8076 = vunpack.c.0.s8 %v8075
        %v8077 = vlaneseq
        %v8078 = vshrl.u32 %v8077, 7
        %v8079 = vsub.s32 %v8076, %v8078
        %v8080 = vrot.slane %v8066, %v8079
        %v8081 = vcombine.low %v8073, %v8080
        %v8083 = vunpack.c.l.s4 1935823168
        %v8084 = vunpack.c.0.s8 %v8083
        %v8085 = vlaneseq
        %v8086 = vshrl.u32 %v8085, 7
        %v8087 = vsub.s32 %v8084, %v8086
        %v8088 = vrot.slane %v8081, %v8087
        %v8089 = vcombine.low %v7424, %v7426
        %v8090 = vcombine.low %v7425, %v7427
        %v8092 = vunpack.c.l.s4 1935823168
        %v8093 = vunpack.c.0.s8 %v8092
        %v8094 = vlaneseq
        %v8095 = vshrl.u32 %v8094, 7
        %v8096 = vsub.s32 %v8093, %v8095
        %v8097 = vrot.slane %v8089, %v8096
        %v8099 = vunpack.c.l.s4 1935823168
        %v8100 = vunpack.c.0.s8 %v8099
        %v8101 = vlaneseq
        %v8102 = vshrl.u32 %v8101, 7
        %v8103 = vsub.s32 %v8100, %v8102
        %v8104 = vrot.slane %v8090, %v8103
        %v8105 = vcombine.low %v8097, %v8104
        %v8107 = vunpack.c.l.s4 1935823168
        %v8108 = vunpack.c.0.s8 %v8107
        %v8109 = vlaneseq
        %v8110 = vshrl.u32 %v8109, 7
        %v8111 = vsub.s32 %v8108, %v8110
        %v8112 = vrot.slane %v8105, %v8111
        %v8113 = vcombine.low %v7428, %v7430
        %v8114 = vcombine.low %v7429, %v7431
        %v8116 = vunpack.c.l.s4 1935823168
        %v8117 = vunpack.c.0.s8 %v8116
        %v8118 = vlaneseq
        %v8119 = vshrl.u32 %v8118, 7
        %v8120 = vsub.s32 %v8117, %v8119
        %v8121 = vrot.slane %v8113, %v8120
        %v8123 = vunpack.c.l.s4 1935823168
        %v8124 = vunpack.c.0.s8 %v8123
        %v8125 = vlaneseq
        %v8126 = vshrl.u32 %v8125, 7
        %v8127 = vsub.s32 %v8124, %v8126
        %v8128 = vrot.slane %v8114, %v8127
        %v8129 = vcombine.low %v8121, %v8128
        %v8131 = vunpack.c.l.s4 1935823168
        %v8132 = vunpack.c.0.s8 %v8131
        %v8133 = vlaneseq
        %v8134 = vshrl.u32 %v8133, 7
        %v8135 = vsub.s32 %v8132, %v8134
        %v8136 = vrot.slane %v8129, %v8135
        %v8137 = vcombine.low %v7432, %v7434
        %v8138 = vcombine.low %v7433, %v7435
        %v8140 = vunpack.c.l.s4 1935823168
        %v8141 = vunpack.c.0.s8 %v8140
        %v8142 = vlaneseq
        %v8143 = vshrl.u32 %v8142, 7
        %v8144 = vsub.s32 %v8141, %v8143
        %v8145 = vrot.slane %v8137, %v8144
        %v8147 = vunpack.c.l.s4 1935823168
        %v8148 = vunpack.c.0.s8 %v8147
        %v8149 = vlaneseq
        %v8150 = vshrl.u32 %v8149, 7
        %v8151 = vsub.s32 %v8148, %v8150
        %v8152 = vrot.slane %v8138, %v8151
        %v8153 = vcombine.low %v8145, %v8152
        %v8155 = vunpack.c.l.s4 1935823168
        %v8156 = vunpack.c.0.s8 %v8155
        %v8157 = vlaneseq
        %v8158 = vshrl.u32 %v8157, 7
        %v8159 = vsub.s32 %v8156, %v8158
        %v8160 = vrot.slane %v8153, %v8159
        %v8161 = vcombine.low %v7436, %v7438
        %v8162 = vcombine.low %v7437, %v7439
        %v8164 = vunpack.c.l.s4 1935823168
        %v8165 = vunpack.c.0.s8 %v8164
        %v8166 = vlaneseq
        %v8167 = vshrl.u32 %v8166, 7
        %v8168 = vsub.s32 %v8165, %v8167
        %v8169 = vrot.slane %v8161, %v8168
        %v8171 = vunpack.c.l.s4 1935823168
        %v8172 = vunpack.c.0.s8 %v8171
        %v8173 = vlaneseq
        %v8174 = vshrl.u32 %v8173, 7
        %v8175 = vsub.s32 %v8172, %v8174
        %v8176 = vrot.slane %v8162, %v8175
        %v8177 = vcombine.low %v8169, %v8176
        %v8179 = vunpack.c.l.s4 1935823168
        %v8180 = vunpack.c.0.s8 %v8179
        %v8181 = vlaneseq
        %v8182 = vshrl.u32 %v8181, 7
        %v8183 = vsub.s32 %v8180, %v8182
        %v8184 = vrot.slane %v8177, %v8183
        %v8185 = vcombine.low %v7440, %v7442
        %v8186 = vcombine.low %v7441, %v7443
        %v8188 = vunpack.c.l.s4 1935823168
        %v8189 = vunpack.c.0.s8 %v8188
        %v8190 = vlaneseq
        %v8191 = vshrl.u32 %v8190, 7
        %v8192 = vsub.s32 %v8189, %v8191
        %v8193 = vrot.slane %v8185, %v8192
        %v8195 = vunpack.c.l.s4 1935823168
        %v8196 = vunpack.c.0.s8 %v8195
        %v8197 = vlaneseq
        %v8198 = vshrl.u32 %v8197, 7
        %v8199 = vsub.s32 %v8196, %v8198
        %v8200 = vrot.slane %v8186, %v8199
        %v8201 = vcombine.low %v8193, %v8200
        %v8203 = vunpack.c.l.s4 1935823168
        %v8204 = vunpack.c.0.s8 %v8203
        %v8205 = vlaneseq
        %v8206 = vshrl.u32 %v8205, 7
        %v8207 = vsub.s32 %v8204, %v8206
        %v8208 = vrot.slane %v8201, %v8207
        %v8209 = vcombine.low %v7444, %v7446
        %v8210 = vcombine.low %v7445, %v7447
        %v8212 = vunpack.c.l.s4 1935823168
        %v8213 = vunpack.c.0.s8 %v8212
        %v8214 = vlaneseq
        %v8215 = vshrl.u32 %v8214, 7
        %v8216 = vsub.s32 %v8213, %v8215
        %v8217 = vrot.slane %v8209, %v8216
        %v8219 = vunpack.c.l.s4 1935823168
        %v8220 = vunpack.c.0.s8 %v8219
        %v8221 = vlaneseq
        %v8222 = vshrl.u32 %v8221, 7
        %v8223 = vsub.s32 %v8220, %v8222
        %v8224 = vrot.slane %v8210, %v8223
        %v8225 = vcombine.low %v8217, %v8224
        %v8227 = vunpack.c.l.s4 1935823168
        %v8228 = vunpack.c.0.s8 %v8227
        %v8229 = vlaneseq
        %v8230 = vshrl.u32 %v8229, 7
        %v8231 = vsub.s32 %v8228, %v8230
        %v8232 = vrot.slane %v8225, %v8231
        %v8233 = vcombine.low %v7448, %v7450
        %v8234 = vcombine.low %v7449, %v7451
        %v8236 = vunpack.c.l.s4 1935823168
        %v8237 = vunpack.c.0.s8 %v8236
        %v8238 = vlaneseq
        %v8239 = vshrl.u32 %v8238, 7
        %v8240 = vsub.s32 %v8237, %v8239
        %v8241 = vrot.slane %v8233, %v8240
        %v8243 = vunpack.c.l.s4 1935823168
        %v8244 = vunpack.c.0.s8 %v8243
        %v8245 = vlaneseq
        %v8246 = vshrl.u32 %v8245, 7
        %v8247 = vsub.s32 %v8244, %v8246
        %v8248 = vrot.slane %v8234, %v8247
        %v8249 = vcombine.low %v8241, %v8248
        %v8251 = vunpack.c.l.s4 1935823168
        %v8252 = vunpack.c.0.s8 %v8251
        %v8253 = vlaneseq
        %v8254 = vshrl.u32 %v8253, 7
        %v8255 = vsub.s32 %v8252, %v8254
        %v8256 = vrot.slane %v8249, %v8255
        %v8257 = vcombine.low %v7452, %v7454
        %v8258 = vcombine.low %v7453, %v7455
        %v8260 = vunpack.c.l.s4 1935823168
        %v8261 = vunpack.c.0.s8 %v8260
        %v8262 = vlaneseq
        %v8263 = vshrl.u32 %v8262, 7
        %v8264 = vsub.s32 %v8261, %v8263
        %v8265 = vrot.slane %v8257, %v8264
        %v8267 = vunpack.c.l.s4 1935823168
        %v8268 = vunpack.c.0.s8 %v8267
        %v8269 = vlaneseq
        %v8270 = vshrl.u32 %v8269, 7
        %v8271 = vsub.s32 %v8268, %v8270
        %v8272 = vrot.slane %v8258, %v8271
        %v8273 = vcombine.low %v8265, %v8272
        %v8275 = vunpack.c.l.s4 1935823168
        %v8276 = vunpack.c.0.s8 %v8275
        %v8277 = vlaneseq
        %v8278 = vshrl.u32 %v8277, 7
        %v8279 = vsub.s32 %v8276, %v8278
        %v8280 = vrot.slane %v8273, %v8279
        %v8281 = vcombine.low %v7456, %v7458
        %v8282 = vcombine.low %v7457, %v7459
        %v8284 = vunpack.c.l.s4 1935823168
        %v8285 = vunpack.c.0.s8 %v8284
        %v8286 = vlaneseq
        %v8287 = vshrl.u32 %v8286, 7
        %v8288 = vsub.s32 %v8285, %v8287
        %v8289 = vrot.slane %v8281, %v8288
        %v8291 = vunpack.c.l.s4 1935823168
        %v8292 = vunpack.c.0.s8 %v8291
        %v8293 = vlaneseq
        %v8294 = vshrl.u32 %v8293, 7
        %v8295 = vsub.s32 %v8292, %v8294
        %v8296 = vrot.slane %v8282, %v8295
        %v8297 = vcombine.low %v8289, %v8296
        %v8299 = vunpack.c.l.s4 1935823168
        %v8300 = vunpack.c.0.s8 %v8299
        %v8301 = vlaneseq
        %v8302 = vshrl.u32 %v8301, 7
        %v8303 = vsub.s32 %v8300, %v8302
        %v8304 = vrot.slane %v8297, %v8303
        %v8305 = vcombine.low %v7460, %v7462
        %v8306 = vcombine.low %v7461, %v7463
        %v8308 = vunpack.c.l.s4 1935823168
        %v8309 = vunpack.c.0.s8 %v8308
        %v8310 = vlaneseq
        %v8311 = vshrl.u32 %v8310, 7
        %v8312 = vsub.s32 %v8309, %v8311
        %v8313 = vrot.slane %v8305, %v8312
        %v8315 = vunpack.c.l.s4 1935823168
        %v8316 = vunpack.c.0.s8 %v8315
        %v8317 = vlaneseq
        %v8318 = vshrl.u32 %v8317, 7
        %v8319 = vsub.s32 %v8316, %v8318
        %v8320 = vrot.slane %v8306, %v8319
        %v8321 = vcombine.low %v8313, %v8320
        %v8323 = vunpack.c.l.s4 1935823168
        %v8324 = vunpack.c.0.s8 %v8323
        %v8325 = vlaneseq
        %v8326 = vshrl.u32 %v8325, 7
        %v8327 = vsub.s32 %v8324, %v8326
        %v8328 = vrot.slane %v8321, %v8327
        %v8330 = vunpack.c.l.s4 1935823168
        %v8331 = vunpack.c.0.s8 %v8330
        %v8332 = vlaneseq
        %v8333 = vshrl.u32 %v8332, 7
        %v8334 = vsub.s32 %v8331, %v8333
        %v8335 = vrot.slane %v7319, %v8334
        %v8337 = vunpack.c.l.s4 1935823168
        %v8338 = vunpack.c.0.s8 %v8337
        %v8339 = vlaneseq
        %v8340 = vshrl.u32 %v8339, 7
        %v8341 = vsub.s32 %v8338, %v8340
        %v8342 = vrot.slane %v8335, %v8341
        %8380 = vst [vmem:[#allocation3 + $0x8] sm:$0xf] %v7488
        %8381 = vst [vmem:[#allocation3 + $0x18] sm:$0xf] %v7512
        %8382 = vst [vmem:[#allocation3 + $0x28] sm:$0xf] %v7536
        %8383 = vst [vmem:[#allocation3 + $0x38] sm:$0xf] %v7560
        %8384 = vst [vmem:[#allocation3 + $0x48] sm:$0xf] %v7584
        %8385 = vst [vmem:[#allocation3 + $0x58] sm:$0xf] %v7608
        %8386 = vst [vmem:[#allocation3 + $0x68] sm:$0xf] %v7632
        %8387 = vst [vmem:[#allocation3 + $0x78] sm:$0xf] %v7656
        %8388 = vst [vmem:[#allocation3 + $0x88] sm:$0xf] %v7680
        %8389 = vst [vmem:[#allocation3 + $0x98] sm:$0xf] %v7704
        %8390 = vst [vmem:[#allocation3 + $0xa8] sm:$0xf] %v7728
        %8391 = vst [vmem:[#allocation3 + $0xb8] sm:$0xf] %v7752
        %8392 = vst [vmem:[#allocation3 + $0xc8] sm:$0xf] %v7776
        %8393 = vst [vmem:[#allocation3 + $0xd8] sm:$0xf] %v7800
        %8394 = vst [vmem:[#allocation3 + $0xe8] sm:$0xf] %v7824
        %8395 = vst [vmem:[#allocation3 + $0xf8] sm:$0xf] %v7848
        %8396 = vst [vmem:[#allocation3 + $0x108] sm:$0xf] %v7872
        %8397 = vst [vmem:[#allocation3 + $0x118] sm:$0xf] %v7896
        %8398 = vst [vmem:[#allocation3 + $0x128] sm:$0xf] %v7920
        %8399 = vst [vmem:[#allocation3 + $0x138] sm:$0xf] %v7944
        %8400 = vst [vmem:[#allocation3 + $0x148] sm:$0xf] %v7968
        %8401 = vst [vmem:[#allocation3 + $0x158] sm:$0xf] %v7992
        %8402 = vst [vmem:[#allocation3 + $0x168] sm:$0xf] %v8016
        %8403 = vst [vmem:[#allocation3 + $0x178] sm:$0xf] %v8040
        %8404 = vst [vmem:[#allocation3 + $0x188] sm:$0xf] %v8064
        %8405 = vst [vmem:[#allocation3 + $0x198] sm:$0xf] %v8088
        %8406 = vst [vmem:[#allocation3 + $0x1a8] sm:$0xf] %v8112
        %8407 = vst [vmem:[#allocation3 + $0x1b8] sm:$0xf] %v8136
        %8408 = vst [vmem:[#allocation3 + $0x1c8] sm:$0xf] %v8160
        %8409 = vst [vmem:[#allocation3 + $0x1d8] sm:$0xf] %v8184
        %8410 = vst [vmem:[#allocation3 + $0x1e8] sm:$0xf] %v8208
        %8411 = vst [vmem:[#allocation3 + $0x1f8] sm:$0xf] %v8232
        %8412 = vst [vmem:[#allocation3 + $0x208] sm:$0xf] %v8256
        %8413 = vst [vmem:[#allocation3 + $0x218] sm:$0xf] %v8280
        %8414 = vst [vmem:[#allocation3 + $0x228] sm:$0xf] %v8304
        %8415 = vst [vmem:[#allocation3 + $0x238] sm:$0xf] %v8328
        %v8416 = vld [vmem:[#allocation3 + $0x248] sm:$0x1]
        %v8417 = vsel %vm207, %v8342, %v8416
        %8418 = vst [vmem:[#allocation3 + $0x248] sm:$0x1] %v8417
        %v8419 = vld [vmem:[#allocation2] sm:$0xf]
        %v8420 = vld [vmem:[#allocation2 + $0x4] sm:$0xf]
        %v8421 = vld [vmem:[#allocation2 + $0x8] sm:$0x1]
        %v8422 = vld [vmem:[#allocation2 + $0xc] sm:$0xf]
        %v8423 = vld [vmem:[#allocation2 + $0x10] sm:$0xf]
        %v8424 = vld [vmem:[#allocation2 + $0x14] sm:$0x1]
        %v8425 = vld [vmem:[#allocation2 + $0x18] sm:$0xf]
        %v8426 = vld [vmem:[#allocation2 + $0x1c] sm:$0xf]
        %v8427 = vld [vmem:[#allocation2 + $0x20] sm:$0x1]
        %v8428 = vld [vmem:[#allocation2 + $0x24] sm:$0xf]
        %v8429 = vld [vmem:[#allocation2 + $0x28] sm:$0xf]
        %v8430 = vld [vmem:[#allocation2 + $0x2c] sm:$0x1]
        %v8431 = vld [vmem:[#allocation2 + $0x30] sm:$0xf]
        %v8432 = vld [vmem:[#allocation2 + $0x34] sm:$0xf]
        %v8433 = vld [vmem:[#allocation2 + $0x38] sm:$0x1]
        %v8434 = vld [vmem:[#allocation2 + $0x3c] sm:$0xf]
        %v8435 = vld [vmem:[#allocation2 + $0x40] sm:$0xf]
        %v8436 = vld [vmem:[#allocation2 + $0x44] sm:$0x1]
        %v8437 = vld [vmem:[#allocation2 + $0x48] sm:$0xf]
        %v8438 = vld [vmem:[#allocation2 + $0x4c] sm:$0xf]
        %v8439 = vld [vmem:[#allocation2 + $0x50] sm:$0x1]
        %v8440 = vld [vmem:[#allocation2 + $0x54] sm:$0xf]
        %v8441 = vld [vmem:[#allocation2 + $0x58] sm:$0xf]
        %v8442 = vld [vmem:[#allocation2 + $0x5c] sm:$0x1]
        %v8443 = vld [vmem:[#allocation2 + $0x60] sm:$0xf]
        %v8444 = vld [vmem:[#allocation2 + $0x64] sm:$0xf]
        %v8445 = vld [vmem:[#allocation2 + $0x68] sm:$0x1]
        %v8446 = vld [vmem:[#allocation2 + $0x6c] sm:$0xf]
        %v8447 = vld [vmem:[#allocation2 + $0x70] sm:$0xf]
        %v8448 = vld [vmem:[#allocation2 + $0x74] sm:$0x1]
        %v8449 = vld [vmem:[#allocation2 + $0x78] sm:$0xf]
        %v8450 = vld [vmem:[#allocation2 + $0x7c] sm:$0xf]
        %v8451 = vld [vmem:[#allocation2 + $0x80] sm:$0x1]
        %v8452 = vld [vmem:[#allocation2 + $0x84] sm:$0xf]
        %v8453 = vld [vmem:[#allocation2 + $0x88] sm:$0xf]
        %v8454 = vld [vmem:[#allocation2 + $0x8c] sm:$0x1]
        %v8455 = vld [vmem:[#allocation2 + $0x90] sm:$0xf]
        %v8456 = vld [vmem:[#allocation2 + $0x94] sm:$0xf]
        %v8457 = vld [vmem:[#allocation2 + $0x98] sm:$0x1]
        %v8458 = vld [vmem:[#allocation2 + $0x9c] sm:$0xf]
        %v8459 = vld [vmem:[#allocation2 + $0xa0] sm:$0xf]
        %v8460 = vld [vmem:[#allocation2 + $0xa4] sm:$0x1]
        %v8461 = vld [vmem:[#allocation2 + $0xa8] sm:$0xf]
        %v8462 = vld [vmem:[#allocation2 + $0xac] sm:$0xf]
        %v8463 = vld [vmem:[#allocation2 + $0xb0] sm:$0x1]
        %v8464 = vld [vmem:[#allocation2 + $0xb4] sm:$0xf]
        %v8465 = vld [vmem:[#allocation2 + $0xb8] sm:$0xf]
        %v8466 = vld [vmem:[#allocation2 + $0xbc] sm:$0x1]
        %v8467 = vld [vmem:[#allocation2 + $0xc0] sm:$0xf]
        %v8468 = vld [vmem:[#allocation2 + $0xc4] sm:$0xf]
        %v8469 = vld [vmem:[#allocation2 + $0xc8] sm:$0x1]
        %v8522 = vunpack.c.l.s4 1966171168
        %v8523 = vunpack.c.0.s8 %v8522
        %v8524 = vlaneseq
        %v8525 = vshrl.u32 %v8524, 7
        %v8526 = vsub.s32 %v8523, %v8525
        %v8527 = vrot.slane %v8419, %v8526
        %v8528 = vcombine.high %v8527, %v8527
        %v8530 = vunpack.c.l.s4 1966171168
        %v8531 = vunpack.c.0.s8 %v8530
        %v8532 = vlaneseq
        %v8533 = vshrl.u32 %v8532, 7
        %v8534 = vsub.s32 %v8531, %v8533
        %v8535 = vrot.slane %v8527, %v8534
        %v8537 = vunpack.c.l.s4 1966171168
        %v8538 = vunpack.c.0.s8 %v8537
        %v8539 = vlaneseq
        %v8540 = vshrl.u32 %v8539, 7
        %v8541 = vsub.s32 %v8538, %v8540
        %v8542 = vrot.slane %v8528, %v8541
        %v8543 = vcombine.high %v8535, %v8535
        %v8544 = vcombine.high %v8542, %v8542
        %v8546 = vunpack.c.l.s4 1966171168
        %v8547 = vunpack.c.0.s8 %v8546
        %v8548 = vlaneseq
        %v8549 = vshrl.u32 %v8548, 7
        %v8550 = vsub.s32 %v8547, %v8549
        %v8551 = vrot.slane %v8420, %v8550
        %v8552 = vcombine.high %v8551, %v8551
        %v8554 = vunpack.c.l.s4 1966171168
        %v8555 = vunpack.c.0.s8 %v8554
        %v8556 = vlaneseq
        %v8557 = vshrl.u32 %v8556, 7
        %v8558 = vsub.s32 %v8555, %v8557
        %v8559 = vrot.slane %v8551, %v8558
        %v8561 = vunpack.c.l.s4 1966171168
        %v8562 = vunpack.c.0.s8 %v8561
        %v8563 = vlaneseq
        %v8564 = vshrl.u32 %v8563, 7
        %v8565 = vsub.s32 %v8562, %v8564
        %v8566 = vrot.slane %v8552, %v8565
        %v8567 = vcombine.high %v8559, %v8559
        %v8568 = vcombine.high %v8566, %v8566
        %v8570 = vunpack.c.l.s4 1966171168
        %v8571 = vunpack.c.0.s8 %v8570
        %v8572 = vlaneseq
        %v8573 = vshrl.u32 %v8572, 7
        %v8574 = vsub.s32 %v8571, %v8573
        %v8575 = vrot.slane %v8421, %v8574
        %v8577 = vunpack.c.l.s4 1966171168
        %v8578 = vunpack.c.0.s8 %v8577
        %v8579 = vlaneseq
        %v8580 = vshrl.u32 %v8579, 7
        %v8581 = vsub.s32 %v8578, %v8580
        %v8582 = vrot.slane %v8575, %v8581
        %v8584 = vunpack.c.l.s4 1966171168
        %v8585 = vunpack.c.0.s8 %v8584
        %v8586 = vlaneseq
        %v8587 = vshrl.u32 %v8586, 7
        %v8588 = vsub.s32 %v8585, %v8587
        %v8589 = vrot.slane %v8422, %v8588
        %v8590 = vcombine.high %v8589, %v8589
        %v8592 = vunpack.c.l.s4 1966171168
        %v8593 = vunpack.c.0.s8 %v8592
        %v8594 = vlaneseq
        %v8595 = vshrl.u32 %v8594, 7
        %v8596 = vsub.s32 %v8593, %v8595
        %v8597 = vrot.slane %v8589, %v8596
        %v8599 = vunpack.c.l.s4 1966171168
        %v8600 = vunpack.c.0.s8 %v8599
        %v8601 = vlaneseq
        %v8602 = vshrl.u32 %v8601, 7
        %v8603 = vsub.s32 %v8600, %v8602
        %v8604 = vrot.slane %v8590, %v8603
        %v8605 = vcombine.high %v8597, %v8597
        %v8606 = vcombine.high %v8604, %v8604
        %v8608 = vunpack.c.l.s4 1966171168
        %v8609 = vunpack.c.0.s8 %v8608
        %v8610 = vlaneseq
        %v8611 = vshrl.u32 %v8610, 7
        %v8612 = vsub.s32 %v8609, %v8611
        %v8613 = vrot.slane %v8423, %v8612
        %v8614 = vcombine.high %v8613, %v8613
        %v8616 = vunpack.c.l.s4 1966171168
        %v8617 = vunpack.c.0.s8 %v8616
        %v8618 = vlaneseq
        %v8619 = vshrl.u32 %v8618, 7
        %v8620 = vsub.s32 %v8617, %v8619
        %v8621 = vrot.slane %v8613, %v8620
        %v8623 = vunpack.c.l.s4 1966171168
        %v8624 = vunpack.c.0.s8 %v8623
        %v8625 = vlaneseq
        %v8626 = vshrl.u32 %v8625, 7
        %v8627 = vsub.s32 %v8624, %v8626
        %v8628 = vrot.slane %v8614, %v8627
        %v8629 = vcombine.high %v8621, %v8621
        %v8630 = vcombine.high %v8628, %v8628
        %v8632 = vunpack.c.l.s4 1966171168
        %v8633 = vunpack.c.0.s8 %v8632
        %v8634 = vlaneseq
        %v8635 = vshrl.u32 %v8634, 7
        %v8636 = vsub.s32 %v8633, %v8635
        %v8637 = vrot.slane %v8424, %v8636
        %v8639 = vunpack.c.l.s4 1966171168
        %v8640 = vunpack.c.0.s8 %v8639
        %v8641 = vlaneseq
        %v8642 = vshrl.u32 %v8641, 7
        %v8643 = vsub.s32 %v8640, %v8642
        %v8644 = vrot.slane %v8637, %v8643
        %v8646 = vunpack.c.l.s4 1966171168
        %v8647 = vunpack.c.0.s8 %v8646
        %v8648 = vlaneseq
        %v8649 = vshrl.u32 %v8648, 7
        %v8650 = vsub.s32 %v8647, %v8649
        %v8651 = vrot.slane %v8425, %v8650
        %v8652 = vcombine.high %v8651, %v8651
        %v8654 = vunpack.c.l.s4 1966171168
        %v8655 = vunpack.c.0.s8 %v8654
        %v8656 = vlaneseq
        %v8657 = vshrl.u32 %v8656, 7
        %v8658 = vsub.s32 %v8655, %v8657
        %v8659 = vrot.slane %v8651, %v8658
        %v8661 = vunpack.c.l.s4 1966171168
        %v8662 = vunpack.c.0.s8 %v8661
        %v8663 = vlaneseq
        %v8664 = vshrl.u32 %v8663, 7
        %v8665 = vsub.s32 %v8662, %v8664
        %v8666 = vrot.slane %v8652, %v8665
        %v8667 = vcombine.high %v8659, %v8659
        %v8668 = vcombine.high %v8666, %v8666
        %v8670 = vunpack.c.l.s4 1966171168
        %v8671 = vunpack.c.0.s8 %v8670
        %v8672 = vlaneseq
        %v8673 = vshrl.u32 %v8672, 7
        %v8674 = vsub.s32 %v8671, %v8673
        %v8675 = vrot.slane %v8426, %v8674
        %v8676 = vcombine.high %v8675, %v8675
        %v8678 = vunpack.c.l.s4 1966171168
        %v8679 = vunpack.c.0.s8 %v8678
        %v8680 = vlaneseq
        %v8681 = vshrl.u32 %v8680, 7
        %v8682 = vsub.s32 %v8679, %v8681
        %v8683 = vrot.slane %v8675, %v8682
        %v8685 = vunpack.c.l.s4 1966171168
        %v8686 = vunpack.c.0.s8 %v8685
        %v8687 = vlaneseq
        %v8688 = vshrl.u32 %v8687, 7
        %v8689 = vsub.s32 %v8686, %v8688
        %v8690 = vrot.slane %v8676, %v8689
        %v8691 = vcombine.high %v8683, %v8683
        %v8692 = vcombine.high %v8690, %v8690
        %v8694 = vunpack.c.l.s4 1966171168
        %v8695 = vunpack.c.0.s8 %v8694
        %v8696 = vlaneseq
        %v8697 = vshrl.u32 %v8696, 7
        %v8698 = vsub.s32 %v8695, %v8697
        %v8699 = vrot.slane %v8427, %v8698
        %v8701 = vunpack.c.l.s4 1966171168
        %v8702 = vunpack.c.0.s8 %v8701
        %v8703 = vlaneseq
        %v8704 = vshrl.u32 %v8703, 7
        %v8705 = vsub.s32 %v8702, %v8704
        %v8706 = vrot.slane %v8699, %v8705
        %v8708 = vunpack.c.l.s4 1966171168
        %v8709 = vunpack.c.0.s8 %v8708
        %v8710 = vlaneseq
        %v8711 = vshrl.u32 %v8710, 7
        %v8712 = vsub.s32 %v8709, %v8711
        %v8713 = vrot.slane %v8428, %v8712
        %v8714 = vcombine.high %v8713, %v8713
        %v8716 = vunpack.c.l.s4 1966171168
        %v8717 = vunpack.c.0.s8 %v8716
        %v8718 = vlaneseq
        %v8719 = vshrl.u32 %v8718, 7
        %v8720 = vsub.s32 %v8717, %v8719
        %v8721 = vrot.slane %v8713, %v8720
        %v8723 = vunpack.c.l.s4 1966171168
        %v8724 = vunpack.c.0.s8 %v8723
        %v8725 = vlaneseq
        %v8726 = vshrl.u32 %v8725, 7
        %v8727 = vsub.s32 %v8724, %v8726
        %v8728 = vrot.slane %v8714, %v8727
        %v8729 = vcombine.high %v8721, %v8721
        %v8730 = vcombine.high %v8728, %v8728
        %v8732 = vunpack.c.l.s4 1966171168
        %v8733 = vunpack.c.0.s8 %v8732
        %v8734 = vlaneseq
        %v8735 = vshrl.u32 %v8734, 7
        %v8736 = vsub.s32 %v8733, %v8735
        %v8737 = vrot.slane %v8429, %v8736
        %v8738 = vcombine.high %v8737, %v8737
        %v8740 = vunpack.c.l.s4 1966171168
        %v8741 = vunpack.c.0.s8 %v8740
        %v8742 = vlaneseq
        %v8743 = vshrl.u32 %v8742, 7
        %v8744 = vsub.s32 %v8741, %v8743
        %v8745 = vrot.slane %v8737, %v8744
        %v8747 = vunpack.c.l.s4 1966171168
        %v8748 = vunpack.c.0.s8 %v8747
        %v8749 = vlaneseq
        %v8750 = vshrl.u32 %v8749, 7
        %v8751 = vsub.s32 %v8748, %v8750
        %v8752 = vrot.slane %v8738, %v8751
        %v8753 = vcombine.high %v8745, %v8745
        %v8754 = vcombine.high %v8752, %v8752
        %v8756 = vunpack.c.l.s4 1966171168
        %v8757 = vunpack.c.0.s8 %v8756
        %v8758 = vlaneseq
        %v8759 = vshrl.u32 %v8758, 7
        %v8760 = vsub.s32 %v8757, %v8759
        %v8761 = vrot.slane %v8430, %v8760
        %v8763 = vunpack.c.l.s4 1966171168
        %v8764 = vunpack.c.0.s8 %v8763
        %v8765 = vlaneseq
        %v8766 = vshrl.u32 %v8765, 7
        %v8767 = vsub.s32 %v8764, %v8766
        %v8768 = vrot.slane %v8761, %v8767
        %v8770 = vunpack.c.l.s4 1966171168
        %v8771 = vunpack.c.0.s8 %v8770
        %v8772 = vlaneseq
        %v8773 = vshrl.u32 %v8772, 7
        %v8774 = vsub.s32 %v8771, %v8773
        %v8775 = vrot.slane %v8431, %v8774
        %v8776 = vcombine.high %v8775, %v8775
        %v8778 = vunpack.c.l.s4 1966171168
        %v8779 = vunpack.c.0.s8 %v8778
        %v8780 = vlaneseq
        %v8781 = vshrl.u32 %v8780, 7
        %v8782 = vsub.s32 %v8779, %v8781
        %v8783 = vrot.slane %v8775, %v8782
        %v8785 = vunpack.c.l.s4 1966171168
        %v8786 = vunpack.c.0.s8 %v8785
        %v8787 = vlaneseq
        %v8788 = vshrl.u32 %v8787, 7
        %v8789 = vsub.s32 %v8786, %v8788
        %v8790 = vrot.slane %v8776, %v8789
        %v8791 = vcombine.high %v8783, %v8783
        %v8792 = vcombine.high %v8790, %v8790
        %v8794 = vunpack.c.l.s4 1966171168
        %v8795 = vunpack.c.0.s8 %v8794
        %v8796 = vlaneseq
        %v8797 = vshrl.u32 %v8796, 7
        %v8798 = vsub.s32 %v8795, %v8797
        %v8799 = vrot.slane %v8432, %v8798
        %v8800 = vcombine.high %v8799, %v8799
        %v8802 = vunpack.c.l.s4 1966171168
        %v8803 = vunpack.c.0.s8 %v8802
        %v8804 = vlaneseq
        %v8805 = vshrl.u32 %v8804, 7
        %v8806 = vsub.s32 %v8803, %v8805
        %v8807 = vrot.slane %v8799, %v8806
        %v8809 = vunpack.c.l.s4 1966171168
        %v8810 = vunpack.c.0.s8 %v8809
        %v8811 = vlaneseq
        %v8812 = vshrl.u32 %v8811, 7
        %v8813 = vsub.s32 %v8810, %v8812
        %v8814 = vrot.slane %v8800, %v8813
        %v8815 = vcombine.high %v8807, %v8807
        %v8816 = vcombine.high %v8814, %v8814
        %v8818 = vunpack.c.l.s4 1966171168
        %v8819 = vunpack.c.0.s8 %v8818
        %v8820 = vlaneseq
        %v8821 = vshrl.u32 %v8820, 7
        %v8822 = vsub.s32 %v8819, %v8821
        %v8823 = vrot.slane %v8433, %v8822
        %v8825 = vunpack.c.l.s4 1966171168
        %v8826 = vunpack.c.0.s8 %v8825
        %v8827 = vlaneseq
        %v8828 = vshrl.u32 %v8827, 7
        %v8829 = vsub.s32 %v8826, %v8828
        %v8830 = vrot.slane %v8823, %v8829
        %v8832 = vunpack.c.l.s4 1966171168
        %v8833 = vunpack.c.0.s8 %v8832
        %v8834 = vlaneseq
        %v8835 = vshrl.u32 %v8834, 7
        %v8836 = vsub.s32 %v8833, %v8835
        %v8837 = vrot.slane %v8434, %v8836
        %v8838 = vcombine.high %v8837, %v8837
        %v8840 = vunpack.c.l.s4 1966171168
        %v8841 = vunpack.c.0.s8 %v8840
        %v8842 = vlaneseq
        %v8843 = vshrl.u32 %v8842, 7
        %v8844 = vsub.s32 %v8841, %v8843
        %v8845 = vrot.slane %v8837, %v8844
        %v8847 = vunpack.c.l.s4 1966171168
        %v8848 = vunpack.c.0.s8 %v8847
        %v8849 = vlaneseq
        %v8850 = vshrl.u32 %v8849, 7
        %v8851 = vsub.s32 %v8848, %v8850
        %v8852 = vrot.slane %v8838, %v8851
        %v8853 = vcombine.high %v8845, %v8845
        %v8854 = vcombine.high %v8852, %v8852
        %v8856 = vunpack.c.l.s4 1966171168
        %v8857 = vunpack.c.0.s8 %v8856
        %v8858 = vlaneseq
        %v8859 = vshrl.u32 %v8858, 7
        %v8860 = vsub.s32 %v8857, %v8859
        %v8861 = vrot.slane %v8435, %v8860
        %v8862 = vcombine.high %v8861, %v8861
        %v8864 = vunpack.c.l.s4 1966171168
        %v8865 = vunpack.c.0.s8 %v8864
        %v8866 = vlaneseq
        %v8867 = vshrl.u32 %v8866, 7
        %v8868 = vsub.s32 %v8865, %v8867
        %v8869 = vrot.slane %v8861, %v8868
        %v8871 = vunpack.c.l.s4 1966171168
        %v8872 = vunpack.c.0.s8 %v8871
        %v8873 = vlaneseq
        %v8874 = vshrl.u32 %v8873, 7
        %v8875 = vsub.s32 %v8872, %v8874
        %v8876 = vrot.slane %v8862, %v8875
        %v8877 = vcombine.high %v8869, %v8869
        %v8878 = vcombine.high %v8876, %v8876
        %v8880 = vunpack.c.l.s4 1966171168
        %v8881 = vunpack.c.0.s8 %v8880
        %v8882 = vlaneseq
        %v8883 = vshrl.u32 %v8882, 7
        %v8884 = vsub.s32 %v8881, %v8883
        %v8885 = vrot.slane %v8436, %v8884
        %v8887 = vunpack.c.l.s4 1966171168
        %v8888 = vunpack.c.0.s8 %v8887
        %v8889 = vlaneseq
        %v8890 = vshrl.u32 %v8889, 7
        %v8891 = vsub.s32 %v8888, %v8890
        %v8892 = vrot.slane %v8885, %v8891
        %v8894 = vunpack.c.l.s4 1966171168
        %v8895 = vunpack.c.0.s8 %v8894
        %v8896 = vlaneseq
        %v8897 = vshrl.u32 %v8896, 7
        %v8898 = vsub.s32 %v8895, %v8897
        %v8899 = vrot.slane %v8437, %v8898
        %v8900 = vcombine.high %v8899, %v8899
        %v8902 = vunpack.c.l.s4 1966171168
        %v8903 = vunpack.c.0.s8 %v8902
        %v8904 = vlaneseq
        %v8905 = vshrl.u32 %v8904, 7
        %v8906 = vsub.s32 %v8903, %v8905
        %v8907 = vrot.slane %v8899, %v8906
        %v8909 = vunpack.c.l.s4 1966171168
        %v8910 = vunpack.c.0.s8 %v8909
        %v8911 = vlaneseq
        %v8912 = vshrl.u32 %v8911, 7
        %v8913 = vsub.s32 %v8910, %v8912
        %v8914 = vrot.slane %v8900, %v8913
        %v8915 = vcombine.high %v8907, %v8907
        %v8916 = vcombine.high %v8914, %v8914
        %v8918 = vunpack.c.l.s4 1966171168
        %v8919 = vunpack.c.0.s8 %v8918
        %v8920 = vlaneseq
        %v8921 = vshrl.u32 %v8920, 7
        %v8922 = vsub.s32 %v8919, %v8921
        %v8923 = vrot.slane %v8438, %v8922
        %v8924 = vcombine.high %v8923, %v8923
        %v8926 = vunpack.c.l.s4 1966171168
        %v8927 = vunpack.c.0.s8 %v8926
        %v8928 = vlaneseq
        %v8929 = vshrl.u32 %v8928, 7
        %v8930 = vsub.s32 %v8927, %v8929
        %v8931 = vrot.slane %v8923, %v8930
        %v8933 = vunpack.c.l.s4 1966171168
        %v8934 = vunpack.c.0.s8 %v8933
        %v8935 = vlaneseq
        %v8936 = vshrl.u32 %v8935, 7
        %v8937 = vsub.s32 %v8934, %v8936
        %v8938 = vrot.slane %v8924, %v8937
        %v8939 = vcombine.high %v8931, %v8931
        %v8940 = vcombine.high %v8938, %v8938
        %v8942 = vunpack.c.l.s4 1966171168
        %v8943 = vunpack.c.0.s8 %v8942
        %v8944 = vlaneseq
        %v8945 = vshrl.u32 %v8944, 7
        %v8946 = vsub.s32 %v8943, %v8945
        %v8947 = vrot.slane %v8439, %v8946
        %v8949 = vunpack.c.l.s4 1966171168
        %v8950 = vunpack.c.0.s8 %v8949
        %v8951 = vlaneseq
        %v8952 = vshrl.u32 %v8951, 7
        %v8953 = vsub.s32 %v8950, %v8952
        %v8954 = vrot.slane %v8947, %v8953
        %v8956 = vunpack.c.l.s4 1966171168
        %v8957 = vunpack.c.0.s8 %v8956
        %v8958 = vlaneseq
        %v8959 = vshrl.u32 %v8958, 7
        %v8960 = vsub.s32 %v8957, %v8959
        %v8961 = vrot.slane %v8440, %v8960
        %v8962 = vcombine.high %v8961, %v8961
        %v8964 = vunpack.c.l.s4 1966171168
        %v8965 = vunpack.c.0.s8 %v8964
        %v8966 = vlaneseq
        %v8967 = vshrl.u32 %v8966, 7
        %v8968 = vsub.s32 %v8965, %v8967
        %v8969 = vrot.slane %v8961, %v8968
        %v8971 = vunpack.c.l.s4 1966171168
        %v8972 = vunpack.c.0.s8 %v8971
        %v8973 = vlaneseq
        %v8974 = vshrl.u32 %v8973, 7
        %v8975 = vsub.s32 %v8972, %v8974
        %v8976 = vrot.slane %v8962, %v8975
        %v8977 = vcombine.high %v8969, %v8969
        %v8978 = vcombine.high %v8976, %v8976
        %v8980 = vunpack.c.l.s4 1966171168
        %v8981 = vunpack.c.0.s8 %v8980
        %v8982 = vlaneseq
        %v8983 = vshrl.u32 %v8982, 7
        %v8984 = vsub.s32 %v8981, %v8983
        %v8985 = vrot.slane %v8441, %v8984
        %v8986 = vcombine.high %v8985, %v8985
        %v8988 = vunpack.c.l.s4 1966171168
        %v8989 = vunpack.c.0.s8 %v8988
        %v8990 = vlaneseq
        %v8991 = vshrl.u32 %v8990, 7
        %v8992 = vsub.s32 %v8989, %v8991
        %v8993 = vrot.slane %v8985, %v8992
        %v8995 = vunpack.c.l.s4 1966171168
        %v8996 = vunpack.c.0.s8 %v8995
        %v8997 = vlaneseq
        %v8998 = vshrl.u32 %v8997, 7
        %v8999 = vsub.s32 %v8996, %v8998
        %v9000 = vrot.slane %v8986, %v8999
        %v9001 = vcombine.high %v8993, %v8993
        %v9002 = vcombine.high %v9000, %v9000
        %v9004 = vunpack.c.l.s4 1966171168
        %v9005 = vunpack.c.0.s8 %v9004
        %v9006 = vlaneseq
        %v9007 = vshrl.u32 %v9006, 7
        %v9008 = vsub.s32 %v9005, %v9007
        %v9009 = vrot.slane %v8442, %v9008
        %v9011 = vunpack.c.l.s4 1966171168
        %v9012 = vunpack.c.0.s8 %v9011
        %v9013 = vlaneseq
        %v9014 = vshrl.u32 %v9013, 7
        %v9015 = vsub.s32 %v9012, %v9014
        %v9016 = vrot.slane %v9009, %v9015
        %v9018 = vunpack.c.l.s4 1966171168
        %v9019 = vunpack.c.0.s8 %v9018
        %v9020 = vlaneseq
        %v9021 = vshrl.u32 %v9020, 7
        %v9022 = vsub.s32 %v9019, %v9021
        %v9023 = vrot.slane %v8443, %v9022
        %v9024 = vcombine.high %v9023, %v9023
        %v9026 = vunpack.c.l.s4 1966171168
        %v9027 = vunpack.c.0.s8 %v9026
        %v9028 = vlaneseq
        %v9029 = vshrl.u32 %v9028, 7
        %v9030 = vsub.s32 %v9027, %v9029
        %v9031 = vrot.slane %v9023, %v9030
        %v9033 = vunpack.c.l.s4 1966171168
        %v9034 = vunpack.c.0.s8 %v9033
        %v9035 = vlaneseq
        %v9036 = vshrl.u32 %v9035, 7
        %v9037 = vsub.s32 %v9034, %v9036
        %v9038 = vrot.slane %v9024, %v9037
        %v9039 = vcombine.high %v9031, %v9031
        %v9040 = vcombine.high %v9038, %v9038
        %v9042 = vunpack.c.l.s4 1966171168
        %v9043 = vunpack.c.0.s8 %v9042
        %v9044 = vlaneseq
        %v9045 = vshrl.u32 %v9044, 7
        %v9046 = vsub.s32 %v9043, %v9045
        %v9047 = vrot.slane %v8444, %v9046
        %v9048 = vcombine.high %v9047, %v9047
        %v9050 = vunpack.c.l.s4 1966171168
        %v9051 = vunpack.c.0.s8 %v9050
        %v9052 = vlaneseq
        %v9053 = vshrl.u32 %v9052, 7
        %v9054 = vsub.s32 %v9051, %v9053
        %v9055 = vrot.slane %v9047, %v9054
        %v9057 = vunpack.c.l.s4 1966171168
        %v9058 = vunpack.c.0.s8 %v9057
        %v9059 = vlaneseq
        %v9060 = vshrl.u32 %v9059, 7
        %v9061 = vsub.s32 %v9058, %v9060
        %v9062 = vrot.slane %v9048, %v9061
        %v9063 = vcombine.high %v9055, %v9055
        %v9064 = vcombine.high %v9062, %v9062
        %v9066 = vunpack.c.l.s4 1966171168
        %v9067 = vunpack.c.0.s8 %v9066
        %v9068 = vlaneseq
        %v9069 = vshrl.u32 %v9068, 7
        %v9070 = vsub.s32 %v9067, %v9069
        %v9071 = vrot.slane %v8445, %v9070
        %v9073 = vunpack.c.l.s4 1966171168
        %v9074 = vunpack.c.0.s8 %v9073
        %v9075 = vlaneseq
        %v9076 = vshrl.u32 %v9075, 7
        %v9077 = vsub.s32 %v9074, %v9076
        %v9078 = vrot.slane %v9071, %v9077
        %v9080 = vunpack.c.l.s4 1966171168
        %v9081 = vunpack.c.0.s8 %v9080
        %v9082 = vlaneseq
        %v9083 = vshrl.u32 %v9082, 7
        %v9084 = vsub.s32 %v9081, %v9083
        %v9085 = vrot.slane %v8446, %v9084
        %v9086 = vcombine.high %v9085, %v9085
        %v9088 = vunpack.c.l.s4 1966171168
        %v9089 = vunpack.c.0.s8 %v9088
        %v9090 = vlaneseq
        %v9091 = vshrl.u32 %v9090, 7
        %v9092 = vsub.s32 %v9089, %v9091
        %v9093 = vrot.slane %v9085, %v9092
        %v9095 = vunpack.c.l.s4 1966171168
        %v9096 = vunpack.c.0.s8 %v9095
        %v9097 = vlaneseq
        %v9098 = vshrl.u32 %v9097, 7
        %v9099 = vsub.s32 %v9096, %v9098
        %v9100 = vrot.slane %v9086, %v9099
        %v9101 = vcombine.high %v9093, %v9093
        %v9102 = vcombine.high %v9100, %v9100
        %v9104 = vunpack.c.l.s4 1966171168
        %v9105 = vunpack.c.0.s8 %v9104
        %v9106 = vlaneseq
        %v9107 = vshrl.u32 %v9106, 7
        %v9108 = vsub.s32 %v9105, %v9107
        %v9109 = vrot.slane %v8447, %v9108
        %v9110 = vcombine.high %v9109, %v9109
        %v9112 = vunpack.c.l.s4 1966171168
        %v9113 = vunpack.c.0.s8 %v9112
        %v9114 = vlaneseq
        %v9115 = vshrl.u32 %v9114, 7
        %v9116 = vsub.s32 %v9113, %v9115
        %v9117 = vrot.slane %v9109, %v9116
        %v9119 = vunpack.c.l.s4 1966171168
        %v9120 = vunpack.c.0.s8 %v9119
        %v9121 = vlaneseq
        %v9122 = vshrl.u32 %v9121, 7
        %v9123 = vsub.s32 %v9120, %v9122
        %v9124 = vrot.slane %v9110, %v9123
        %v9125 = vcombine.high %v9117, %v9117
        %v9126 = vcombine.high %v9124, %v9124
        %v9128 = vunpack.c.l.s4 1966171168
        %v9129 = vunpack.c.0.s8 %v9128
        %v9130 = vlaneseq
        %v9131 = vshrl.u32 %v9130, 7
        %v9132 = vsub.s32 %v9129, %v9131
        %v9133 = vrot.slane %v8448, %v9132
        %v9135 = vunpack.c.l.s4 1966171168
        %v9136 = vunpack.c.0.s8 %v9135
        %v9137 = vlaneseq
        %v9138 = vshrl.u32 %v9137, 7
        %v9139 = vsub.s32 %v9136, %v9138
        %v9140 = vrot.slane %v9133, %v9139
        %v9142 = vunpack.c.l.s4 1966171168
        %v9143 = vunpack.c.0.s8 %v9142
        %v9144 = vlaneseq
        %v9145 = vshrl.u32 %v9144, 7
        %v9146 = vsub.s32 %v9143, %v9145
        %v9147 = vrot.slane %v8449, %v9146
        %v9148 = vcombine.high %v9147, %v9147
        %v9150 = vunpack.c.l.s4 1966171168
        %v9151 = vunpack.c.0.s8 %v9150
        %v9152 = vlaneseq
        %v9153 = vshrl.u32 %v9152, 7
        %v9154 = vsub.s32 %v9151, %v9153
        %v9155 = vrot.slane %v9147, %v9154
        %v9157 = vunpack.c.l.s4 1966171168
        %v9158 = vunpack.c.0.s8 %v9157
        %v9159 = vlaneseq
        %v9160 = vshrl.u32 %v9159, 7
        %v9161 = vsub.s32 %v9158, %v9160
        %v9162 = vrot.slane %v9148, %v9161
        %v9163 = vcombine.high %v9155, %v9155
        %v9164 = vcombine.high %v9162, %v9162
        %v9166 = vunpack.c.l.s4 1966171168
        %v9167 = vunpack.c.0.s8 %v9166
        %v9168 = vlaneseq
        %v9169 = vshrl.u32 %v9168, 7
        %v9170 = vsub.s32 %v9167, %v9169
        %v9171 = vrot.slane %v8450, %v9170
        %v9172 = vcombine.high %v9171, %v9171
        %v9174 = vunpack.c.l.s4 1966171168
        %v9175 = vunpack.c.0.s8 %v9174
        %v9176 = vlaneseq
        %v9177 = vshrl.u32 %v9176, 7
        %v9178 = vsub.s32 %v9175, %v9177
        %v9179 = vrot.slane %v9171, %v9178
        %v9181 = vunpack.c.l.s4 1966171168
        %v9182 = vunpack.c.0.s8 %v9181
        %v9183 = vlaneseq
        %v9184 = vshrl.u32 %v9183, 7
        %v9185 = vsub.s32 %v9182, %v9184
        %v9186 = vrot.slane %v9172, %v9185
        %v9187 = vcombine.high %v9179, %v9179
        %v9188 = vcombine.high %v9186, %v9186
        %v9190 = vunpack.c.l.s4 1966171168
        %v9191 = vunpack.c.0.s8 %v9190
        %v9192 = vlaneseq
        %v9193 = vshrl.u32 %v9192, 7
        %v9194 = vsub.s32 %v9191, %v9193
        %v9195 = vrot.slane %v8451, %v9194
        %v9197 = vunpack.c.l.s4 1966171168
        %v9198 = vunpack.c.0.s8 %v9197
        %v9199 = vlaneseq
        %v9200 = vshrl.u32 %v9199, 7
        %v9201 = vsub.s32 %v9198, %v9200
        %v9202 = vrot.slane %v9195, %v9201
        %v9204 = vunpack.c.l.s4 1966171168
        %v9205 = vunpack.c.0.s8 %v9204
        %v9206 = vlaneseq
        %v9207 = vshrl.u32 %v9206, 7
        %v9208 = vsub.s32 %v9205, %v9207
        %v9209 = vrot.slane %v8452, %v9208
        %v9210 = vcombine.high %v9209, %v9209
        %v9212 = vunpack.c.l.s4 1966171168
        %v9213 = vunpack.c.0.s8 %v9212
        %v9214 = vlaneseq
        %v9215 = vshrl.u32 %v9214, 7
        %v9216 = vsub.s32 %v9213, %v9215
        %v9217 = vrot.slane %v9209, %v9216
        %v9219 = vunpack.c.l.s4 1966171168
        %v9220 = vunpack.c.0.s8 %v9219
        %v9221 = vlaneseq
        %v9222 = vshrl.u32 %v9221, 7
        %v9223 = vsub.s32 %v9220, %v9222
        %v9224 = vrot.slane %v9210, %v9223
        %v9225 = vcombine.high %v9217, %v9217
        %v9226 = vcombine.high %v9224, %v9224
        %v9228 = vunpack.c.l.s4 1966171168
        %v9229 = vunpack.c.0.s8 %v9228
        %v9230 = vlaneseq
        %v9231 = vshrl.u32 %v9230, 7
        %v9232 = vsub.s32 %v9229, %v9231
        %v9233 = vrot.slane %v8453, %v9232
        %v9234 = vcombine.high %v9233, %v9233
        %v9236 = vunpack.c.l.s4 1966171168
        %v9237 = vunpack.c.0.s8 %v9236
        %v9238 = vlaneseq
        %v9239 = vshrl.u32 %v9238, 7
        %v9240 = vsub.s32 %v9237, %v9239
        %v9241 = vrot.slane %v9233, %v9240
        %v9243 = vunpack.c.l.s4 1966171168
        %v9244 = vunpack.c.0.s8 %v9243
        %v9245 = vlaneseq
        %v9246 = vshrl.u32 %v9245, 7
        %v9247 = vsub.s32 %v9244, %v9246
        %v9248 = vrot.slane %v9234, %v9247
        %v9249 = vcombine.high %v9241, %v9241
        %v9250 = vcombine.high %v9248, %v9248
        %v9252 = vunpack.c.l.s4 1966171168
        %v9253 = vunpack.c.0.s8 %v9252
        %v9254 = vlaneseq
        %v9255 = vshrl.u32 %v9254, 7
        %v9256 = vsub.s32 %v9253, %v9255
        %v9257 = vrot.slane %v8454, %v9256
        %v9259 = vunpack.c.l.s4 1966171168
        %v9260 = vunpack.c.0.s8 %v9259
        %v9261 = vlaneseq
        %v9262 = vshrl.u32 %v9261, 7
        %v9263 = vsub.s32 %v9260, %v9262
        %v9264 = vrot.slane %v9257, %v9263
        %v9266 = vunpack.c.l.s4 1966171168
        %v9267 = vunpack.c.0.s8 %v9266
        %v9268 = vlaneseq
        %v9269 = vshrl.u32 %v9268, 7
        %v9270 = vsub.s32 %v9267, %v9269
        %v9271 = vrot.slane %v8455, %v9270
        %v9272 = vcombine.high %v9271, %v9271
        %v9274 = vunpack.c.l.s4 1966171168
        %v9275 = vunpack.c.0.s8 %v9274
        %v9276 = vlaneseq
        %v9277 = vshrl.u32 %v9276, 7
        %v9278 = vsub.s32 %v9275, %v9277
        %v9279 = vrot.slane %v9271, %v9278
        %v9281 = vunpack.c.l.s4 1966171168
        %v9282 = vunpack.c.0.s8 %v9281
        %v9283 = vlaneseq
        %v9284 = vshrl.u32 %v9283, 7
        %v9285 = vsub.s32 %v9282, %v9284
        %v9286 = vrot.slane %v9272, %v9285
        %v9287 = vcombine.high %v9279, %v9279
        %v9288 = vcombine.high %v9286, %v9286
        %v9290 = vunpack.c.l.s4 1966171168
        %v9291 = vunpack.c.0.s8 %v9290
        %v9292 = vlaneseq
        %v9293 = vshrl.u32 %v9292, 7
        %v9294 = vsub.s32 %v9291, %v9293
        %v9295 = vrot.slane %v8456, %v9294
        %v9296 = vcombine.high %v9295, %v9295
        %v9298 = vunpack.c.l.s4 1966171168
        %v9299 = vunpack.c.0.s8 %v9298
        %v9300 = vlaneseq
        %v9301 = vshrl.u32 %v9300, 7
        %v9302 = vsub.s32 %v9299, %v9301
        %v9303 = vrot.slane %v9295, %v9302
        %v9305 = vunpack.c.l.s4 1966171168
        %v9306 = vunpack.c.0.s8 %v9305
        %v9307 = vlaneseq
        %v9308 = vshrl.u32 %v9307, 7
        %v9309 = vsub.s32 %v9306, %v9308
        %v9310 = vrot.slane %v9296, %v9309
        %v9311 = vcombine.high %v9303, %v9303
        %v9312 = vcombine.high %v9310, %v9310
        %v9314 = vunpack.c.l.s4 1966171168
        %v9315 = vunpack.c.0.s8 %v9314
        %v9316 = vlaneseq
        %v9317 = vshrl.u32 %v9316, 7
        %v9318 = vsub.s32 %v9315, %v9317
        %v9319 = vrot.slane %v8457, %v9318
        %v9321 = vunpack.c.l.s4 1966171168
        %v9322 = vunpack.c.0.s8 %v9321
        %v9323 = vlaneseq
        %v9324 = vshrl.u32 %v9323, 7
        %v9325 = vsub.s32 %v9322, %v9324
        %v9326 = vrot.slane %v9319, %v9325
        %v9328 = vunpack.c.l.s4 1966171168
        %v9329 = vunpack.c.0.s8 %v9328
        %v9330 = vlaneseq
        %v9331 = vshrl.u32 %v9330, 7
        %v9332 = vsub.s32 %v9329, %v9331
        %v9333 = vrot.slane %v8458, %v9332
        %v9334 = vcombine.high %v9333, %v9333
        %v9336 = vunpack.c.l.s4 1966171168
        %v9337 = vunpack.c.0.s8 %v9336
        %v9338 = vlaneseq
        %v9339 = vshrl.u32 %v9338, 7
        %v9340 = vsub.s32 %v9337, %v9339
        %v9341 = vrot.slane %v9333, %v9340
        %v9343 = vunpack.c.l.s4 1966171168
        %v9344 = vunpack.c.0.s8 %v9343
        %v9345 = vlaneseq
        %v9346 = vshrl.u32 %v9345, 7
        %v9347 = vsub.s32 %v9344, %v9346
        %v9348 = vrot.slane %v9334, %v9347
        %v9349 = vcombine.high %v9341, %v9341
        %v9350 = vcombine.high %v9348, %v9348
        %v9352 = vunpack.c.l.s4 1966171168
        %v9353 = vunpack.c.0.s8 %v9352
        %v9354 = vlaneseq
        %v9355 = vshrl.u32 %v9354, 7
        %v9356 = vsub.s32 %v9353, %v9355
        %v9357 = vrot.slane %v8459, %v9356
        %v9358 = vcombine.high %v9357, %v9357
        %v9360 = vunpack.c.l.s4 1966171168
        %v9361 = vunpack.c.0.s8 %v9360
        %v9362 = vlaneseq
        %v9363 = vshrl.u32 %v9362, 7
        %v9364 = vsub.s32 %v9361, %v9363
        %v9365 = vrot.slane %v9357, %v9364
        %v9367 = vunpack.c.l.s4 1966171168
        %v9368 = vunpack.c.0.s8 %v9367
        %v9369 = vlaneseq
        %v9370 = vshrl.u32 %v9369, 7
        %v9371 = vsub.s32 %v9368, %v9370
        %v9372 = vrot.slane %v9358, %v9371
        %v9373 = vcombine.high %v9365, %v9365
        %v9374 = vcombine.high %v9372, %v9372
        %v9376 = vunpack.c.l.s4 1966171168
        %v9377 = vunpack.c.0.s8 %v9376
        %v9378 = vlaneseq
        %v9379 = vshrl.u32 %v9378, 7
        %v9380 = vsub.s32 %v9377, %v9379
        %v9381 = vrot.slane %v8460, %v9380
        %v9383 = vunpack.c.l.s4 1966171168
        %v9384 = vunpack.c.0.s8 %v9383
        %v9385 = vlaneseq
        %v9386 = vshrl.u32 %v9385, 7
        %v9387 = vsub.s32 %v9384, %v9386
        %v9388 = vrot.slane %v9381, %v9387
        %v9390 = vunpack.c.l.s4 1966171168
        %v9391 = vunpack.c.0.s8 %v9390
        %v9392 = vlaneseq
        %v9393 = vshrl.u32 %v9392, 7
        %v9394 = vsub.s32 %v9391, %v9393
        %v9395 = vrot.slane %v8461, %v9394
        %v9396 = vcombine.high %v9395, %v9395
        %v9398 = vunpack.c.l.s4 1966171168
        %v9399 = vunpack.c.0.s8 %v9398
        %v9400 = vlaneseq
        %v9401 = vshrl.u32 %v9400, 7
        %v9402 = vsub.s32 %v9399, %v9401
        %v9403 = vrot.slane %v9395, %v9402
        %v9405 = vunpack.c.l.s4 1966171168
        %v9406 = vunpack.c.0.s8 %v9405
        %v9407 = vlaneseq
        %v9408 = vshrl.u32 %v9407, 7
        %v9409 = vsub.s32 %v9406, %v9408
        %v9410 = vrot.slane %v9396, %v9409
        %v9411 = vcombine.high %v9403, %v9403
        %v9412 = vcombine.high %v9410, %v9410
        %v9414 = vunpack.c.l.s4 1966171168
        %v9415 = vunpack.c.0.s8 %v9414
        %v9416 = vlaneseq
        %v9417 = vshrl.u32 %v9416, 7
        %v9418 = vsub.s32 %v9415, %v9417
        %v9419 = vrot.slane %v8462, %v9418
        %v9420 = vcombine.high %v9419, %v9419
        %v9422 = vunpack.c.l.s4 1966171168
        %v9423 = vunpack.c.0.s8 %v9422
        %v9424 = vlaneseq
        %v9425 = vshrl.u32 %v9424, 7
        %v9426 = vsub.s32 %v9423, %v9425
        %v9427 = vrot.slane %v9419, %v9426
        %v9429 = vunpack.c.l.s4 1966171168
        %v9430 = vunpack.c.0.s8 %v9429
        %v9431 = vlaneseq
        %v9432 = vshrl.u32 %v9431, 7
        %v9433 = vsub.s32 %v9430, %v9432
        %v9434 = vrot.slane %v9420, %v9433
        %v9435 = vcombine.high %v9427, %v9427
        %v9436 = vcombine.high %v9434, %v9434
        %v9438 = vunpack.c.l.s4 1966171168
        %v9439 = vunpack.c.0.s8 %v9438
        %v9440 = vlaneseq
        %v9441 = vshrl.u32 %v9440, 7
        %v9442 = vsub.s32 %v9439, %v9441
        %v9443 = vrot.slane %v8463, %v9442
        %v9445 = vunpack.c.l.s4 1966171168
        %v9446 = vunpack.c.0.s8 %v9445
        %v9447 = vlaneseq
        %v9448 = vshrl.u32 %v9447, 7
        %v9449 = vsub.s32 %v9446, %v9448
        %v9450 = vrot.slane %v9443, %v9449
        %v9452 = vunpack.c.l.s4 1966171168
        %v9453 = vunpack.c.0.s8 %v9452
        %v9454 = vlaneseq
        %v9455 = vshrl.u32 %v9454, 7
        %v9456 = vsub.s32 %v9453, %v9455
        %v9457 = vrot.slane %v8464, %v9456
        %v9458 = vcombine.high %v9457, %v9457
        %v9460 = vunpack.c.l.s4 1966171168
        %v9461 = vunpack.c.0.s8 %v9460
        %v9462 = vlaneseq
        %v9463 = vshrl.u32 %v9462, 7
        %v9464 = vsub.s32 %v9461, %v9463
        %v9465 = vrot.slane %v9457, %v9464
        %v9467 = vunpack.c.l.s4 1966171168
        %v9468 = vunpack.c.0.s8 %v9467
        %v9469 = vlaneseq
        %v9470 = vshrl.u32 %v9469, 7
        %v9471 = vsub.s32 %v9468, %v9470
        %v9472 = vrot.slane %v9458, %v9471
        %v9473 = vcombine.high %v9465, %v9465
        %v9474 = vcombine.high %v9472, %v9472
        %v9476 = vunpack.c.l.s4 1966171168
        %v9477 = vunpack.c.0.s8 %v9476
        %v9478 = vlaneseq
        %v9479 = vshrl.u32 %v9478, 7
        %v9480 = vsub.s32 %v9477, %v9479
        %v9481 = vrot.slane %v8465, %v9480
        %v9482 = vcombine.high %v9481, %v9481
        %v9484 = vunpack.c.l.s4 1966171168
        %v9485 = vunpack.c.0.s8 %v9484
        %v9486 = vlaneseq
        %v9487 = vshrl.u32 %v9486, 7
        %v9488 = vsub.s32 %v9485, %v9487
        %v9489 = vrot.slane %v9481, %v9488
        %v9491 = vunpack.c.l.s4 1966171168
        %v9492 = vunpack.c.0.s8 %v9491
        %v9493 = vlaneseq
        %v9494 = vshrl.u32 %v9493, 7
        %v9495 = vsub.s32 %v9492, %v9494
        %v9496 = vrot.slane %v9482, %v9495
        %v9497 = vcombine.high %v9489, %v9489
        %v9498 = vcombine.high %v9496, %v9496
        %v9500 = vunpack.c.l.s4 1966171168
        %v9501 = vunpack.c.0.s8 %v9500
        %v9502 = vlaneseq
        %v9503 = vshrl.u32 %v9502, 7
        %v9504 = vsub.s32 %v9501, %v9503
        %v9505 = vrot.slane %v8466, %v9504
        %v9507 = vunpack.c.l.s4 1966171168
        %v9508 = vunpack.c.0.s8 %v9507
        %v9509 = vlaneseq
        %v9510 = vshrl.u32 %v9509, 7
        %v9511 = vsub.s32 %v9508, %v9510
        %v9512 = vrot.slane %v9505, %v9511
        %v9514 = vunpack.c.l.s4 1966171168
        %v9515 = vunpack.c.0.s8 %v9514
        %v9516 = vlaneseq
        %v9517 = vshrl.u32 %v9516, 7
        %v9518 = vsub.s32 %v9515, %v9517
        %v9519 = vrot.slane %v8467, %v9518
        %v9520 = vcombine.high %v9519, %v9519
        %v9522 = vunpack.c.l.s4 1966171168
        %v9523 = vunpack.c.0.s8 %v9522
        %v9524 = vlaneseq
        %v9525 = vshrl.u32 %v9524, 7
        %v9526 = vsub.s32 %v9523, %v9525
        %v9527 = vrot.slane %v9519, %v9526
        %v9529 = vunpack.c.l.s4 1966171168
        %v9530 = vunpack.c.0.s8 %v9529
        %v9531 = vlaneseq
        %v9532 = vshrl.u32 %v9531, 7
        %v9533 = vsub.s32 %v9530, %v9532
        %v9534 = vrot.slane %v9520, %v9533
        %v9535 = vcombine.high %v9527, %v9527
        %v9536 = vcombine.high %v9534, %v9534
        %v9538 = vunpack.c.l.s4 1966171168
        %v9539 = vunpack.c.0.s8 %v9538
        %v9540 = vlaneseq
        %v9541 = vshrl.u32 %v9540, 7
        %v9542 = vsub.s32 %v9539, %v9541
        %v9543 = vrot.slane %v8468, %v9542
        %v9544 = vcombine.high %v9543, %v9543
        %v9546 = vunpack.c.l.s4 1966171168
        %v9547 = vunpack.c.0.s8 %v9546
        %v9548 = vlaneseq
        %v9549 = vshrl.u32 %v9548, 7
        %v9550 = vsub.s32 %v9547, %v9549
        %v9551 = vrot.slane %v9543, %v9550
        %v9553 = vunpack.c.l.s4 1966171168
        %v9554 = vunpack.c.0.s8 %v9553
        %v9555 = vlaneseq
        %v9556 = vshrl.u32 %v9555, 7
        %v9557 = vsub.s32 %v9554, %v9556
        %v9558 = vrot.slane %v9544, %v9557
        %v9559 = vcombine.high %v9551, %v9551
        %v9560 = vcombine.high %v9558, %v9558
        %v9562 = vunpack.c.l.s4 1966171168
        %v9563 = vunpack.c.0.s8 %v9562
        %v9564 = vlaneseq
        %v9565 = vshrl.u32 %v9564, 7
        %v9566 = vsub.s32 %v9563, %v9565
        %v9567 = vrot.slane %v8469, %v9566
        %v9569 = vunpack.c.l.s4 1966171168
        %v9570 = vunpack.c.0.s8 %v9569
        %v9571 = vlaneseq
        %v9572 = vshrl.u32 %v9571, 7
        %v9573 = vsub.s32 %v9570, %v9572
        %v9574 = vrot.slane %v9567, %v9573
        %v9575 = vunpack.i.l.s16 %v8535
        %v9576 = vunpack.i.h.s16 %v8535
        %v9577 = vunpack.i.l.s16 %v8542
        %v9578 = vunpack.i.h.s16 %v8542
        %v9579 = vunpack.i.l.s16 %v8543
        %v9580 = vunpack.i.h.s16 %v8543
        %v9581 = vunpack.i.l.s16 %v8544
        %v9582 = vunpack.i.h.s16 %v8544
        %v9583 = vunpack.i.l.s16 %v8559
        %v9584 = vunpack.i.h.s16 %v8559
        %v9585 = vunpack.i.l.s16 %v8566
        %v9586 = vunpack.i.h.s16 %v8566
        %v9587 = vunpack.i.l.s16 %v8567
        %v9588 = vunpack.i.h.s16 %v8567
        %v9589 = vunpack.i.l.s16 %v8568
        %v9590 = vunpack.i.h.s16 %v8568
        %v9591 = vunpack.i.l.s16 %v8582
        %v9592 = vunpack.i.l.s16 %v8597
        %v9593 = vunpack.i.h.s16 %v8597
        %v9594 = vunpack.i.l.s16 %v8604
        %v9595 = vunpack.i.h.s16 %v8604
        %v9596 = vunpack.i.l.s16 %v8605
        %v9597 = vunpack.i.h.s16 %v8605
        %v9598 = vunpack.i.l.s16 %v8606
        %v9599 = vunpack.i.h.s16 %v8606
        %v9600 = vunpack.i.l.s16 %v8621
        %v9601 = vunpack.i.h.s16 %v8621
        %v9602 = vunpack.i.l.s16 %v8628
        %v9603 = vunpack.i.h.s16 %v8628
        %v9604 = vunpack.i.l.s16 %v8629
        %v9605 = vunpack.i.h.s16 %v8629
        %v9606 = vunpack.i.l.s16 %v8630
        %v9607 = vunpack.i.h.s16 %v8630
        %v9608 = vunpack.i.l.s16 %v8644
        %v9609 = vunpack.i.l.s16 %v8659
        %v9610 = vunpack.i.h.s16 %v8659
        %v9611 = vunpack.i.l.s16 %v8666
        %v9612 = vunpack.i.h.s16 %v8666
        %v9613 = vunpack.i.l.s16 %v8667
        %v9614 = vunpack.i.h.s16 %v8667
        %v9615 = vunpack.i.l.s16 %v8668
        %v9616 = vunpack.i.h.s16 %v8668
        %v9617 = vunpack.i.l.s16 %v8683
        %v9618 = vunpack.i.h.s16 %v8683
        %v9619 = vunpack.i.l.s16 %v8690
        %v9620 = vunpack.i.h.s16 %v8690
        %v9621 = vunpack.i.l.s16 %v8691
        %v9622 = vunpack.i.h.s16 %v8691
        %v9623 = vunpack.i.l.s16 %v8692
        %v9624 = vunpack.i.h.s16 %v8692
        %v9625 = vunpack.i.l.s16 %v8706
        %v9626 = vunpack.i.l.s16 %v8721
        %v9627 = vunpack.i.h.s16 %v8721
        %v9628 = vunpack.i.l.s16 %v8728
        %v9629 = vunpack.i.h.s16 %v8728
        %v9630 = vunpack.i.l.s16 %v8729
        %v9631 = vunpack.i.h.s16 %v8729
        %v9632 = vunpack.i.l.s16 %v8730
        %v9633 = vunpack.i.h.s16 %v8730
        %v9634 = vunpack.i.l.s16 %v8745
        %v9635 = vunpack.i.h.s16 %v8745
        %v9636 = vunpack.i.l.s16 %v8752
        %v9637 = vunpack.i.h.s16 %v8752
        %v9638 = vunpack.i.l.s16 %v8753
        %v9639 = vunpack.i.h.s16 %v8753
        %v9640 = vunpack.i.l.s16 %v8754
        %v9641 = vunpack.i.h.s16 %v8754
        %v9642 = vunpack.i.l.s16 %v8768
        %v9643 = vunpack.i.l.s16 %v8783
        %v9644 = vunpack.i.h.s16 %v8783
        %v9645 = vunpack.i.l.s16 %v8790
        %v9646 = vunpack.i.h.s16 %v8790
        %v9647 = vunpack.i.l.s16 %v8791
        %v9648 = vunpack.i.h.s16 %v8791
        %v9649 = vunpack.i.l.s16 %v8792
        %v9650 = vunpack.i.h.s16 %v8792
        %v9651 = vunpack.i.l.s16 %v8807
        %v9652 = vunpack.i.h.s16 %v8807
        %v9653 = vunpack.i.l.s16 %v8814
        %v9654 = vunpack.i.h.s16 %v8814
        %v9655 = vunpack.i.l.s16 %v8815
        %v9656 = vunpack.i.h.s16 %v8815
        %v9657 = vunpack.i.l.s16 %v8816
        %v9658 = vunpack.i.h.s16 %v8816
        %v9659 = vunpack.i.l.s16 %v8830
        %v9660 = vunpack.i.l.s16 %v8845
        %v9661 = vunpack.i.h.s16 %v8845
        %v9662 = vunpack.i.l.s16 %v8852
        %v9663 = vunpack.i.h.s16 %v8852
        %v9664 = vunpack.i.l.s16 %v8853
        %v9665 = vunpack.i.h.s16 %v8853
        %v9666 = vunpack.i.l.s16 %v8854
        %v9667 = vunpack.i.h.s16 %v8854
        %v9668 = vunpack.i.l.s16 %v8869
        %v9669 = vunpack.i.h.s16 %v8869
        %v9670 = vunpack.i.l.s16 %v8876
        %v9671 = vunpack.i.h.s16 %v8876
        %v9672 = vunpack.i.l.s16 %v8877
        %v9673 = vunpack.i.h.s16 %v8877
        %v9674 = vunpack.i.l.s16 %v8878
        %v9675 = vunpack.i.h.s16 %v8878
        %v9676 = vunpack.i.l.s16 %v8892
        %v9677 = vunpack.i.l.s16 %v8907
        %v9678 = vunpack.i.h.s16 %v8907
        %v9679 = vunpack.i.l.s16 %v8914
        %v9680 = vunpack.i.h.s16 %v8914
        %v9681 = vunpack.i.l.s16 %v8915
        %v9682 = vunpack.i.h.s16 %v8915
        %v9683 = vunpack.i.l.s16 %v8916
        %v9684 = vunpack.i.h.s16 %v8916
        %v9685 = vunpack.i.l.s16 %v8931
        %v9686 = vunpack.i.h.s16 %v8931
        %v9687 = vunpack.i.l.s16 %v8938
        %v9688 = vunpack.i.h.s16 %v8938
        %v9689 = vunpack.i.l.s16 %v8939
        %v9690 = vunpack.i.h.s16 %v8939
        %v9691 = vunpack.i.l.s16 %v8940
        %v9692 = vunpack.i.h.s16 %v8940
        %v9693 = vunpack.i.l.s16 %v8954
        %v9694 = vunpack.i.l.s16 %v8969
        %v9695 = vunpack.i.h.s16 %v8969
        %v9696 = vunpack.i.l.s16 %v8976
        %v9697 = vunpack.i.h.s16 %v8976
        %v9698 = vunpack.i.l.s16 %v8977
        %v9699 = vunpack.i.h.s16 %v8977
        %v9700 = vunpack.i.l.s16 %v8978
        %v9701 = vunpack.i.h.s16 %v8978
        %v9702 = vunpack.i.l.s16 %v8993
        %v9703 = vunpack.i.h.s16 %v8993
        %v9704 = vunpack.i.l.s16 %v9000
        %v9705 = vunpack.i.h.s16 %v9000
        %v9706 = vunpack.i.l.s16 %v9001
        %v9707 = vunpack.i.h.s16 %v9001
        %v9708 = vunpack.i.l.s16 %v9002
        %v9709 = vunpack.i.h.s16 %v9002
        %v9710 = vunpack.i.l.s16 %v9016
        %v9711 = vunpack.i.l.s16 %v9031
        %v9712 = vunpack.i.h.s16 %v9031
        %v9713 = vunpack.i.l.s16 %v9038
        %v9714 = vunpack.i.h.s16 %v9038
        %v9715 = vunpack.i.l.s16 %v9039
        %v9716 = vunpack.i.h.s16 %v9039
        %v9717 = vunpack.i.l.s16 %v9040
        %v9718 = vunpack.i.h.s16 %v9040
        %v9719 = vunpack.i.l.s16 %v9055
        %v9720 = vunpack.i.h.s16 %v9055
        %v9721 = vunpack.i.l.s16 %v9062
        %v9722 = vunpack.i.h.s16 %v9062
        %v9723 = vunpack.i.l.s16 %v9063
        %v9724 = vunpack.i.h.s16 %v9063
        %v9725 = vunpack.i.l.s16 %v9064
        %v9726 = vunpack.i.h.s16 %v9064
        %v9727 = vunpack.i.l.s16 %v9078
        %v9728 = vunpack.i.l.s16 %v9093
        %v9729 = vunpack.i.h.s16 %v9093
        %v9730 = vunpack.i.l.s16 %v9100
        %v9731 = vunpack.i.h.s16 %v9100
        %v9732 = vunpack.i.l.s16 %v9101
        %v9733 = vunpack.i.h.s16 %v9101
        %v9734 = vunpack.i.l.s16 %v9102
        %v9735 = vunpack.i.h.s16 %v9102
        %v9736 = vunpack.i.l.s16 %v9117
        %v9737 = vunpack.i.h.s16 %v9117
        %v9738 = vunpack.i.l.s16 %v9124
        %v9739 = vunpack.i.h.s16 %v9124
        %v9740 = vunpack.i.l.s16 %v9125
        %v9741 = vunpack.i.h.s16 %v9125
        %v9742 = vunpack.i.l.s16 %v9126
        %v9743 = vunpack.i.h.s16 %v9126
        %v9744 = vunpack.i.l.s16 %v9140
        %v9745 = vunpack.i.l.s16 %v9155
        %v9746 = vunpack.i.h.s16 %v9155
        %v9747 = vunpack.i.l.s16 %v9162
        %v9748 = vunpack.i.h.s16 %v9162
        %v9749 = vunpack.i.l.s16 %v9163
        %v9750 = vunpack.i.h.s16 %v9163
        %v9751 = vunpack.i.l.s16 %v9164
        %v9752 = vunpack.i.h.s16 %v9164
        %v9753 = vunpack.i.l.s16 %v9179
        %v9754 = vunpack.i.h.s16 %v9179
        %v9755 = vunpack.i.l.s16 %v9186
        %v9756 = vunpack.i.h.s16 %v9186
        %v9757 = vunpack.i.l.s16 %v9187
        %v9758 = vunpack.i.h.s16 %v9187
        %v9759 = vunpack.i.l.s16 %v9188
        %v9760 = vunpack.i.h.s16 %v9188
        %v9761 = vunpack.i.l.s16 %v9202
        %v9762 = vunpack.i.l.s16 %v9217
        %v9763 = vunpack.i.h.s16 %v9217
        %v9764 = vunpack.i.l.s16 %v9224
        %v9765 = vunpack.i.h.s16 %v9224
        %v9766 = vunpack.i.l.s16 %v9225
        %v9767 = vunpack.i.h.s16 %v9225
        %v9768 = vunpack.i.l.s16 %v9226
        %v9769 = vunpack.i.h.s16 %v9226
        %v9770 = vunpack.i.l.s16 %v9241
        %v9771 = vunpack.i.h.s16 %v9241
        %v9772 = vunpack.i.l.s16 %v9248
        %v9773 = vunpack.i.h.s16 %v9248
        %v9774 = vunpack.i.l.s16 %v9249
        %v9775 = vunpack.i.h.s16 %v9249
        %v9776 = vunpack.i.l.s16 %v9250
        %v9777 = vunpack.i.h.s16 %v9250
        %v9778 = vunpack.i.l.s16 %v9264
        %v9779 = vunpack.i.l.s16 %v9279
        %v9780 = vunpack.i.h.s16 %v9279
        %v9781 = vunpack.i.l.s16 %v9286
        %v9782 = vunpack.i.h.s16 %v9286
        %v9783 = vunpack.i.l.s16 %v9287
        %v9784 = vunpack.i.h.s16 %v9287
        %v9785 = vunpack.i.l.s16 %v9288
        %v9786 = vunpack.i.h.s16 %v9288
        %v9787 = vunpack.i.l.s16 %v9303
        %v9788 = vunpack.i.h.s16 %v9303
        %v9789 = vunpack.i.l.s16 %v9310
        %v9790 = vunpack.i.h.s16 %v9310
        %v9791 = vunpack.i.l.s16 %v9311
        %v9792 = vunpack.i.h.s16 %v9311
        %v9793 = vunpack.i.l.s16 %v9312
        %v9794 = vunpack.i.h.s16 %v9312
        %v9795 = vunpack.i.l.s16 %v9326
        %v9796 = vunpack.i.l.s16 %v9341
        %v9797 = vunpack.i.h.s16 %v9341
        %v9798 = vunpack.i.l.s16 %v9348
        %v9799 = vunpack.i.h.s16 %v9348
        %v9800 = vunpack.i.l.s16 %v9349
        %v9801 = vunpack.i.h.s16 %v9349
        %v9802 = vunpack.i.l.s16 %v9350
        %v9803 = vunpack.i.h.s16 %v9350
        %v9804 = vunpack.i.l.s16 %v9365
        %v9805 = vunpack.i.h.s16 %v9365
        %v9806 = vunpack.i.l.s16 %v9372
        %v9807 = vunpack.i.h.s16 %v9372
        %v9808 = vunpack.i.l.s16 %v9373
        %v9809 = vunpack.i.h.s16 %v9373
        %v9810 = vunpack.i.l.s16 %v9374
        %v9811 = vunpack.i.h.s16 %v9374
        %v9812 = vunpack.i.l.s16 %v9388
        %v9813 = vunpack.i.l.s16 %v9403
        %v9814 = vunpack.i.h.s16 %v9403
        %v9815 = vunpack.i.l.s16 %v9410
        %v9816 = vunpack.i.h.s16 %v9410
        %v9817 = vunpack.i.l.s16 %v9411
        %v9818 = vunpack.i.h.s16 %v9411
        %v9819 = vunpack.i.l.s16 %v9412
        %v9820 = vunpack.i.h.s16 %v9412
        %v9821 = vunpack.i.l.s16 %v9427
        %v9822 = vunpack.i.h.s16 %v9427
        %v9823 = vunpack.i.l.s16 %v9434
        %v9824 = vunpack.i.h.s16 %v9434
        %v9825 = vunpack.i.l.s16 %v9435
        %v9826 = vunpack.i.h.s16 %v9435
        %v9827 = vunpack.i.l.s16 %v9436
        %v9828 = vunpack.i.h.s16 %v9436
        %v9829 = vunpack.i.l.s16 %v9450
        %v9830 = vunpack.i.l.s16 %v9465
        %v9831 = vunpack.i.h.s16 %v9465
        %v9832 = vunpack.i.l.s16 %v9472
        %v9833 = vunpack.i.h.s16 %v9472
        %v9834 = vunpack.i.l.s16 %v9473
        %v9835 = vunpack.i.h.s16 %v9473
        %v9836 = vunpack.i.l.s16 %v9474
        %v9837 = vunpack.i.h.s16 %v9474
        %v9838 = vunpack.i.l.s16 %v9489
        %v9839 = vunpack.i.h.s16 %v9489
        %v9840 = vunpack.i.l.s16 %v9496
        %v9841 = vunpack.i.h.s16 %v9496
        %v9842 = vunpack.i.l.s16 %v9497
        %v9843 = vunpack.i.h.s16 %v9497
        %v9844 = vunpack.i.l.s16 %v9498
        %v9845 = vunpack.i.h.s16 %v9498
        %v9846 = vunpack.i.l.s16 %v9512
        %v9847 = vunpack.i.l.s16 %v9527
        %v9848 = vunpack.i.h.s16 %v9527
        %v9849 = vunpack.i.l.s16 %v9534
        %v9850 = vunpack.i.h.s16 %v9534
        %v9851 = vunpack.i.l.s16 %v9535
        %v9852 = vunpack.i.h.s16 %v9535
        %v9853 = vunpack.i.l.s16 %v9536
        %v9854 = vunpack.i.h.s16 %v9536
        %v9855 = vunpack.i.l.s16 %v9551
        %v9856 = vunpack.i.h.s16 %v9551
        %v9857 = vunpack.i.l.s16 %v9558
        %v9858 = vunpack.i.h.s16 %v9558
        %v9859 = vunpack.i.l.s16 %v9559
        %v9860 = vunpack.i.h.s16 %v9559
        %v9861 = vunpack.i.l.s16 %v9560
        %v9862 = vunpack.i.h.s16 %v9560
        %v9863 = vunpack.i.l.s16 %v9574
        %v9864 = vpack.i.b16 %v9576, %v9575
        %v9865 = vpack.i.b16 %v9578, %v9577
        %v9866 = vpack.i.b16 %v9580, %v9579
        %v9867 = vpack.i.b16 %v9582, %v9581
        %v9868 = vpack.i.b16 %v9584, %v9583
        %v9869 = vpack.i.b16 %v9586, %v9585
        %v9870 = vpack.i.b16 %v9588, %v9587
        %v9871 = vpack.i.b16 %v9590, %v9589
        %v9872 = vpack.i.b16 %v9592, %v9591
        %v9873 = vpack.i.b16 %v9594, %v9593
        %v9874 = vpack.i.b16 %v9596, %v9595
        %v9875 = vpack.i.b16 %v9598, %v9597
        %v9876 = vpack.i.b16 %v9600, %v9599
        %v9877 = vpack.i.b16 %v9602, %v9601
        %v9878 = vpack.i.b16 %v9604, %v9603
        %v9879 = vpack.i.b16 %v9606, %v9605
        %v9880 = vpack.i.b16 %v9608, %v9607
        %v9881 = vpack.i.b16 %v9610, %v9609
        %v9882 = vpack.i.b16 %v9612, %v9611
        %v9883 = vpack.i.b16 %v9614, %v9613
        %v9884 = vpack.i.b16 %v9616, %v9615
        %v9885 = vpack.i.b16 %v9618, %v9617
        %v9886 = vpack.i.b16 %v9620, %v9619
        %v9887 = vpack.i.b16 %v9622, %v9621
        %v9888 = vpack.i.b16 %v9624, %v9623
        %v9889 = vpack.i.b16 %v9626, %v9625
        %v9890 = vpack.i.b16 %v9628, %v9627
        %v9891 = vpack.i.b16 %v9630, %v9629
        %v9892 = vpack.i.b16 %v9632, %v9631
        %v9893 = vpack.i.b16 %v9634, %v9633
        %v9894 = vpack.i.b16 %v9636, %v9635
        %v9895 = vpack.i.b16 %v9638, %v9637
        %v9896 = vpack.i.b16 %v9640, %v9639
        %v9897 = vpack.i.b16 %v9642, %v9641
        %v9898 = vpack.i.b16 %v9644, %v9643
        %v9899 = vpack.i.b16 %v9646, %v9645
        %v9900 = vpack.i.b16 %v9648, %v9647
        %v9901 = vpack.i.b16 %v9650, %v9649
        %v9902 = vpack.i.b16 %v9652, %v9651
        %v9903 = vpack.i.b16 %v9654, %v9653
        %v9904 = vpack.i.b16 %v9656, %v9655
        %v9905 = vpack.i.b16 %v9658, %v9657
        %v9906 = vpack.i.b16 %v9660, %v9659
        %v9907 = vpack.i.b16 %v9662, %v9661
        %v9908 = vpack.i.b16 %v9664, %v9663
        %v9909 = vpack.i.b16 %v9666, %v9665
        %v9910 = vpack.i.b16 %v9668, %v9667
        %v9911 = vpack.i.b16 %v9670, %v9669
        %v9912 = vpack.i.b16 %v9672, %v9671
        %v9913 = vpack.i.b16 %v9674, %v9673
        %v9914 = vpack.i.b16 %v9676, %v9675
        %v9915 = vpack.i.b16 %v9678, %v9677
        %v9916 = vpack.i.b16 %v9680, %v9679
        %v9917 = vpack.i.b16 %v9682, %v9681
        %v9918 = vpack.i.b16 %v9684, %v9683
        %v9919 = vpack.i.b16 %v9686, %v9685
        %v9920 = vpack.i.b16 %v9688, %v9687
        %v9921 = vpack.i.b16 %v9690, %v9689
        %v9922 = vpack.i.b16 %v9692, %v9691
        %v9923 = vpack.i.b16 %v9694, %v9693
        %v9924 = vpack.i.b16 %v9696, %v9695
        %v9925 = vpack.i.b16 %v9698, %v9697
        %v9926 = vpack.i.b16 %v9700, %v9699
        %v9927 = vpack.i.b16 %v9702, %v9701
        %v9928 = vpack.i.b16 %v9704, %v9703
        %v9929 = vpack.i.b16 %v9706, %v9705
        %v9930 = vpack.i.b16 %v9708, %v9707
        %v9931 = vpack.i.b16 %v9710, %v9709
        %v9932 = vpack.i.b16 %v9712, %v9711
        %v9933 = vpack.i.b16 %v9714, %v9713
        %v9934 = vpack.i.b16 %v9716, %v9715
        %v9935 = vpack.i.b16 %v9718, %v9717
        %v9936 = vpack.i.b16 %v9720, %v9719
        %v9937 = vpack.i.b16 %v9722, %v9721
        %v9938 = vpack.i.b16 %v9724, %v9723
        %v9939 = vpack.i.b16 %v9726, %v9725
        %v9940 = vpack.i.b16 %v9728, %v9727
        %v9941 = vpack.i.b16 %v9730, %v9729
        %v9942 = vpack.i.b16 %v9732, %v9731
        %v9943 = vpack.i.b16 %v9734, %v9733
        %v9944 = vpack.i.b16 %v9736, %v9735
        %v9945 = vpack.i.b16 %v9738, %v9737
        %v9946 = vpack.i.b16 %v9740, %v9739
        %v9947 = vpack.i.b16 %v9742, %v9741
        %v9948 = vpack.i.b16 %v9744, %v9743
        %v9949 = vpack.i.b16 %v9746, %v9745
        %v9950 = vpack.i.b16 %v9748, %v9747
        %v9951 = vpack.i.b16 %v9750, %v9749
        %v9952 = vpack.i.b16 %v9752, %v9751
        %v9953 = vpack.i.b16 %v9754, %v9753
        %v9954 = vpack.i.b16 %v9756, %v9755
        %v9955 = vpack.i.b16 %v9758, %v9757
        %v9956 = vpack.i.b16 %v9760, %v9759
        %v9957 = vpack.i.b16 %v9762, %v9761
        %v9958 = vpack.i.b16 %v9764, %v9763
        %v9959 = vpack.i.b16 %v9766, %v9765
        %v9960 = vpack.i.b16 %v9768, %v9767
        %v9961 = vpack.i.b16 %v9770, %v9769
        %v9962 = vpack.i.b16 %v9772, %v9771
        %v9963 = vpack.i.b16 %v9774, %v9773
        %v9964 = vpack.i.b16 %v9776, %v9775
        %v9965 = vpack.i.b16 %v9778, %v9777
        %v9966 = vpack.i.b16 %v9780, %v9779
        %v9967 = vpack.i.b16 %v9782, %v9781
        %v9968 = vpack.i.b16 %v9784, %v9783
        %v9969 = vpack.i.b16 %v9786, %v9785
        %v9970 = vpack.i.b16 %v9788, %v9787
        %v9971 = vpack.i.b16 %v9790, %v9789
        %v9972 = vpack.i.b16 %v9792, %v9791
        %v9973 = vpack.i.b16 %v9794, %v9793
        %v9974 = vpack.i.b16 %v9796, %v9795
        %v9975 = vpack.i.b16 %v9798, %v9797
        %v9976 = vpack.i.b16 %v9800, %v9799
        %v9977 = vpack.i.b16 %v9802, %v9801
        %v9978 = vpack.i.b16 %v9804, %v9803
        %v9979 = vpack.i.b16 %v9806, %v9805
        %v9980 = vpack.i.b16 %v9808, %v9807
        %v9981 = vpack.i.b16 %v9810, %v9809
        %v9982 = vpack.i.b16 %v9812, %v9811
        %v9983 = vpack.i.b16 %v9814, %v9813
        %v9984 = vpack.i.b16 %v9816, %v9815
        %v9985 = vpack.i.b16 %v9818, %v9817
        %v9986 = vpack.i.b16 %v9820, %v9819
        %v9987 = vpack.i.b16 %v9822, %v9821
        %v9988 = vpack.i.b16 %v9824, %v9823
        %v9989 = vpack.i.b16 %v9826, %v9825
        %v9990 = vpack.i.b16 %v9828, %v9827
        %v9991 = vpack.i.b16 %v9830, %v9829
        %v9992 = vpack.i.b16 %v9832, %v9831
        %v9993 = vpack.i.b16 %v9834, %v9833
        %v9994 = vpack.i.b16 %v9836, %v9835
        %v9995 = vpack.i.b16 %v9838, %v9837
        %v9996 = vpack.i.b16 %v9840, %v9839
        %v9997 = vpack.i.b16 %v9842, %v9841
        %v9998 = vpack.i.b16 %v9844, %v9843
        %v9999 = vpack.i.b16 %v9846, %v9845
        %v10000 = vpack.i.b16 %v9848, %v9847
        %v10001 = vpack.i.b16 %v9850, %v9849
        %v10002 = vpack.i.b16 %v9852, %v9851
        %v10003 = vpack.i.b16 %v9854, %v9853
        %v10004 = vpack.i.b16 %v9856, %v9855
        %v10005 = vpack.i.b16 %v9858, %v9857
        %v10006 = vpack.i.b16 %v9860, %v9859
        %v10007 = vpack.i.b16 %v9862, %v9861
        %v10009 = vcombine.low %v9864, %v9866
        %v10010 = vcombine.low %v9865, %v9867
        %v10012 = vunpack.c.l.s4 1935823168
        %v10013 = vunpack.c.0.s8 %v10012
        %v10014 = vlaneseq
        %v10015 = vshrl.u32 %v10014, 7
        %v10016 = vsub.s32 %v10013, %v10015
        %v10017 = vrot.slane %v10009, %v10016
        %v10019 = vunpack.c.l.s4 1935823168
        %v10020 = vunpack.c.0.s8 %v10019
        %v10021 = vlaneseq
        %v10022 = vshrl.u32 %v10021, 7
        %v10023 = vsub.s32 %v10020, %v10022
        %v10024 = vrot.slane %v10010, %v10023
        %v10025 = vcombine.low %v10017, %v10024
        %v10027 = vunpack.c.l.s4 1935823168
        %v10028 = vunpack.c.0.s8 %v10027
        %v10029 = vlaneseq
        %v10030 = vshrl.u32 %v10029, 7
        %v10031 = vsub.s32 %v10028, %v10030
        %v10032 = vrot.slane %v10025, %v10031
        %v10033 = vcombine.low %v9868, %v9870
        %v10034 = vcombine.low %v9869, %v9871
        %v10036 = vunpack.c.l.s4 1935823168
        %v10037 = vunpack.c.0.s8 %v10036
        %v10038 = vlaneseq
        %v10039 = vshrl.u32 %v10038, 7
        %v10040 = vsub.s32 %v10037, %v10039
        %v10041 = vrot.slane %v10033, %v10040
        %v10043 = vunpack.c.l.s4 1935823168
        %v10044 = vunpack.c.0.s8 %v10043
        %v10045 = vlaneseq
        %v10046 = vshrl.u32 %v10045, 7
        %v10047 = vsub.s32 %v10044, %v10046
        %v10048 = vrot.slane %v10034, %v10047
        %v10049 = vcombine.low %v10041, %v10048
        %v10051 = vunpack.c.l.s4 1935823168
        %v10052 = vunpack.c.0.s8 %v10051
        %v10053 = vlaneseq
        %v10054 = vshrl.u32 %v10053, 7
        %v10055 = vsub.s32 %v10052, %v10054
        %v10056 = vrot.slane %v10049, %v10055
        %v10057 = vcombine.low %v9872, %v9874
        %v10058 = vcombine.low %v9873, %v9875
        %v10060 = vunpack.c.l.s4 1935823168
        %v10061 = vunpack.c.0.s8 %v10060
        %v10062 = vlaneseq
        %v10063 = vshrl.u32 %v10062, 7
        %v10064 = vsub.s32 %v10061, %v10063
        %v10065 = vrot.slane %v10057, %v10064
        %v10067 = vunpack.c.l.s4 1935823168
        %v10068 = vunpack.c.0.s8 %v10067
        %v10069 = vlaneseq
        %v10070 = vshrl.u32 %v10069, 7
        %v10071 = vsub.s32 %v10068, %v10070
        %v10072 = vrot.slane %v10058, %v10071
        %v10073 = vcombine.low %v10065, %v10072
        %v10075 = vunpack.c.l.s4 1935823168
        %v10076 = vunpack.c.0.s8 %v10075
        %v10077 = vlaneseq
        %v10078 = vshrl.u32 %v10077, 7
        %v10079 = vsub.s32 %v10076, %v10078
        %v10080 = vrot.slane %v10073, %v10079
        %v10081 = vcombine.low %v9876, %v9878
        %v10082 = vcombine.low %v9877, %v9879
        %v10084 = vunpack.c.l.s4 1935823168
        %v10085 = vunpack.c.0.s8 %v10084
        %v10086 = vlaneseq
        %v10087 = vshrl.u32 %v10086, 7
        %v10088 = vsub.s32 %v10085, %v10087
        %v10089 = vrot.slane %v10081, %v10088
        %v10091 = vunpack.c.l.s4 1935823168
        %v10092 = vunpack.c.0.s8 %v10091
        %v10093 = vlaneseq
        %v10094 = vshrl.u32 %v10093, 7
        %v10095 = vsub.s32 %v10092, %v10094
        %v10096 = vrot.slane %v10082, %v10095
        %v10097 = vcombine.low %v10089, %v10096
        %v10099 = vunpack.c.l.s4 1935823168
        %v10100 = vunpack.c.0.s8 %v10099
        %v10101 = vlaneseq
        %v10102 = vshrl.u32 %v10101, 7
        %v10103 = vsub.s32 %v10100, %v10102
        %v10104 = vrot.slane %v10097, %v10103
        %v10105 = vcombine.low %v9880, %v9882
        %v10106 = vcombine.low %v9881, %v9883
        %v10108 = vunpack.c.l.s4 1935823168
        %v10109 = vunpack.c.0.s8 %v10108
        %v10110 = vlaneseq
        %v10111 = vshrl.u32 %v10110, 7
        %v10112 = vsub.s32 %v10109, %v10111
        %v10113 = vrot.slane %v10105, %v10112
        %v10115 = vunpack.c.l.s4 1935823168
        %v10116 = vunpack.c.0.s8 %v10115
        %v10117 = vlaneseq
        %v10118 = vshrl.u32 %v10117, 7
        %v10119 = vsub.s32 %v10116, %v10118
        %v10120 = vrot.slane %v10106, %v10119
        %v10121 = vcombine.low %v10113, %v10120
        %v10123 = vunpack.c.l.s4 1935823168
        %v10124 = vunpack.c.0.s8 %v10123
        %v10125 = vlaneseq
        %v10126 = vshrl.u32 %v10125, 7
        %v10127 = vsub.s32 %v10124, %v10126
        %v10128 = vrot.slane %v10121, %v10127
        %v10129 = vcombine.low %v9884, %v9886
        %v10130 = vcombine.low %v9885, %v9887
        %v10132 = vunpack.c.l.s4 1935823168
        %v10133 = vunpack.c.0.s8 %v10132
        %v10134 = vlaneseq
        %v10135 = vshrl.u32 %v10134, 7
        %v10136 = vsub.s32 %v10133, %v10135
        %v10137 = vrot.slane %v10129, %v10136
        %v10139 = vunpack.c.l.s4 1935823168
        %v10140 = vunpack.c.0.s8 %v10139
        %v10141 = vlaneseq
        %v10142 = vshrl.u32 %v10141, 7
        %v10143 = vsub.s32 %v10140, %v10142
        %v10144 = vrot.slane %v10130, %v10143
        %v10145 = vcombine.low %v10137, %v10144
        %v10147 = vunpack.c.l.s4 1935823168
        %v10148 = vunpack.c.0.s8 %v10147
        %v10149 = vlaneseq
        %v10150 = vshrl.u32 %v10149, 7
        %v10151 = vsub.s32 %v10148, %v10150
        %v10152 = vrot.slane %v10145, %v10151
        %v10153 = vcombine.low %v9888, %v9890
        %v10154 = vcombine.low %v9889, %v9891
        %v10156 = vunpack.c.l.s4 1935823168
        %v10157 = vunpack.c.0.s8 %v10156
        %v10158 = vlaneseq
        %v10159 = vshrl.u32 %v10158, 7
        %v10160 = vsub.s32 %v10157, %v10159
        %v10161 = vrot.slane %v10153, %v10160
        %v10163 = vunpack.c.l.s4 1935823168
        %v10164 = vunpack.c.0.s8 %v10163
        %v10165 = vlaneseq
        %v10166 = vshrl.u32 %v10165, 7
        %v10167 = vsub.s32 %v10164, %v10166
        %v10168 = vrot.slane %v10154, %v10167
        %v10169 = vcombine.low %v10161, %v10168
        %v10171 = vunpack.c.l.s4 1935823168
        %v10172 = vunpack.c.0.s8 %v10171
        %v10173 = vlaneseq
        %v10174 = vshrl.u32 %v10173, 7
        %v10175 = vsub.s32 %v10172, %v10174
        %v10176 = vrot.slane %v10169, %v10175
        %v10177 = vcombine.low %v9892, %v9894
        %v10178 = vcombine.low %v9893, %v9895
        %v10180 = vunpack.c.l.s4 1935823168
        %v10181 = vunpack.c.0.s8 %v10180
        %v10182 = vlaneseq
        %v10183 = vshrl.u32 %v10182, 7
        %v10184 = vsub.s32 %v10181, %v10183
        %v10185 = vrot.slane %v10177, %v10184
        %v10187 = vunpack.c.l.s4 1935823168
        %v10188 = vunpack.c.0.s8 %v10187
        %v10189 = vlaneseq
        %v10190 = vshrl.u32 %v10189, 7
        %v10191 = vsub.s32 %v10188, %v10190
        %v10192 = vrot.slane %v10178, %v10191
        %v10193 = vcombine.low %v10185, %v10192
        %v10195 = vunpack.c.l.s4 1935823168
        %v10196 = vunpack.c.0.s8 %v10195
        %v10197 = vlaneseq
        %v10198 = vshrl.u32 %v10197, 7
        %v10199 = vsub.s32 %v10196, %v10198
        %v10200 = vrot.slane %v10193, %v10199
        %v10201 = vcombine.low %v9896, %v9898
        %v10202 = vcombine.low %v9897, %v9899
        %v10204 = vunpack.c.l.s4 1935823168
        %v10205 = vunpack.c.0.s8 %v10204
        %v10206 = vlaneseq
        %v10207 = vshrl.u32 %v10206, 7
        %v10208 = vsub.s32 %v10205, %v10207
        %v10209 = vrot.slane %v10201, %v10208
        %v10211 = vunpack.c.l.s4 1935823168
        %v10212 = vunpack.c.0.s8 %v10211
        %v10213 = vlaneseq
        %v10214 = vshrl.u32 %v10213, 7
        %v10215 = vsub.s32 %v10212, %v10214
        %v10216 = vrot.slane %v10202, %v10215
        %v10217 = vcombine.low %v10209, %v10216
        %v10219 = vunpack.c.l.s4 1935823168
        %v10220 = vunpack.c.0.s8 %v10219
        %v10221 = vlaneseq
        %v10222 = vshrl.u32 %v10221, 7
        %v10223 = vsub.s32 %v10220, %v10222
        %v10224 = vrot.slane %v10217, %v10223
        %v10225 = vcombine.low %v9900, %v9902
        %v10226 = vcombine.low %v9901, %v9903
        %v10228 = vunpack.c.l.s4 1935823168
        %v10229 = vunpack.c.0.s8 %v10228
        %v10230 = vlaneseq
        %v10231 = vshrl.u32 %v10230, 7
        %v10232 = vsub.s32 %v10229, %v10231
        %v10233 = vrot.slane %v10225, %v10232
        %v10235 = vunpack.c.l.s4 1935823168
        %v10236 = vunpack.c.0.s8 %v10235
        %v10237 = vlaneseq
        %v10238 = vshrl.u32 %v10237, 7
        %v10239 = vsub.s32 %v10236, %v10238
        %v10240 = vrot.slane %v10226, %v10239
        %v10241 = vcombine.low %v10233, %v10240
        %v10243 = vunpack.c.l.s4 1935823168
        %v10244 = vunpack.c.0.s8 %v10243
        %v10245 = vlaneseq
        %v10246 = vshrl.u32 %v10245, 7
        %v10247 = vsub.s32 %v10244, %v10246
        %v10248 = vrot.slane %v10241, %v10247
        %v10249 = vcombine.low %v9904, %v9906
        %v10250 = vcombine.low %v9905, %v9907
        %v10252 = vunpack.c.l.s4 1935823168
        %v10253 = vunpack.c.0.s8 %v10252
        %v10254 = vlaneseq
        %v10255 = vshrl.u32 %v10254, 7
        %v10256 = vsub.s32 %v10253, %v10255
        %v10257 = vrot.slane %v10249, %v10256
        %v10259 = vunpack.c.l.s4 1935823168
        %v10260 = vunpack.c.0.s8 %v10259
        %v10261 = vlaneseq
        %v10262 = vshrl.u32 %v10261, 7
        %v10263 = vsub.s32 %v10260, %v10262
        %v10264 = vrot.slane %v10250, %v10263
        %v10265 = vcombine.low %v10257, %v10264
        %v10267 = vunpack.c.l.s4 1935823168
        %v10268 = vunpack.c.0.s8 %v10267
        %v10269 = vlaneseq
        %v10270 = vshrl.u32 %v10269, 7
        %v10271 = vsub.s32 %v10268, %v10270
        %v10272 = vrot.slane %v10265, %v10271
        %v10273 = vcombine.low %v9908, %v9910
        %v10274 = vcombine.low %v9909, %v9911
        %v10276 = vunpack.c.l.s4 1935823168
        %v10277 = vunpack.c.0.s8 %v10276
        %v10278 = vlaneseq
        %v10279 = vshrl.u32 %v10278, 7
        %v10280 = vsub.s32 %v10277, %v10279
        %v10281 = vrot.slane %v10273, %v10280
        %v10283 = vunpack.c.l.s4 1935823168
        %v10284 = vunpack.c.0.s8 %v10283
        %v10285 = vlaneseq
        %v10286 = vshrl.u32 %v10285, 7
        %v10287 = vsub.s32 %v10284, %v10286
        %v10288 = vrot.slane %v10274, %v10287
        %v10289 = vcombine.low %v10281, %v10288
        %v10291 = vunpack.c.l.s4 1935823168
        %v10292 = vunpack.c.0.s8 %v10291
        %v10293 = vlaneseq
        %v10294 = vshrl.u32 %v10293, 7
        %v10295 = vsub.s32 %v10292, %v10294
        %v10296 = vrot.slane %v10289, %v10295
        %v10297 = vcombine.low %v9912, %v9914
        %v10298 = vcombine.low %v9913, %v9915
        %v10300 = vunpack.c.l.s4 1935823168
        %v10301 = vunpack.c.0.s8 %v10300
        %v10302 = vlaneseq
        %v10303 = vshrl.u32 %v10302, 7
        %v10304 = vsub.s32 %v10301, %v10303
        %v10305 = vrot.slane %v10297, %v10304
        %v10307 = vunpack.c.l.s4 1935823168
        %v10308 = vunpack.c.0.s8 %v10307
        %v10309 = vlaneseq
        %v10310 = vshrl.u32 %v10309, 7
        %v10311 = vsub.s32 %v10308, %v10310
        %v10312 = vrot.slane %v10298, %v10311
        %v10313 = vcombine.low %v10305, %v10312
        %v10315 = vunpack.c.l.s4 1935823168
        %v10316 = vunpack.c.0.s8 %v10315
        %v10317 = vlaneseq
        %v10318 = vshrl.u32 %v10317, 7
        %v10319 = vsub.s32 %v10316, %v10318
        %v10320 = vrot.slane %v10313, %v10319
        %v10321 = vcombine.low %v9916, %v9918
        %v10322 = vcombine.low %v9917, %v9919
        %v10324 = vunpack.c.l.s4 1935823168
        %v10325 = vunpack.c.0.s8 %v10324
        %v10326 = vlaneseq
        %v10327 = vshrl.u32 %v10326, 7
        %v10328 = vsub.s32 %v10325, %v10327
        %v10329 = vrot.slane %v10321, %v10328
        %v10331 = vunpack.c.l.s4 1935823168
        %v10332 = vunpack.c.0.s8 %v10331
        %v10333 = vlaneseq
        %v10334 = vshrl.u32 %v10333, 7
        %v10335 = vsub.s32 %v10332, %v10334
        %v10336 = vrot.slane %v10322, %v10335
        %v10337 = vcombine.low %v10329, %v10336
        %v10339 = vunpack.c.l.s4 1935823168
        %v10340 = vunpack.c.0.s8 %v10339
        %v10341 = vlaneseq
        %v10342 = vshrl.u32 %v10341, 7
        %v10343 = vsub.s32 %v10340, %v10342
        %v10344 = vrot.slane %v10337, %v10343
        %v10345 = vcombine.low %v9920, %v9922
        %v10346 = vcombine.low %v9921, %v9923
        %v10348 = vunpack.c.l.s4 1935823168
        %v10349 = vunpack.c.0.s8 %v10348
        %v10350 = vlaneseq
        %v10351 = vshrl.u32 %v10350, 7
        %v10352 = vsub.s32 %v10349, %v10351
        %v10353 = vrot.slane %v10345, %v10352
        %v10355 = vunpack.c.l.s4 1935823168
        %v10356 = vunpack.c.0.s8 %v10355
        %v10357 = vlaneseq
        %v10358 = vshrl.u32 %v10357, 7
        %v10359 = vsub.s32 %v10356, %v10358
        %v10360 = vrot.slane %v10346, %v10359
        %v10361 = vcombine.low %v10353, %v10360
        %v10363 = vunpack.c.l.s4 1935823168
        %v10364 = vunpack.c.0.s8 %v10363
        %v10365 = vlaneseq
        %v10366 = vshrl.u32 %v10365, 7
        %v10367 = vsub.s32 %v10364, %v10366
        %v10368 = vrot.slane %v10361, %v10367
        %v10369 = vcombine.low %v9924, %v9926
        %v10370 = vcombine.low %v9925, %v9927
        %v10372 = vunpack.c.l.s4 1935823168
        %v10373 = vunpack.c.0.s8 %v10372
        %v10374 = vlaneseq
        %v10375 = vshrl.u32 %v10374, 7
        %v10376 = vsub.s32 %v10373, %v10375
        %v10377 = vrot.slane %v10369, %v10376
        %v10379 = vunpack.c.l.s4 1935823168
        %v10380 = vunpack.c.0.s8 %v10379
        %v10381 = vlaneseq
        %v10382 = vshrl.u32 %v10381, 7
        %v10383 = vsub.s32 %v10380, %v10382
        %v10384 = vrot.slane %v10370, %v10383
        %v10385 = vcombine.low %v10377, %v10384
        %v10387 = vunpack.c.l.s4 1935823168
        %v10388 = vunpack.c.0.s8 %v10387
        %v10389 = vlaneseq
        %v10390 = vshrl.u32 %v10389, 7
        %v10391 = vsub.s32 %v10388, %v10390
        %v10392 = vrot.slane %v10385, %v10391
        %v10393 = vcombine.low %v9928, %v9930
        %v10394 = vcombine.low %v9929, %v9931
        %v10396 = vunpack.c.l.s4 1935823168
        %v10397 = vunpack.c.0.s8 %v10396
        %v10398 = vlaneseq
        %v10399 = vshrl.u32 %v10398, 7
        %v10400 = vsub.s32 %v10397, %v10399
        %v10401 = vrot.slane %v10393, %v10400
        %v10403 = vunpack.c.l.s4 1935823168
        %v10404 = vunpack.c.0.s8 %v10403
        %v10405 = vlaneseq
        %v10406 = vshrl.u32 %v10405, 7
        %v10407 = vsub.s32 %v10404, %v10406
        %v10408 = vrot.slane %v10394, %v10407
        %v10409 = vcombine.low %v10401, %v10408
        %v10411 = vunpack.c.l.s4 1935823168
        %v10412 = vunpack.c.0.s8 %v10411
        %v10413 = vlaneseq
        %v10414 = vshrl.u32 %v10413, 7
        %v10415 = vsub.s32 %v10412, %v10414
        %v10416 = vrot.slane %v10409, %v10415
        %v10417 = vcombine.low %v9932, %v9934
        %v10418 = vcombine.low %v9933, %v9935
        %v10420 = vunpack.c.l.s4 1935823168
        %v10421 = vunpack.c.0.s8 %v10420
        %v10422 = vlaneseq
        %v10423 = vshrl.u32 %v10422, 7
        %v10424 = vsub.s32 %v10421, %v10423
        %v10425 = vrot.slane %v10417, %v10424
        %v10427 = vunpack.c.l.s4 1935823168
        %v10428 = vunpack.c.0.s8 %v10427
        %v10429 = vlaneseq
        %v10430 = vshrl.u32 %v10429, 7
        %v10431 = vsub.s32 %v10428, %v10430
        %v10432 = vrot.slane %v10418, %v10431
        %v10433 = vcombine.low %v10425, %v10432
        %v10435 = vunpack.c.l.s4 1935823168
        %v10436 = vunpack.c.0.s8 %v10435
        %v10437 = vlaneseq
        %v10438 = vshrl.u32 %v10437, 7
        %v10439 = vsub.s32 %v10436, %v10438
        %v10440 = vrot.slane %v10433, %v10439
        %v10441 = vcombine.low %v9936, %v9938
        %v10442 = vcombine.low %v9937, %v9939
        %v10444 = vunpack.c.l.s4 1935823168
        %v10445 = vunpack.c.0.s8 %v10444
        %v10446 = vlaneseq
        %v10447 = vshrl.u32 %v10446, 7
        %v10448 = vsub.s32 %v10445, %v10447
        %v10449 = vrot.slane %v10441, %v10448
        %v10451 = vunpack.c.l.s4 1935823168
        %v10452 = vunpack.c.0.s8 %v10451
        %v10453 = vlaneseq
        %v10454 = vshrl.u32 %v10453, 7
        %v10455 = vsub.s32 %v10452, %v10454
        %v10456 = vrot.slane %v10442, %v10455
        %v10457 = vcombine.low %v10449, %v10456
        %v10459 = vunpack.c.l.s4 1935823168
        %v10460 = vunpack.c.0.s8 %v10459
        %v10461 = vlaneseq
        %v10462 = vshrl.u32 %v10461, 7
        %v10463 = vsub.s32 %v10460, %v10462
        %v10464 = vrot.slane %v10457, %v10463
        %v10465 = vcombine.low %v9940, %v9942
        %v10466 = vcombine.low %v9941, %v9943
        %v10468 = vunpack.c.l.s4 1935823168
        %v10469 = vunpack.c.0.s8 %v10468
        %v10470 = vlaneseq
        %v10471 = vshrl.u32 %v10470, 7
        %v10472 = vsub.s32 %v10469, %v10471
        %v10473 = vrot.slane %v10465, %v10472
        %v10475 = vunpack.c.l.s4 1935823168
        %v10476 = vunpack.c.0.s8 %v10475
        %v10477 = vlaneseq
        %v10478 = vshrl.u32 %v10477, 7
        %v10479 = vsub.s32 %v10476, %v10478
        %v10480 = vrot.slane %v10466, %v10479
        %v10481 = vcombine.low %v10473, %v10480
        %v10483 = vunpack.c.l.s4 1935823168
        %v10484 = vunpack.c.0.s8 %v10483
        %v10485 = vlaneseq
        %v10486 = vshrl.u32 %v10485, 7
        %v10487 = vsub.s32 %v10484, %v10486
        %v10488 = vrot.slane %v10481, %v10487
        %v10489 = vcombine.low %v9944, %v9946
        %v10490 = vcombine.low %v9945, %v9947
        %v10492 = vunpack.c.l.s4 1935823168
        %v10493 = vunpack.c.0.s8 %v10492
        %v10494 = vlaneseq
        %v10495 = vshrl.u32 %v10494, 7
        %v10496 = vsub.s32 %v10493, %v10495
        %v10497 = vrot.slane %v10489, %v10496
        %v10499 = vunpack.c.l.s4 1935823168
        %v10500 = vunpack.c.0.s8 %v10499
        %v10501 = vlaneseq
        %v10502 = vshrl.u32 %v10501, 7
        %v10503 = vsub.s32 %v10500, %v10502
        %v10504 = vrot.slane %v10490, %v10503
        %v10505 = vcombine.low %v10497, %v10504
        %v10507 = vunpack.c.l.s4 1935823168
        %v10508 = vunpack.c.0.s8 %v10507
        %v10509 = vlaneseq
        %v10510 = vshrl.u32 %v10509, 7
        %v10511 = vsub.s32 %v10508, %v10510
        %v10512 = vrot.slane %v10505, %v10511
        %v10513 = vcombine.low %v9948, %v9950
        %v10514 = vcombine.low %v9949, %v9951
        %v10516 = vunpack.c.l.s4 1935823168
        %v10517 = vunpack.c.0.s8 %v10516
        %v10518 = vlaneseq
        %v10519 = vshrl.u32 %v10518, 7
        %v10520 = vsub.s32 %v10517, %v10519
        %v10521 = vrot.slane %v10513, %v10520
        %v10523 = vunpack.c.l.s4 1935823168
        %v10524 = vunpack.c.0.s8 %v10523
        %v10525 = vlaneseq
        %v10526 = vshrl.u32 %v10525, 7
        %v10527 = vsub.s32 %v10524, %v10526
        %v10528 = vrot.slane %v10514, %v10527
        %v10529 = vcombine.low %v10521, %v10528
        %v10531 = vunpack.c.l.s4 1935823168
        %v10532 = vunpack.c.0.s8 %v10531
        %v10533 = vlaneseq
        %v10534 = vshrl.u32 %v10533, 7
        %v10535 = vsub.s32 %v10532, %v10534
        %v10536 = vrot.slane %v10529, %v10535
        %v10537 = vcombine.low %v9952, %v9954
        %v10538 = vcombine.low %v9953, %v9955
        %v10540 = vunpack.c.l.s4 1935823168
        %v10541 = vunpack.c.0.s8 %v10540
        %v10542 = vlaneseq
        %v10543 = vshrl.u32 %v10542, 7
        %v10544 = vsub.s32 %v10541, %v10543
        %v10545 = vrot.slane %v10537, %v10544
        %v10547 = vunpack.c.l.s4 1935823168
        %v10548 = vunpack.c.0.s8 %v10547
        %v10549 = vlaneseq
        %v10550 = vshrl.u32 %v10549, 7
        %v10551 = vsub.s32 %v10548, %v10550
        %v10552 = vrot.slane %v10538, %v10551
        %v10553 = vcombine.low %v10545, %v10552
        %v10555 = vunpack.c.l.s4 1935823168
        %v10556 = vunpack.c.0.s8 %v10555
        %v10557 = vlaneseq
        %v10558 = vshrl.u32 %v10557, 7
        %v10559 = vsub.s32 %v10556, %v10558
        %v10560 = vrot.slane %v10553, %v10559
        %v10561 = vcombine.low %v9956, %v9958
        %v10562 = vcombine.low %v9957, %v9959
        %v10564 = vunpack.c.l.s4 1935823168
        %v10565 = vunpack.c.0.s8 %v10564
        %v10566 = vlaneseq
        %v10567 = vshrl.u32 %v10566, 7
        %v10568 = vsub.s32 %v10565, %v10567
        %v10569 = vrot.slane %v10561, %v10568
        %v10571 = vunpack.c.l.s4 1935823168
        %v10572 = vunpack.c.0.s8 %v10571
        %v10573 = vlaneseq
        %v10574 = vshrl.u32 %v10573, 7
        %v10575 = vsub.s32 %v10572, %v10574
        %v10576 = vrot.slane %v10562, %v10575
        %v10577 = vcombine.low %v10569, %v10576
        %v10579 = vunpack.c.l.s4 1935823168
        %v10580 = vunpack.c.0.s8 %v10579
        %v10581 = vlaneseq
        %v10582 = vshrl.u32 %v10581, 7
        %v10583 = vsub.s32 %v10580, %v10582
        %v10584 = vrot.slane %v10577, %v10583
        %v10585 = vcombine.low %v9960, %v9962
        %v10586 = vcombine.low %v9961, %v9963
        %v10588 = vunpack.c.l.s4 1935823168
        %v10589 = vunpack.c.0.s8 %v10588
        %v10590 = vlaneseq
        %v10591 = vshrl.u32 %v10590, 7
        %v10592 = vsub.s32 %v10589, %v10591
        %v10593 = vrot.slane %v10585, %v10592
        %v10595 = vunpack.c.l.s4 1935823168
        %v10596 = vunpack.c.0.s8 %v10595
        %v10597 = vlaneseq
        %v10598 = vshrl.u32 %v10597, 7
        %v10599 = vsub.s32 %v10596, %v10598
        %v10600 = vrot.slane %v10586, %v10599
        %v10601 = vcombine.low %v10593, %v10600
        %v10603 = vunpack.c.l.s4 1935823168
        %v10604 = vunpack.c.0.s8 %v10603
        %v10605 = vlaneseq
        %v10606 = vshrl.u32 %v10605, 7
        %v10607 = vsub.s32 %v10604, %v10606
        %v10608 = vrot.slane %v10601, %v10607
        %v10609 = vcombine.low %v9964, %v9966
        %v10610 = vcombine.low %v9965, %v9967
        %v10612 = vunpack.c.l.s4 1935823168
        %v10613 = vunpack.c.0.s8 %v10612
        %v10614 = vlaneseq
        %v10615 = vshrl.u32 %v10614, 7
        %v10616 = vsub.s32 %v10613, %v10615
        %v10617 = vrot.slane %v10609, %v10616
        %v10619 = vunpack.c.l.s4 1935823168
        %v10620 = vunpack.c.0.s8 %v10619
        %v10621 = vlaneseq
        %v10622 = vshrl.u32 %v10621, 7
        %v10623 = vsub.s32 %v10620, %v10622
        %v10624 = vrot.slane %v10610, %v10623
        %v10625 = vcombine.low %v10617, %v10624
        %v10627 = vunpack.c.l.s4 1935823168
        %v10628 = vunpack.c.0.s8 %v10627
        %v10629 = vlaneseq
        %v10630 = vshrl.u32 %v10629, 7
        %v10631 = vsub.s32 %v10628, %v10630
        %v10632 = vrot.slane %v10625, %v10631
        %v10633 = vcombine.low %v9968, %v9970
        %v10634 = vcombine.low %v9969, %v9971
        %v10636 = vunpack.c.l.s4 1935823168
        %v10637 = vunpack.c.0.s8 %v10636
        %v10638 = vlaneseq
        %v10639 = vshrl.u32 %v10638, 7
        %v10640 = vsub.s32 %v10637, %v10639
        %v10641 = vrot.slane %v10633, %v10640
        %v10643 = vunpack.c.l.s4 1935823168
        %v10644 = vunpack.c.0.s8 %v10643
        %v10645 = vlaneseq
        %v10646 = vshrl.u32 %v10645, 7
        %v10647 = vsub.s32 %v10644, %v10646
        %v10648 = vrot.slane %v10634, %v10647
        %v10649 = vcombine.low %v10641, %v10648
        %v10651 = vunpack.c.l.s4 1935823168
        %v10652 = vunpack.c.0.s8 %v10651
        %v10653 = vlaneseq
        %v10654 = vshrl.u32 %v10653, 7
        %v10655 = vsub.s32 %v10652, %v10654
        %v10656 = vrot.slane %v10649, %v10655
        %v10657 = vcombine.low %v9972, %v9974
        %v10658 = vcombine.low %v9973, %v9975
        %v10660 = vunpack.c.l.s4 1935823168
        %v10661 = vunpack.c.0.s8 %v10660
        %v10662 = vlaneseq
        %v10663 = vshrl.u32 %v10662, 7
        %v10664 = vsub.s32 %v10661, %v10663
        %v10665 = vrot.slane %v10657, %v10664
        %v10667 = vunpack.c.l.s4 1935823168
        %v10668 = vunpack.c.0.s8 %v10667
        %v10669 = vlaneseq
        %v10670 = vshrl.u32 %v10669, 7
        %v10671 = vsub.s32 %v10668, %v10670
        %v10672 = vrot.slane %v10658, %v10671
        %v10673 = vcombine.low %v10665, %v10672
        %v10675 = vunpack.c.l.s4 1935823168
        %v10676 = vunpack.c.0.s8 %v10675
        %v10677 = vlaneseq
        %v10678 = vshrl.u32 %v10677, 7
        %v10679 = vsub.s32 %v10676, %v10678
        %v10680 = vrot.slane %v10673, %v10679
        %v10681 = vcombine.low %v9976, %v9978
        %v10682 = vcombine.low %v9977, %v9979
        %v10684 = vunpack.c.l.s4 1935823168
        %v10685 = vunpack.c.0.s8 %v10684
        %v10686 = vlaneseq
        %v10687 = vshrl.u32 %v10686, 7
        %v10688 = vsub.s32 %v10685, %v10687
        %v10689 = vrot.slane %v10681, %v10688
        %v10691 = vunpack.c.l.s4 1935823168
        %v10692 = vunpack.c.0.s8 %v10691
        %v10693 = vlaneseq
        %v10694 = vshrl.u32 %v10693, 7
        %v10695 = vsub.s32 %v10692, %v10694
        %v10696 = vrot.slane %v10682, %v10695
        %v10697 = vcombine.low %v10689, %v10696
        %v10699 = vunpack.c.l.s4 1935823168
        %v10700 = vunpack.c.0.s8 %v10699
        %v10701 = vlaneseq
        %v10702 = vshrl.u32 %v10701, 7
        %v10703 = vsub.s32 %v10700, %v10702
        %v10704 = vrot.slane %v10697, %v10703
        %v10705 = vcombine.low %v9980, %v9982
        %v10706 = vcombine.low %v9981, %v9983
        %v10708 = vunpack.c.l.s4 1935823168
        %v10709 = vunpack.c.0.s8 %v10708
        %v10710 = vlaneseq
        %v10711 = vshrl.u32 %v10710, 7
        %v10712 = vsub.s32 %v10709, %v10711
        %v10713 = vrot.slane %v10705, %v10712
        %v10715 = vunpack.c.l.s4 1935823168
        %v10716 = vunpack.c.0.s8 %v10715
        %v10717 = vlaneseq
        %v10718 = vshrl.u32 %v10717, 7
        %v10719 = vsub.s32 %v10716, %v10718
        %v10720 = vrot.slane %v10706, %v10719
        %v10721 = vcombine.low %v10713, %v10720
        %v10723 = vunpack.c.l.s4 1935823168
        %v10724 = vunpack.c.0.s8 %v10723
        %v10725 = vlaneseq
        %v10726 = vshrl.u32 %v10725, 7
        %v10727 = vsub.s32 %v10724, %v10726
        %v10728 = vrot.slane %v10721, %v10727
        %v10729 = vcombine.low %v9984, %v9986
        %v10730 = vcombine.low %v9985, %v9987
        %v10732 = vunpack.c.l.s4 1935823168
        %v10733 = vunpack.c.0.s8 %v10732
        %v10734 = vlaneseq
        %v10735 = vshrl.u32 %v10734, 7
        %v10736 = vsub.s32 %v10733, %v10735
        %v10737 = vrot.slane %v10729, %v10736
        %v10739 = vunpack.c.l.s4 1935823168
        %v10740 = vunpack.c.0.s8 %v10739
        %v10741 = vlaneseq
        %v10742 = vshrl.u32 %v10741, 7
        %v10743 = vsub.s32 %v10740, %v10742
        %v10744 = vrot.slane %v10730, %v10743
        %v10745 = vcombine.low %v10737, %v10744
        %v10747 = vunpack.c.l.s4 1935823168
        %v10748 = vunpack.c.0.s8 %v10747
        %v10749 = vlaneseq
        %v10750 = vshrl.u32 %v10749, 7
        %v10751 = vsub.s32 %v10748, %v10750
        %v10752 = vrot.slane %v10745, %v10751
        %v10753 = vcombine.low %v9988, %v9990
        %v10754 = vcombine.low %v9989, %v9991
        %v10756 = vunpack.c.l.s4 1935823168
        %v10757 = vunpack.c.0.s8 %v10756
        %v10758 = vlaneseq
        %v10759 = vshrl.u32 %v10758, 7
        %v10760 = vsub.s32 %v10757, %v10759
        %v10761 = vrot.slane %v10753, %v10760
        %v10763 = vunpack.c.l.s4 1935823168
        %v10764 = vunpack.c.0.s8 %v10763
        %v10765 = vlaneseq
        %v10766 = vshrl.u32 %v10765, 7
        %v10767 = vsub.s32 %v10764, %v10766
        %v10768 = vrot.slane %v10754, %v10767
        %v10769 = vcombine.low %v10761, %v10768
        %v10771 = vunpack.c.l.s4 1935823168
        %v10772 = vunpack.c.0.s8 %v10771
        %v10773 = vlaneseq
        %v10774 = vshrl.u32 %v10773, 7
        %v10775 = vsub.s32 %v10772, %v10774
        %v10776 = vrot.slane %v10769, %v10775
        %v10777 = vcombine.low %v9992, %v9994
        %v10778 = vcombine.low %v9993, %v9995
        %v10780 = vunpack.c.l.s4 1935823168
        %v10781 = vunpack.c.0.s8 %v10780
        %v10782 = vlaneseq
        %v10783 = vshrl.u32 %v10782, 7
        %v10784 = vsub.s32 %v10781, %v10783
        %v10785 = vrot.slane %v10777, %v10784
        %v10787 = vunpack.c.l.s4 1935823168
        %v10788 = vunpack.c.0.s8 %v10787
        %v10789 = vlaneseq
        %v10790 = vshrl.u32 %v10789, 7
        %v10791 = vsub.s32 %v10788, %v10790
        %v10792 = vrot.slane %v10778, %v10791
        %v10793 = vcombine.low %v10785, %v10792
        %v10795 = vunpack.c.l.s4 1935823168
        %v10796 = vunpack.c.0.s8 %v10795
        %v10797 = vlaneseq
        %v10798 = vshrl.u32 %v10797, 7
        %v10799 = vsub.s32 %v10796, %v10798
        %v10800 = vrot.slane %v10793, %v10799
        %v10801 = vcombine.low %v9996, %v9998
        %v10802 = vcombine.low %v9997, %v9999
        %v10804 = vunpack.c.l.s4 1935823168
        %v10805 = vunpack.c.0.s8 %v10804
        %v10806 = vlaneseq
        %v10807 = vshrl.u32 %v10806, 7
        %v10808 = vsub.s32 %v10805, %v10807
        %v10809 = vrot.slane %v10801, %v10808
        %v10811 = vunpack.c.l.s4 1935823168
        %v10812 = vunpack.c.0.s8 %v10811
        %v10813 = vlaneseq
        %v10814 = vshrl.u32 %v10813, 7
        %v10815 = vsub.s32 %v10812, %v10814
        %v10816 = vrot.slane %v10802, %v10815
        %v10817 = vcombine.low %v10809, %v10816
        %v10819 = vunpack.c.l.s4 1935823168
        %v10820 = vunpack.c.0.s8 %v10819
        %v10821 = vlaneseq
        %v10822 = vshrl.u32 %v10821, 7
        %v10823 = vsub.s32 %v10820, %v10822
        %v10824 = vrot.slane %v10817, %v10823
        %v10825 = vcombine.low %v10000, %v10002
        %v10826 = vcombine.low %v10001, %v10003
        %v10828 = vunpack.c.l.s4 1935823168
        %v10829 = vunpack.c.0.s8 %v10828
        %v10830 = vlaneseq
        %v10831 = vshrl.u32 %v10830, 7
        %v10832 = vsub.s32 %v10829, %v10831
        %v10833 = vrot.slane %v10825, %v10832
        %v10835 = vunpack.c.l.s4 1935823168
        %v10836 = vunpack.c.0.s8 %v10835
        %v10837 = vlaneseq
        %v10838 = vshrl.u32 %v10837, 7
        %v10839 = vsub.s32 %v10836, %v10838
        %v10840 = vrot.slane %v10826, %v10839
        %v10841 = vcombine.low %v10833, %v10840
        %v10843 = vunpack.c.l.s4 1935823168
        %v10844 = vunpack.c.0.s8 %v10843
        %v10845 = vlaneseq
        %v10846 = vshrl.u32 %v10845, 7
        %v10847 = vsub.s32 %v10844, %v10846
        %v10848 = vrot.slane %v10841, %v10847
        %v10849 = vcombine.low %v10004, %v10006
        %v10850 = vcombine.low %v10005, %v10007
        %v10852 = vunpack.c.l.s4 1935823168
        %v10853 = vunpack.c.0.s8 %v10852
        %v10854 = vlaneseq
        %v10855 = vshrl.u32 %v10854, 7
        %v10856 = vsub.s32 %v10853, %v10855
        %v10857 = vrot.slane %v10849, %v10856
        %v10859 = vunpack.c.l.s4 1935823168
        %v10860 = vunpack.c.0.s8 %v10859
        %v10861 = vlaneseq
        %v10862 = vshrl.u32 %v10861, 7
        %v10863 = vsub.s32 %v10860, %v10862
        %v10864 = vrot.slane %v10850, %v10863
        %v10865 = vcombine.low %v10857, %v10864
        %v10867 = vunpack.c.l.s4 1935823168
        %v10868 = vunpack.c.0.s8 %v10867
        %v10869 = vlaneseq
        %v10870 = vshrl.u32 %v10869, 7
        %v10871 = vsub.s32 %v10868, %v10870
        %v10872 = vrot.slane %v10865, %v10871
        %v10874 = vunpack.c.l.s4 1935823168
        %v10875 = vunpack.c.0.s8 %v10874
        %v10876 = vlaneseq
        %v10877 = vshrl.u32 %v10876, 7
        %v10878 = vsub.s32 %v10875, %v10877
        %v10879 = vrot.slane %v9863, %v10878
        %v10881 = vunpack.c.l.s4 1935823168
        %v10882 = vunpack.c.0.s8 %v10881
        %v10883 = vlaneseq
        %v10884 = vshrl.u32 %v10883, 7
        %v10885 = vsub.s32 %v10882, %v10884
        %v10886 = vrot.slane %v10879, %v10885
        %10924 = vst [vmem:[#allocation3 + $0xc] sm:$0xf] %v10032
        %10925 = vst [vmem:[#allocation3 + $0x1c] sm:$0xf] %v10056
        %10926 = vst [vmem:[#allocation3 + $0x2c] sm:$0xf] %v10080
        %10927 = vst [vmem:[#allocation3 + $0x3c] sm:$0xf] %v10104
        %10928 = vst [vmem:[#allocation3 + $0x4c] sm:$0xf] %v10128
        %10929 = vst [vmem:[#allocation3 + $0x5c] sm:$0xf] %v10152
        %10930 = vst [vmem:[#allocation3 + $0x6c] sm:$0xf] %v10176
        %10931 = vst [vmem:[#allocation3 + $0x7c] sm:$0xf] %v10200
        %10932 = vst [vmem:[#allocation3 + $0x8c] sm:$0xf] %v10224
        %10933 = vst [vmem:[#allocation3 + $0x9c] sm:$0xf] %v10248
        %10934 = vst [vmem:[#allocation3 + $0xac] sm:$0xf] %v10272
        %10935 = vst [vmem:[#allocation3 + $0xbc] sm:$0xf] %v10296
        %10936 = vst [vmem:[#allocation3 + $0xcc] sm:$0xf] %v10320
        %10937 = vst [vmem:[#allocation3 + $0xdc] sm:$0xf] %v10344
        %10938 = vst [vmem:[#allocation3 + $0xec] sm:$0xf] %v10368
        %10939 = vst [vmem:[#allocation3 + $0xfc] sm:$0xf] %v10392
        %10940 = vst [vmem:[#allocation3 + $0x10c] sm:$0xf] %v10416
        %10941 = vst [vmem:[#allocation3 + $0x11c] sm:$0xf] %v10440
        %10942 = vst [vmem:[#allocation3 + $0x12c] sm:$0xf] %v10464
        %10943 = vst [vmem:[#allocation3 + $0x13c] sm:$0xf] %v10488
        %10944 = vst [vmem:[#allocation3 + $0x14c] sm:$0xf] %v10512
        %10945 = vst [vmem:[#allocation3 + $0x15c] sm:$0xf] %v10536
        %10946 = vst [vmem:[#allocation3 + $0x16c] sm:$0xf] %v10560
        %10947 = vst [vmem:[#allocation3 + $0x17c] sm:$0xf] %v10584
        %10948 = vst [vmem:[#allocation3 + $0x18c] sm:$0xf] %v10608
        %10949 = vst [vmem:[#allocation3 + $0x19c] sm:$0xf] %v10632
        %10950 = vst [vmem:[#allocation3 + $0x1ac] sm:$0xf] %v10656
        %10951 = vst [vmem:[#allocation3 + $0x1bc] sm:$0xf] %v10680
        %10952 = vst [vmem:[#allocation3 + $0x1cc] sm:$0xf] %v10704
        %10953 = vst [vmem:[#allocation3 + $0x1dc] sm:$0xf] %v10728
        %10954 = vst [vmem:[#allocation3 + $0x1ec] sm:$0xf] %v10752
        %10955 = vst [vmem:[#allocation3 + $0x1fc] sm:$0xf] %v10776
        %10956 = vst [vmem:[#allocation3 + $0x20c] sm:$0xf] %v10800
        %10957 = vst [vmem:[#allocation3 + $0x21c] sm:$0xf] %v10824
        %10958 = vst [vmem:[#allocation3 + $0x22c] sm:$0xf] %v10848
        %10959 = vst [vmem:[#allocation3 + $0x23c] sm:$0xf] %v10872
        %v10960 = vld [vmem:[#allocation3 + $0x24c] sm:$0x1]
        %v10961 = vsel %vm207, %v10886, %v10960
        %10962 = vst [vmem:[#allocation3 + $0x24c] sm:$0x1] %v10961
      $region36: #{deconv2d_batchnorm_forward.1} parent=31 // pred_fallthru
        _
      %v10963 = vld [vmem:[#allocation3] sm:$0xff]
      %v10964 = vld [vmem:[#allocation3 + $0x8] sm:$0xff]
      %v10965 = vld [vmem:[#allocation3 + $0x10] sm:$0xff]
      %v10966 = vld [vmem:[#allocation3 + $0x18] sm:$0xff]
      %v10967 = vld [vmem:[#allocation3 + $0x20] sm:$0xff]
      %v10968 = vld [vmem:[#allocation3 + $0x28] sm:$0xff]
      %v10969 = vld [vmem:[#allocation3 + $0x30] sm:$0xff]
      %v10970 = vld [vmem:[#allocation3 + $0x38] sm:$0xff]
      %v10971 = vld [vmem:[#allocation3 + $0x40] sm:$0xff]
      %v10972 = vld [vmem:[#allocation3 + $0x48] sm:$0xff]
      %v10973 = vld [vmem:[#allocation3 + $0x50] sm:$0xff]
      %v10974 = vld [vmem:[#allocation3 + $0x58] sm:$0xff]
      %v10975 = vld [vmem:[#allocation3 + $0x60] sm:$0xff]
      %v10976 = vld [vmem:[#allocation3 + $0x68] sm:$0xff]
      %v10977 = vld [vmem:[#allocation3 + $0x70] sm:$0xff]
      %v10978 = vld [vmem:[#allocation3 + $0x78] sm:$0xff]
      %v10979 = vld [vmem:[#allocation3 + $0x80] sm:$0xff]
      %v10980 = vld [vmem:[#allocation3 + $0x88] sm:$0xff]
      %v10981 = vld [vmem:[#allocation3 + $0x90] sm:$0xff]
      %v10982 = vld [vmem:[#allocation3 + $0x98] sm:$0xff]
      %v10983 = vld [vmem:[#allocation3 + $0xa0] sm:$0xff]
      %v10984 = vld [vmem:[#allocation3 + $0xa8] sm:$0xff]
      %v10985 = vld [vmem:[#allocation3 + $0xb0] sm:$0xff]
      %v10986 = vld [vmem:[#allocation3 + $0xb8] sm:$0xff]
      %v10987 = vld [vmem:[#allocation3 + $0xc0] sm:$0xff]
      %v10988 = vld [vmem:[#allocation3 + $0xc8] sm:$0xff]
      %v10989 = vld [vmem:[#allocation3 + $0xd0] sm:$0xff]
      %v10990 = vld [vmem:[#allocation3 + $0xd8] sm:$0xff]
      %v10991 = vld [vmem:[#allocation3 + $0xe0] sm:$0xff]
      %v10992 = vld [vmem:[#allocation3 + $0xe8] sm:$0xff]
      %v10993 = vld [vmem:[#allocation3 + $0xf0] sm:$0xff]
      %v10994 = vld [vmem:[#allocation3 + $0xf8] sm:$0xff]
      %v10995 = vld [vmem:[#allocation3 + $0x100] sm:$0xff]
      %v10996 = vld [vmem:[#allocation3 + $0x108] sm:$0xff]
      %v10997 = vld [vmem:[#allocation3 + $0x110] sm:$0xff]
      %v10998 = vld [vmem:[#allocation3 + $0x118] sm:$0xff]
      %v10999 = vld [vmem:[#allocation3 + $0x120] sm:$0xff]
      %v11000 = vld [vmem:[#allocation3 + $0x128] sm:$0xff]
      %v11001 = vld [vmem:[#allocation3 + $0x130] sm:$0xff]
      %v11002 = vld [vmem:[#allocation3 + $0x138] sm:$0xff]
      %v11003 = vld [vmem:[#allocation3 + $0x140] sm:$0xff]
      %v11004 = vld [vmem:[#allocation3 + $0x148] sm:$0xff]
      %v11005 = vld [vmem:[#allocation3 + $0x150] sm:$0xff]
      %v11006 = vld [vmem:[#allocation3 + $0x158] sm:$0xff]
      %v11007 = vld [vmem:[#allocation3 + $0x160] sm:$0xff]
      %v11008 = vld [vmem:[#allocation3 + $0x168] sm:$0xff]
      %v11009 = vld [vmem:[#allocation3 + $0x170] sm:$0xff]
      %v11010 = vld [vmem:[#allocation3 + $0x178] sm:$0xff]
      %v11011 = vld [vmem:[#allocation3 + $0x180] sm:$0xff]
      %v11012 = vld [vmem:[#allocation3 + $0x188] sm:$0xff]
      %v11013 = vld [vmem:[#allocation3 + $0x190] sm:$0xff]
      %v11014 = vld [vmem:[#allocation3 + $0x198] sm:$0xff]
      %v11015 = vld [vmem:[#allocation3 + $0x1a0] sm:$0xff]
      %v11016 = vld [vmem:[#allocation3 + $0x1a8] sm:$0xff]
      %v11017 = vld [vmem:[#allocation3 + $0x1b0] sm:$0xff]
      %v11018 = vld [vmem:[#allocation3 + $0x1b8] sm:$0xff]
      %v11019 = vld [vmem:[#allocation3 + $0x1c0] sm:$0xff]
      %v11020 = vld [vmem:[#allocation3 + $0x1c8] sm:$0xff]
      %v11021 = vld [vmem:[#allocation3 + $0x1d0] sm:$0xff]
      %v11022 = vld [vmem:[#allocation3 + $0x1d8] sm:$0xff]
      %v11023 = vld [vmem:[#allocation3 + $0x1e0] sm:$0xff]
      %v11024 = vld [vmem:[#allocation3 + $0x1e8] sm:$0xff]
      %v11025 = vld [vmem:[#allocation3 + $0x1f0] sm:$0xff]
      %v11026 = vld [vmem:[#allocation3 + $0x1f8] sm:$0xff]
      %v11027 = vld [vmem:[#allocation3 + $0x200] sm:$0xff]
      %v11028 = vld [vmem:[#allocation3 + $0x208] sm:$0xff]
      %v11029 = vld [vmem:[#allocation3 + $0x210] sm:$0xff]
      %v11030 = vld [vmem:[#allocation3 + $0x218] sm:$0xff]
      %v11031 = vld [vmem:[#allocation3 + $0x220] sm:$0xff]
      %v11032 = vld [vmem:[#allocation3 + $0x228] sm:$0xff]
      %v11033 = vld [vmem:[#allocation3 + $0x230] sm:$0xff]
      %v11034 = vld [vmem:[#allocation3 + $0x238] sm:$0xff]
      %v11035 = vld [vmem:[#allocation3 + $0x240] sm:$0x11]
      %v11036 = vld [vmem:[#allocation3 + $0x248] sm:$0x11]
      %s11037 = smul.u32 %s19, 128
      %s11038 = smul.addr %s11037, 4
      %s11039 = scalar_lea.vmem %s1, %s11038
      %v11040 = vld [vmem:[%s11039] sm:$0xff]
      %v11041 = vld [vmem:[%s11039 + $0x8] sm:$0xff]
      %v11042 = vld [vmem:[%s11039 + $0x10] sm:$0xff]
      %v11043 = vld [vmem:[%s11039 + $0x18] sm:$0xff]
      %v11044 = vld [vmem:[%s11039 + $0x20] sm:$0xff]
      %v11045 = vld [vmem:[%s11039 + $0x28] sm:$0xff]
      %v11046 = vld [vmem:[%s11039 + $0x30] sm:$0xff]
      %v11047 = vld [vmem:[%s11039 + $0x38] sm:$0xff]
      %v11048 = vld [vmem:[%s11039 + $0x40] sm:$0xff]
      %v11049 = vld [vmem:[%s11039 + $0x48] sm:$0xff]
      %v11050 = vld [vmem:[%s11039 + $0x50] sm:$0xff]
      %v11051 = vld [vmem:[%s11039 + $0x58] sm:$0xff]
      %v11052 = vld [vmem:[%s11039 + $0x60] sm:$0xff]
      %v11053 = vld [vmem:[%s11039 + $0x68] sm:$0xff]
      %v11054 = vld [vmem:[%s11039 + $0x70] sm:$0xff]
      %v11055 = vld [vmem:[%s11039 + $0x78] sm:$0xff]
      %v11056 = vld [vmem:[%s11039 + $0x80] sm:$0xff]
      %v11057 = vld [vmem:[%s11039 + $0x88] sm:$0xff]
      %v11058 = vld [vmem:[%s11039 + $0x90] sm:$0xff]
      %v11059 = vld [vmem:[%s11039 + $0x98] sm:$0xff]
      %v11060 = vld [vmem:[%s11039 + $0xa0] sm:$0xff]
      %v11061 = vld [vmem:[%s11039 + $0xa8] sm:$0xff]
      %v11062 = vld [vmem:[%s11039 + $0xb0] sm:$0xff]
      %v11063 = vld [vmem:[%s11039 + $0xb8] sm:$0xff]
      %v11064 = vld [vmem:[%s11039 + $0xc0] sm:$0xff]
      %v11065 = vld [vmem:[%s11039 + $0xc8] sm:$0xff]
      %v11066 = vld [vmem:[%s11039 + $0xd0] sm:$0xff]
      %v11067 = vld [vmem:[%s11039 + $0xd8] sm:$0xff]
      %v11068 = vld [vmem:[%s11039 + $0xe0] sm:$0xff]
      %v11069 = vld [vmem:[%s11039 + $0xe8] sm:$0xff]
      %v11070 = vld [vmem:[%s11039 + $0xf0] sm:$0xff]
      %v11071 = vld [vmem:[%s11039 + $0xf8] sm:$0xff]
      %v11072 = vld [vmem:[%s11039 + $0x100] sm:$0xff]
      %v11073 = vld [vmem:[%s11039 + $0x108] sm:$0xff]
      %v11074 = vld [vmem:[%s11039 + $0x110] sm:$0xff]
      %v11075 = vld [vmem:[%s11039 + $0x118] sm:$0xff]
      %v11076 = vld [vmem:[%s11039 + $0x120] sm:$0xff]
      %v11077 = vld [vmem:[%s11039 + $0x128] sm:$0xff]
      %v11078 = vld [vmem:[%s11039 + $0x130] sm:$0xff]
      %v11079 = vld [vmem:[%s11039 + $0x138] sm:$0xff]
      %v11080 = vld [vmem:[%s11039 + $0x140] sm:$0xff]
      %v11081 = vld [vmem:[%s11039 + $0x148] sm:$0xff]
      %v11082 = vld [vmem:[%s11039 + $0x150] sm:$0xff]
      %v11083 = vld [vmem:[%s11039 + $0x158] sm:$0xff]
      %v11084 = vld [vmem:[%s11039 + $0x160] sm:$0xff]
      %v11085 = vld [vmem:[%s11039 + $0x168] sm:$0xff]
      %v11086 = vld [vmem:[%s11039 + $0x170] sm:$0xff]
      %v11087 = vld [vmem:[%s11039 + $0x178] sm:$0xff]
      %v11088 = vld [vmem:[%s11039 + $0x180] sm:$0xff]
      %v11089 = vld [vmem:[%s11039 + $0x188] sm:$0xff]
      %v11090 = vld [vmem:[%s11039 + $0x190] sm:$0xff]
      %v11091 = vld [vmem:[%s11039 + $0x198] sm:$0xff]
      %v11092 = vld [vmem:[%s11039 + $0x1a0] sm:$0xff]
      %v11093 = vld [vmem:[%s11039 + $0x1a8] sm:$0xff]
      %v11094 = vld [vmem:[%s11039 + $0x1b0] sm:$0xff]
      %v11095 = vld [vmem:[%s11039 + $0x1b8] sm:$0xff]
      %v11096 = vld [vmem:[%s11039 + $0x1c0] sm:$0xff]
      %v11097 = vld [vmem:[%s11039 + $0x1c8] sm:$0xff]
      %v11098 = vld [vmem:[%s11039 + $0x1d0] sm:$0xff]
      %v11099 = vld [vmem:[%s11039 + $0x1d8] sm:$0xff]
      %v11100 = vld [vmem:[%s11039 + $0x1e0] sm:$0xff]
      %v11101 = vld [vmem:[%s11039 + $0x1e8] sm:$0xff]
      %v11102 = vld [vmem:[%s11039 + $0x1f0] sm:$0xff]
      %v11103 = vld [vmem:[%s11039 + $0x1f8] sm:$0xff]
      %v11104 = vld [vmem:[%s2] sm:$0x3]
      %v11106 = vlaneseq
      %v11107 = vshrl.u32 %v11106, 7
      %v11108 = vsub.s32 0, %v11107
      %v11109 = vrot.slane %v11104, %v11108
      %v11110 = vlaneseq
      %v11111 = vshrl.u32 %v11110, 7
      %v11112 = vsub.s32 1, %v11111
      %v11113 = vrot.slane %v11104, %v11112
      %v11190 = vunpack.c.l.b16 %v10963
      %v11191 = vunpack.c.h.b16 %v10963
      %v11192 = vunpack.c.l.b16 %v10964
      %v11193 = vunpack.c.h.b16 %v10964
      %v11194 = vunpack.c.l.b16 %v10965
      %v11195 = vunpack.c.h.b16 %v10965
      %v11196 = vunpack.c.l.b16 %v10966
      %v11197 = vunpack.c.h.b16 %v10966
      %v11198 = vunpack.c.l.b16 %v10967
      %v11199 = vunpack.c.h.b16 %v10967
      %v11200 = vunpack.c.l.b16 %v10968
      %v11201 = vunpack.c.h.b16 %v10968
      %v11202 = vunpack.c.l.b16 %v10969
      %v11203 = vunpack.c.h.b16 %v10969
      %v11204 = vunpack.c.l.b16 %v10970
      %v11205 = vunpack.c.h.b16 %v10970
      %v11206 = vunpack.c.l.b16 %v10971
      %v11207 = vunpack.c.h.b16 %v10971
      %v11208 = vunpack.c.l.b16 %v10972
      %v11209 = vunpack.c.h.b16 %v10972
      %v11210 = vunpack.c.l.b16 %v10973
      %v11211 = vunpack.c.h.b16 %v10973
      %v11212 = vunpack.c.l.b16 %v10974
      %v11213 = vunpack.c.h.b16 %v10974
      %v11214 = vunpack.c.l.b16 %v10975
      %v11215 = vunpack.c.h.b16 %v10975
      %v11216 = vunpack.c.l.b16 %v10976
      %v11217 = vunpack.c.h.b16 %v10976
      %v11218 = vunpack.c.l.b16 %v10977
      %v11219 = vunpack.c.h.b16 %v10977
      %v11220 = vunpack.c.l.b16 %v10978
      %v11221 = vunpack.c.h.b16 %v10978
      %v11222 = vunpack.c.l.b16 %v10979
      %v11223 = vunpack.c.h.b16 %v10979
      %v11224 = vunpack.c.l.b16 %v10980
      %v11225 = vunpack.c.h.b16 %v10980
      %v11226 = vunpack.c.l.b16 %v10981
      %v11227 = vunpack.c.h.b16 %v10981
      %v11228 = vunpack.c.l.b16 %v10982
      %v11229 = vunpack.c.h.b16 %v10982
      %v11230 = vunpack.c.l.b16 %v10983
      %v11231 = vunpack.c.h.b16 %v10983
      %v11232 = vunpack.c.l.b16 %v10984
      %v11233 = vunpack.c.h.b16 %v10984
      %v11234 = vunpack.c.l.b16 %v10985
      %v11235 = vunpack.c.h.b16 %v10985
      %v11236 = vunpack.c.l.b16 %v10986
      %v11237 = vunpack.c.h.b16 %v10986
      %v11238 = vunpack.c.l.b16 %v10987
      %v11239 = vunpack.c.h.b16 %v10987
      %v11240 = vunpack.c.l.b16 %v10988
      %v11241 = vunpack.c.h.b16 %v10988
      %v11242 = vunpack.c.l.b16 %v10989
      %v11243 = vunpack.c.h.b16 %v10989
      %v11244 = vunpack.c.l.b16 %v10990
      %v11245 = vunpack.c.h.b16 %v10990
      %v11246 = vunpack.c.l.b16 %v10991
      %v11247 = vunpack.c.h.b16 %v10991
      %v11248 = vunpack.c.l.b16 %v10992
      %v11249 = vunpack.c.h.b16 %v10992
      %v11250 = vunpack.c.l.b16 %v10993
      %v11251 = vunpack.c.h.b16 %v10993
      %v11252 = vunpack.c.l.b16 %v10994
      %v11253 = vunpack.c.h.b16 %v10994
      %v11254 = vunpack.c.l.b16 %v10995
      %v11255 = vunpack.c.h.b16 %v10995
      %v11256 = vunpack.c.l.b16 %v10996
      %v11257 = vunpack.c.h.b16 %v10996
      %v11258 = vunpack.c.l.b16 %v10997
      %v11259 = vunpack.c.h.b16 %v10997
      %v11260 = vunpack.c.l.b16 %v10998
      %v11261 = vunpack.c.h.b16 %v10998
      %v11262 = vunpack.c.l.b16 %v10999
      %v11263 = vunpack.c.h.b16 %v10999
      %v11264 = vunpack.c.l.b16 %v11000
      %v11265 = vunpack.c.h.b16 %v11000
      %v11266 = vunpack.c.l.b16 %v11001
      %v11267 = vunpack.c.h.b16 %v11001
      %v11268 = vunpack.c.l.b16 %v11002
      %v11269 = vunpack.c.h.b16 %v11002
      %v11270 = vunpack.c.l.b16 %v11003
      %v11271 = vunpack.c.h.b16 %v11003
      %v11272 = vunpack.c.l.b16 %v11004
      %v11273 = vunpack.c.h.b16 %v11004
      %v11274 = vunpack.c.l.b16 %v11005
      %v11275 = vunpack.c.h.b16 %v11005
      %v11276 = vunpack.c.l.b16 %v11006
      %v11277 = vunpack.c.h.b16 %v11006
      %v11278 = vunpack.c.l.b16 %v11007
      %v11279 = vunpack.c.h.b16 %v11007
      %v11280 = vunpack.c.l.b16 %v11008
      %v11281 = vunpack.c.h.b16 %v11008
      %v11282 = vunpack.c.l.b16 %v11009
      %v11283 = vunpack.c.h.b16 %v11009
      %v11284 = vunpack.c.l.b16 %v11010
      %v11285 = vunpack.c.h.b16 %v11010
      %v11286 = vunpack.c.l.b16 %v11011
      %v11287 = vunpack.c.h.b16 %v11011
      %v11288 = vunpack.c.l.b16 %v11012
      %v11289 = vunpack.c.h.b16 %v11012
      %v11290 = vunpack.c.l.b16 %v11013
      %v11291 = vunpack.c.h.b16 %v11013
      %v11292 = vunpack.c.l.b16 %v11014
      %v11293 = vunpack.c.h.b16 %v11014
      %v11294 = vunpack.c.l.b16 %v11015
      %v11295 = vunpack.c.h.b16 %v11015
      %v11296 = vunpack.c.l.b16 %v11016
      %v11297 = vunpack.c.h.b16 %v11016
      %v11298 = vunpack.c.l.b16 %v11017
      %v11299 = vunpack.c.h.b16 %v11017
      %v11300 = vunpack.c.l.b16 %v11018
      %v11301 = vunpack.c.h.b16 %v11018
      %v11302 = vunpack.c.l.b16 %v11019
      %v11303 = vunpack.c.h.b16 %v11019
      %v11304 = vunpack.c.l.b16 %v11020
      %v11305 = vunpack.c.h.b16 %v11020
      %v11306 = vunpack.c.l.b16 %v11021
      %v11307 = vunpack.c.h.b16 %v11021
      %v11308 = vunpack.c.l.b16 %v11022
      %v11309 = vunpack.c.h.b16 %v11022
      %v11310 = vunpack.c.l.b16 %v11023
      %v11311 = vunpack.c.h.b16 %v11023
      %v11312 = vunpack.c.l.b16 %v11024
      %v11313 = vunpack.c.h.b16 %v11024
      %v11314 = vunpack.c.l.b16 %v11025
      %v11315 = vunpack.c.h.b16 %v11025
      %v11316 = vunpack.c.l.b16 %v11026
      %v11317 = vunpack.c.h.b16 %v11026
      %v11318 = vunpack.c.l.b16 %v11027
      %v11319 = vunpack.c.h.b16 %v11027
      %v11320 = vunpack.c.l.b16 %v11028
      %v11321 = vunpack.c.h.b16 %v11028
      %v11322 = vunpack.c.l.b16 %v11029
      %v11323 = vunpack.c.h.b16 %v11029
      %v11324 = vunpack.c.l.b16 %v11030
      %v11325 = vunpack.c.h.b16 %v11030
      %v11326 = vunpack.c.l.b16 %v11031
      %v11327 = vunpack.c.h.b16 %v11031
      %v11328 = vunpack.c.l.b16 %v11032
      %v11329 = vunpack.c.h.b16 %v11032
      %v11330 = vunpack.c.l.b16 %v11033
      %v11331 = vunpack.c.h.b16 %v11033
      %v11332 = vunpack.c.l.b16 %v11034
      %v11333 = vunpack.c.h.b16 %v11034
      %v11334 = vunpack.c.l.b16 %v11035
      %v11335 = vunpack.c.h.b16 %v11035
      %v11336 = vunpack.c.l.b16 %v11036
      %v11337 = vunpack.c.h.b16 %v11036
      %v11338 = vpack.c.b16 %v11194, %v11190
      %v11339 = vpack.c.b16 %v11195, %v11191
      %v11340 = vpack.c.b16 %v11196, %v11192
      %v11341 = vpack.c.b16 %v11197, %v11193
      %v11342 = vpack.c.b16 %v11202, %v11198
      %v11343 = vpack.c.b16 %v11203, %v11199
      %v11344 = vpack.c.b16 %v11204, %v11200
      %v11345 = vpack.c.b16 %v11205, %v11201
      %v11346 = vpack.c.b16 %v11210, %v11206
      %v11347 = vpack.c.b16 %v11211, %v11207
      %v11348 = vpack.c.b16 %v11212, %v11208
      %v11349 = vpack.c.b16 %v11213, %v11209
      %v11350 = vpack.c.b16 %v11218, %v11214
      %v11351 = vpack.c.b16 %v11219, %v11215
      %v11352 = vpack.c.b16 %v11220, %v11216
      %v11353 = vpack.c.b16 %v11221, %v11217
      %v11354 = vpack.c.b16 %v11226, %v11222
      %v11355 = vpack.c.b16 %v11227, %v11223
      %v11356 = vpack.c.b16 %v11228, %v11224
      %v11357 = vpack.c.b16 %v11229, %v11225
      %v11358 = vpack.c.b16 %v11234, %v11230
      %v11359 = vpack.c.b16 %v11235, %v11231
      %v11360 = vpack.c.b16 %v11236, %v11232
      %v11361 = vpack.c.b16 %v11237, %v11233
      %v11362 = vpack.c.b16 %v11242, %v11238
      %v11363 = vpack.c.b16 %v11243, %v11239
      %v11364 = vpack.c.b16 %v11244, %v11240
      %v11365 = vpack.c.b16 %v11245, %v11241
      %v11366 = vpack.c.b16 %v11250, %v11246
      %v11367 = vpack.c.b16 %v11251, %v11247
      %v11368 = vpack.c.b16 %v11252, %v11248
      %v11369 = vpack.c.b16 %v11253, %v11249
      %v11370 = vpack.c.b16 %v11258, %v11254
      %v11371 = vpack.c.b16 %v11259, %v11255
      %v11372 = vpack.c.b16 %v11260, %v11256
      %v11373 = vpack.c.b16 %v11261, %v11257
      %v11374 = vpack.c.b16 %v11266, %v11262
      %v11375 = vpack.c.b16 %v11267, %v11263
      %v11376 = vpack.c.b16 %v11268, %v11264
      %v11377 = vpack.c.b16 %v11269, %v11265
      %v11378 = vpack.c.b16 %v11274, %v11270
      %v11379 = vpack.c.b16 %v11275, %v11271
      %v11380 = vpack.c.b16 %v11276, %v11272
      %v11381 = vpack.c.b16 %v11277, %v11273
      %v11382 = vpack.c.b16 %v11282, %v11278
      %v11383 = vpack.c.b16 %v11283, %v11279
      %v11384 = vpack.c.b16 %v11284, %v11280
      %v11385 = vpack.c.b16 %v11285, %v11281
      %v11386 = vpack.c.b16 %v11290, %v11286
      %v11387 = vpack.c.b16 %v11291, %v11287
      %v11388 = vpack.c.b16 %v11292, %v11288
      %v11389 = vpack.c.b16 %v11293, %v11289
      %v11390 = vpack.c.b16 %v11298, %v11294
      %v11391 = vpack.c.b16 %v11299, %v11295
      %v11392 = vpack.c.b16 %v11300, %v11296
      %v11393 = vpack.c.b16 %v11301, %v11297
      %v11394 = vpack.c.b16 %v11306, %v11302
      %v11395 = vpack.c.b16 %v11307, %v11303
      %v11396 = vpack.c.b16 %v11308, %v11304
      %v11397 = vpack.c.b16 %v11309, %v11305
      %v11398 = vpack.c.b16 %v11314, %v11310
      %v11399 = vpack.c.b16 %v11315, %v11311
      %v11400 = vpack.c.b16 %v11316, %v11312
      %v11401 = vpack.c.b16 %v11317, %v11313
      %v11402 = vpack.c.b16 %v11322, %v11318
      %v11403 = vpack.c.b16 %v11323, %v11319
      %v11404 = vpack.c.b16 %v11324, %v11320
      %v11405 = vpack.c.b16 %v11325, %v11321
      %v11406 = vpack.c.b16 %v11330, %v11326
      %v11407 = vpack.c.b16 %v11331, %v11327
      %v11408 = vpack.c.b16 %v11332, %v11328
      %v11409 = vpack.c.b16 %v11333, %v11329
      %v11410 = vpack.c.b16 %v11334, %v11334
      %v11411 = vpack.c.b16 %v11335, %v11335
      %v11412 = vpack.c.b16 %v11336, %v11336
      %v11413 = vpack.c.b16 %v11337, %v11337
      %v11554 = vunpack.c.l.b16 %v11040
      %v11555 = vunpack.c.h.b16 %v11040
      %v11556 = vunpack.c.l.b16 %v11041
      %v11557 = vunpack.c.h.b16 %v11041
      %v11558 = vunpack.c.l.b16 %v11042
      %v11559 = vunpack.c.h.b16 %v11042
      %v11560 = vunpack.c.l.b16 %v11043
      %v11561 = vunpack.c.h.b16 %v11043
      %v11562 = vunpack.c.l.b16 %v11044
      %v11563 = vunpack.c.h.b16 %v11044
      %v11564 = vunpack.c.l.b16 %v11045
      %v11565 = vunpack.c.h.b16 %v11045
      %v11566 = vunpack.c.l.b16 %v11046
      %v11567 = vunpack.c.h.b16 %v11046
      %v11568 = vunpack.c.l.b16 %v11047
      %v11569 = vunpack.c.h.b16 %v11047
      %v11570 = vunpack.c.l.b16 %v11048
      %v11571 = vunpack.c.h.b16 %v11048
      %v11572 = vunpack.c.l.b16 %v11049
      %v11573 = vunpack.c.h.b16 %v11049
      %v11574 = vunpack.c.l.b16 %v11050
      %v11575 = vunpack.c.h.b16 %v11050
      %v11576 = vunpack.c.l.b16 %v11051
      %v11577 = vunpack.c.h.b16 %v11051
      %v11578 = vunpack.c.l.b16 %v11052
      %v11579 = vunpack.c.h.b16 %v11052
      %v11580 = vunpack.c.l.b16 %v11053
      %v11581 = vunpack.c.h.b16 %v11053
      %v11582 = vunpack.c.l.b16 %v11054
      %v11583 = vunpack.c.h.b16 %v11054
      %v11584 = vunpack.c.l.b16 %v11055
      %v11585 = vunpack.c.h.b16 %v11055
      %v11586 = vunpack.c.l.b16 %v11056
      %v11587 = vunpack.c.h.b16 %v11056
      %v11588 = vunpack.c.l.b16 %v11057
      %v11589 = vunpack.c.h.b16 %v11057
      %v11590 = vunpack.c.l.b16 %v11058
      %v11591 = vunpack.c.h.b16 %v11058
      %v11592 = vunpack.c.l.b16 %v11059
      %v11593 = vunpack.c.h.b16 %v11059
      %v11594 = vunpack.c.l.b16 %v11060
      %v11595 = vunpack.c.h.b16 %v11060
      %v11596 = vunpack.c.l.b16 %v11061
      %v11597 = vunpack.c.h.b16 %v11061
      %v11598 = vunpack.c.l.b16 %v11062
      %v11599 = vunpack.c.h.b16 %v11062
      %v11600 = vunpack.c.l.b16 %v11063
      %v11601 = vunpack.c.h.b16 %v11063
      %v11602 = vunpack.c.l.b16 %v11064
      %v11603 = vunpack.c.h.b16 %v11064
      %v11604 = vunpack.c.l.b16 %v11065
      %v11605 = vunpack.c.h.b16 %v11065
      %v11606 = vunpack.c.l.b16 %v11066
      %v11607 = vunpack.c.h.b16 %v11066
      %v11608 = vunpack.c.l.b16 %v11067
      %v11609 = vunpack.c.h.b16 %v11067
      %v11610 = vunpack.c.l.b16 %v11068
      %v11611 = vunpack.c.h.b16 %v11068
      %v11612 = vunpack.c.l.b16 %v11069
      %v11613 = vunpack.c.h.b16 %v11069
      %v11614 = vunpack.c.l.b16 %v11070
      %v11615 = vunpack.c.h.b16 %v11070
      %v11616 = vunpack.c.l.b16 %v11071
      %v11617 = vunpack.c.h.b16 %v11071
      %v11618 = vunpack.c.l.b16 %v11072
      %v11619 = vunpack.c.h.b16 %v11072
      %v11620 = vunpack.c.l.b16 %v11073
      %v11621 = vunpack.c.h.b16 %v11073
      %v11622 = vunpack.c.l.b16 %v11074
      %v11623 = vunpack.c.h.b16 %v11074
      %v11624 = vunpack.c.l.b16 %v11075
      %v11625 = vunpack.c.h.b16 %v11075
      %v11626 = vunpack.c.l.b16 %v11076
      %v11627 = vunpack.c.h.b16 %v11076
      %v11628 = vunpack.c.l.b16 %v11077
      %v11629 = vunpack.c.h.b16 %v11077
      %v11630 = vunpack.c.l.b16 %v11078
      %v11631 = vunpack.c.h.b16 %v11078
      %v11632 = vunpack.c.l.b16 %v11079
      %v11633 = vunpack.c.h.b16 %v11079
      %v11634 = vunpack.c.l.b16 %v11080
      %v11635 = vunpack.c.h.b16 %v11080
      %v11636 = vunpack.c.l.b16 %v11081
      %v11637 = vunpack.c.h.b16 %v11081
      %v11638 = vunpack.c.l.b16 %v11082
      %v11639 = vunpack.c.h.b16 %v11082
      %v11640 = vunpack.c.l.b16 %v11083
      %v11641 = vunpack.c.h.b16 %v11083
      %v11642 = vunpack.c.l.b16 %v11084
      %v11643 = vunpack.c.h.b16 %v11084
      %v11644 = vunpack.c.l.b16 %v11085
      %v11645 = vunpack.c.h.b16 %v11085
      %v11646 = vunpack.c.l.b16 %v11086
      %v11647 = vunpack.c.h.b16 %v11086
      %v11648 = vunpack.c.l.b16 %v11087
      %v11649 = vunpack.c.h.b16 %v11087
      %v11650 = vunpack.c.l.b16 %v11088
      %v11651 = vunpack.c.h.b16 %v11088
      %v11652 = vunpack.c.l.b16 %v11089
      %v11653 = vunpack.c.h.b16 %v11089
      %v11654 = vunpack.c.l.b16 %v11090
      %v11655 = vunpack.c.h.b16 %v11090
      %v11656 = vunpack.c.l.b16 %v11091
      %v11657 = vunpack.c.h.b16 %v11091
      %v11658 = vunpack.c.l.b16 %v11092
      %v11659 = vunpack.c.h.b16 %v11092
      %v11660 = vunpack.c.l.b16 %v11093
      %v11661 = vunpack.c.h.b16 %v11093
      %v11662 = vunpack.c.l.b16 %v11094
      %v11663 = vunpack.c.h.b16 %v11094
      %v11664 = vunpack.c.l.b16 %v11095
      %v11665 = vunpack.c.h.b16 %v11095
      %v11666 = vunpack.c.l.b16 %v11096
      %v11667 = vunpack.c.h.b16 %v11096
      %v11668 = vunpack.c.l.b16 %v11097
      %v11669 = vunpack.c.h.b16 %v11097
      %v11670 = vunpack.c.l.b16 %v11098
      %v11671 = vunpack.c.h.b16 %v11098
      %v11672 = vunpack.c.l.b16 %v11099
      %v11673 = vunpack.c.h.b16 %v11099
      %v11674 = vunpack.c.l.b16 %v11100
      %v11675 = vunpack.c.h.b16 %v11100
      %v11676 = vunpack.c.l.b16 %v11101
      %v11677 = vunpack.c.h.b16 %v11101
      %v11678 = vunpack.c.l.b16 %v11102
      %v11679 = vunpack.c.h.b16 %v11102
      %v11680 = vunpack.c.l.b16 %v11103
      %v11681 = vunpack.c.h.b16 %v11103
      %v11682 = vpack.c.b16 %v11556, %v11554
      %v11683 = vpack.c.b16 %v11557, %v11555
      %v11684 = vpack.c.b16 %v11560, %v11558
      %v11685 = vpack.c.b16 %v11561, %v11559
      %v11686 = vpack.c.b16 %v11564, %v11562
      %v11687 = vpack.c.b16 %v11565, %v11563
      %v11688 = vpack.c.b16 %v11568, %v11566
      %v11689 = vpack.c.b16 %v11569, %v11567
      %v11690 = vpack.c.b16 %v11572, %v11570
      %v11691 = vpack.c.b16 %v11573, %v11571
      %v11692 = vpack.c.b16 %v11576, %v11574
      %v11693 = vpack.c.b16 %v11577, %v11575
      %v11694 = vpack.c.b16 %v11580, %v11578
      %v11695 = vpack.c.b16 %v11581, %v11579
      %v11696 = vpack.c.b16 %v11584, %v11582
      %v11697 = vpack.c.b16 %v11585, %v11583
      %v11698 = vpack.c.b16 %v11588, %v11586
      %v11699 = vpack.c.b16 %v11589, %v11587
      %v11700 = vpack.c.b16 %v11592, %v11590
      %v11701 = vpack.c.b16 %v11593, %v11591
      %v11702 = vpack.c.b16 %v11596, %v11594
      %v11703 = vpack.c.b16 %v11597, %v11595
      %v11704 = vpack.c.b16 %v11600, %v11598
      %v11705 = vpack.c.b16 %v11601, %v11599
      %v11706 = vpack.c.b16 %v11604, %v11602
      %v11707 = vpack.c.b16 %v11605, %v11603
      %v11708 = vpack.c.b16 %v11608, %v11606
      %v11709 = vpack.c.b16 %v11609, %v11607
      %v11710 = vpack.c.b16 %v11612, %v11610
      %v11711 = vpack.c.b16 %v11613, %v11611
      %v11712 = vpack.c.b16 %v11616, %v11614
      %v11713 = vpack.c.b16 %v11617, %v11615
      %v11714 = vpack.c.b16 %v11620, %v11618
      %v11715 = vpack.c.b16 %v11621, %v11619
      %v11716 = vpack.c.b16 %v11624, %v11622
      %v11717 = vpack.c.b16 %v11625, %v11623
      %v11718 = vpack.c.b16 %v11628, %v11626
      %v11719 = vpack.c.b16 %v11629, %v11627
      %v11720 = vpack.c.b16 %v11632, %v11630
      %v11721 = vpack.c.b16 %v11633, %v11631
      %v11722 = vpack.c.b16 %v11636, %v11634
      %v11723 = vpack.c.b16 %v11637, %v11635
      %v11724 = vpack.c.b16 %v11640, %v11638
      %v11725 = vpack.c.b16 %v11641, %v11639
      %v11726 = vpack.c.b16 %v11644, %v11642
      %v11727 = vpack.c.b16 %v11645, %v11643
      %v11728 = vpack.c.b16 %v11648, %v11646
      %v11729 = vpack.c.b16 %v11649, %v11647
      %v11730 = vpack.c.b16 %v11652, %v11650
      %v11731 = vpack.c.b16 %v11653, %v11651
      %v11732 = vpack.c.b16 %v11656, %v11654
      %v11733 = vpack.c.b16 %v11657, %v11655
      %v11734 = vpack.c.b16 %v11660, %v11658
      %v11735 = vpack.c.b16 %v11661, %v11659
      %v11736 = vpack.c.b16 %v11664, %v11662
      %v11737 = vpack.c.b16 %v11665, %v11663
      %v11738 = vpack.c.b16 %v11668, %v11666
      %v11739 = vpack.c.b16 %v11669, %v11667
      %v11740 = vpack.c.b16 %v11672, %v11670
      %v11741 = vpack.c.b16 %v11673, %v11671
      %v11742 = vpack.c.b16 %v11676, %v11674
      %v11743 = vpack.c.b16 %v11677, %v11675
      %v11744 = vpack.c.b16 %v11680, %v11678
      %v11745 = vpack.c.b16 %v11681, %v11679
      %11810 = vmatprep.subr.bf16.mxu0 %v11683
      %11811 = vmatpush1.bf16.msra.mxu0 %v11682
      %11812 = vmatprep.subr.bf16.mxu0 %v11685
      %11813 = vmatpush1.bf16.msra.mxu0 %v11684
      %11814 = vmatprep.subr.bf16.mxu0 %v11687
      %11815 = vmatpush1.bf16.msra.mxu0 %v11686
      %11816 = vmatprep.subr.bf16.mxu0 %v11689
      %11817 = vmatpush1.bf16.msra.mxu0 %v11688
      %11818 = vmatprep.subr.bf16.mxu0 %v11691
      %11819 = vmatpush1.bf16.msra.mxu0 %v11690
      %11820 = vmatprep.subr.bf16.mxu0 %v11693
      %11821 = vmatpush1.bf16.msra.mxu0 %v11692
      %11822 = vmatprep.subr.bf16.mxu0 %v11695
      %11823 = vmatpush1.bf16.msra.mxu0 %v11694
      %11824 = vmatprep.subr.bf16.mxu0 %v11697
      %11825 = vmatpush1.bf16.msra.mxu0 %v11696
      %11826 = vmatprep.subr.bf16.mxu0 %v11699
      %11827 = vmatpush1.bf16.msra.mxu0 %v11698
      %11828 = vmatprep.subr.bf16.mxu0 %v11701
      %11829 = vmatpush1.bf16.msra.mxu0 %v11700
      %11830 = vmatprep.subr.bf16.mxu0 %v11703
      %11831 = vmatpush1.bf16.msra.mxu0 %v11702
      %11832 = vmatprep.subr.bf16.mxu0 %v11705
      %11833 = vmatpush1.bf16.msra.mxu0 %v11704
      %11834 = vmatprep.subr.bf16.mxu0 %v11707
      %11835 = vmatpush1.bf16.msra.mxu0 %v11706
      %11836 = vmatprep.subr.bf16.mxu0 %v11709
      %11837 = vmatpush1.bf16.msra.mxu0 %v11708
      %11838 = vmatprep.subr.bf16.mxu0 %v11711
      %11839 = vmatpush1.bf16.msra.mxu0 %v11710
      %11840 = vmatprep.subr.bf16.mxu0 %v11713
      %11841 = vmatpush1.bf16.msra.mxu0 %v11712
      %11842 = vmatprep.mubr.bf16.mxu0 %v11339
      %11843 = vmatmul.mubr.bf16.gmra.mrb[0].mxu0 %v11338
      %v11844 = vpop.f32.mrb[0].mxu0
      %v11845 = vadd.f32 %v11109, %v11844
      %v11846 = vpop.f32.mrb[0].mxu0
      %v11847 = vadd.f32 %v11113, %v11846
      %v11848 = vpop.f32.mrb[0].mxu0
      %v11849 = vadd.f32 %v11109, %v11848
      %v11850 = vpop.f32.mrb[0].mxu0
      %v11851 = vadd.f32 %v11113, %v11850
      %11852 = vmatprep.mubr.bf16.mxu0 %v11343
      %11853 = vmatmul.mubr.bf16.gmra.mrb[0].mxu0 %v11342
      %v11854 = vpop.f32.mrb[0].mxu0
      %v11855 = vadd.f32 %v11109, %v11854
      %v11856 = vpop.f32.mrb[0].mxu0
      %v11857 = vadd.f32 %v11113, %v11856
      %v11858 = vpop.f32.mrb[0].mxu0
      %v11859 = vadd.f32 %v11109, %v11858
      %v11860 = vpop.f32.mrb[0].mxu0
      %v11861 = vadd.f32 %v11113, %v11860
      %11862 = vmatprep.mubr.bf16.mxu0 %v11347
      %11863 = vmatmul.mubr.bf16.gmra.mrb[0].mxu0 %v11346
      %v11864 = vpop.f32.mrb[0].mxu0
      %v11865 = vadd.f32 %v11109, %v11864
      %v11866 = vpop.f32.mrb[0].mxu0
      %v11867 = vadd.f32 %v11113, %v11866
      %v11868 = vpop.f32.mrb[0].mxu0
      %v11869 = vadd.f32 %v11109, %v11868
      %v11870 = vpop.f32.mrb[0].mxu0
      %v11871 = vadd.f32 %v11113, %v11870
      %11872 = vmatprep.mubr.bf16.mxu0 %v11351
      %11873 = vmatmul.mubr.bf16.gmra.mrb[0].mxu0 %v11350
      %v11874 = vpop.f32.mrb[0].mxu0
      %v11875 = vadd.f32 %v11109, %v11874
      %v11876 = vpop.f32.mrb[0].mxu0
      %v11877 = vadd.f32 %v11113, %v11876
      %v11878 = vpop.f32.mrb[0].mxu0
      %v11879 = vadd.f32 %v11109, %v11878
      %v11880 = vpop.f32.mrb[0].mxu0
      %v11881 = vadd.f32 %v11113, %v11880
      %11882 = vmatprep.mubr.bf16.mxu0 %v11355
      %11883 = vmatmul.mubr.bf16.gmra.mrb[0].mxu0 %v11354
      %v11884 = vpop.f32.mrb[0].mxu0
      %v11885 = vadd.f32 %v11109, %v11884
      %v11886 = vpop.f32.mrb[0].mxu0
      %v11887 = vadd.f32 %v11113, %v11886
      %v11888 = vpop.f32.mrb[0].mxu0
      %v11889 = vadd.f32 %v11109, %v11888
      %v11890 = vpop.f32.mrb[0].mxu0
      %v11891 = vadd.f32 %v11113, %v11890
      %11892 = vmatprep.mubr.bf16.mxu0 %v11359
      %11893 = vmatmul.mubr.bf16.gmra.mrb[0].mxu0 %v11358
      %v11894 = vpop.f32.mrb[0].mxu0
      %v11895 = vadd.f32 %v11109, %v11894
      %v11896 = vpop.f32.mrb[0].mxu0
      %v11897 = vadd.f32 %v11113, %v11896
      %v11898 = vpop.f32.mrb[0].mxu0
      %v11899 = vadd.f32 %v11109, %v11898
      %v11900 = vpop.f32.mrb[0].mxu0
      %v11901 = vadd.f32 %v11113, %v11900
      %11902 = vmatprep.mubr.bf16.mxu0 %v11363
      %11903 = vmatmul.mubr.bf16.gmra.mrb[0].mxu0 %v11362
      %v11904 = vpop.f32.mrb[0].mxu0
      %v11905 = vadd.f32 %v11109, %v11904
      %v11906 = vpop.f32.mrb[0].mxu0
      %v11907 = vadd.f32 %v11113, %v11906
      %v11908 = vpop.f32.mrb[0].mxu0
      %v11909 = vadd.f32 %v11109, %v11908
      %v11910 = vpop.f32.mrb[0].mxu0
      %v11911 = vadd.f32 %v11113, %v11910
      %11912 = vmatprep.mubr.bf16.mxu0 %v11367
      %11913 = vmatmul.mubr.bf16.gmra.mrb[0].mxu0 %v11366
      %v11914 = vpop.f32.mrb[0].mxu0
      %v11915 = vadd.f32 %v11109, %v11914
      %v11916 = vpop.f32.mrb[0].mxu0
      %v11917 = vadd.f32 %v11113, %v11916
      %v11918 = vpop.f32.mrb[0].mxu0
      %v11919 = vadd.f32 %v11109, %v11918
      %v11920 = vpop.f32.mrb[0].mxu0
      %v11921 = vadd.f32 %v11113, %v11920
      %11922 = vmatprep.mubr.bf16.mxu0 %v11371
      %11923 = vmatmul.mubr.bf16.gmra.mrb[0].mxu0 %v11370
      %v11924 = vpop.f32.mrb[0].mxu0
      %v11925 = vadd.f32 %v11109, %v11924
      %v11926 = vpop.f32.mrb[0].mxu0
      %v11927 = vadd.f32 %v11113, %v11926
      %v11928 = vpop.f32.mrb[0].mxu0
      %v11929 = vadd.f32 %v11109, %v11928
      %v11930 = vpop.f32.mrb[0].mxu0
      %v11931 = vadd.f32 %v11113, %v11930
      %11932 = vmatprep.mubr.bf16.mxu0 %v11375
      %11933 = vmatmul.mubr.bf16.gmra.mrb[0].mxu0 %v11374
      %v11934 = vpop.f32.mrb[0].mxu0
      %v11935 = vadd.f32 %v11109, %v11934
      %v11936 = vpop.f32.mrb[0].mxu0
      %v11937 = vadd.f32 %v11113, %v11936
      %v11938 = vpop.f32.mrb[0].mxu0
      %v11939 = vadd.f32 %v11109, %v11938
      %v11940 = vpop.f32.mrb[0].mxu0
      %v11941 = vadd.f32 %v11113, %v11940
      %11942 = vmatprep.mubr.bf16.mxu0 %v11379
      %11943 = vmatmul.mubr.bf16.gmra.mrb[0].mxu0 %v11378
      %v11944 = vpop.f32.mrb[0].mxu0
      %v11945 = vadd.f32 %v11109, %v11944
      %v11946 = vpop.f32.mrb[0].mxu0
      %v11947 = vadd.f32 %v11113, %v11946
      %v11948 = vpop.f32.mrb[0].mxu0
      %v11949 = vadd.f32 %v11109, %v11948
      %v11950 = vpop.f32.mrb[0].mxu0
      %v11951 = vadd.f32 %v11113, %v11950
      %11952 = vmatprep.mubr.bf16.mxu0 %v11383
      %11953 = vmatmul.mubr.bf16.gmra.mrb[0].mxu0 %v11382
      %v11954 = vpop.f32.mrb[0].mxu0
      %v11955 = vadd.f32 %v11109, %v11954
      %v11956 = vpop.f32.mrb[0].mxu0
      %v11957 = vadd.f32 %v11113, %v11956
      %v11958 = vpop.f32.mrb[0].mxu0
      %v11959 = vadd.f32 %v11109, %v11958
      %v11960 = vpop.f32.mrb[0].mxu0
      %v11961 = vadd.f32 %v11113, %v11960
      %11962 = vmatprep.mubr.bf16.mxu0 %v11387
      %11963 = vmatmul.mubr.bf16.gmra.mrb[0].mxu0 %v11386
      %v11964 = vpop.f32.mrb[0].mxu0
      %v11965 = vadd.f32 %v11109, %v11964
      %v11966 = vpop.f32.mrb[0].mxu0
      %v11967 = vadd.f32 %v11113, %v11966
      %v11968 = vpop.f32.mrb[0].mxu0
      %v11969 = vadd.f32 %v11109, %v11968
      %v11970 = vpop.f32.mrb[0].mxu0
      %v11971 = vadd.f32 %v11113, %v11970
      %11972 = vmatprep.mubr.bf16.mxu0 %v11391
      %11973 = vmatmul.mubr.bf16.gmra.mrb[0].mxu0 %v11390
      %v11974 = vpop.f32.mrb[0].mxu0
      %v11975 = vadd.f32 %v11109, %v11974
      %v11976 = vpop.f32.mrb[0].mxu0
      %v11977 = vadd.f32 %v11113, %v11976
      %v11978 = vpop.f32.mrb[0].mxu0
      %v11979 = vadd.f32 %v11109, %v11978
      %v11980 = vpop.f32.mrb[0].mxu0
      %v11981 = vadd.f32 %v11113, %v11980
      %11982 = vmatprep.mubr.bf16.mxu0 %v11395
      %11983 = vmatmul.mubr.bf16.gmra.mrb[0].mxu0 %v11394
      %v11984 = vpop.f32.mrb[0].mxu0
      %v11985 = vadd.f32 %v11109, %v11984
      %v11986 = vpop.f32.mrb[0].mxu0
      %v11987 = vadd.f32 %v11113, %v11986
      %v11988 = vpop.f32.mrb[0].mxu0
      %v11989 = vadd.f32 %v11109, %v11988
      %v11990 = vpop.f32.mrb[0].mxu0
      %v11991 = vadd.f32 %v11113, %v11990
      %11992 = vmatprep.mubr.bf16.mxu0 %v11399
      %11993 = vmatmul.mubr.bf16.gmra.mrb[0].mxu0 %v11398
      %v11994 = vpop.f32.mrb[0].mxu0
      %v11995 = vadd.f32 %v11109, %v11994
      %v11996 = vpop.f32.mrb[0].mxu0
      %v11997 = vadd.f32 %v11113, %v11996
      %v11998 = vpop.f32.mrb[0].mxu0
      %v11999 = vadd.f32 %v11109, %v11998
      %v12000 = vpop.f32.mrb[0].mxu0
      %v12001 = vadd.f32 %v11113, %v12000
      %12002 = vmatprep.mubr.bf16.mxu0 %v11403
      %12003 = vmatmul.mubr.bf16.gmra.mrb[0].mxu0 %v11402
      %v12004 = vpop.f32.mrb[0].mxu0
      %v12005 = vadd.f32 %v11109, %v12004
      %v12006 = vpop.f32.mrb[0].mxu0
      %v12007 = vadd.f32 %v11113, %v12006
      %v12008 = vpop.f32.mrb[0].mxu0
      %v12009 = vadd.f32 %v11109, %v12008
      %v12010 = vpop.f32.mrb[0].mxu0
      %v12011 = vadd.f32 %v11113, %v12010
      %12012 = vmatprep.mubr.bf16.mxu0 %v11407
      %12013 = vmatmul.mubr.bf16.gmra.mrb[0].mxu0 %v11406
      %v12014 = vpop.f32.mrb[0].mxu0
      %v12015 = vadd.f32 %v11109, %v12014
      %v12016 = vpop.f32.mrb[0].mxu0
      %v12017 = vadd.f32 %v11113, %v12016
      %v12018 = vpop.f32.mrb[0].mxu0
      %v12019 = vadd.f32 %v11109, %v12018
      %v12020 = vpop.f32.mrb[0].mxu0
      %v12021 = vadd.f32 %v11113, %v12020
      %12022 = vmatprep.mubr.bf16.mxu0 %v11411
      %12023 = vmatmul.mubr.bf16.gmra.mrb[0].mxu0 %v11410
      %v12024 = vpop.f32.mrb[0].mxu0
      %v12025 = vadd.f32 %v11109, %v12024
      %v12026 = vpop.f32.mrb[0].mxu0
      %v12027 = vadd.f32 %v11113, %v12026
      %v12028 = vpop.f32.mrb[0].mxu0
      %v12029 = vpop.f32.mrb[0].mxu0
      %12030 = vdwg.mxu0
      %12031 = vmatprep.subr.bf16.mxu0 %v11715
      %12032 = vmatpush1.bf16.msra.mxu0 %v11714
      %12033 = vmatprep.subr.bf16.mxu0 %v11717
      %12034 = vmatpush1.bf16.msra.mxu0 %v11716
      %12035 = vmatprep.subr.bf16.mxu0 %v11719
      %12036 = vmatpush1.bf16.msra.mxu0 %v11718
      %12037 = vmatprep.subr.bf16.mxu0 %v11721
      %12038 = vmatpush1.bf16.msra.mxu0 %v11720
      %12039 = vmatprep.subr.bf16.mxu0 %v11723
      %12040 = vmatpush1.bf16.msra.mxu0 %v11722
      %12041 = vmatprep.subr.bf16.mxu0 %v11725
      %12042 = vmatpush1.bf16.msra.mxu0 %v11724
      %12043 = vmatprep.subr.bf16.mxu0 %v11727
      %12044 = vmatpush1.bf16.msra.mxu0 %v11726
      %12045 = vmatprep.subr.bf16.mxu0 %v11729
      %12046 = vmatpush1.bf16.msra.mxu0 %v11728
      %12047 = vmatprep.subr.bf16.mxu0 %v11731
      %12048 = vmatpush1.bf16.msra.mxu0 %v11730
      %12049 = vmatprep.subr.bf16.mxu0 %v11733
      %12050 = vmatpush1.bf16.msra.mxu0 %v11732
      %12051 = vmatprep.subr.bf16.mxu0 %v11735
      %12052 = vmatpush1.bf16.msra.mxu0 %v11734
      %12053 = vmatprep.subr.bf16.mxu0 %v11737
      %12054 = vmatpush1.bf16.msra.mxu0 %v11736
      %12055 = vmatprep.subr.bf16.mxu0 %v11739
      %12056 = vmatpush1.bf16.msra.mxu0 %v11738
      %12057 = vmatprep.subr.bf16.mxu0 %v11741
      %12058 = vmatpush1.bf16.msra.mxu0 %v11740
      %12059 = vmatprep.subr.bf16.mxu0 %v11743
      %12060 = vmatpush1.bf16.msra.mxu0 %v11742
      %12061 = vmatprep.subr.bf16.mxu0 %v11745
      %12062 = vmatpush1.bf16.msra.mxu0 %v11744
      %12063 = vmatprep.mubr.bf16.mxu0 %v11341
      %12064 = vmatmul.mubr.bf16.gmra.mrb[0].mxu0 %v11340
      %v12065 = vpop.f32.mrb[0].mxu0
      %v12066 = vadd.f32 %v11845, %v12065
      %v12067 = vpop.f32.mrb[0].mxu0
      %v12068 = vadd.f32 %v11847, %v12067
      %v12069 = vpop.f32.mrb[0].mxu0
      %v12070 = vadd.f32 %v11849, %v12069
      %v12071 = vpop.f32.mrb[0].mxu0
      %v12072 = vadd.f32 %v11851, %v12071
      %12073 = vmatprep.mubr.bf16.mxu0 %v11345
      %12074 = vmatmul.mubr.bf16.gmra.mrb[0].mxu0 %v11344
      %v12075 = vpop.f32.mrb[0].mxu0
      %v12076 = vadd.f32 %v11855, %v12075
      %v12077 = vpop.f32.mrb[0].mxu0
      %v12078 = vadd.f32 %v11857, %v12077
      %v12079 = vpop.f32.mrb[0].mxu0
      %v12080 = vadd.f32 %v11859, %v12079
      %v12081 = vpop.f32.mrb[0].mxu0
      %v12082 = vadd.f32 %v11861, %v12081
      %12083 = vmatprep.mubr.bf16.mxu0 %v11349
      %12084 = vmatmul.mubr.bf16.gmra.mrb[0].mxu0 %v11348
      %v12085 = vpop.f32.mrb[0].mxu0
      %v12086 = vadd.f32 %v11865, %v12085
      %v12087 = vpop.f32.mrb[0].mxu0
      %v12088 = vadd.f32 %v11867, %v12087
      %v12089 = vpop.f32.mrb[0].mxu0
      %v12090 = vadd.f32 %v11869, %v12089
      %v12091 = vpop.f32.mrb[0].mxu0
      %v12092 = vadd.f32 %v11871, %v12091
      %12093 = vmatprep.mubr.bf16.mxu0 %v11353
      %12094 = vmatmul.mubr.bf16.gmra.mrb[0].mxu0 %v11352
      %v12095 = vpop.f32.mrb[0].mxu0
      %v12096 = vadd.f32 %v11875, %v12095
      %v12097 = vpop.f32.mrb[0].mxu0
      %v12098 = vadd.f32 %v11877, %v12097
      %v12099 = vpop.f32.mrb[0].mxu0
      %v12100 = vadd.f32 %v11879, %v12099
      %v12101 = vpop.f32.mrb[0].mxu0
      %v12102 = vadd.f32 %v11881, %v12101
      %12103 = vmatprep.mubr.bf16.mxu0 %v11357
      %12104 = vmatmul.mubr.bf16.gmra.mrb[0].mxu0 %v11356
      %v12105 = vpop.f32.mrb[0].mxu0
      %v12106 = vadd.f32 %v11885, %v12105
      %v12107 = vpop.f32.mrb[0].mxu0
      %v12108 = vadd.f32 %v11887, %v12107
      %v12109 = vpop.f32.mrb[0].mxu0
      %v12110 = vadd.f32 %v11889, %v12109
      %v12111 = vpop.f32.mrb[0].mxu0
      %v12112 = vadd.f32 %v11891, %v12111
      %12113 = vmatprep.mubr.bf16.mxu0 %v11361
      %12114 = vmatmul.mubr.bf16.gmra.mrb[0].mxu0 %v11360
      %v12115 = vpop.f32.mrb[0].mxu0
      %v12116 = vadd.f32 %v11895, %v12115
      %v12117 = vpop.f32.mrb[0].mxu0
      %v12118 = vadd.f32 %v11897, %v12117
      %v12119 = vpop.f32.mrb[0].mxu0
      %v12120 = vadd.f32 %v11899, %v12119
      %v12121 = vpop.f32.mrb[0].mxu0
      %v12122 = vadd.f32 %v11901, %v12121
      %12123 = vmatprep.mubr.bf16.mxu0 %v11365
      %12124 = vmatmul.mubr.bf16.gmra.mrb[0].mxu0 %v11364
      %v12125 = vpop.f32.mrb[0].mxu0
      %v12126 = vadd.f32 %v11905, %v12125
      %v12127 = vpop.f32.mrb[0].mxu0
      %v12128 = vadd.f32 %v11907, %v12127
      %v12129 = vpop.f32.mrb[0].mxu0
      %v12130 = vadd.f32 %v11909, %v12129
      %v12131 = vpop.f32.mrb[0].mxu0
      %v12132 = vadd.f32 %v11911, %v12131
      %12133 = vmatprep.mubr.bf16.mxu0 %v11369
      %12134 = vmatmul.mubr.bf16.gmra.mrb[0].mxu0 %v11368
      %v12135 = vpop.f32.mrb[0].mxu0
      %v12136 = vadd.f32 %v11915, %v12135
      %v12137 = vpop.f32.mrb[0].mxu0
      %v12138 = vadd.f32 %v11917, %v12137
      %v12139 = vpop.f32.mrb[0].mxu0
      %v12140 = vadd.f32 %v11919, %v12139
      %v12141 = vpop.f32.mrb[0].mxu0
      %v12142 = vadd.f32 %v11921, %v12141
      %12143 = vmatprep.mubr.bf16.mxu0 %v11373
      %12144 = vmatmul.mubr.bf16.gmra.mrb[0].mxu0 %v11372
      %v12145 = vpop.f32.mrb[0].mxu0
      %v12146 = vadd.f32 %v11925, %v12145
      %v12147 = vpop.f32.mrb[0].mxu0
      %v12148 = vadd.f32 %v11927, %v12147
      %v12149 = vpop.f32.mrb[0].mxu0
      %v12150 = vadd.f32 %v11929, %v12149
      %v12151 = vpop.f32.mrb[0].mxu0
      %v12152 = vadd.f32 %v11931, %v12151
      %12153 = vmatprep.mubr.bf16.mxu0 %v11377
      %12154 = vmatmul.mubr.bf16.gmra.mrb[0].mxu0 %v11376
      %v12155 = vpop.f32.mrb[0].mxu0
      %v12156 = vadd.f32 %v11935, %v12155
      %v12157 = vpop.f32.mrb[0].mxu0
      %v12158 = vadd.f32 %v11937, %v12157
      %v12159 = vpop.f32.mrb[0].mxu0
      %v12160 = vadd.f32 %v11939, %v12159
      %v12161 = vpop.f32.mrb[0].mxu0
      %v12162 = vadd.f32 %v11941, %v12161
      %12163 = vmatprep.mubr.bf16.mxu0 %v11381
      %12164 = vmatmul.mubr.bf16.gmra.mrb[0].mxu0 %v11380
      %v12165 = vpop.f32.mrb[0].mxu0
      %v12166 = vadd.f32 %v11945, %v12165
      %v12167 = vpop.f32.mrb[0].mxu0
      %v12168 = vadd.f32 %v11947, %v12167
      %v12169 = vpop.f32.mrb[0].mxu0
      %v12170 = vadd.f32 %v11949, %v12169
      %v12171 = vpop.f32.mrb[0].mxu0
      %v12172 = vadd.f32 %v11951, %v12171
      %12173 = vmatprep.mubr.bf16.mxu0 %v11385
      %12174 = vmatmul.mubr.bf16.gmra.mrb[0].mxu0 %v11384
      %v12175 = vpop.f32.mrb[0].mxu0
      %v12176 = vadd.f32 %v11955, %v12175
      %v12177 = vpop.f32.mrb[0].mxu0
      %v12178 = vadd.f32 %v11957, %v12177
      %v12179 = vpop.f32.mrb[0].mxu0
      %v12180 = vadd.f32 %v11959, %v12179
      %v12181 = vpop.f32.mrb[0].mxu0
      %v12182 = vadd.f32 %v11961, %v12181
      %12183 = vmatprep.mubr.bf16.mxu0 %v11389
      %12184 = vmatmul.mubr.bf16.gmra.mrb[0].mxu0 %v11388
      %v12185 = vpop.f32.mrb[0].mxu0
      %v12186 = vadd.f32 %v11965, %v12185
      %v12187 = vpop.f32.mrb[0].mxu0
      %v12188 = vadd.f32 %v11967, %v12187
      %v12189 = vpop.f32.mrb[0].mxu0
      %v12190 = vadd.f32 %v11969, %v12189
      %v12191 = vpop.f32.mrb[0].mxu0
      %v12192 = vadd.f32 %v11971, %v12191
      %12193 = vmatprep.mubr.bf16.mxu0 %v11393
      %12194 = vmatmul.mubr.bf16.gmra.mrb[0].mxu0 %v11392
      %v12195 = vpop.f32.mrb[0].mxu0
      %v12196 = vadd.f32 %v11975, %v12195
      %v12197 = vpop.f32.mrb[0].mxu0
      %v12198 = vadd.f32 %v11977, %v12197
      %v12199 = vpop.f32.mrb[0].mxu0
      %v12200 = vadd.f32 %v11979, %v12199
      %v12201 = vpop.f32.mrb[0].mxu0
      %v12202 = vadd.f32 %v11981, %v12201
      %12203 = vmatprep.mubr.bf16.mxu0 %v11397
      %12204 = vmatmul.mubr.bf16.gmra.mrb[0].mxu0 %v11396
      %v12205 = vpop.f32.mrb[0].mxu0
      %v12206 = vadd.f32 %v11985, %v12205
      %v12207 = vpop.f32.mrb[0].mxu0
      %v12208 = vadd.f32 %v11987, %v12207
      %v12209 = vpop.f32.mrb[0].mxu0
      %v12210 = vadd.f32 %v11989, %v12209
      %v12211 = vpop.f32.mrb[0].mxu0
      %v12212 = vadd.f32 %v11991, %v12211
      %12213 = vmatprep.mubr.bf16.mxu0 %v11401
      %12214 = vmatmul.mubr.bf16.gmra.mrb[0].mxu0 %v11400
      %v12215 = vpop.f32.mrb[0].mxu0
      %v12216 = vadd.f32 %v11995, %v12215
      %v12217 = vpop.f32.mrb[0].mxu0
      %v12218 = vadd.f32 %v11997, %v12217
      %v12219 = vpop.f32.mrb[0].mxu0
      %v12220 = vadd.f32 %v11999, %v12219
      %v12221 = vpop.f32.mrb[0].mxu0
      %v12222 = vadd.f32 %v12001, %v12221
      %12223 = vmatprep.mubr.bf16.mxu0 %v11405
      %12224 = vmatmul.mubr.bf16.gmra.mrb[0].mxu0 %v11404
      %v12225 = vpop.f32.mrb[0].mxu0
      %v12226 = vadd.f32 %v12005, %v12225
      %v12227 = vpop.f32.mrb[0].mxu0
      %v12228 = vadd.f32 %v12007, %v12227
      %v12229 = vpop.f32.mrb[0].mxu0
      %v12230 = vadd.f32 %v12009, %v12229
      %v12231 = vpop.f32.mrb[0].mxu0
      %v12232 = vadd.f32 %v12011, %v12231
      %12233 = vmatprep.mubr.bf16.mxu0 %v11409
      %12234 = vmatmul.mubr.bf16.gmra.mrb[0].mxu0 %v11408
      %v12235 = vpop.f32.mrb[0].mxu0
      %v12236 = vadd.f32 %v12015, %v12235
      %v12237 = vpop.f32.mrb[0].mxu0
      %v12238 = vadd.f32 %v12017, %v12237
      %v12239 = vpop.f32.mrb[0].mxu0
      %v12240 = vadd.f32 %v12019, %v12239
      %v12241 = vpop.f32.mrb[0].mxu0
      %v12242 = vadd.f32 %v12021, %v12241
      %12243 = vmatprep.mubr.bf16.mxu0 %v11413
      %12244 = vmatmul.mubr.bf16.gmra.mrb[0].mxu0 %v11412
      %v12245 = vpop.f32.mrb[0].mxu0
      %v12246 = vadd.f32 %v12025, %v12245
      %v12247 = vpop.f32.mrb[0].mxu0
      %v12248 = vadd.f32 %v12027, %v12247
      %v12249 = vpop.f32.mrb[0].mxu0
      %v12250 = vpop.f32.mrb[0].mxu0
      %12251 = vdwg.mxu0
      %12252 = vst [vmem:[%s190] sm:$0xff] %v12066
      %12253 = vst [vmem:[%s190 + $0x8] sm:$0xff] %v12068
      %12254 = vst [vmem:[%s190 + $0x10] sm:$0xff] %v12070
      %12255 = vst [vmem:[%s190 + $0x18] sm:$0xff] %v12072
      %12256 = vst [vmem:[%s190 + $0x20] sm:$0xff] %v12076
      %12257 = vst [vmem:[%s190 + $0x28] sm:$0xff] %v12078
      %12258 = vst [vmem:[%s190 + $0x30] sm:$0xff] %v12080
      %12259 = vst [vmem:[%s190 + $0x38] sm:$0xff] %v12082
      %12260 = vst [vmem:[%s190 + $0x40] sm:$0xff] %v12086
      %12261 = vst [vmem:[%s190 + $0x48] sm:$0xff] %v12088
      %12262 = vst [vmem:[%s190 + $0x50] sm:$0xff] %v12090
      %12263 = vst [vmem:[%s190 + $0x58] sm:$0xff] %v12092
      %12264 = vst [vmem:[%s190 + $0x60] sm:$0xff] %v12096
      %12265 = vst [vmem:[%s190 + $0x68] sm:$0xff] %v12098
      %12266 = vst [vmem:[%s190 + $0x70] sm:$0xff] %v12100
      %12267 = vst [vmem:[%s190 + $0x78] sm:$0xff] %v12102
      %12268 = vst [vmem:[%s190 + $0x80] sm:$0xff] %v12106
      %12269 = vst [vmem:[%s190 + $0x88] sm:$0xff] %v12108
      %12270 = vst [vmem:[%s190 + $0x90] sm:$0xff] %v12110
      %12271 = vst [vmem:[%s190 + $0x98] sm:$0xff] %v12112
      %12272 = vst [vmem:[%s190 + $0xa0] sm:$0xff] %v12116
      %12273 = vst [vmem:[%s190 + $0xa8] sm:$0xff] %v12118
      %12274 = vst [vmem:[%s190 + $0xb0] sm:$0xff] %v12120
      %12275 = vst [vmem:[%s190 + $0xb8] sm:$0xff] %v12122
      %12276 = vst [vmem:[%s190 + $0xc0] sm:$0xff] %v12126
      %12277 = vst [vmem:[%s190 + $0xc8] sm:$0xff] %v12128
      %12278 = vst [vmem:[%s190 + $0xd0] sm:$0xff] %v12130
      %12279 = vst [vmem:[%s190 + $0xd8] sm:$0xff] %v12132
      %12280 = vst [vmem:[%s190 + $0xe0] sm:$0xff] %v12136
      %12281 = vst [vmem:[%s190 + $0xe8] sm:$0xff] %v12138
      %12282 = vst [vmem:[%s190 + $0xf0] sm:$0xff] %v12140
      %12283 = vst [vmem:[%s190 + $0xf8] sm:$0xff] %v12142
      %12284 = vst [vmem:[%s190 + $0x100] sm:$0xff] %v12146
      %12285 = vst [vmem:[%s190 + $0x108] sm:$0xff] %v12148
      %12286 = vst [vmem:[%s190 + $0x110] sm:$0xff] %v12150
      %12287 = vst [vmem:[%s190 + $0x118] sm:$0xff] %v12152
      %12288 = vst [vmem:[%s190 + $0x120] sm:$0xff] %v12156
      %12289 = vst [vmem:[%s190 + $0x128] sm:$0xff] %v12158
      %12290 = vst [vmem:[%s190 + $0x130] sm:$0xff] %v12160
      %12291 = vst [vmem:[%s190 + $0x138] sm:$0xff] %v12162
      %12292 = vst [vmem:[%s190 + $0x140] sm:$0xff] %v12166
      %12293 = vst [vmem:[%s190 + $0x148] sm:$0xff] %v12168
      %12294 = vst [vmem:[%s190 + $0x150] sm:$0xff] %v12170
      %12295 = vst [vmem:[%s190 + $0x158] sm:$0xff] %v12172
      %12296 = vst [vmem:[%s190 + $0x160] sm:$0xff] %v12176
      %12297 = vst [vmem:[%s190 + $0x168] sm:$0xff] %v12178
      %12298 = vst [vmem:[%s190 + $0x170] sm:$0xff] %v12180
      %12299 = vst [vmem:[%s190 + $0x178] sm:$0xff] %v12182
      %12300 = vst [vmem:[%s190 + $0x180] sm:$0xff] %v12186
      %12301 = vst [vmem:[%s190 + $0x188] sm:$0xff] %v12188
      %12302 = vst [vmem:[%s190 + $0x190] sm:$0xff] %v12190
      %12303 = vst [vmem:[%s190 + $0x198] sm:$0xff] %v12192
      %12304 = vst [vmem:[%s190 + $0x1a0] sm:$0xff] %v12196
      %12305 = vst [vmem:[%s190 + $0x1a8] sm:$0xff] %v12198
      %12306 = vst [vmem:[%s190 + $0x1b0] sm:$0xff] %v12200
      %12307 = vst [vmem:[%s190 + $0x1b8] sm:$0xff] %v12202
      %12308 = vst [vmem:[%s190 + $0x1c0] sm:$0xff] %v12206
      %12309 = vst [vmem:[%s190 + $0x1c8] sm:$0xff] %v12208
      %12310 = vst [vmem:[%s190 + $0x1d0] sm:$0xff] %v12210
      %12311 = vst [vmem:[%s190 + $0x1d8] sm:$0xff] %v12212
      %12312 = vst [vmem:[%s190 + $0x1e0] sm:$0xff] %v12216
      %12313 = vst [vmem:[%s190 + $0x1e8] sm:$0xff] %v12218
      %12314 = vst [vmem:[%s190 + $0x1f0] sm:$0xff] %v12220
      %12315 = vst [vmem:[%s190 + $0x1f8] sm:$0xff] %v12222
      %12316 = vst [vmem:[%s190 + $0x200] sm:$0xff] %v12226
      %12317 = vst [vmem:[%s190 + $0x208] sm:$0xff] %v12228
      %12318 = vst [vmem:[%s190 + $0x210] sm:$0xff] %v12230
      %12319 = vst [vmem:[%s190 + $0x218] sm:$0xff] %v12232
      %12320 = vst [vmem:[%s190 + $0x220] sm:$0xff] %v12236
      %12321 = vst [vmem:[%s190 + $0x228] sm:$0xff] %v12238
      %12322 = vst [vmem:[%s190 + $0x230] sm:$0xff] %v12240
      %12323 = vst [vmem:[%s190 + $0x238] sm:$0xff] %v12242
      %12324 = vst [vmem:[%s190 + $0x240] sm:$0x1] %v12246
      %12325 = vst [vmem:[%s190 + $0x248] sm:$0x1] %v12248
      %s12326 = smul.u32 %s18, 4
      %s12327 = sadd.s32 %s12326, %s19
      %p12328 = scmp.lt.s32.totalorder %s12327, 7
      %s12329 = scalar_select %p12328, %s12327, 7
      %s12330 = smul.addr %s12329, 74
      %s12331 = smul.addr %s12330, 8
      %s12332 = scalar_lea.vmem %s3, %s12331
      // Predicated region
      $region37: #{deconv2d_batchnorm_forward.1} parent=31 // pred_check
        %p12333 = pneg %p116
      $region38: #{deconv2d_batchnorm_forward.1} parent=31 // pred_check_branch
        %12335 = sbr.rel (%p12333) target = $region40
      $region39: #{deconv2d_batchnorm_forward.1} parent=31 // pred_region
        %s12336 = smul.u32 %s18, 4
        %s12337 = sadd.s32 %s12336, %s19
      $region40: #{deconv2d_batchnorm_forward.1} parent=31 // pred_fallthru
        _
    $region32: #{deconv2d_batchnorm_forward.1} parent=5 // pred_fallthru
      _
    %p12338 = scmp.le.s32.totalorder 2, %s9
    // Predicated region
    $region41: #{deconv2d_batchnorm_forward.1} parent=5 // pred_check
      %p12339 = pneg %p12338
    $region42: #{deconv2d_batchnorm_forward.1} parent=5 // pred_check_branch
      %12341 = sbr.rel (%p12339) target = $region44
    $region43: #{deconv2d_batchnorm_forward.1} parent=5 // pred_region
      %s12342 = ssub.s32 %s9, 2
      // Predicated region
      $region45: #{deconv2d_batchnorm_forward.1} parent=43 // pred_check
        %p12343 = pneg %p122
      $region46: #{deconv2d_batchnorm_forward.1} parent=43 // pred_check_branch
        %12345 = sbr.rel (%p12343) target = $region48
      $region47: #{deconv2d_batchnorm_forward.1} parent=43 // pred_region
        %s12346 = smul.u32 %s20, 4
        %s12347 = sadd.s32 %s12346, %s21
        %p12348 = scmp.lt.s32.totalorder %s12347, 7
        %s12349 = scalar_select %p12348, %s12347, 7
        %s12350 = smul.addr %s12349, 74
        %s12351 = smul.addr %s12350, 8
        %s12352 = scalar_lea.vmem %s3, %s12351
      $region48: #{deconv2d_batchnorm_forward.1} parent=43 // pred_fallthru
        _
    $region44: #{deconv2d_batchnorm_forward.1} parent=5 // pred_fallthru
      _
  $region6: #{deconv2d_batchnorm_forward.1} parent=0 // loop_footer
    %s13 = sadd.s32 1, %s9
  $region7: #{deconv2d_batchnorm_forward.1} parent=0 // loop_footer_branch
    %8 = sbr.rel target = $region3
  $region8: #{deconv2d_batchnorm_forward.1} parent=0 // loop_exit
    _

</llo_original>
